<compile_context>
chip_gen: v6e
topology: v6e:2x2x1
jax: 0.10.0
libtpu: 0.0.40
codegen_flags: <defaults>
</compile_context>

<pallas_src>
import numpy as np
import jax
import jax.numpy as jnp
from jax.experimental import pallas as pl
from jax.experimental.pallas import tpu as pltpu

C_IN = 100      # Conv1d in channels (= feature dim of the input sequence)
C_MID = 200     # Conv1d(100 -> 200)
C_FC = 20       # Linear(100 -> 20)
C_OUT_PAD = 128 # fc output padded to a full lane group for dense stores
K = 3           # conv kernel size
STRIDE = 2      # conv stride
POOL1 = 6       # AdaptiveAvgPool1d(6)


# ---------------------------------------------------------------------------
# helpers (host-side constant construction)
# ---------------------------------------------------------------------------
def _pool_matrix_np(l_in, l_out):
    """P (l_out, l_in) such that P @ y == AdaptiveAvgPool1d(l_out)(y)."""
    p = np.zeros((l_out, l_in), np.float32)
    for i in range(l_out):
        s = (i * l_in) // l_out
        e = -(-((i + 1) * l_in) // l_out)  # ceil
        p[i, s:e] = 1.0 / (e - s)
    return p


# ---------------------------------------------------------------------------
# Pallas kernel: whole forward pass for one batch tile (3 fused matmuls)
# ---------------------------------------------------------------------------
def t2cnn_kernel(x_ref, w1_ref, b1_ref, w2_ref, b2_ref, w3_ref, b3_ref, o_ref):
    # stage 1: stride-2 conv1 (stride + im2col folded into W1) + bias + ReLU
    a1 = jnp.dot(x_ref[...], w1_ref[...], preferred_element_type=jnp.float32)
    a1 = jnp.maximum(a1 + b1_ref[...], 0.0)

    # stage 2: AdaptiveAvgPool1d(6) fused with conv2 + bias + ReLU
    a2 = jnp.dot(a1.astype(jnp.bfloat16), w2_ref[...],
                 preferred_element_type=jnp.float32)
    a2 = jnp.maximum(a2 + b2_ref[...], 0.0)

    # stage 3: AdaptiveAvgPool1d(1) fused with fc (output zero-padded to 128)
    out = jnp.dot(a2.astype(jnp.bfloat16), w3_ref[...],
                  preferred_element_type=jnp.float32)
    o_ref[...] = (out + b3_ref[...]).astype(o_ref.dtype)


# ---------------------------------------------------------------------------
# wrapper
# ---------------------------------------------------------------------------
def t2cnn_forward(x, w1, b1, w2, b2, w3, b3, *, max_tb=128):
    B, L, c_in = x.shape
    assert c_in == C_IN
    l1 = (L - K) // STRIDE + 1          # conv1 output length
    l2 = (POOL1 - K) // STRIDE + 1      # conv2 output length (= 2)
    n1 = l1 * C_MID
    n2 = l2 * C_IN

    # batch tile: multiple of 8 (sublane-dense), capped at max_tb
    TB = min(max_tb, ((B + 7) // 8) * 8)
    Bp = ((B + TB - 1) // TB) * TB

    w1np = np.asarray(w1); w2np = np.asarray(w2); w3np = np.asarray(w3)
    b1np = np.asarray(b1); b2np = np.asarray(b2); b3np = np.asarray(b3)

    # ---- stage-1 slab: stride-2 conv1 over flattened (position, channel) ----
    W1 = np.zeros((L * C_IN, n1), np.float32)
    for l in range(l1):
        for k in range(K):
            p = STRIDE * l + k
            W1[p * C_IN:(p + 1) * C_IN, l * C_MID:(l + 1) * C_MID] = w1np[:, :, k].T
    B1 = np.tile(b1np, l1)[None, :]                       # (1, n1)

    # ---- stage-2 slab: pool1 fused with conv2 (both linear, adjacent) ----
    P1 = _pool_matrix_np(l1, POOL1)                        # (6, l1)
    W2 = np.zeros((n1, n2), np.float32)
    for t in range(l2):
        for k in range(K):
            coeff = P1[STRIDE * t + k]                     # (l1,)
            w2k = w2np[:, :, k].T                          # (C_MID, C_IN)
            for l in range(l1):
                W2[l * C_MID:(l + 1) * C_MID,
                   t * C_IN:(t + 1) * C_IN] += coeff[l] * w2k
    B2 = np.tile(b2np, l2)[None, :]                        # (1, n2)

    # ---- stage-3 slab: pool2 (mean over l2) fused with fc, padded to 128 ----
    W3 = np.zeros((n2, C_OUT_PAD), np.float32)
    for t in range(l2):
        W3[t * C_IN:(t + 1) * C_IN, :C_FC] = w3np.T / l2
    B3 = np.zeros((1, C_OUT_PAD), np.float32)
    B3[0, :C_FC] = b3np

    # ---- kernel operand layouts (bf16 data/weights, f32 biases) ----
    x2d = jnp.pad(x.reshape(B, L * C_IN), ((0, Bp - B), (0, 0))).astype(jnp.bfloat16)
    W1j = jnp.asarray(W1, jnp.bfloat16)
    W2j = jnp.asarray(W2, jnp.bfloat16)
    W3j = jnp.asarray(W3, jnp.bfloat16)
    B1j = jnp.asarray(B1); B2j = jnp.asarray(B2); B3j = jnp.asarray(B3)

    full = lambda a: pl.BlockSpec(a.shape, lambda i, _n=a.ndim: (0,) * _n)

    out = pl.pallas_call(
        t2cnn_kernel,
        out_shape=jax.ShapeDtypeStruct((Bp, C_OUT_PAD), jnp.float32),
        grid_spec=pltpu.PrefetchScalarGridSpec(
            num_scalar_prefetch=0,
            grid=(Bp // TB,),
            in_specs=[
                pl.BlockSpec((TB, L * C_IN), lambda i: (i, 0)),
                full(W1j), full(B1j),
                full(W2j), full(B2j),
                full(W3j), full(B3j),
            ],
            out_specs=pl.BlockSpec((TB, C_OUT_PAD), lambda i: (i, 0)),
        ),
        compiler_params=pltpu.CompilerParams(
            dimension_semantics=("parallel",)),
    )(x2d, W1j, B1j, W2j, B2j, W3j, B3j)

    # NB: PyTorch's x2.squeeze() would return shape (20,) when B == 1;
    # we always return (B, 20).
    return out[:B, :C_FC]


# ---------------------------------------------------------------------------
# pure-JAX reference (mirrors the PyTorch math) for a correctness check
# ---------------------------------------------------------------------------
def ref_forward(x, w1, b1, w2, b2, w3, b3):
    xc = jnp.transpose(x, (0, 2, 1))                       # (B, 100, L)
    B, _, L = xc.shape
    l1 = (L - K) // STRIDE + 1
    cols1 = jnp.stack([xc[:, :, STRIDE * t:STRIDE * t + K] for t in range(l1)],
                      axis=-1)                             # (B, 100, K, L1)
    y1 = jnp.einsum('bckt,ock->bot', cols1, w1) + b1[None, :, None]
    y1 = jnp.maximum(y1, 0.0)
    y1 = jnp.einsum('bot,pt->bop', y1,
                    jnp.asarray(_pool_matrix_np(l1, POOL1)))   # (B, 200, 6)

    l2 = (POOL1 - K) // STRIDE + 1
    cols2 = jnp.stack([y1[:, :, STRIDE * t:STRIDE * t + K] for t in range(l2)],
                      axis=-1)                             # (B, 200, K, 2)
    y2 = jnp.einsum('bckt,ock->bot', cols2, w2) + b2[None, :, None]
    y2 = jnp.maximum(y2, 0.0)
    y2 = jnp.einsum('bot,pt->bop', y2,
                    jnp.asarray(_pool_matrix_np(l2, 1)))       # (B, 100, 1)

    flat = y2[:, :, 0]
    return flat @ w3.T + b3[None, :]


# ---------------------------------------------------------------------------
def init_params(key):
    ks = jax.random.split(key, 6)
    w1 = jax.random.normal(ks[0], (C_MID, C_IN, K), jnp.float32) / np.sqrt(C_IN * K)
    b1 = jax.random.normal(ks[1], (C_MID,), jnp.float32) * 0.01
    w2 = jax.random.normal(ks[2], (C_IN, C_MID, K), jnp.float32) / np.sqrt(C_MID * K)
    b2 = jax.random.normal(ks[3], (C_IN,), jnp.float32) * 0.01
    w3 = jax.random.normal(ks[4], (C_FC, C_IN), jnp.float32) / np.sqrt(C_IN)
    b3 = jax.random.normal(ks[5], (C_FC,), jnp.float32) * 0.01
    return w1, b1, w2, b2, w3, b3


if __name__ == "__main__":
    key = jax.random.PRNGKey(0)
    kx, kp = jax.random.split(key)

    B, L = 2, 16                      # small shapes: (batch, seq_len, features=100)
    x = jax.random.normal(kx, (B, L, C_IN), jnp.float32)
    w1, b1, w2, b2, w3, b3 = init_params(kp)

    out = jax.block_until_ready(t2cnn_forward(x, w1, b1, w2, b2, w3, b3))
    ref = jax.block_until_ready(ref_forward(x, w1, b1, w2, b2, w3, b3))

    assert out.shape == (B, C_FC), out.shape
    err = float(np.max(np.abs(np.asarray(out) - np.asarray(ref))))
    assert np.allclose(np.asarray(out), np.asarray(ref), rtol=5e-2, atol=5e-2), err

    print("KERNEL_OK")
</pallas_src>

<mosaic_0001>
module attributes {stable_mosaic.version = 11 : i64} {
  func.func @t2cnn_kernel(%arg0: i32, %arg1: memref<8x1600xbf16, #tpu.memory_space<vmem>>, %arg2: memref<1600x1400xbf16, #tpu.memory_space<vmem>>, %arg3: memref<1x1400xf32, #tpu.memory_space<vmem>>, %arg4: memref<1400x200xbf16, #tpu.memory_space<vmem>>, %arg5: memref<1x200xf32, #tpu.memory_space<vmem>>, %arg6: memref<200x128xbf16, #tpu.memory_space<vmem>>, %arg7: memref<1x128xf32, #tpu.memory_space<vmem>>, %arg8: memref<8x128xf32, #tpu.memory_space<vmem>>) attributes {dimension_semantics = [#tpu.dimension_semantics<parallel>], iteration_bounds = array<i64: 1>, scalar_prefetch = 0 : i64, scratch_operands = 0 : i64, tpu.core_type = #tpu.core_type<tc>, window_params = [{transform_indices = @transform_0, window_bounds = array<i64: 8, 1600>}, {pipeline_mode = #tpu.pipeline_mode<synchronous>, transform_indices = @transform_1, window_bounds = array<i64: 1600, 1400>}, {pipeline_mode = #tpu.pipeline_mode<synchronous>, transform_indices = @transform_2, window_bounds = array<i64: 1, 1400>}, {pipeline_mode = #tpu.pipeline_mode<synchronous>, transform_indices = @transform_3, window_bounds = array<i64: 1400, 200>}, {pipeline_mode = #tpu.pipeline_mode<synchronous>, transform_indices = @transform_4, window_bounds = array<i64: 1, 200>}, {pipeline_mode = #tpu.pipeline_mode<synchronous>, transform_indices = @transform_5, window_bounds = array<i64: 200, 128>}, {pipeline_mode = #tpu.pipeline_mode<synchronous>, transform_indices = @transform_6, window_bounds = array<i64: 1, 128>}, {transform_indices = @transform_7, window_bounds = array<i64: 8, 128>}]} {
    %c0 = arith.constant 0 : index
    %c0_0 = arith.constant 0 : index
    %0 = vector.load %arg1[%c0, %c0_0] : memref<8x1600xbf16, #tpu.memory_space<vmem>>, vector<8x1600xbf16>
    %c0_1 = arith.constant 0 : index
    %c0_2 = arith.constant 0 : index
    %1 = vector.load %arg2[%c0_1, %c0_2] : memref<1600x1400xbf16, #tpu.memory_space<vmem>>, vector<1600x1400xbf16>
    %cst = arith.constant dense<0.000000e+00> : vector<8x1400xf32>
    %2 = tpu.matmul %0, %1, %cst {dimension_numbers = #tpu.dot_dimension_numbers<[1], [0], [0], [1], [0, 0, 1, 1], [], []>} : vector<8x1600xbf16>, vector<1600x1400xbf16>, vector<8x1400xf32> -> vector<8x1400xf32>
    %c0_3 = arith.constant 0 : index
    %c0_4 = arith.constant 0 : index
    %3 = vector.load %arg3[%c0_3, %c0_4] : memref<1x1400xf32, #tpu.memory_space<vmem>>, vector<1x1400xf32>
    %4 = vector.broadcast %3 : vector<1x1400xf32> to vector<8x1400xf32>
    %5 = arith.addf %2, %4 : vector<8x1400xf32>
    %cst_5 = arith.constant 0.000000e+00 : f32
    %6 = vector.broadcast %cst_5 : f32 to vector<8x1400xf32>
    %7 = arith.maximumf %5, %6 : vector<8x1400xf32>
    %8 = arith.truncf %7 : vector<8x1400xf32> to vector<8x1400xbf16>
    %c0_6 = arith.constant 0 : index
    %c0_7 = arith.constant 0 : index
    %9 = vector.load %arg4[%c0_6, %c0_7] : memref<1400x200xbf16, #tpu.memory_space<vmem>>, vector<1400x200xbf16>
    %cst_8 = arith.constant dense<0.000000e+00> : vector<8x200xf32>
    %10 = tpu.matmul %8, %9, %cst_8 {dimension_numbers = #tpu.dot_dimension_numbers<[1], [0], [0], [1], [0, 0, 1, 1], [], []>} : vector<8x1400xbf16>, vector<1400x200xbf16>, vector<8x200xf32> -> vector<8x200xf32>
    %c0_9 = arith.constant 0 : index
    %c0_10 = arith.constant 0 : index
    %11 = vector.load %arg5[%c0_9, %c0_10] : memref<1x200xf32, #tpu.memory_space<vmem>>, vector<1x200xf32>
    %12 = vector.broadcast %11 : vector<1x200xf32> to vector<8x200xf32>
    %13 = arith.addf %10, %12 : vector<8x200xf32>
    %cst_11 = arith.constant 0.000000e+00 : f32
    %14 = vector.broadcast %cst_11 : f32 to vector<8x200xf32>
    %15 = arith.maximumf %13, %14 : vector<8x200xf32>
    %16 = arith.truncf %15 : vector<8x200xf32> to vector<8x200xbf16>
    %c0_12 = arith.constant 0 : index
    %c0_13 = arith.constant 0 : index
    %17 = vector.load %arg6[%c0_12, %c0_13] : memref<200x128xbf16, #tpu.memory_space<vmem>>, vector<200x128xbf16>
    %cst_14 = arith.constant dense<0.000000e+00> : vector<8x128xf32>
    %18 = tpu.matmul %16, %17, %cst_14 {dimension_numbers = #tpu.dot_dimension_numbers<[1], [0], [0], [1], [0, 0, 1, 1], [], []>} : vector<8x200xbf16>, vector<200x128xbf16>, vector<8x128xf32> -> vector<8x128xf32>
    %c0_15 = arith.constant 0 : index
    %c0_16 = arith.constant 0 : index
    %19 = vector.load %arg7[%c0_15, %c0_16] : memref<1x128xf32, #tpu.memory_space<vmem>>, vector<1x128xf32>
    %20 = vector.broadcast %19 : vector<1x128xf32> to vector<8x128xf32>
    %21 = arith.addf %18, %20 : vector<8x128xf32>
    %c0_17 = arith.constant 0 : index
    %c0_18 = arith.constant 0 : index
    %22 = vector.load %arg8[%c0_17, %c0_18] : memref<8x128xf32, #tpu.memory_space<vmem>>, vector<8x128xf32>
    tpu.vector_store %arg8[%c0_17, %c0_18], %21 {strides = array<i32>} : memref<8x128xf32, #tpu.memory_space<vmem>>, vector<8x128xf32>,
    return
  }
  func.func @transform_0(%arg0: i32) -> (i32, i32) {
    %c0_i32 = arith.constant 0 : i32
    %c0_i32_0 = arith.constant 0 : i32
    return %arg0, %c0_i32 : i32, i32
  }
  func.func @transform_1(%arg0: i32) -> (i32, i32) {
    %c0_i32 = arith.constant 0 : i32
    %c0_i32_0 = arith.constant 0 : i32
    %c0_i32_1 = arith.constant 0 : i32
    return %c0_i32, %c0_i32_0 : i32, i32
  }
  func.func @transform_2(%arg0: i32) -> (i32, i32) {
    %c0_i32 = arith.constant 0 : i32
    %c0_i32_0 = arith.constant 0 : i32
    %c0_i32_1 = arith.constant 0 : i32
    return %c0_i32, %c0_i32_0 : i32, i32
  }
  func.func @transform_3(%arg0: i32) -> (i32, i32) {
    %c0_i32 = arith.constant 0 : i32
    %c0_i32_0 = arith.constant 0 : i32
    %c0_i32_1 = arith.constant 0 : i32
    return %c0_i32, %c0_i32_0 : i32, i32
  }
  func.func @transform_4(%arg0: i32) -> (i32, i32) {
    %c0_i32 = arith.constant 0 : i32
    %c0_i32_0 = arith.constant 0 : i32
    %c0_i32_1 = arith.constant 0 : i32
    return %c0_i32, %c0_i32_0 : i32, i32
  }
  func.func @transform_5(%arg0: i32) -> (i32, i32) {
    %c0_i32 = arith.constant 0 : i32
    %c0_i32_0 = arith.constant 0 : i32
    %c0_i32_1 = arith.constant 0 : i32
    return %c0_i32, %c0_i32_0 : i32, i32
  }
  func.func @transform_6(%arg0: i32) -> (i32, i32) {
    %c0_i32 = arith.constant 0 : i32
    %c0_i32_0 = arith.constant 0 : i32
    %c0_i32_1 = arith.constant 0 : i32
    return %c0_i32, %c0_i32_0 : i32, i32
  }
  func.func @transform_7(%arg0: i32) -> (i32, i32) {
    %c0_i32 = arith.constant 0 : i32
    %c0_i32_0 = arith.constant 0 : i32
    return %arg0, %c0_i32 : i32, i32
  }
}

</mosaic_0001>

<llo_original>
// kernel: tpu_custom_call.1
$region0: #{tpu_custom_call.1}
  #allocation0 [shape = 'u32[]', space=smem, size = 0x4, offset = 0x4, fixed_abs, tag = 'smem constant byte address 0x4 - core index']
  #allocation1 [shape = 'u32[144,128]{1,0:T(1,128)}', space=vmem, size = 0x12000, scoped, tag = 'internal scratch']
  %s0 = inlined_call_operand.hbm [shape: bf16[8,1600], index: 0, kind: input, shape index: {}]
  %s1 = inlined_call_operand.hbm [shape: bf16[1600,1400], index: 1, kind: input, shape index: {}]
  %s2 = inlined_call_operand.hbm [shape: f32[1,1400], index: 2, kind: input, shape index: {}]
  %s3 = inlined_call_operand.vmem [shape: bf16[1400,200], index: 3, kind: input, shape index: {}]
  %s4 = inlined_call_operand.hbm [shape: f32[1,200], index: 4, kind: input, shape index: {}]
  %s5 = inlined_call_operand.hbm [shape: bf16[200,128], index: 5, kind: input, shape index: {}]
  %s6 = inlined_call_operand.hbm [shape: f32[1,128], index: 6, kind: input, shape index: {}]
  %s7 = inlined_call_operand.hbm [shape: f32[8,128], index: 7, kind: output, shape index: {}]
  %s8 = sld [smem:[#allocation0]]
  $region62: #{tpu_custom_call.1} parent=0
    _
  %s10 = ssub.s32 1, %s8
  %s11 = scalar_select 0, %s10, %s8
  $region1: #{tpu_custom_call.1} parent=0
    #allocation2 [shape = 'u8[26624]{0}', space=vmem, size = 0x6800, scoped, tag = 'input window, operand 0, single buffered']
    #allocation3 [shape = 's32[1]{0}', space=sflag, size = 0x4, scoped, tag = 'scoped memory for tpu_custom_call.1']
    #allocation4 [shape = 's32[1]{0}', space=sflag, size = 0x4, scoped, tag = 'scoped memory for tpu_custom_call.1']
    #allocation5 [shape = 'u8[4505600]{0}', space=vmem, size = 0x44c000, scoped, tag = 'input window, operand 1, single buffered']
    #allocation6 [shape = 's32[1]{0}', space=sflag, size = 0x4, scoped, tag = 'scoped memory for tpu_custom_call.1']
    #allocation7 [shape = 'u8[5632]{0}', space=vmem, size = 0x1800, scoped, tag = 'input window, operand 2, single buffered']
    #allocation8 [shape = 'u8[1024]{0}', space=vmem, size = 0x400, scoped, tag = 'input window, operand 4, single buffered']
    #allocation9 [shape = 's32[1]{0}', space=sflag, size = 0x4, scoped, tag = 'scoped memory for tpu_custom_call.1']
    #allocation10 [shape = 'u8[51200]{0}', space=vmem, size = 0xc800, scoped, tag = 'input window, operand 5, single buffered']
    #allocation11 [shape = 'u8[512]{0}', space=vmem, size = 0x400, scoped, tag = 'input window, operand 6, single buffered']
    #allocation12 [shape = 's32[1]{0}', space=sflag, size = 0x4, scoped, tag = 'scoped memory for tpu_custom_call.1']
    #allocation13 [shape = 'u8[4096]{0}', space=vmem, size = 0x1000, scoped, tag = 'output window, operand 0, single buffered']
    %12 = vsyncpa [#allocation3], 0
    %13 = vsyncpa [#allocation6], 0
    %14 = vsyncpa [#allocation9], 0
    %15 = vsyncpa [#allocation12], 0
    %16 = vsyncpa [#allocation4], 0
    // Predicated region
    $region2: #{tpu_custom_call.1} parent=1 // pred_check
      _
    $region3: #{tpu_custom_call.1} parent=1 // pred_check_branch
      %18 = sbr.rel (0) target = $region5
    $region4: #{tpu_custom_call.1} parent=1 // pred_region
      %s20 = ssub.s32 832, 832
      %21 = vsyncadd [#allocation3], %s20
      %s23 = sshll.u32 [#allocation2], 4
      %s24 = int_to_ptr.vmem [resolvable:$true] %s23
      %26 = dma.hbm_to_vmem [thread:$0]  %s0, 832, %s24, [#allocation3]
    $region5: #{tpu_custom_call.1} parent=1 // pred_fallthru
      _
    // Predicated region
    $region6: #{tpu_custom_call.1} parent=1 // pred_check
      _
    $region7: #{tpu_custom_call.1} parent=1 // pred_check_branch
      %28 = sbr.rel (0) target = $region9
    $region8: #{tpu_custom_call.1} parent=1 // pred_region
      %s30 = ssub.s32 140800, 140800
      %31 = vsyncadd [#allocation6], %s30
      %s32 = sshll.u32 [#allocation5], 4
      %s33 = int_to_ptr.vmem [resolvable:$true] %s32
      %38 = dma.hbm_to_vmem [thread:$0]  %s1, 140800, %s33, [#allocation6], 704, 704, 44
    $region9: #{tpu_custom_call.1} parent=1 // pred_fallthru
      _
    // Predicated region
    $region10: #{tpu_custom_call.1} parent=1 // pred_check
      _
    $region11: #{tpu_custom_call.1} parent=1 // pred_check_branch
      %40 = sbr.rel (0) target = $region13
    $region12: #{tpu_custom_call.1} parent=1 // pred_region
      %s42 = ssub.s32 176, 176
      %43 = vsyncadd [#allocation6], %s42
      %s45 = sshll.u32 [#allocation7], 4
      %s46 = int_to_ptr.vmem [resolvable:$true] %s45
      %48 = dma.hbm_to_vmem [thread:$0]  %s2, 176, %s46, [#allocation6]
    $region13: #{tpu_custom_call.1} parent=1 // pred_fallthru
      _
    // Predicated region
    $region14: #{tpu_custom_call.1} parent=1 // pred_check
      _
    $region15: #{tpu_custom_call.1} parent=1 // pred_check_branch
      %50 = sbr.rel (0) target = $region17
    $region16: #{tpu_custom_call.1} parent=1 // pred_region
      _
    $region17: #{tpu_custom_call.1} parent=1 // pred_fallthru
      _
    // Predicated region
    $region18: #{tpu_custom_call.1} parent=1 // pred_check
      _
    $region19: #{tpu_custom_call.1} parent=1 // pred_check_branch
      %52 = sbr.rel (0) target = $region21
    $region20: #{tpu_custom_call.1} parent=1 // pred_region
      %s54 = ssub.s32 32, 32
      %55 = vsyncadd [#allocation9], %s54
      %s57 = sshll.u32 [#allocation8], 4
      %s58 = int_to_ptr.vmem [resolvable:$true] %s57
      %60 = dma.hbm_to_vmem [thread:$0]  %s4, 32, %s58, [#allocation9]
    $region21: #{tpu_custom_call.1} parent=1 // pred_fallthru
      _
    // Predicated region
    $region22: #{tpu_custom_call.1} parent=1 // pred_check
      _
    $region23: #{tpu_custom_call.1} parent=1 // pred_check_branch
      %62 = sbr.rel (0) target = $region25
    $region24: #{tpu_custom_call.1} parent=1 // pred_region
      %s64 = ssub.s32 1600, 1600
      %65 = vsyncadd [#allocation9], %s64
      %s66 = sshll.u32 [#allocation10], 4
      %s67 = int_to_ptr.vmem [resolvable:$true] %s66
      %72 = dma.hbm_to_vmem [thread:$0]  %s5, 1600, %s67, [#allocation9], 64, 64, 4
    $region25: #{tpu_custom_call.1} parent=1 // pred_fallthru
      _
    // Predicated region
    $region26: #{tpu_custom_call.1} parent=1 // pred_check
      _
    $region27: #{tpu_custom_call.1} parent=1 // pred_check_branch
      %74 = sbr.rel (0) target = $region29
    $region28: #{tpu_custom_call.1} parent=1 // pred_region
      %s76 = ssub.s32 16, 16
      %77 = vsyncadd [#allocation12], %s76
      %s79 = sshll.u32 [#allocation11], 4
      %s80 = int_to_ptr.vmem [resolvable:$true] %s79
      %82 = dma.hbm_to_vmem [thread:$0]  %s6, 16, %s80, [#allocation12]
    $region29: #{tpu_custom_call.1} parent=1 // pred_fallthru
      _
    // Predicated region
    $region30: #{tpu_custom_call.1} parent=1 // pred_check
      _
    $region31: #{tpu_custom_call.1} parent=1 // pred_check_branch
      %84 = sbr.rel (0) target = $region33
    $region32: #{tpu_custom_call.1} parent=1 // pred_region
      %85 = dma.done [#allocation3], 832
    $region33: #{tpu_custom_call.1} parent=1 // pred_fallthru
      _
    // Predicated region
    $region34: #{tpu_custom_call.1} parent=1 // pred_check
      _
    $region35: #{tpu_custom_call.1} parent=1 // pred_check_branch
      %87 = sbr.rel (0) target = $region37
    $region36: #{tpu_custom_call.1} parent=1 // pred_region
      %88 = dma.done [#allocation6], 140800
    $region37: #{tpu_custom_call.1} parent=1 // pred_fallthru
      _
    // Predicated region
    $region38: #{tpu_custom_call.1} parent=1 // pred_check
      _
    $region39: #{tpu_custom_call.1} parent=1 // pred_check_branch
      %90 = sbr.rel (0) target = $region41
    $region40: #{tpu_custom_call.1} parent=1 // pred_region
      %91 = dma.done [#allocation6], 176
    $region41: #{tpu_custom_call.1} parent=1 // pred_fallthru
      _
    // Predicated region
    $region42: #{tpu_custom_call.1} parent=1 // pred_check
      _
    $region43: #{tpu_custom_call.1} parent=1 // pred_check_branch
      %93 = sbr.rel (0) target = $region45
    $region44: #{tpu_custom_call.1} parent=1 // pred_region
      %94 = dma.done [#allocation9], 32
    $region45: #{tpu_custom_call.1} parent=1 // pred_fallthru
      _
    // Predicated region
    $region46: #{tpu_custom_call.1} parent=1 // pred_check
      _
    $region47: #{tpu_custom_call.1} parent=1 // pred_check_branch
      %96 = sbr.rel (0) target = $region49
    $region48: #{tpu_custom_call.1} parent=1 // pred_region
      %97 = dma.done [#allocation9], 1600
    $region49: #{tpu_custom_call.1} parent=1 // pred_fallthru
      _
    // Predicated region
    $region50: #{tpu_custom_call.1} parent=1 // pred_check
      _
    $region51: #{tpu_custom_call.1} parent=1 // pred_check_branch
      %99 = sbr.rel (0) target = $region53
    $region52: #{tpu_custom_call.1} parent=1 // pred_region
      %100 = dma.done [#allocation12], 16
    $region53: #{tpu_custom_call.1} parent=1 // pred_fallthru
      _
    %v102 = vld [vmem:[#allocation2] sm:$0xff]
    %v103 = vld [vmem:[#allocation2 + $0x8] sm:$0xff]
    %v104 = vld [vmem:[#allocation2 + $0x10] sm:$0xff]
    %v105 = vld [vmem:[#allocation2 + $0x18] sm:$0xff]
    %v106 = vld [vmem:[#allocation2 + $0x20] sm:$0xff]
    %v107 = vld [vmem:[#allocation2 + $0x28] sm:$0xff]
    %v108 = vld [vmem:[#allocation2 + $0x30] sm:$0xf]
    %v109 = vld [vmem:[#allocation5] sm:$0xff]
    %v110 = vld [vmem:[#allocation5 + $0x8] sm:$0xff]
    %v111 = vld [vmem:[#allocation5 + $0x10] sm:$0xff]
    %v112 = vld [vmem:[#allocation5 + $0x18] sm:$0xff]
    %v113 = vld [vmem:[#allocation5 + $0x20] sm:$0xff]
    %v114 = vld [vmem:[#allocation5 + $0x28] sm:$0xf]
    %v115 = vld [vmem:[#allocation5 + $0x2c] sm:$0xff]
    %v116 = vld [vmem:[#allocation5 + $0x34] sm:$0xff]
    %v117 = vld [vmem:[#allocation5 + $0x3c] sm:$0xff]
    %v118 = vld [vmem:[#allocation5 + $0x44] sm:$0xff]
    %v119 = vld [vmem:[#allocation5 + $0x4c] sm:$0xff]
    %v120 = vld [vmem:[#allocation5 + $0x54] sm:$0xf]
    %v121 = vld [vmem:[#allocation5 + $0x58] sm:$0xff]
    %v122 = vld [vmem:[#allocation5 + $0x60] sm:$0xff]
    %v123 = vld [vmem:[#allocation5 + $0x68] sm:$0xff]
    %v124 = vld [vmem:[#allocation5 + $0x70] sm:$0xff]
    %v125 = vld [vmem:[#allocation5 + $0x78] sm:$0xff]
    %v126 = vld [vmem:[#allocation5 + $0x80] sm:$0xf]
    %v127 = vld [vmem:[#allocation5 + $0x84] sm:$0xff]
    %v128 = vld [vmem:[#allocation5 + $0x8c] sm:$0xff]
    %v129 = vld [vmem:[#allocation5 + $0x94] sm:$0xff]
    %v130 = vld [vmem:[#allocation5 + $0x9c] sm:$0xff]
    %v131 = vld [vmem:[#allocation5 + $0xa4] sm:$0xff]
    %v132 = vld [vmem:[#allocation5 + $0xac] sm:$0xf]
    %v133 = vld [vmem:[#allocation5 + $0xb0] sm:$0xff]
    %v134 = vld [vmem:[#allocation5 + $0xb8] sm:$0xff]
    %v135 = vld [vmem:[#allocation5 + $0xc0] sm:$0xff]
    %v136 = vld [vmem:[#allocation5 + $0xc8] sm:$0xff]
    %v137 = vld [vmem:[#allocation5 + $0xd0] sm:$0xff]
    %v138 = vld [vmem:[#allocation5 + $0xd8] sm:$0xf]
    %v139 = vld [vmem:[#allocation5 + $0xdc] sm:$0xff]
    %v140 = vld [vmem:[#allocation5 + $0xe4] sm:$0xff]
    %v141 = vld [vmem:[#allocation5 + $0xec] sm:$0xff]
    %v142 = vld [vmem:[#allocation5 + $0xf4] sm:$0xff]
    %v143 = vld [vmem:[#allocation5 + $0xfc] sm:$0xff]
    %v144 = vld [vmem:[#allocation5 + $0x104] sm:$0xf]
    %v145 = vld [vmem:[#allocation5 + $0x108] sm:$0xff]
    %v146 = vld [vmem:[#allocation5 + $0x110] sm:$0xff]
    %v147 = vld [vmem:[#allocation5 + $0x118] sm:$0xff]
    %v148 = vld [vmem:[#allocation5 + $0x120] sm:$0xff]
    %v149 = vld [vmem:[#allocation5 + $0x128] sm:$0xff]
    %v150 = vld [vmem:[#allocation5 + $0x130] sm:$0xf]
    %v151 = vld [vmem:[#allocation5 + $0x134] sm:$0xff]
    %v152 = vld [vmem:[#allocation5 + $0x13c] sm:$0xff]
    %v153 = vld [vmem:[#allocation5 + $0x144] sm:$0xff]
    %v154 = vld [vmem:[#allocation5 + $0x14c] sm:$0xff]
    %v155 = vld [vmem:[#allocation5 + $0x154] sm:$0xff]
    %v156 = vld [vmem:[#allocation5 + $0x15c] sm:$0xf]
    %v157 = vld [vmem:[#allocation5 + $0x160] sm:$0xff]
    %v158 = vld [vmem:[#allocation5 + $0x168] sm:$0xff]
    %v159 = vld [vmem:[#allocation5 + $0x170] sm:$0xff]
    %v160 = vld [vmem:[#allocation5 + $0x178] sm:$0xff]
    %v161 = vld [vmem:[#allocation5 + $0x180] sm:$0xff]
    %v162 = vld [vmem:[#allocation5 + $0x188] sm:$0xf]
    %v163 = vld [vmem:[#allocation5 + $0x18c] sm:$0xff]
    %v164 = vld [vmem:[#allocation5 + $0x194] sm:$0xff]
    %v165 = vld [vmem:[#allocation5 + $0x19c] sm:$0xff]
    %v166 = vld [vmem:[#allocation5 + $0x1a4] sm:$0xff]
    %v167 = vld [vmem:[#allocation5 + $0x1ac] sm:$0xff]
    %v168 = vld [vmem:[#allocation5 + $0x1b4] sm:$0xf]
    %v169 = vld [vmem:[#allocation5 + $0x1b8] sm:$0xff]
    %v170 = vld [vmem:[#allocation5 + $0x1c0] sm:$0xff]
    %v171 = vld [vmem:[#allocation5 + $0x1c8] sm:$0xff]
    %v172 = vld [vmem:[#allocation5 + $0x1d0] sm:$0xff]
    %v173 = vld [vmem:[#allocation5 + $0x1d8] sm:$0xff]
    %v174 = vld [vmem:[#allocation5 + $0x1e0] sm:$0xf]
    %v175 = vld [vmem:[#allocation5 + $0x1e4] sm:$0xff]
    %v176 = vld [vmem:[#allocation5 + $0x1ec] sm:$0xff]
    %v177 = vld [vmem:[#allocation5 + $0x1f4] sm:$0xff]
    %v178 = vld [vmem:[#allocation5 + $0x1fc] sm:$0xff]
    %v179 = vld [vmem:[#allocation5 + $0x204] sm:$0xff]
    %v180 = vld [vmem:[#allocation5 + $0x20c] sm:$0xf]
    %v181 = vld [vmem:[#allocation5 + $0x210] sm:$0xff]
    %v182 = vld [vmem:[#allocation5 + $0x218] sm:$0xff]
    %v183 = vld [vmem:[#allocation5 + $0x220] sm:$0xff]
    %v184 = vld [vmem:[#allocation5 + $0x228] sm:$0xff]
    %v185 = vld [vmem:[#allocation5 + $0x230] sm:$0xff]
    %v186 = vld [vmem:[#allocation5 + $0x238] sm:$0xf]
    %v187 = vld [vmem:[#allocation5 + $0x23c] sm:$0xff]
    %v188 = vld [vmem:[#allocation5 + $0x244] sm:$0xff]
    %v189 = vld [vmem:[#allocation5 + $0x24c] sm:$0xff]
    %v190 = vld [vmem:[#allocation5 + $0x254] sm:$0xff]
    %v191 = vld [vmem:[#allocation5 + $0x25c] sm:$0xff]
    %v192 = vld [vmem:[#allocation5 + $0x264] sm:$0xf]
    %v193 = vld [vmem:[#allocation5 + $0x268] sm:$0xff]
    %v194 = vld [vmem:[#allocation5 + $0x270] sm:$0xff]
    %v195 = vld [vmem:[#allocation5 + $0x278] sm:$0xff]
    %v196 = vld [vmem:[#allocation5 + $0x280] sm:$0xff]
    %v197 = vld [vmem:[#allocation5 + $0x288] sm:$0xff]
    %v198 = vld [vmem:[#allocation5 + $0x290] sm:$0xf]
    %v199 = vld [vmem:[#allocation5 + $0x294] sm:$0xff]
    %v200 = vld [vmem:[#allocation5 + $0x29c] sm:$0xff]
    %v201 = vld [vmem:[#allocation5 + $0x2a4] sm:$0xff]
    %v202 = vld [vmem:[#allocation5 + $0x2ac] sm:$0xff]
    %v203 = vld [vmem:[#allocation5 + $0x2b4] sm:$0xff]
    %v204 = vld [vmem:[#allocation5 + $0x2bc] sm:$0xf]
    %v205 = vld [vmem:[#allocation5 + $0x2c0] sm:$0xff]
    %v206 = vld [vmem:[#allocation5 + $0x2c8] sm:$0xff]
    %v207 = vld [vmem:[#allocation5 + $0x2d0] sm:$0xff]
    %v208 = vld [vmem:[#allocation5 + $0x2d8] sm:$0xff]
    %v209 = vld [vmem:[#allocation5 + $0x2e0] sm:$0xff]
    %v210 = vld [vmem:[#allocation5 + $0x2e8] sm:$0xf]
    %v211 = vld [vmem:[#allocation5 + $0x2ec] sm:$0xff]
    %v212 = vld [vmem:[#allocation5 + $0x2f4] sm:$0xff]
    %v213 = vld [vmem:[#allocation5 + $0x2fc] sm:$0xff]
    %v214 = vld [vmem:[#allocation5 + $0x304] sm:$0xff]
    %v215 = vld [vmem:[#allocation5 + $0x30c] sm:$0xff]
    %v216 = vld [vmem:[#allocation5 + $0x314] sm:$0xf]
    %v217 = vld [vmem:[#allocation5 + $0x318] sm:$0xff]
    %v218 = vld [vmem:[#allocation5 + $0x320] sm:$0xff]
    %v219 = vld [vmem:[#allocation5 + $0x328] sm:$0xff]
    %v220 = vld [vmem:[#allocation5 + $0x330] sm:$0xff]
    %v221 = vld [vmem:[#allocation5 + $0x338] sm:$0xff]
    %v222 = vld [vmem:[#allocation5 + $0x340] sm:$0xf]
    %v223 = vld [vmem:[#allocation5 + $0x344] sm:$0xff]
    %v224 = vld [vmem:[#allocation5 + $0x34c] sm:$0xff]
    %v225 = vld [vmem:[#allocation5 + $0x354] sm:$0xff]
    %v226 = vld [vmem:[#allocation5 + $0x35c] sm:$0xff]
    %v227 = vld [vmem:[#allocation5 + $0x364] sm:$0xff]
    %v228 = vld [vmem:[#allocation5 + $0x36c] sm:$0xf]
    %v229 = vld [vmem:[#allocation5 + $0x370] sm:$0xff]
    %v230 = vld [vmem:[#allocation5 + $0x378] sm:$0xff]
    %v231 = vld [vmem:[#allocation5 + $0x380] sm:$0xff]
    %v232 = vld [vmem:[#allocation5 + $0x388] sm:$0xff]
    %v233 = vld [vmem:[#allocation5 + $0x390] sm:$0xff]
    %v234 = vld [vmem:[#allocation5 + $0x398] sm:$0xf]
    %v235 = vld [vmem:[#allocation5 + $0x39c] sm:$0xff]
    %v236 = vld [vmem:[#allocation5 + $0x3a4] sm:$0xff]
    %v237 = vld [vmem:[#allocation5 + $0x3ac] sm:$0xff]
    %v238 = vld [vmem:[#allocation5 + $0x3b4] sm:$0xff]
    %v239 = vld [vmem:[#allocation5 + $0x3bc] sm:$0xff]
    %v240 = vld [vmem:[#allocation5 + $0x3c4] sm:$0xf]
    %v241 = vld [vmem:[#allocation5 + $0x3c8] sm:$0xff]
    %v242 = vld [vmem:[#allocation5 + $0x3d0] sm:$0xff]
    %v243 = vld [vmem:[#allocation5 + $0x3d8] sm:$0xff]
    %v244 = vld [vmem:[#allocation5 + $0x3e0] sm:$0xff]
    %v245 = vld [vmem:[#allocation5 + $0x3e8] sm:$0xff]
    %v246 = vld [vmem:[#allocation5 + $0x3f0] sm:$0xf]
    %v247 = vld [vmem:[#allocation5 + $0x3f4] sm:$0xff]
    %v248 = vld [vmem:[#allocation5 + $0x3fc] sm:$0xff]
    %v249 = vld [vmem:[#allocation5 + $0x404] sm:$0xff]
    %v250 = vld [vmem:[#allocation5 + $0x40c] sm:$0xff]
    %v251 = vld [vmem:[#allocation5 + $0x414] sm:$0xff]
    %v252 = vld [vmem:[#allocation5 + $0x41c] sm:$0xf]
    %v253 = vld [vmem:[#allocation5 + $0x420] sm:$0xff]
    %v254 = vld [vmem:[#allocation5 + $0x428] sm:$0xff]
    %v255 = vld [vmem:[#allocation5 + $0x430] sm:$0xff]
    %v256 = vld [vmem:[#allocation5 + $0x438] sm:$0xff]
    %v257 = vld [vmem:[#allocation5 + $0x440] sm:$0xff]
    %v258 = vld [vmem:[#allocation5 + $0x448] sm:$0xf]
    %v259 = vld [vmem:[#allocation5 + $0x44c] sm:$0xff]
    %v260 = vld [vmem:[#allocation5 + $0x454] sm:$0xff]
    %v261 = vld [vmem:[#allocation5 + $0x45c] sm:$0xff]
    %v262 = vld [vmem:[#allocation5 + $0x464] sm:$0xff]
    %v263 = vld [vmem:[#allocation5 + $0x46c] sm:$0xff]
    %v264 = vld [vmem:[#allocation5 + $0x474] sm:$0xf]
    %v265 = vld [vmem:[#allocation5 + $0x478] sm:$0xff]
    %v266 = vld [vmem:[#allocation5 + $0x480] sm:$0xff]
    %v267 = vld [vmem:[#allocation5 + $0x488] sm:$0xff]
    %v268 = vld [vmem:[#allocation5 + $0x490] sm:$0xff]
    %v269 = vld [vmem:[#allocation5 + $0x498] sm:$0xff]
    %v270 = vld [vmem:[#allocation5 + $0x4a0] sm:$0xf]
    %v271 = vld [vmem:[#allocation5 + $0x4a4] sm:$0xff]
    %v272 = vld [vmem:[#allocation5 + $0x4ac] sm:$0xff]
    %v273 = vld [vmem:[#allocation5 + $0x4b4] sm:$0xff]
    %v274 = vld [vmem:[#allocation5 + $0x4bc] sm:$0xff]
    %v275 = vld [vmem:[#allocation5 + $0x4c4] sm:$0xff]
    %v276 = vld [vmem:[#allocation5 + $0x4cc] sm:$0xf]
    %v277 = vld [vmem:[#allocation5 + $0x4d0] sm:$0xff]
    %v278 = vld [vmem:[#allocation5 + $0x4d8] sm:$0xff]
    %v279 = vld [vmem:[#allocation5 + $0x4e0] sm:$0xff]
    %v280 = vld [vmem:[#allocation5 + $0x4e8] sm:$0xff]
    %v281 = vld [vmem:[#allocation5 + $0x4f0] sm:$0xff]
    %v282 = vld [vmem:[#allocation5 + $0x4f8] sm:$0xf]
    %v283 = vld [vmem:[#allocation5 + $0x4fc] sm:$0xff]
    %v284 = vld [vmem:[#allocation5 + $0x504] sm:$0xff]
    %v285 = vld [vmem:[#allocation5 + $0x50c] sm:$0xff]
    %v286 = vld [vmem:[#allocation5 + $0x514] sm:$0xff]
    %v287 = vld [vmem:[#allocation5 + $0x51c] sm:$0xff]
    %v288 = vld [vmem:[#allocation5 + $0x524] sm:$0xf]
    %v289 = vld [vmem:[#allocation5 + $0x528] sm:$0xff]
    %v290 = vld [vmem:[#allocation5 + $0x530] sm:$0xff]
    %v291 = vld [vmem:[#allocation5 + $0x538] sm:$0xff]
    %v292 = vld [vmem:[#allocation5 + $0x540] sm:$0xff]
    %v293 = vld [vmem:[#allocation5 + $0x548] sm:$0xff]
    %v294 = vld [vmem:[#allocation5 + $0x550] sm:$0xf]
    %v295 = vld [vmem:[#allocation5 + $0x554] sm:$0xff]
    %v296 = vld [vmem:[#allocation5 + $0x55c] sm:$0xff]
    %v297 = vld [vmem:[#allocation5 + $0x564] sm:$0xff]
    %v298 = vld [vmem:[#allocation5 + $0x56c] sm:$0xff]
    %v299 = vld [vmem:[#allocation5 + $0x574] sm:$0xff]
    %v300 = vld [vmem:[#allocation5 + $0x57c] sm:$0xf]
    %v301 = vld [vmem:[#allocation5 + $0x580] sm:$0xff]
    %v302 = vld [vmem:[#allocation5 + $0x588] sm:$0xff]
    %v303 = vld [vmem:[#allocation5 + $0x590] sm:$0xff]
    %v304 = vld [vmem:[#allocation5 + $0x598] sm:$0xff]
    %v305 = vld [vmem:[#allocation5 + $0x5a0] sm:$0xff]
    %v306 = vld [vmem:[#allocation5 + $0x5a8] sm:$0xf]
    %v307 = vld [vmem:[#allocation5 + $0x5ac] sm:$0xff]
    %v308 = vld [vmem:[#allocation5 + $0x5b4] sm:$0xff]
    %v309 = vld [vmem:[#allocation5 + $0x5bc] sm:$0xff]
    %v310 = vld [vmem:[#allocation5 + $0x5c4] sm:$0xff]
    %v311 = vld [vmem:[#allocation5 + $0x5cc] sm:$0xff]
    %v312 = vld [vmem:[#allocation5 + $0x5d4] sm:$0xf]
    %v313 = vld [vmem:[#allocation5 + $0x5d8] sm:$0xff]
    %v314 = vld [vmem:[#allocation5 + $0x5e0] sm:$0xff]
    %v315 = vld [vmem:[#allocation5 + $0x5e8] sm:$0xff]
    %v316 = vld [vmem:[#allocation5 + $0x5f0] sm:$0xff]
    %v317 = vld [vmem:[#allocation5 + $0x5f8] sm:$0xff]
    %v318 = vld [vmem:[#allocation5 + $0x600] sm:$0xf]
    %v319 = vld [vmem:[#allocation5 + $0x604] sm:$0xff]
    %v320 = vld [vmem:[#allocation5 + $0x60c] sm:$0xff]
    %v321 = vld [vmem:[#allocation5 + $0x614] sm:$0xff]
    %v322 = vld [vmem:[#allocation5 + $0x61c] sm:$0xff]
    %v323 = vld [vmem:[#allocation5 + $0x624] sm:$0xff]
    %v324 = vld [vmem:[#allocation5 + $0x62c] sm:$0xf]
    %v325 = vld [vmem:[#allocation5 + $0x630] sm:$0xff]
    %v326 = vld [vmem:[#allocation5 + $0x638] sm:$0xff]
    %v327 = vld [vmem:[#allocation5 + $0x640] sm:$0xff]
    %v328 = vld [vmem:[#allocation5 + $0x648] sm:$0xff]
    %v329 = vld [vmem:[#allocation5 + $0x650] sm:$0xff]
    %v330 = vld [vmem:[#allocation5 + $0x658] sm:$0xf]
    %v331 = vld [vmem:[#allocation5 + $0x65c] sm:$0xff]
    %v332 = vld [vmem:[#allocation5 + $0x664] sm:$0xff]
    %v333 = vld [vmem:[#allocation5 + $0x66c] sm:$0xff]
    %v334 = vld [vmem:[#allocation5 + $0x674] sm:$0xff]
    %v335 = vld [vmem:[#allocation5 + $0x67c] sm:$0xff]
    %v336 = vld [vmem:[#allocation5 + $0x684] sm:$0xf]
    %v337 = vld [vmem:[#allocation5 + $0x688] sm:$0xff]
    %v338 = vld [vmem:[#allocation5 + $0x690] sm:$0xff]
    %v339 = vld [vmem:[#allocation5 + $0x698] sm:$0xff]
    %v340 = vld [vmem:[#allocation5 + $0x6a0] sm:$0xff]
    %v341 = vld [vmem:[#allocation5 + $0x6a8] sm:$0xff]
    %v342 = vld [vmem:[#allocation5 + $0x6b0] sm:$0xf]
    %v343 = vld [vmem:[#allocation5 + $0x6b4] sm:$0xff]
    %v344 = vld [vmem:[#allocation5 + $0x6bc] sm:$0xff]
    %v345 = vld [vmem:[#allocation5 + $0x6c4] sm:$0xff]
    %v346 = vld [vmem:[#allocation5 + $0x6cc] sm:$0xff]
    %v347 = vld [vmem:[#allocation5 + $0x6d4] sm:$0xff]
    %v348 = vld [vmem:[#allocation5 + $0x6dc] sm:$0xf]
    %v349 = vld [vmem:[#allocation5 + $0x6e0] sm:$0xff]
    %v350 = vld [vmem:[#allocation5 + $0x6e8] sm:$0xff]
    %v351 = vld [vmem:[#allocation5 + $0x6f0] sm:$0xff]
    %v352 = vld [vmem:[#allocation5 + $0x6f8] sm:$0xff]
    %v353 = vld [vmem:[#allocation5 + $0x700] sm:$0xff]
    %v354 = vld [vmem:[#allocation5 + $0x708] sm:$0xf]
    %v355 = vld [vmem:[#allocation5 + $0x70c] sm:$0xff]
    %v356 = vld [vmem:[#allocation5 + $0x714] sm:$0xff]
    %v357 = vld [vmem:[#allocation5 + $0x71c] sm:$0xff]
    %v358 = vld [vmem:[#allocation5 + $0x724] sm:$0xff]
    %v359 = vld [vmem:[#allocation5 + $0x72c] sm:$0xff]
    %v360 = vld [vmem:[#allocation5 + $0x734] sm:$0xf]
    %v361 = vld [vmem:[#allocation5 + $0x738] sm:$0xff]
    %v362 = vld [vmem:[#allocation5 + $0x740] sm:$0xff]
    %v363 = vld [vmem:[#allocation5 + $0x748] sm:$0xff]
    %v364 = vld [vmem:[#allocation5 + $0x750] sm:$0xff]
    %v365 = vld [vmem:[#allocation5 + $0x758] sm:$0xff]
    %v366 = vld [vmem:[#allocation5 + $0x760] sm:$0xf]
    %v367 = vld [vmem:[#allocation5 + $0x764] sm:$0xff]
    %v368 = vld [vmem:[#allocation5 + $0x76c] sm:$0xff]
    %v369 = vld [vmem:[#allocation5 + $0x774] sm:$0xff]
    %v370 = vld [vmem:[#allocation5 + $0x77c] sm:$0xff]
    %v371 = vld [vmem:[#allocation5 + $0x784] sm:$0xff]
    %v372 = vld [vmem:[#allocation5 + $0x78c] sm:$0xf]
    %v373 = vld [vmem:[#allocation5 + $0x790] sm:$0xff]
    %v374 = vld [vmem:[#allocation5 + $0x798] sm:$0xff]
    %v375 = vld [vmem:[#allocation5 + $0x7a0] sm:$0xff]
    %v376 = vld [vmem:[#allocation5 + $0x7a8] sm:$0xff]
    %v377 = vld [vmem:[#allocation5 + $0x7b0] sm:$0xff]
    %v378 = vld [vmem:[#allocation5 + $0x7b8] sm:$0xf]
    %v379 = vld [vmem:[#allocation5 + $0x7bc] sm:$0xff]
    %v380 = vld [vmem:[#allocation5 + $0x7c4] sm:$0xff]
    %v381 = vld [vmem:[#allocation5 + $0x7cc] sm:$0xff]
    %v382 = vld [vmem:[#allocation5 + $0x7d4] sm:$0xff]
    %v383 = vld [vmem:[#allocation5 + $0x7dc] sm:$0xff]
    %v384 = vld [vmem:[#allocation5 + $0x7e4] sm:$0xf]
    %v385 = vld [vmem:[#allocation5 + $0x7e8] sm:$0xff]
    %v386 = vld [vmem:[#allocation5 + $0x7f0] sm:$0xff]
    %v387 = vld [vmem:[#allocation5 + $0x7f8] sm:$0xff]
    %v388 = vld [vmem:[#allocation5 + $0x800] sm:$0xff]
    %v389 = vld [vmem:[#allocation5 + $0x808] sm:$0xff]
    %v390 = vld [vmem:[#allocation5 + $0x810] sm:$0xf]
    %v391 = vld [vmem:[#allocation5 + $0x814] sm:$0xff]
    %v392 = vld [vmem:[#allocation5 + $0x81c] sm:$0xff]
    %v393 = vld [vmem:[#allocation5 + $0x824] sm:$0xff]
    %v394 = vld [vmem:[#allocation5 + $0x82c] sm:$0xff]
    %v395 = vld [vmem:[#allocation5 + $0x834] sm:$0xff]
    %v396 = vld [vmem:[#allocation5 + $0x83c] sm:$0xf]
    %v397 = vld [vmem:[#allocation5 + $0x840] sm:$0xff]
    %v398 = vld [vmem:[#allocation5 + $0x848] sm:$0xff]
    %v399 = vld [vmem:[#allocation5 + $0x850] sm:$0xff]
    %v400 = vld [vmem:[#allocation5 + $0x858] sm:$0xff]
    %v401 = vld [vmem:[#allocation5 + $0x860] sm:$0xff]
    %v402 = vld [vmem:[#allocation5 + $0x868] sm:$0xf]
    %v403 = vld [vmem:[#allocation5 + $0x86c] sm:$0xff]
    %v404 = vld [vmem:[#allocation5 + $0x874] sm:$0xff]
    %v405 = vld [vmem:[#allocation5 + $0x87c] sm:$0xff]
    %v406 = vld [vmem:[#allocation5 + $0x884] sm:$0xff]
    %v407 = vld [vmem:[#allocation5 + $0x88c] sm:$0xff]
    %v408 = vld [vmem:[#allocation5 + $0x894] sm:$0xf]
    %v409 = vld [vmem:[#allocation5 + $0x898] sm:$0xff]
    %v410 = vld [vmem:[#allocation5 + $0x8a0] sm:$0xff]
    %v411 = vld [vmem:[#allocation5 + $0x8a8] sm:$0xff]
    %v412 = vld [vmem:[#allocation5 + $0x8b0] sm:$0xff]
    %v413 = vld [vmem:[#allocation5 + $0x8b8] sm:$0xff]
    %v414 = vld [vmem:[#allocation5 + $0x8c0] sm:$0xf]
    %v415 = vld [vmem:[#allocation5 + $0x8c4] sm:$0xff]
    %v416 = vld [vmem:[#allocation5 + $0x8cc] sm:$0xff]
    %v417 = vld [vmem:[#allocation5 + $0x8d4] sm:$0xff]
    %v418 = vld [vmem:[#allocation5 + $0x8dc] sm:$0xff]
    %v419 = vld [vmem:[#allocation5 + $0x8e4] sm:$0xff]
    %v420 = vld [vmem:[#allocation5 + $0x8ec] sm:$0xf]
    %v421 = vld [vmem:[#allocation5 + $0x8f0] sm:$0xff]
    %v422 = vld [vmem:[#allocation5 + $0x8f8] sm:$0xff]
    %v423 = vld [vmem:[#allocation5 + $0x900] sm:$0xff]
    %v424 = vld [vmem:[#allocation5 + $0x908] sm:$0xff]
    %v425 = vld [vmem:[#allocation5 + $0x910] sm:$0xff]
    %v426 = vld [vmem:[#allocation5 + $0x918] sm:$0xf]
    %v427 = vld [vmem:[#allocation5 + $0x91c] sm:$0xff]
    %v428 = vld [vmem:[#allocation5 + $0x924] sm:$0xff]
    %v429 = vld [vmem:[#allocation5 + $0x92c] sm:$0xff]
    %v430 = vld [vmem:[#allocation5 + $0x934] sm:$0xff]
    %v431 = vld [vmem:[#allocation5 + $0x93c] sm:$0xff]
    %v432 = vld [vmem:[#allocation5 + $0x944] sm:$0xf]
    %v433 = vld [vmem:[#allocation5 + $0x948] sm:$0xff]
    %v434 = vld [vmem:[#allocation5 + $0x950] sm:$0xff]
    %v435 = vld [vmem:[#allocation5 + $0x958] sm:$0xff]
    %v436 = vld [vmem:[#allocation5 + $0x960] sm:$0xff]
    %v437 = vld [vmem:[#allocation5 + $0x968] sm:$0xff]
    %v438 = vld [vmem:[#allocation5 + $0x970] sm:$0xf]
    %v439 = vld [vmem:[#allocation5 + $0x974] sm:$0xff]
    %v440 = vld [vmem:[#allocation5 + $0x97c] sm:$0xff]
    %v441 = vld [vmem:[#allocation5 + $0x984] sm:$0xff]
    %v442 = vld [vmem:[#allocation5 + $0x98c] sm:$0xff]
    %v443 = vld [vmem:[#allocation5 + $0x994] sm:$0xff]
    %v444 = vld [vmem:[#allocation5 + $0x99c] sm:$0xf]
    %v445 = vld [vmem:[#allocation5 + $0x9a0] sm:$0xff]
    %v446 = vld [vmem:[#allocation5 + $0x9a8] sm:$0xff]
    %v447 = vld [vmem:[#allocation5 + $0x9b0] sm:$0xff]
    %v448 = vld [vmem:[#allocation5 + $0x9b8] sm:$0xff]
    %v449 = vld [vmem:[#allocation5 + $0x9c0] sm:$0xff]
    %v450 = vld [vmem:[#allocation5 + $0x9c8] sm:$0xf]
    %v451 = vld [vmem:[#allocation5 + $0x9cc] sm:$0xff]
    %v452 = vld [vmem:[#allocation5 + $0x9d4] sm:$0xff]
    %v453 = vld [vmem:[#allocation5 + $0x9dc] sm:$0xff]
    %v454 = vld [vmem:[#allocation5 + $0x9e4] sm:$0xff]
    %v455 = vld [vmem:[#allocation5 + $0x9ec] sm:$0xff]
    %v456 = vld [vmem:[#allocation5 + $0x9f4] sm:$0xf]
    %v457 = vld [vmem:[#allocation5 + $0x9f8] sm:$0xff]
    %v458 = vld [vmem:[#allocation5 + $0xa00] sm:$0xff]
    %v459 = vld [vmem:[#allocation5 + $0xa08] sm:$0xff]
    %v460 = vld [vmem:[#allocation5 + $0xa10] sm:$0xff]
    %v461 = vld [vmem:[#allocation5 + $0xa18] sm:$0xff]
    %v462 = vld [vmem:[#allocation5 + $0xa20] sm:$0xf]
    %v463 = vld [vmem:[#allocation5 + $0xa24] sm:$0xff]
    %v464 = vld [vmem:[#allocation5 + $0xa2c] sm:$0xff]
    %v465 = vld [vmem:[#allocation5 + $0xa34] sm:$0xff]
    %v466 = vld [vmem:[#allocation5 + $0xa3c] sm:$0xff]
    %v467 = vld [vmem:[#allocation5 + $0xa44] sm:$0xff]
    %v468 = vld [vmem:[#allocation5 + $0xa4c] sm:$0xf]
    %v469 = vld [vmem:[#allocation5 + $0xa50] sm:$0xff]
    %v470 = vld [vmem:[#allocation5 + $0xa58] sm:$0xff]
    %v471 = vld [vmem:[#allocation5 + $0xa60] sm:$0xff]
    %v472 = vld [vmem:[#allocation5 + $0xa68] sm:$0xff]
    %v473 = vld [vmem:[#allocation5 + $0xa70] sm:$0xff]
    %v474 = vld [vmem:[#allocation5 + $0xa78] sm:$0xf]
    %v475 = vld [vmem:[#allocation5 + $0xa7c] sm:$0xff]
    %v476 = vld [vmem:[#allocation5 + $0xa84] sm:$0xff]
    %v477 = vld [vmem:[#allocation5 + $0xa8c] sm:$0xff]
    %v478 = vld [vmem:[#allocation5 + $0xa94] sm:$0xff]
    %v479 = vld [vmem:[#allocation5 + $0xa9c] sm:$0xff]
    %v480 = vld [vmem:[#allocation5 + $0xaa4] sm:$0xf]
    %v481 = vld [vmem:[#allocation5 + $0xaa8] sm:$0xff]
    %v482 = vld [vmem:[#allocation5 + $0xab0] sm:$0xff]
    %v483 = vld [vmem:[#allocation5 + $0xab8] sm:$0xff]
    %v484 = vld [vmem:[#allocation5 + $0xac0] sm:$0xff]
    %v485 = vld [vmem:[#allocation5 + $0xac8] sm:$0xff]
    %v486 = vld [vmem:[#allocation5 + $0xad0] sm:$0xf]
    %v487 = vld [vmem:[#allocation5 + $0xad4] sm:$0xff]
    %v488 = vld [vmem:[#allocation5 + $0xadc] sm:$0xff]
    %v489 = vld [vmem:[#allocation5 + $0xae4] sm:$0xff]
    %v490 = vld [vmem:[#allocation5 + $0xaec] sm:$0xff]
    %v491 = vld [vmem:[#allocation5 + $0xaf4] sm:$0xff]
    %v492 = vld [vmem:[#allocation5 + $0xafc] sm:$0xf]
    %v493 = vld [vmem:[#allocation5 + $0xb00] sm:$0xff]
    %v494 = vld [vmem:[#allocation5 + $0xb08] sm:$0xff]
    %v495 = vld [vmem:[#allocation5 + $0xb10] sm:$0xff]
    %v496 = vld [vmem:[#allocation5 + $0xb18] sm:$0xff]
    %v497 = vld [vmem:[#allocation5 + $0xb20] sm:$0xff]
    %v498 = vld [vmem:[#allocation5 + $0xb28] sm:$0xf]
    %v499 = vld [vmem:[#allocation5 + $0xb2c] sm:$0xff]
    %v500 = vld [vmem:[#allocation5 + $0xb34] sm:$0xff]
    %v501 = vld [vmem:[#allocation5 + $0xb3c] sm:$0xff]
    %v502 = vld [vmem:[#allocation5 + $0xb44] sm:$0xff]
    %v503 = vld [vmem:[#allocation5 + $0xb4c] sm:$0xff]
    %v504 = vld [vmem:[#allocation5 + $0xb54] sm:$0xf]
    %v505 = vld [vmem:[#allocation5 + $0xb58] sm:$0xff]
    %v506 = vld [vmem:[#allocation5 + $0xb60] sm:$0xff]
    %v507 = vld [vmem:[#allocation5 + $0xb68] sm:$0xff]
    %v508 = vld [vmem:[#allocation5 + $0xb70] sm:$0xff]
    %v509 = vld [vmem:[#allocation5 + $0xb78] sm:$0xff]
    %v510 = vld [vmem:[#allocation5 + $0xb80] sm:$0xf]
    %v511 = vld [vmem:[#allocation5 + $0xb84] sm:$0xff]
    %v512 = vld [vmem:[#allocation5 + $0xb8c] sm:$0xff]
    %v513 = vld [vmem:[#allocation5 + $0xb94] sm:$0xff]
    %v514 = vld [vmem:[#allocation5 + $0xb9c] sm:$0xff]
    %v515 = vld [vmem:[#allocation5 + $0xba4] sm:$0xff]
    %v516 = vld [vmem:[#allocation5 + $0xbac] sm:$0xf]
    %v517 = vld [vmem:[#allocation5 + $0xbb0] sm:$0xff]
    %v518 = vld [vmem:[#allocation5 + $0xbb8] sm:$0xff]
    %v519 = vld [vmem:[#allocation5 + $0xbc0] sm:$0xff]
    %v520 = vld [vmem:[#allocation5 + $0xbc8] sm:$0xff]
    %v521 = vld [vmem:[#allocation5 + $0xbd0] sm:$0xff]
    %v522 = vld [vmem:[#allocation5 + $0xbd8] sm:$0xf]
    %v523 = vld [vmem:[#allocation5 + $0xbdc] sm:$0xff]
    %v524 = vld [vmem:[#allocation5 + $0xbe4] sm:$0xff]
    %v525 = vld [vmem:[#allocation5 + $0xbec] sm:$0xff]
    %v526 = vld [vmem:[#allocation5 + $0xbf4] sm:$0xff]
    %v527 = vld [vmem:[#allocation5 + $0xbfc] sm:$0xff]
    %v528 = vld [vmem:[#allocation5 + $0xc04] sm:$0xf]
    %v529 = vld [vmem:[#allocation5 + $0xc08] sm:$0xff]
    %v530 = vld [vmem:[#allocation5 + $0xc10] sm:$0xff]
    %v531 = vld [vmem:[#allocation5 + $0xc18] sm:$0xff]
    %v532 = vld [vmem:[#allocation5 + $0xc20] sm:$0xff]
    %v533 = vld [vmem:[#allocation5 + $0xc28] sm:$0xff]
    %v534 = vld [vmem:[#allocation5 + $0xc30] sm:$0xf]
    %v535 = vld [vmem:[#allocation5 + $0xc34] sm:$0xff]
    %v536 = vld [vmem:[#allocation5 + $0xc3c] sm:$0xff]
    %v537 = vld [vmem:[#allocation5 + $0xc44] sm:$0xff]
    %v538 = vld [vmem:[#allocation5 + $0xc4c] sm:$0xff]
    %v539 = vld [vmem:[#allocation5 + $0xc54] sm:$0xff]
    %v540 = vld [vmem:[#allocation5 + $0xc5c] sm:$0xf]
    %v541 = vld [vmem:[#allocation5 + $0xc60] sm:$0xff]
    %v542 = vld [vmem:[#allocation5 + $0xc68] sm:$0xff]
    %v543 = vld [vmem:[#allocation5 + $0xc70] sm:$0xff]
    %v544 = vld [vmem:[#allocation5 + $0xc78] sm:$0xff]
    %v545 = vld [vmem:[#allocation5 + $0xc80] sm:$0xff]
    %v546 = vld [vmem:[#allocation5 + $0xc88] sm:$0xf]
    %v547 = vld [vmem:[#allocation5 + $0xc8c] sm:$0xff]
    %v548 = vld [vmem:[#allocation5 + $0xc94] sm:$0xff]
    %v549 = vld [vmem:[#allocation5 + $0xc9c] sm:$0xff]
    %v550 = vld [vmem:[#allocation5 + $0xca4] sm:$0xff]
    %v551 = vld [vmem:[#allocation5 + $0xcac] sm:$0xff]
    %v552 = vld [vmem:[#allocation5 + $0xcb4] sm:$0xf]
    %v553 = vld [vmem:[#allocation5 + $0xcb8] sm:$0xff]
    %v554 = vld [vmem:[#allocation5 + $0xcc0] sm:$0xff]
    %v555 = vld [vmem:[#allocation5 + $0xcc8] sm:$0xff]
    %v556 = vld [vmem:[#allocation5 + $0xcd0] sm:$0xff]
    %v557 = vld [vmem:[#allocation5 + $0xcd8] sm:$0xff]
    %v558 = vld [vmem:[#allocation5 + $0xce0] sm:$0xf]
    %v559 = vld [vmem:[#allocation5 + $0xce4] sm:$0xff]
    %v560 = vld [vmem:[#allocation5 + $0xcec] sm:$0xff]
    %v561 = vld [vmem:[#allocation5 + $0xcf4] sm:$0xff]
    %v562 = vld [vmem:[#allocation5 + $0xcfc] sm:$0xff]
    %v563 = vld [vmem:[#allocation5 + $0xd04] sm:$0xff]
    %v564 = vld [vmem:[#allocation5 + $0xd0c] sm:$0xf]
    %v565 = vld [vmem:[#allocation5 + $0xd10] sm:$0xff]
    %v566 = vld [vmem:[#allocation5 + $0xd18] sm:$0xff]
    %v567 = vld [vmem:[#allocation5 + $0xd20] sm:$0xff]
    %v568 = vld [vmem:[#allocation5 + $0xd28] sm:$0xff]
    %v569 = vld [vmem:[#allocation5 + $0xd30] sm:$0xff]
    %v570 = vld [vmem:[#allocation5 + $0xd38] sm:$0xf]
    %v571 = vld [vmem:[#allocation5 + $0xd3c] sm:$0xff]
    %v572 = vld [vmem:[#allocation5 + $0xd44] sm:$0xff]
    %v573 = vld [vmem:[#allocation5 + $0xd4c] sm:$0xff]
    %v574 = vld [vmem:[#allocation5 + $0xd54] sm:$0xff]
    %v575 = vld [vmem:[#allocation5 + $0xd5c] sm:$0xff]
    %v576 = vld [vmem:[#allocation5 + $0xd64] sm:$0xf]
    %v577 = vld [vmem:[#allocation5 + $0xd68] sm:$0xff]
    %v578 = vld [vmem:[#allocation5 + $0xd70] sm:$0xff]
    %v579 = vld [vmem:[#allocation5 + $0xd78] sm:$0xff]
    %v580 = vld [vmem:[#allocation5 + $0xd80] sm:$0xff]
    %v581 = vld [vmem:[#allocation5 + $0xd88] sm:$0xff]
    %v582 = vld [vmem:[#allocation5 + $0xd90] sm:$0xf]
    %v583 = vld [vmem:[#allocation5 + $0xd94] sm:$0xff]
    %v584 = vld [vmem:[#allocation5 + $0xd9c] sm:$0xff]
    %v585 = vld [vmem:[#allocation5 + $0xda4] sm:$0xff]
    %v586 = vld [vmem:[#allocation5 + $0xdac] sm:$0xff]
    %v587 = vld [vmem:[#allocation5 + $0xdb4] sm:$0xff]
    %v588 = vld [vmem:[#allocation5 + $0xdbc] sm:$0xf]
    %v589 = vld [vmem:[#allocation5 + $0xdc0] sm:$0xff]
    %v590 = vld [vmem:[#allocation5 + $0xdc8] sm:$0xff]
    %v591 = vld [vmem:[#allocation5 + $0xdd0] sm:$0xff]
    %v592 = vld [vmem:[#allocation5 + $0xdd8] sm:$0xff]
    %v593 = vld [vmem:[#allocation5 + $0xde0] sm:$0xff]
    %v594 = vld [vmem:[#allocation5 + $0xde8] sm:$0xf]
    %v595 = vld [vmem:[#allocation5 + $0xdec] sm:$0xff]
    %v596 = vld [vmem:[#allocation5 + $0xdf4] sm:$0xff]
    %v597 = vld [vmem:[#allocation5 + $0xdfc] sm:$0xff]
    %v598 = vld [vmem:[#allocation5 + $0xe04] sm:$0xff]
    %v599 = vld [vmem:[#allocation5 + $0xe0c] sm:$0xff]
    %v600 = vld [vmem:[#allocation5 + $0xe14] sm:$0xf]
    %v601 = vld [vmem:[#allocation5 + $0xe18] sm:$0xff]
    %v602 = vld [vmem:[#allocation5 + $0xe20] sm:$0xff]
    %v603 = vld [vmem:[#allocation5 + $0xe28] sm:$0xff]
    %v604 = vld [vmem:[#allocation5 + $0xe30] sm:$0xff]
    %v605 = vld [vmem:[#allocation5 + $0xe38] sm:$0xff]
    %v606 = vld [vmem:[#allocation5 + $0xe40] sm:$0xf]
    %v607 = vld [vmem:[#allocation5 + $0xe44] sm:$0xff]
    %v608 = vld [vmem:[#allocation5 + $0xe4c] sm:$0xff]
    %v609 = vld [vmem:[#allocation5 + $0xe54] sm:$0xff]
    %v610 = vld [vmem:[#allocation5 + $0xe5c] sm:$0xff]
    %v611 = vld [vmem:[#allocation5 + $0xe64] sm:$0xff]
    %v612 = vld [vmem:[#allocation5 + $0xe6c] sm:$0xf]
    %v613 = vld [vmem:[#allocation5 + $0xe70] sm:$0xff]
    %v614 = vld [vmem:[#allocation5 + $0xe78] sm:$0xff]
    %v615 = vld [vmem:[#allocation5 + $0xe80] sm:$0xff]
    %v616 = vld [vmem:[#allocation5 + $0xe88] sm:$0xff]
    %v617 = vld [vmem:[#allocation5 + $0xe90] sm:$0xff]
    %v618 = vld [vmem:[#allocation5 + $0xe98] sm:$0xf]
    %v619 = vld [vmem:[#allocation5 + $0xe9c] sm:$0xff]
    %v620 = vld [vmem:[#allocation5 + $0xea4] sm:$0xff]
    %v621 = vld [vmem:[#allocation5 + $0xeac] sm:$0xff]
    %v622 = vld [vmem:[#allocation5 + $0xeb4] sm:$0xff]
    %v623 = vld [vmem:[#allocation5 + $0xebc] sm:$0xff]
    %v624 = vld [vmem:[#allocation5 + $0xec4] sm:$0xf]
    %v625 = vld [vmem:[#allocation5 + $0xec8] sm:$0xff]
    %v626 = vld [vmem:[#allocation5 + $0xed0] sm:$0xff]
    %v627 = vld [vmem:[#allocation5 + $0xed8] sm:$0xff]
    %v628 = vld [vmem:[#allocation5 + $0xee0] sm:$0xff]
    %v629 = vld [vmem:[#allocation5 + $0xee8] sm:$0xff]
    %v630 = vld [vmem:[#allocation5 + $0xef0] sm:$0xf]
    %v631 = vld [vmem:[#allocation5 + $0xef4] sm:$0xff]
    %v632 = vld [vmem:[#allocation5 + $0xefc] sm:$0xff]
    %v633 = vld [vmem:[#allocation5 + $0xf04] sm:$0xff]
    %v634 = vld [vmem:[#allocation5 + $0xf0c] sm:$0xff]
    %v635 = vld [vmem:[#allocation5 + $0xf14] sm:$0xff]
    %v636 = vld [vmem:[#allocation5 + $0xf1c] sm:$0xf]
    %v637 = vld [vmem:[#allocation5 + $0xf20] sm:$0xff]
    %v638 = vld [vmem:[#allocation5 + $0xf28] sm:$0xff]
    %v639 = vld [vmem:[#allocation5 + $0xf30] sm:$0xff]
    %v640 = vld [vmem:[#allocation5 + $0xf38] sm:$0xff]
    %v641 = vld [vmem:[#allocation5 + $0xf40] sm:$0xff]
    %v642 = vld [vmem:[#allocation5 + $0xf48] sm:$0xf]
    %v643 = vld [vmem:[#allocation5 + $0xf4c] sm:$0xff]
    %v644 = vld [vmem:[#allocation5 + $0xf54] sm:$0xff]
    %v645 = vld [vmem:[#allocation5 + $0xf5c] sm:$0xff]
    %v646 = vld [vmem:[#allocation5 + $0xf64] sm:$0xff]
    %v647 = vld [vmem:[#allocation5 + $0xf6c] sm:$0xff]
    %v648 = vld [vmem:[#allocation5 + $0xf74] sm:$0xf]
    %v649 = vld [vmem:[#allocation5 + $0xf78] sm:$0xff]
    %v650 = vld [vmem:[#allocation5 + $0xf80] sm:$0xff]
    %v651 = vld [vmem:[#allocation5 + $0xf88] sm:$0xff]
    %v652 = vld [vmem:[#allocation5 + $0xf90] sm:$0xff]
    %v653 = vld [vmem:[#allocation5 + $0xf98] sm:$0xff]
    %v654 = vld [vmem:[#allocation5 + $0xfa0] sm:$0xf]
    %v655 = vld [vmem:[#allocation5 + $0xfa4] sm:$0xff]
    %v656 = vld [vmem:[#allocation5 + $0xfac] sm:$0xff]
    %v657 = vld [vmem:[#allocation5 + $0xfb4] sm:$0xff]
    %v658 = vld [vmem:[#allocation5 + $0xfbc] sm:$0xff]
    %v659 = vld [vmem:[#allocation5 + $0xfc4] sm:$0xff]
    %v660 = vld [vmem:[#allocation5 + $0xfcc] sm:$0xf]
    %v661 = vld [vmem:[#allocation5 + $0xfd0] sm:$0xff]
    %v662 = vld [vmem:[#allocation5 + $0xfd8] sm:$0xff]
    %v663 = vld [vmem:[#allocation5 + $0xfe0] sm:$0xff]
    %v664 = vld [vmem:[#allocation5 + $0xfe8] sm:$0xff]
    %v665 = vld [vmem:[#allocation5 + $0xff0] sm:$0xff]
    %v666 = vld [vmem:[#allocation5 + $0xff8] sm:$0xf]
    %v667 = vld [vmem:[#allocation5 + $0xffc] sm:$0xff]
    %v668 = vld [vmem:[#allocation5 + $0x1004] sm:$0xff]
    %v669 = vld [vmem:[#allocation5 + $0x100c] sm:$0xff]
    %v670 = vld [vmem:[#allocation5 + $0x1014] sm:$0xff]
    %v671 = vld [vmem:[#allocation5 + $0x101c] sm:$0xff]
    %v672 = vld [vmem:[#allocation5 + $0x1024] sm:$0xf]
    %v673 = vld [vmem:[#allocation5 + $0x1028] sm:$0xff]
    %v674 = vld [vmem:[#allocation5 + $0x1030] sm:$0xff]
    %v675 = vld [vmem:[#allocation5 + $0x1038] sm:$0xff]
    %v676 = vld [vmem:[#allocation5 + $0x1040] sm:$0xff]
    %v677 = vld [vmem:[#allocation5 + $0x1048] sm:$0xff]
    %v678 = vld [vmem:[#allocation5 + $0x1050] sm:$0xf]
    %v679 = vld [vmem:[#allocation5 + $0x1054] sm:$0xff]
    %v680 = vld [vmem:[#allocation5 + $0x105c] sm:$0xff]
    %v681 = vld [vmem:[#allocation5 + $0x1064] sm:$0xff]
    %v682 = vld [vmem:[#allocation5 + $0x106c] sm:$0xff]
    %v683 = vld [vmem:[#allocation5 + $0x1074] sm:$0xff]
    %v684 = vld [vmem:[#allocation5 + $0x107c] sm:$0xf]
    %v685 = vld [vmem:[#allocation5 + $0x1080] sm:$0xff]
    %v686 = vld [vmem:[#allocation5 + $0x1088] sm:$0xff]
    %v687 = vld [vmem:[#allocation5 + $0x1090] sm:$0xff]
    %v688 = vld [vmem:[#allocation5 + $0x1098] sm:$0xff]
    %v689 = vld [vmem:[#allocation5 + $0x10a0] sm:$0xff]
    %v690 = vld [vmem:[#allocation5 + $0x10a8] sm:$0xf]
    %v691 = vld [vmem:[#allocation5 + $0x10ac] sm:$0xff]
    %v692 = vld [vmem:[#allocation5 + $0x10b4] sm:$0xff]
    %v693 = vld [vmem:[#allocation5 + $0x10bc] sm:$0xff]
    %v694 = vld [vmem:[#allocation5 + $0x10c4] sm:$0xff]
    %v695 = vld [vmem:[#allocation5 + $0x10cc] sm:$0xff]
    %v696 = vld [vmem:[#allocation5 + $0x10d4] sm:$0xf]
    %v697 = vld [vmem:[#allocation5 + $0x10d8] sm:$0xff]
    %v698 = vld [vmem:[#allocation5 + $0x10e0] sm:$0xff]
    %v699 = vld [vmem:[#allocation5 + $0x10e8] sm:$0xff]
    %v700 = vld [vmem:[#allocation5 + $0x10f0] sm:$0xff]
    %v701 = vld [vmem:[#allocation5 + $0x10f8] sm:$0xff]
    %v702 = vld [vmem:[#allocation5 + $0x1100] sm:$0xf]
    %v703 = vld [vmem:[#allocation5 + $0x1104] sm:$0xff]
    %v704 = vld [vmem:[#allocation5 + $0x110c] sm:$0xff]
    %v705 = vld [vmem:[#allocation5 + $0x1114] sm:$0xff]
    %v706 = vld [vmem:[#allocation5 + $0x111c] sm:$0xff]
    %v707 = vld [vmem:[#allocation5 + $0x1124] sm:$0xff]
    %v708 = vld [vmem:[#allocation5 + $0x112c] sm:$0xf]
    %v709 = vld [vmem:[#allocation5 + $0x1130] sm:$0xff]
    %v710 = vld [vmem:[#allocation5 + $0x1138] sm:$0xff]
    %v711 = vld [vmem:[#allocation5 + $0x1140] sm:$0xff]
    %v712 = vld [vmem:[#allocation5 + $0x1148] sm:$0xff]
    %v713 = vld [vmem:[#allocation5 + $0x1150] sm:$0xff]
    %v714 = vld [vmem:[#allocation5 + $0x1158] sm:$0xf]
    %v715 = vld [vmem:[#allocation5 + $0x115c] sm:$0xff]
    %v716 = vld [vmem:[#allocation5 + $0x1164] sm:$0xff]
    %v717 = vld [vmem:[#allocation5 + $0x116c] sm:$0xff]
    %v718 = vld [vmem:[#allocation5 + $0x1174] sm:$0xff]
    %v719 = vld [vmem:[#allocation5 + $0x117c] sm:$0xff]
    %v720 = vld [vmem:[#allocation5 + $0x1184] sm:$0xf]
    %v721 = vld [vmem:[#allocation5 + $0x1188] sm:$0xff]
    %v722 = vld [vmem:[#allocation5 + $0x1190] sm:$0xff]
    %v723 = vld [vmem:[#allocation5 + $0x1198] sm:$0xff]
    %v724 = vld [vmem:[#allocation5 + $0x11a0] sm:$0xff]
    %v725 = vld [vmem:[#allocation5 + $0x11a8] sm:$0xff]
    %v726 = vld [vmem:[#allocation5 + $0x11b0] sm:$0xf]
    %v727 = vld [vmem:[#allocation5 + $0x11b4] sm:$0xff]
    %v728 = vld [vmem:[#allocation5 + $0x11bc] sm:$0xff]
    %v729 = vld [vmem:[#allocation5 + $0x11c4] sm:$0xff]
    %v730 = vld [vmem:[#allocation5 + $0x11cc] sm:$0xff]
    %v731 = vld [vmem:[#allocation5 + $0x11d4] sm:$0xff]
    %v732 = vld [vmem:[#allocation5 + $0x11dc] sm:$0xf]
    %v733 = vld [vmem:[#allocation5 + $0x11e0] sm:$0xff]
    %v734 = vld [vmem:[#allocation5 + $0x11e8] sm:$0xff]
    %v735 = vld [vmem:[#allocation5 + $0x11f0] sm:$0xff]
    %v736 = vld [vmem:[#allocation5 + $0x11f8] sm:$0xff]
    %v737 = vld [vmem:[#allocation5 + $0x1200] sm:$0xff]
    %v738 = vld [vmem:[#allocation5 + $0x1208] sm:$0xf]
    %v739 = vld [vmem:[#allocation5 + $0x120c] sm:$0xff]
    %v740 = vld [vmem:[#allocation5 + $0x1214] sm:$0xff]
    %v741 = vld [vmem:[#allocation5 + $0x121c] sm:$0xff]
    %v742 = vld [vmem:[#allocation5 + $0x1224] sm:$0xff]
    %v743 = vld [vmem:[#allocation5 + $0x122c] sm:$0xff]
    %v744 = vld [vmem:[#allocation5 + $0x1234] sm:$0xf]
    %v745 = vld [vmem:[#allocation5 + $0x1238] sm:$0xff]
    %v746 = vld [vmem:[#allocation5 + $0x1240] sm:$0xff]
    %v747 = vld [vmem:[#allocation5 + $0x1248] sm:$0xff]
    %v748 = vld [vmem:[#allocation5 + $0x1250] sm:$0xff]
    %v749 = vld [vmem:[#allocation5 + $0x1258] sm:$0xff]
    %v750 = vld [vmem:[#allocation5 + $0x1260] sm:$0xf]
    %v751 = vld [vmem:[#allocation5 + $0x1264] sm:$0xff]
    %v752 = vld [vmem:[#allocation5 + $0x126c] sm:$0xff]
    %v753 = vld [vmem:[#allocation5 + $0x1274] sm:$0xff]
    %v754 = vld [vmem:[#allocation5 + $0x127c] sm:$0xff]
    %v755 = vld [vmem:[#allocation5 + $0x1284] sm:$0xff]
    %v756 = vld [vmem:[#allocation5 + $0x128c] sm:$0xf]
    %v757 = vld [vmem:[#allocation5 + $0x1290] sm:$0xff]
    %v758 = vld [vmem:[#allocation5 + $0x1298] sm:$0xff]
    %v759 = vld [vmem:[#allocation5 + $0x12a0] sm:$0xff]
    %v760 = vld [vmem:[#allocation5 + $0x12a8] sm:$0xff]
    %v761 = vld [vmem:[#allocation5 + $0x12b0] sm:$0xff]
    %v762 = vld [vmem:[#allocation5 + $0x12b8] sm:$0xf]
    %v763 = vld [vmem:[#allocation5 + $0x12bc] sm:$0xff]
    %v764 = vld [vmem:[#allocation5 + $0x12c4] sm:$0xff]
    %v765 = vld [vmem:[#allocation5 + $0x12cc] sm:$0xff]
    %v766 = vld [vmem:[#allocation5 + $0x12d4] sm:$0xff]
    %v767 = vld [vmem:[#allocation5 + $0x12dc] sm:$0xff]
    %v768 = vld [vmem:[#allocation5 + $0x12e4] sm:$0xf]
    %v769 = vld [vmem:[#allocation5 + $0x12e8] sm:$0xff]
    %v770 = vld [vmem:[#allocation5 + $0x12f0] sm:$0xff]
    %v771 = vld [vmem:[#allocation5 + $0x12f8] sm:$0xff]
    %v772 = vld [vmem:[#allocation5 + $0x1300] sm:$0xff]
    %v773 = vld [vmem:[#allocation5 + $0x1308] sm:$0xff]
    %v774 = vld [vmem:[#allocation5 + $0x1310] sm:$0xf]
    %v775 = vld [vmem:[#allocation5 + $0x1314] sm:$0xff]
    %v776 = vld [vmem:[#allocation5 + $0x131c] sm:$0xff]
    %v777 = vld [vmem:[#allocation5 + $0x1324] sm:$0xff]
    %v778 = vld [vmem:[#allocation5 + $0x132c] sm:$0xff]
    %v779 = vld [vmem:[#allocation5 + $0x1334] sm:$0xff]
    %v780 = vld [vmem:[#allocation5 + $0x133c] sm:$0xf]
    %v781 = vld [vmem:[#allocation5 + $0x1340] sm:$0xff]
    %v782 = vld [vmem:[#allocation5 + $0x1348] sm:$0xff]
    %v783 = vld [vmem:[#allocation5 + $0x1350] sm:$0xff]
    %v784 = vld [vmem:[#allocation5 + $0x1358] sm:$0xff]
    %v785 = vld [vmem:[#allocation5 + $0x1360] sm:$0xff]
    %v786 = vld [vmem:[#allocation5 + $0x1368] sm:$0xf]
    %v787 = vld [vmem:[#allocation5 + $0x136c] sm:$0xff]
    %v788 = vld [vmem:[#allocation5 + $0x1374] sm:$0xff]
    %v789 = vld [vmem:[#allocation5 + $0x137c] sm:$0xff]
    %v790 = vld [vmem:[#allocation5 + $0x1384] sm:$0xff]
    %v791 = vld [vmem:[#allocation5 + $0x138c] sm:$0xff]
    %v792 = vld [vmem:[#allocation5 + $0x1394] sm:$0xf]
    %v793 = vld [vmem:[#allocation5 + $0x1398] sm:$0xff]
    %v794 = vld [vmem:[#allocation5 + $0x13a0] sm:$0xff]
    %v795 = vld [vmem:[#allocation5 + $0x13a8] sm:$0xff]
    %v796 = vld [vmem:[#allocation5 + $0x13b0] sm:$0xff]
    %v797 = vld [vmem:[#allocation5 + $0x13b8] sm:$0xff]
    %v798 = vld [vmem:[#allocation5 + $0x13c0] sm:$0xf]
    %v799 = vld [vmem:[#allocation5 + $0x13c4] sm:$0xff]
    %v800 = vld [vmem:[#allocation5 + $0x13cc] sm:$0xff]
    %v801 = vld [vmem:[#allocation5 + $0x13d4] sm:$0xff]
    %v802 = vld [vmem:[#allocation5 + $0x13dc] sm:$0xff]
    %v803 = vld [vmem:[#allocation5 + $0x13e4] sm:$0xff]
    %v804 = vld [vmem:[#allocation5 + $0x13ec] sm:$0xf]
    %v805 = vld [vmem:[#allocation5 + $0x13f0] sm:$0xff]
    %v806 = vld [vmem:[#allocation5 + $0x13f8] sm:$0xff]
    %v807 = vld [vmem:[#allocation5 + $0x1400] sm:$0xff]
    %v808 = vld [vmem:[#allocation5 + $0x1408] sm:$0xff]
    %v809 = vld [vmem:[#allocation5 + $0x1410] sm:$0xff]
    %v810 = vld [vmem:[#allocation5 + $0x1418] sm:$0xf]
    %v811 = vld [vmem:[#allocation5 + $0x141c] sm:$0xff]
    %v812 = vld [vmem:[#allocation5 + $0x1424] sm:$0xff]
    %v813 = vld [vmem:[#allocation5 + $0x142c] sm:$0xff]
    %v814 = vld [vmem:[#allocation5 + $0x1434] sm:$0xff]
    %v815 = vld [vmem:[#allocation5 + $0x143c] sm:$0xff]
    %v816 = vld [vmem:[#allocation5 + $0x1444] sm:$0xf]
    %v817 = vld [vmem:[#allocation5 + $0x1448] sm:$0xff]
    %v818 = vld [vmem:[#allocation5 + $0x1450] sm:$0xff]
    %v819 = vld [vmem:[#allocation5 + $0x1458] sm:$0xff]
    %v820 = vld [vmem:[#allocation5 + $0x1460] sm:$0xff]
    %v821 = vld [vmem:[#allocation5 + $0x1468] sm:$0xff]
    %v822 = vld [vmem:[#allocation5 + $0x1470] sm:$0xf]
    %v823 = vld [vmem:[#allocation5 + $0x1474] sm:$0xff]
    %v824 = vld [vmem:[#allocation5 + $0x147c] sm:$0xff]
    %v825 = vld [vmem:[#allocation5 + $0x1484] sm:$0xff]
    %v826 = vld [vmem:[#allocation5 + $0x148c] sm:$0xff]
    %v827 = vld [vmem:[#allocation5 + $0x1494] sm:$0xff]
    %v828 = vld [vmem:[#allocation5 + $0x149c] sm:$0xf]
    %v829 = vld [vmem:[#allocation5 + $0x14a0] sm:$0xff]
    %v830 = vld [vmem:[#allocation5 + $0x14a8] sm:$0xff]
    %v831 = vld [vmem:[#allocation5 + $0x14b0] sm:$0xff]
    %v832 = vld [vmem:[#allocation5 + $0x14b8] sm:$0xff]
    %v833 = vld [vmem:[#allocation5 + $0x14c0] sm:$0xff]
    %v834 = vld [vmem:[#allocation5 + $0x14c8] sm:$0xf]
    %v835 = vld [vmem:[#allocation5 + $0x14cc] sm:$0xff]
    %v836 = vld [vmem:[#allocation5 + $0x14d4] sm:$0xff]
    %v837 = vld [vmem:[#allocation5 + $0x14dc] sm:$0xff]
    %v838 = vld [vmem:[#allocation5 + $0x14e4] sm:$0xff]
    %v839 = vld [vmem:[#allocation5 + $0x14ec] sm:$0xff]
    %v840 = vld [vmem:[#allocation5 + $0x14f4] sm:$0xf]
    %v841 = vld [vmem:[#allocation5 + $0x14f8] sm:$0xff]
    %v842 = vld [vmem:[#allocation5 + $0x1500] sm:$0xff]
    %v843 = vld [vmem:[#allocation5 + $0x1508] sm:$0xff]
    %v844 = vld [vmem:[#allocation5 + $0x1510] sm:$0xff]
    %v845 = vld [vmem:[#allocation5 + $0x1518] sm:$0xff]
    %v846 = vld [vmem:[#allocation5 + $0x1520] sm:$0xf]
    %v847 = vld [vmem:[#allocation5 + $0x1524] sm:$0xff]
    %v848 = vld [vmem:[#allocation5 + $0x152c] sm:$0xff]
    %v849 = vld [vmem:[#allocation5 + $0x1534] sm:$0xff]
    %v850 = vld [vmem:[#allocation5 + $0x153c] sm:$0xff]
    %v851 = vld [vmem:[#allocation5 + $0x1544] sm:$0xff]
    %v852 = vld [vmem:[#allocation5 + $0x154c] sm:$0xf]
    %v853 = vld [vmem:[#allocation5 + $0x1550] sm:$0xff]
    %v854 = vld [vmem:[#allocation5 + $0x1558] sm:$0xff]
    %v855 = vld [vmem:[#allocation5 + $0x1560] sm:$0xff]
    %v856 = vld [vmem:[#allocation5 + $0x1568] sm:$0xff]
    %v857 = vld [vmem:[#allocation5 + $0x1570] sm:$0xff]
    %v858 = vld [vmem:[#allocation5 + $0x1578] sm:$0xf]
    %v859 = vld [vmem:[#allocation5 + $0x157c] sm:$0xff]
    %v860 = vld [vmem:[#allocation5 + $0x1584] sm:$0xff]
    %v861 = vld [vmem:[#allocation5 + $0x158c] sm:$0xff]
    %v862 = vld [vmem:[#allocation5 + $0x1594] sm:$0xff]
    %v863 = vld [vmem:[#allocation5 + $0x159c] sm:$0xff]
    %v864 = vld [vmem:[#allocation5 + $0x15a4] sm:$0xf]
    %v865 = vld [vmem:[#allocation5 + $0x15a8] sm:$0xff]
    %v866 = vld [vmem:[#allocation5 + $0x15b0] sm:$0xff]
    %v867 = vld [vmem:[#allocation5 + $0x15b8] sm:$0xff]
    %v868 = vld [vmem:[#allocation5 + $0x15c0] sm:$0xff]
    %v869 = vld [vmem:[#allocation5 + $0x15c8] sm:$0xff]
    %v870 = vld [vmem:[#allocation5 + $0x15d0] sm:$0xf]
    %v871 = vld [vmem:[#allocation5 + $0x15d4] sm:$0xff]
    %v872 = vld [vmem:[#allocation5 + $0x15dc] sm:$0xff]
    %v873 = vld [vmem:[#allocation5 + $0x15e4] sm:$0xff]
    %v874 = vld [vmem:[#allocation5 + $0x15ec] sm:$0xff]
    %v875 = vld [vmem:[#allocation5 + $0x15f4] sm:$0xff]
    %v876 = vld [vmem:[#allocation5 + $0x15fc] sm:$0xf]
    %v877 = vld [vmem:[#allocation5 + $0x1600] sm:$0xff]
    %v878 = vld [vmem:[#allocation5 + $0x1608] sm:$0xff]
    %v879 = vld [vmem:[#allocation5 + $0x1610] sm:$0xff]
    %v880 = vld [vmem:[#allocation5 + $0x1618] sm:$0xff]
    %v881 = vld [vmem:[#allocation5 + $0x1620] sm:$0xff]
    %v882 = vld [vmem:[#allocation5 + $0x1628] sm:$0xf]
    %v883 = vld [vmem:[#allocation5 + $0x162c] sm:$0xff]
    %v884 = vld [vmem:[#allocation5 + $0x1634] sm:$0xff]
    %v885 = vld [vmem:[#allocation5 + $0x163c] sm:$0xff]
    %v886 = vld [vmem:[#allocation5 + $0x1644] sm:$0xff]
    %v887 = vld [vmem:[#allocation5 + $0x164c] sm:$0xff]
    %v888 = vld [vmem:[#allocation5 + $0x1654] sm:$0xf]
    %v889 = vld [vmem:[#allocation5 + $0x1658] sm:$0xff]
    %v890 = vld [vmem:[#allocation5 + $0x1660] sm:$0xff]
    %v891 = vld [vmem:[#allocation5 + $0x1668] sm:$0xff]
    %v892 = vld [vmem:[#allocation5 + $0x1670] sm:$0xff]
    %v893 = vld [vmem:[#allocation5 + $0x1678] sm:$0xff]
    %v894 = vld [vmem:[#allocation5 + $0x1680] sm:$0xf]
    %v895 = vld [vmem:[#allocation5 + $0x1684] sm:$0xff]
    %v896 = vld [vmem:[#allocation5 + $0x168c] sm:$0xff]
    %v897 = vld [vmem:[#allocation5 + $0x1694] sm:$0xff]
    %v898 = vld [vmem:[#allocation5 + $0x169c] sm:$0xff]
    %v899 = vld [vmem:[#allocation5 + $0x16a4] sm:$0xff]
    %v900 = vld [vmem:[#allocation5 + $0x16ac] sm:$0xf]
    %v901 = vld [vmem:[#allocation5 + $0x16b0] sm:$0xff]
    %v902 = vld [vmem:[#allocation5 + $0x16b8] sm:$0xff]
    %v903 = vld [vmem:[#allocation5 + $0x16c0] sm:$0xff]
    %v904 = vld [vmem:[#allocation5 + $0x16c8] sm:$0xff]
    %v905 = vld [vmem:[#allocation5 + $0x16d0] sm:$0xff]
    %v906 = vld [vmem:[#allocation5 + $0x16d8] sm:$0xf]
    %v907 = vld [vmem:[#allocation5 + $0x16dc] sm:$0xff]
    %v908 = vld [vmem:[#allocation5 + $0x16e4] sm:$0xff]
    %v909 = vld [vmem:[#allocation5 + $0x16ec] sm:$0xff]
    %v910 = vld [vmem:[#allocation5 + $0x16f4] sm:$0xff]
    %v911 = vld [vmem:[#allocation5 + $0x16fc] sm:$0xff]
    %v912 = vld [vmem:[#allocation5 + $0x1704] sm:$0xf]
    %v913 = vld [vmem:[#allocation5 + $0x1708] sm:$0xff]
    %v914 = vld [vmem:[#allocation5 + $0x1710] sm:$0xff]
    %v915 = vld [vmem:[#allocation5 + $0x1718] sm:$0xff]
    %v916 = vld [vmem:[#allocation5 + $0x1720] sm:$0xff]
    %v917 = vld [vmem:[#allocation5 + $0x1728] sm:$0xff]
    %v918 = vld [vmem:[#allocation5 + $0x1730] sm:$0xf]
    %v919 = vld [vmem:[#allocation5 + $0x1734] sm:$0xff]
    %v920 = vld [vmem:[#allocation5 + $0x173c] sm:$0xff]
    %v921 = vld [vmem:[#allocation5 + $0x1744] sm:$0xff]
    %v922 = vld [vmem:[#allocation5 + $0x174c] sm:$0xff]
    %v923 = vld [vmem:[#allocation5 + $0x1754] sm:$0xff]
    %v924 = vld [vmem:[#allocation5 + $0x175c] sm:$0xf]
    %v925 = vld [vmem:[#allocation5 + $0x1760] sm:$0xff]
    %v926 = vld [vmem:[#allocation5 + $0x1768] sm:$0xff]
    %v927 = vld [vmem:[#allocation5 + $0x1770] sm:$0xff]
    %v928 = vld [vmem:[#allocation5 + $0x1778] sm:$0xff]
    %v929 = vld [vmem:[#allocation5 + $0x1780] sm:$0xff]
    %v930 = vld [vmem:[#allocation5 + $0x1788] sm:$0xf]
    %v931 = vld [vmem:[#allocation5 + $0x178c] sm:$0xff]
    %v932 = vld [vmem:[#allocation5 + $0x1794] sm:$0xff]
    %v933 = vld [vmem:[#allocation5 + $0x179c] sm:$0xff]
    %v934 = vld [vmem:[#allocation5 + $0x17a4] sm:$0xff]
    %v935 = vld [vmem:[#allocation5 + $0x17ac] sm:$0xff]
    %v936 = vld [vmem:[#allocation5 + $0x17b4] sm:$0xf]
    %v937 = vld [vmem:[#allocation5 + $0x17b8] sm:$0xff]
    %v938 = vld [vmem:[#allocation5 + $0x17c0] sm:$0xff]
    %v939 = vld [vmem:[#allocation5 + $0x17c8] sm:$0xff]
    %v940 = vld [vmem:[#allocation5 + $0x17d0] sm:$0xff]
    %v941 = vld [vmem:[#allocation5 + $0x17d8] sm:$0xff]
    %v942 = vld [vmem:[#allocation5 + $0x17e0] sm:$0xf]
    %v943 = vld [vmem:[#allocation5 + $0x17e4] sm:$0xff]
    %v944 = vld [vmem:[#allocation5 + $0x17ec] sm:$0xff]
    %v945 = vld [vmem:[#allocation5 + $0x17f4] sm:$0xff]
    %v946 = vld [vmem:[#allocation5 + $0x17fc] sm:$0xff]
    %v947 = vld [vmem:[#allocation5 + $0x1804] sm:$0xff]
    %v948 = vld [vmem:[#allocation5 + $0x180c] sm:$0xf]
    %v949 = vld [vmem:[#allocation5 + $0x1810] sm:$0xff]
    %v950 = vld [vmem:[#allocation5 + $0x1818] sm:$0xff]
    %v951 = vld [vmem:[#allocation5 + $0x1820] sm:$0xff]
    %v952 = vld [vmem:[#allocation5 + $0x1828] sm:$0xff]
    %v953 = vld [vmem:[#allocation5 + $0x1830] sm:$0xff]
    %v954 = vld [vmem:[#allocation5 + $0x1838] sm:$0xf]
    %v955 = vld [vmem:[#allocation5 + $0x183c] sm:$0xff]
    %v956 = vld [vmem:[#allocation5 + $0x1844] sm:$0xff]
    %v957 = vld [vmem:[#allocation5 + $0x184c] sm:$0xff]
    %v958 = vld [vmem:[#allocation5 + $0x1854] sm:$0xff]
    %v959 = vld [vmem:[#allocation5 + $0x185c] sm:$0xff]
    %v960 = vld [vmem:[#allocation5 + $0x1864] sm:$0xf]
    %v961 = vld [vmem:[#allocation5 + $0x1868] sm:$0xff]
    %v962 = vld [vmem:[#allocation5 + $0x1870] sm:$0xff]
    %v963 = vld [vmem:[#allocation5 + $0x1878] sm:$0xff]
    %v964 = vld [vmem:[#allocation5 + $0x1880] sm:$0xff]
    %v965 = vld [vmem:[#allocation5 + $0x1888] sm:$0xff]
    %v966 = vld [vmem:[#allocation5 + $0x1890] sm:$0xf]
    %v967 = vld [vmem:[#allocation5 + $0x1894] sm:$0xff]
    %v968 = vld [vmem:[#allocation5 + $0x189c] sm:$0xff]
    %v969 = vld [vmem:[#allocation5 + $0x18a4] sm:$0xff]
    %v970 = vld [vmem:[#allocation5 + $0x18ac] sm:$0xff]
    %v971 = vld [vmem:[#allocation5 + $0x18b4] sm:$0xff]
    %v972 = vld [vmem:[#allocation5 + $0x18bc] sm:$0xf]
    %v973 = vld [vmem:[#allocation5 + $0x18c0] sm:$0xff]
    %v974 = vld [vmem:[#allocation5 + $0x18c8] sm:$0xff]
    %v975 = vld [vmem:[#allocation5 + $0x18d0] sm:$0xff]
    %v976 = vld [vmem:[#allocation5 + $0x18d8] sm:$0xff]
    %v977 = vld [vmem:[#allocation5 + $0x18e0] sm:$0xff]
    %v978 = vld [vmem:[#allocation5 + $0x18e8] sm:$0xf]
    %v979 = vld [vmem:[#allocation5 + $0x18ec] sm:$0xff]
    %v980 = vld [vmem:[#allocation5 + $0x18f4] sm:$0xff]
    %v981 = vld [vmem:[#allocation5 + $0x18fc] sm:$0xff]
    %v982 = vld [vmem:[#allocation5 + $0x1904] sm:$0xff]
    %v983 = vld [vmem:[#allocation5 + $0x190c] sm:$0xff]
    %v984 = vld [vmem:[#allocation5 + $0x1914] sm:$0xf]
    %v985 = vld [vmem:[#allocation5 + $0x1918] sm:$0xff]
    %v986 = vld [vmem:[#allocation5 + $0x1920] sm:$0xff]
    %v987 = vld [vmem:[#allocation5 + $0x1928] sm:$0xff]
    %v988 = vld [vmem:[#allocation5 + $0x1930] sm:$0xff]
    %v989 = vld [vmem:[#allocation5 + $0x1938] sm:$0xff]
    %v990 = vld [vmem:[#allocation5 + $0x1940] sm:$0xf]
    %v991 = vld [vmem:[#allocation5 + $0x1944] sm:$0xff]
    %v992 = vld [vmem:[#allocation5 + $0x194c] sm:$0xff]
    %v993 = vld [vmem:[#allocation5 + $0x1954] sm:$0xff]
    %v994 = vld [vmem:[#allocation5 + $0x195c] sm:$0xff]
    %v995 = vld [vmem:[#allocation5 + $0x1964] sm:$0xff]
    %v996 = vld [vmem:[#allocation5 + $0x196c] sm:$0xf]
    %v997 = vld [vmem:[#allocation5 + $0x1970] sm:$0xff]
    %v998 = vld [vmem:[#allocation5 + $0x1978] sm:$0xff]
    %v999 = vld [vmem:[#allocation5 + $0x1980] sm:$0xff]
    %v1000 = vld [vmem:[#allocation5 + $0x1988] sm:$0xff]
    %v1001 = vld [vmem:[#allocation5 + $0x1990] sm:$0xff]
    %v1002 = vld [vmem:[#allocation5 + $0x1998] sm:$0xf]
    %v1003 = vld [vmem:[#allocation5 + $0x199c] sm:$0xff]
    %v1004 = vld [vmem:[#allocation5 + $0x19a4] sm:$0xff]
    %v1005 = vld [vmem:[#allocation5 + $0x19ac] sm:$0xff]
    %v1006 = vld [vmem:[#allocation5 + $0x19b4] sm:$0xff]
    %v1007 = vld [vmem:[#allocation5 + $0x19bc] sm:$0xff]
    %v1008 = vld [vmem:[#allocation5 + $0x19c4] sm:$0xf]
    %v1009 = vld [vmem:[#allocation5 + $0x19c8] sm:$0xff]
    %v1010 = vld [vmem:[#allocation5 + $0x19d0] sm:$0xff]
    %v1011 = vld [vmem:[#allocation5 + $0x19d8] sm:$0xff]
    %v1012 = vld [vmem:[#allocation5 + $0x19e0] sm:$0xff]
    %v1013 = vld [vmem:[#allocation5 + $0x19e8] sm:$0xff]
    %v1014 = vld [vmem:[#allocation5 + $0x19f0] sm:$0xf]
    %v1015 = vld [vmem:[#allocation5 + $0x19f4] sm:$0xff]
    %v1016 = vld [vmem:[#allocation5 + $0x19fc] sm:$0xff]
    %v1017 = vld [vmem:[#allocation5 + $0x1a04] sm:$0xff]
    %v1018 = vld [vmem:[#allocation5 + $0x1a0c] sm:$0xff]
    %v1019 = vld [vmem:[#allocation5 + $0x1a14] sm:$0xff]
    %v1020 = vld [vmem:[#allocation5 + $0x1a1c] sm:$0xf]
    %v1021 = vld [vmem:[#allocation5 + $0x1a20] sm:$0xff]
    %v1022 = vld [vmem:[#allocation5 + $0x1a28] sm:$0xff]
    %v1023 = vld [vmem:[#allocation5 + $0x1a30] sm:$0xff]
    %v1024 = vld [vmem:[#allocation5 + $0x1a38] sm:$0xff]
    %v1025 = vld [vmem:[#allocation5 + $0x1a40] sm:$0xff]
    %v1026 = vld [vmem:[#allocation5 + $0x1a48] sm:$0xf]
    %v1027 = vld [vmem:[#allocation5 + $0x1a4c] sm:$0xff]
    %v1028 = vld [vmem:[#allocation5 + $0x1a54] sm:$0xff]
    %v1029 = vld [vmem:[#allocation5 + $0x1a5c] sm:$0xff]
    %v1030 = vld [vmem:[#allocation5 + $0x1a64] sm:$0xff]
    %v1031 = vld [vmem:[#allocation5 + $0x1a6c] sm:$0xff]
    %v1032 = vld [vmem:[#allocation5 + $0x1a74] sm:$0xf]
    %v1033 = vld [vmem:[#allocation5 + $0x1a78] sm:$0xff]
    %v1034 = vld [vmem:[#allocation5 + $0x1a80] sm:$0xff]
    %v1035 = vld [vmem:[#allocation5 + $0x1a88] sm:$0xff]
    %v1036 = vld [vmem:[#allocation5 + $0x1a90] sm:$0xff]
    %v1037 = vld [vmem:[#allocation5 + $0x1a98] sm:$0xff]
    %v1038 = vld [vmem:[#allocation5 + $0x1aa0] sm:$0xf]
    %v1039 = vld [vmem:[#allocation5 + $0x1aa4] sm:$0xff]
    %v1040 = vld [vmem:[#allocation5 + $0x1aac] sm:$0xff]
    %v1041 = vld [vmem:[#allocation5 + $0x1ab4] sm:$0xff]
    %v1042 = vld [vmem:[#allocation5 + $0x1abc] sm:$0xff]
    %v1043 = vld [vmem:[#allocation5 + $0x1ac4] sm:$0xff]
    %v1044 = vld [vmem:[#allocation5 + $0x1acc] sm:$0xf]
    %v1045 = vld [vmem:[#allocation5 + $0x1ad0] sm:$0xff]
    %v1046 = vld [vmem:[#allocation5 + $0x1ad8] sm:$0xff]
    %v1047 = vld [vmem:[#allocation5 + $0x1ae0] sm:$0xff]
    %v1048 = vld [vmem:[#allocation5 + $0x1ae8] sm:$0xff]
    %v1049 = vld [vmem:[#allocation5 + $0x1af0] sm:$0xff]
    %v1050 = vld [vmem:[#allocation5 + $0x1af8] sm:$0xf]
    %v1051 = vld [vmem:[#allocation5 + $0x1afc] sm:$0xff]
    %v1052 = vld [vmem:[#allocation5 + $0x1b04] sm:$0xff]
    %v1053 = vld [vmem:[#allocation5 + $0x1b0c] sm:$0xff]
    %v1054 = vld [vmem:[#allocation5 + $0x1b14] sm:$0xff]
    %v1055 = vld [vmem:[#allocation5 + $0x1b1c] sm:$0xff]
    %v1056 = vld [vmem:[#allocation5 + $0x1b24] sm:$0xf]
    %v1057 = vld [vmem:[#allocation5 + $0x1b28] sm:$0xff]
    %v1058 = vld [vmem:[#allocation5 + $0x1b30] sm:$0xff]
    %v1059 = vld [vmem:[#allocation5 + $0x1b38] sm:$0xff]
    %v1060 = vld [vmem:[#allocation5 + $0x1b40] sm:$0xff]
    %v1061 = vld [vmem:[#allocation5 + $0x1b48] sm:$0xff]
    %v1062 = vld [vmem:[#allocation5 + $0x1b50] sm:$0xf]
    %v1063 = vld [vmem:[#allocation5 + $0x1b54] sm:$0xff]
    %v1064 = vld [vmem:[#allocation5 + $0x1b5c] sm:$0xff]
    %v1065 = vld [vmem:[#allocation5 + $0x1b64] sm:$0xff]
    %v1066 = vld [vmem:[#allocation5 + $0x1b6c] sm:$0xff]
    %v1067 = vld [vmem:[#allocation5 + $0x1b74] sm:$0xff]
    %v1068 = vld [vmem:[#allocation5 + $0x1b7c] sm:$0xf]
    %v1069 = vld [vmem:[#allocation5 + $0x1b80] sm:$0xff]
    %v1070 = vld [vmem:[#allocation5 + $0x1b88] sm:$0xff]
    %v1071 = vld [vmem:[#allocation5 + $0x1b90] sm:$0xff]
    %v1072 = vld [vmem:[#allocation5 + $0x1b98] sm:$0xff]
    %v1073 = vld [vmem:[#allocation5 + $0x1ba0] sm:$0xff]
    %v1074 = vld [vmem:[#allocation5 + $0x1ba8] sm:$0xf]
    %v1075 = vld [vmem:[#allocation5 + $0x1bac] sm:$0xff]
    %v1076 = vld [vmem:[#allocation5 + $0x1bb4] sm:$0xff]
    %v1077 = vld [vmem:[#allocation5 + $0x1bbc] sm:$0xff]
    %v1078 = vld [vmem:[#allocation5 + $0x1bc4] sm:$0xff]
    %v1079 = vld [vmem:[#allocation5 + $0x1bcc] sm:$0xff]
    %v1080 = vld [vmem:[#allocation5 + $0x1bd4] sm:$0xf]
    %v1081 = vld [vmem:[#allocation5 + $0x1bd8] sm:$0xff]
    %v1082 = vld [vmem:[#allocation5 + $0x1be0] sm:$0xff]
    %v1083 = vld [vmem:[#allocation5 + $0x1be8] sm:$0xff]
    %v1084 = vld [vmem:[#allocation5 + $0x1bf0] sm:$0xff]
    %v1085 = vld [vmem:[#allocation5 + $0x1bf8] sm:$0xff]
    %v1086 = vld [vmem:[#allocation5 + $0x1c00] sm:$0xf]
    %v1087 = vld [vmem:[#allocation5 + $0x1c04] sm:$0xff]
    %v1088 = vld [vmem:[#allocation5 + $0x1c0c] sm:$0xff]
    %v1089 = vld [vmem:[#allocation5 + $0x1c14] sm:$0xff]
    %v1090 = vld [vmem:[#allocation5 + $0x1c1c] sm:$0xff]
    %v1091 = vld [vmem:[#allocation5 + $0x1c24] sm:$0xff]
    %v1092 = vld [vmem:[#allocation5 + $0x1c2c] sm:$0xf]
    %v1093 = vld [vmem:[#allocation5 + $0x1c30] sm:$0xff]
    %v1094 = vld [vmem:[#allocation5 + $0x1c38] sm:$0xff]
    %v1095 = vld [vmem:[#allocation5 + $0x1c40] sm:$0xff]
    %v1096 = vld [vmem:[#allocation5 + $0x1c48] sm:$0xff]
    %v1097 = vld [vmem:[#allocation5 + $0x1c50] sm:$0xff]
    %v1098 = vld [vmem:[#allocation5 + $0x1c58] sm:$0xf]
    %v1099 = vld [vmem:[#allocation5 + $0x1c5c] sm:$0xff]
    %v1100 = vld [vmem:[#allocation5 + $0x1c64] sm:$0xff]
    %v1101 = vld [vmem:[#allocation5 + $0x1c6c] sm:$0xff]
    %v1102 = vld [vmem:[#allocation5 + $0x1c74] sm:$0xff]
    %v1103 = vld [vmem:[#allocation5 + $0x1c7c] sm:$0xff]
    %v1104 = vld [vmem:[#allocation5 + $0x1c84] sm:$0xf]
    %v1105 = vld [vmem:[#allocation5 + $0x1c88] sm:$0xff]
    %v1106 = vld [vmem:[#allocation5 + $0x1c90] sm:$0xff]
    %v1107 = vld [vmem:[#allocation5 + $0x1c98] sm:$0xff]
    %v1108 = vld [vmem:[#allocation5 + $0x1ca0] sm:$0xff]
    %v1109 = vld [vmem:[#allocation5 + $0x1ca8] sm:$0xff]
    %v1110 = vld [vmem:[#allocation5 + $0x1cb0] sm:$0xf]
    %v1111 = vld [vmem:[#allocation5 + $0x1cb4] sm:$0xff]
    %v1112 = vld [vmem:[#allocation5 + $0x1cbc] sm:$0xff]
    %v1113 = vld [vmem:[#allocation5 + $0x1cc4] sm:$0xff]
    %v1114 = vld [vmem:[#allocation5 + $0x1ccc] sm:$0xff]
    %v1115 = vld [vmem:[#allocation5 + $0x1cd4] sm:$0xff]
    %v1116 = vld [vmem:[#allocation5 + $0x1cdc] sm:$0xf]
    %v1117 = vld [vmem:[#allocation5 + $0x1ce0] sm:$0xff]
    %v1118 = vld [vmem:[#allocation5 + $0x1ce8] sm:$0xff]
    %v1119 = vld [vmem:[#allocation5 + $0x1cf0] sm:$0xff]
    %v1120 = vld [vmem:[#allocation5 + $0x1cf8] sm:$0xff]
    %v1121 = vld [vmem:[#allocation5 + $0x1d00] sm:$0xff]
    %v1122 = vld [vmem:[#allocation5 + $0x1d08] sm:$0xf]
    %v1123 = vld [vmem:[#allocation5 + $0x1d0c] sm:$0xff]
    %v1124 = vld [vmem:[#allocation5 + $0x1d14] sm:$0xff]
    %v1125 = vld [vmem:[#allocation5 + $0x1d1c] sm:$0xff]
    %v1126 = vld [vmem:[#allocation5 + $0x1d24] sm:$0xff]
    %v1127 = vld [vmem:[#allocation5 + $0x1d2c] sm:$0xff]
    %v1128 = vld [vmem:[#allocation5 + $0x1d34] sm:$0xf]
    %v1129 = vld [vmem:[#allocation5 + $0x1d38] sm:$0xff]
    %v1130 = vld [vmem:[#allocation5 + $0x1d40] sm:$0xff]
    %v1131 = vld [vmem:[#allocation5 + $0x1d48] sm:$0xff]
    %v1132 = vld [vmem:[#allocation5 + $0x1d50] sm:$0xff]
    %v1133 = vld [vmem:[#allocation5 + $0x1d58] sm:$0xff]
    %v1134 = vld [vmem:[#allocation5 + $0x1d60] sm:$0xf]
    %v1135 = vld [vmem:[#allocation5 + $0x1d64] sm:$0xff]
    %v1136 = vld [vmem:[#allocation5 + $0x1d6c] sm:$0xff]
    %v1137 = vld [vmem:[#allocation5 + $0x1d74] sm:$0xff]
    %v1138 = vld [vmem:[#allocation5 + $0x1d7c] sm:$0xff]
    %v1139 = vld [vmem:[#allocation5 + $0x1d84] sm:$0xff]
    %v1140 = vld [vmem:[#allocation5 + $0x1d8c] sm:$0xf]
    %v1141 = vld [vmem:[#allocation5 + $0x1d90] sm:$0xff]
    %v1142 = vld [vmem:[#allocation5 + $0x1d98] sm:$0xff]
    %v1143 = vld [vmem:[#allocation5 + $0x1da0] sm:$0xff]
    %v1144 = vld [vmem:[#allocation5 + $0x1da8] sm:$0xff]
    %v1145 = vld [vmem:[#allocation5 + $0x1db0] sm:$0xff]
    %v1146 = vld [vmem:[#allocation5 + $0x1db8] sm:$0xf]
    %v1147 = vld [vmem:[#allocation5 + $0x1dbc] sm:$0xff]
    %v1148 = vld [vmem:[#allocation5 + $0x1dc4] sm:$0xff]
    %v1149 = vld [vmem:[#allocation5 + $0x1dcc] sm:$0xff]
    %v1150 = vld [vmem:[#allocation5 + $0x1dd4] sm:$0xff]
    %v1151 = vld [vmem:[#allocation5 + $0x1ddc] sm:$0xff]
    %v1152 = vld [vmem:[#allocation5 + $0x1de4] sm:$0xf]
    %v1153 = vld [vmem:[#allocation5 + $0x1de8] sm:$0xff]
    %v1154 = vld [vmem:[#allocation5 + $0x1df0] sm:$0xff]
    %v1155 = vld [vmem:[#allocation5 + $0x1df8] sm:$0xff]
    %v1156 = vld [vmem:[#allocation5 + $0x1e00] sm:$0xff]
    %v1157 = vld [vmem:[#allocation5 + $0x1e08] sm:$0xff]
    %v1158 = vld [vmem:[#allocation5 + $0x1e10] sm:$0xf]
    %v1159 = vld [vmem:[#allocation5 + $0x1e14] sm:$0xff]
    %v1160 = vld [vmem:[#allocation5 + $0x1e1c] sm:$0xff]
    %v1161 = vld [vmem:[#allocation5 + $0x1e24] sm:$0xff]
    %v1162 = vld [vmem:[#allocation5 + $0x1e2c] sm:$0xff]
    %v1163 = vld [vmem:[#allocation5 + $0x1e34] sm:$0xff]
    %v1164 = vld [vmem:[#allocation5 + $0x1e3c] sm:$0xf]
    %v1165 = vld [vmem:[#allocation5 + $0x1e40] sm:$0xff]
    %v1166 = vld [vmem:[#allocation5 + $0x1e48] sm:$0xff]
    %v1167 = vld [vmem:[#allocation5 + $0x1e50] sm:$0xff]
    %v1168 = vld [vmem:[#allocation5 + $0x1e58] sm:$0xff]
    %v1169 = vld [vmem:[#allocation5 + $0x1e60] sm:$0xff]
    %v1170 = vld [vmem:[#allocation5 + $0x1e68] sm:$0xf]
    %v1171 = vld [vmem:[#allocation5 + $0x1e6c] sm:$0xff]
    %v1172 = vld [vmem:[#allocation5 + $0x1e74] sm:$0xff]
    %v1173 = vld [vmem:[#allocation5 + $0x1e7c] sm:$0xff]
    %v1174 = vld [vmem:[#allocation5 + $0x1e84] sm:$0xff]
    %v1175 = vld [vmem:[#allocation5 + $0x1e8c] sm:$0xff]
    %v1176 = vld [vmem:[#allocation5 + $0x1e94] sm:$0xf]
    %v1177 = vld [vmem:[#allocation5 + $0x1e98] sm:$0xff]
    %v1178 = vld [vmem:[#allocation5 + $0x1ea0] sm:$0xff]
    %v1179 = vld [vmem:[#allocation5 + $0x1ea8] sm:$0xff]
    %v1180 = vld [vmem:[#allocation5 + $0x1eb0] sm:$0xff]
    %v1181 = vld [vmem:[#allocation5 + $0x1eb8] sm:$0xff]
    %v1182 = vld [vmem:[#allocation5 + $0x1ec0] sm:$0xf]
    %v1183 = vld [vmem:[#allocation5 + $0x1ec4] sm:$0xff]
    %v1184 = vld [vmem:[#allocation5 + $0x1ecc] sm:$0xff]
    %v1185 = vld [vmem:[#allocation5 + $0x1ed4] sm:$0xff]
    %v1186 = vld [vmem:[#allocation5 + $0x1edc] sm:$0xff]
    %v1187 = vld [vmem:[#allocation5 + $0x1ee4] sm:$0xff]
    %v1188 = vld [vmem:[#allocation5 + $0x1eec] sm:$0xf]
    %v1189 = vld [vmem:[#allocation5 + $0x1ef0] sm:$0xff]
    %v1190 = vld [vmem:[#allocation5 + $0x1ef8] sm:$0xff]
    %v1191 = vld [vmem:[#allocation5 + $0x1f00] sm:$0xff]
    %v1192 = vld [vmem:[#allocation5 + $0x1f08] sm:$0xff]
    %v1193 = vld [vmem:[#allocation5 + $0x1f10] sm:$0xff]
    %v1194 = vld [vmem:[#allocation5 + $0x1f18] sm:$0xf]
    %v1195 = vld [vmem:[#allocation5 + $0x1f1c] sm:$0xff]
    %v1196 = vld [vmem:[#allocation5 + $0x1f24] sm:$0xff]
    %v1197 = vld [vmem:[#allocation5 + $0x1f2c] sm:$0xff]
    %v1198 = vld [vmem:[#allocation5 + $0x1f34] sm:$0xff]
    %v1199 = vld [vmem:[#allocation5 + $0x1f3c] sm:$0xff]
    %v1200 = vld [vmem:[#allocation5 + $0x1f44] sm:$0xf]
    %v1201 = vld [vmem:[#allocation5 + $0x1f48] sm:$0xff]
    %v1202 = vld [vmem:[#allocation5 + $0x1f50] sm:$0xff]
    %v1203 = vld [vmem:[#allocation5 + $0x1f58] sm:$0xff]
    %v1204 = vld [vmem:[#allocation5 + $0x1f60] sm:$0xff]
    %v1205 = vld [vmem:[#allocation5 + $0x1f68] sm:$0xff]
    %v1206 = vld [vmem:[#allocation5 + $0x1f70] sm:$0xf]
    %v1207 = vld [vmem:[#allocation5 + $0x1f74] sm:$0xff]
    %v1208 = vld [vmem:[#allocation5 + $0x1f7c] sm:$0xff]
    %v1209 = vld [vmem:[#allocation5 + $0x1f84] sm:$0xff]
    %v1210 = vld [vmem:[#allocation5 + $0x1f8c] sm:$0xff]
    %v1211 = vld [vmem:[#allocation5 + $0x1f94] sm:$0xff]
    %v1212 = vld [vmem:[#allocation5 + $0x1f9c] sm:$0xf]
    %v1213 = vld [vmem:[#allocation5 + $0x1fa0] sm:$0xff]
    %v1214 = vld [vmem:[#allocation5 + $0x1fa8] sm:$0xff]
    %v1215 = vld [vmem:[#allocation5 + $0x1fb0] sm:$0xff]
    %v1216 = vld [vmem:[#allocation5 + $0x1fb8] sm:$0xff]
    %v1217 = vld [vmem:[#allocation5 + $0x1fc0] sm:$0xff]
    %v1218 = vld [vmem:[#allocation5 + $0x1fc8] sm:$0xf]
    %v1219 = vld [vmem:[#allocation5 + $0x1fcc] sm:$0xff]
    %v1220 = vld [vmem:[#allocation5 + $0x1fd4] sm:$0xff]
    %v1221 = vld [vmem:[#allocation5 + $0x1fdc] sm:$0xff]
    %v1222 = vld [vmem:[#allocation5 + $0x1fe4] sm:$0xff]
    %v1223 = vld [vmem:[#allocation5 + $0x1fec] sm:$0xff]
    %v1224 = vld [vmem:[#allocation5 + $0x1ff4] sm:$0xf]
    %v1225 = vld [vmem:[#allocation5 + $0x1ff8] sm:$0xff]
    %v1226 = vld [vmem:[#allocation5 + $0x2000] sm:$0xff]
    %v1227 = vld [vmem:[#allocation5 + $0x2008] sm:$0xff]
    %v1228 = vld [vmem:[#allocation5 + $0x2010] sm:$0xff]
    %v1229 = vld [vmem:[#allocation5 + $0x2018] sm:$0xff]
    %v1230 = vld [vmem:[#allocation5 + $0x2020] sm:$0xf]
    %v1231 = vld [vmem:[#allocation5 + $0x2024] sm:$0xff]
    %v1232 = vld [vmem:[#allocation5 + $0x202c] sm:$0xff]
    %v1233 = vld [vmem:[#allocation5 + $0x2034] sm:$0xff]
    %v1234 = vld [vmem:[#allocation5 + $0x203c] sm:$0xff]
    %v1235 = vld [vmem:[#allocation5 + $0x2044] sm:$0xff]
    %v1236 = vld [vmem:[#allocation5 + $0x204c] sm:$0xf]
    %v1237 = vld [vmem:[#allocation5 + $0x2050] sm:$0xff]
    %v1238 = vld [vmem:[#allocation5 + $0x2058] sm:$0xff]
    %v1239 = vld [vmem:[#allocation5 + $0x2060] sm:$0xff]
    %v1240 = vld [vmem:[#allocation5 + $0x2068] sm:$0xff]
    %v1241 = vld [vmem:[#allocation5 + $0x2070] sm:$0xff]
    %v1242 = vld [vmem:[#allocation5 + $0x2078] sm:$0xf]
    %v1243 = vld [vmem:[#allocation5 + $0x207c] sm:$0xff]
    %v1244 = vld [vmem:[#allocation5 + $0x2084] sm:$0xff]
    %v1245 = vld [vmem:[#allocation5 + $0x208c] sm:$0xff]
    %v1246 = vld [vmem:[#allocation5 + $0x2094] sm:$0xff]
    %v1247 = vld [vmem:[#allocation5 + $0x209c] sm:$0xff]
    %v1248 = vld [vmem:[#allocation5 + $0x20a4] sm:$0xf]
    %v1249 = vld [vmem:[#allocation5 + $0x20a8] sm:$0xff]
    %v1250 = vld [vmem:[#allocation5 + $0x20b0] sm:$0xff]
    %v1251 = vld [vmem:[#allocation5 + $0x20b8] sm:$0xff]
    %v1252 = vld [vmem:[#allocation5 + $0x20c0] sm:$0xff]
    %v1253 = vld [vmem:[#allocation5 + $0x20c8] sm:$0xff]
    %v1254 = vld [vmem:[#allocation5 + $0x20d0] sm:$0xf]
    %v1255 = vld [vmem:[#allocation5 + $0x20d4] sm:$0xff]
    %v1256 = vld [vmem:[#allocation5 + $0x20dc] sm:$0xff]
    %v1257 = vld [vmem:[#allocation5 + $0x20e4] sm:$0xff]
    %v1258 = vld [vmem:[#allocation5 + $0x20ec] sm:$0xff]
    %v1259 = vld [vmem:[#allocation5 + $0x20f4] sm:$0xff]
    %v1260 = vld [vmem:[#allocation5 + $0x20fc] sm:$0xf]
    %v1261 = vld [vmem:[#allocation5 + $0x2100] sm:$0xff]
    %v1262 = vld [vmem:[#allocation5 + $0x2108] sm:$0xff]
    %v1263 = vld [vmem:[#allocation5 + $0x2110] sm:$0xff]
    %v1264 = vld [vmem:[#allocation5 + $0x2118] sm:$0xff]
    %v1265 = vld [vmem:[#allocation5 + $0x2120] sm:$0xff]
    %v1266 = vld [vmem:[#allocation5 + $0x2128] sm:$0xf]
    %v1267 = vld [vmem:[#allocation5 + $0x212c] sm:$0xff]
    %v1268 = vld [vmem:[#allocation5 + $0x2134] sm:$0xff]
    %v1269 = vld [vmem:[#allocation5 + $0x213c] sm:$0xff]
    %v1270 = vld [vmem:[#allocation5 + $0x2144] sm:$0xff]
    %v1271 = vld [vmem:[#allocation5 + $0x214c] sm:$0xff]
    %v1272 = vld [vmem:[#allocation5 + $0x2154] sm:$0xf]
    %v1273 = vld [vmem:[#allocation5 + $0x2158] sm:$0xff]
    %v1274 = vld [vmem:[#allocation5 + $0x2160] sm:$0xff]
    %v1275 = vld [vmem:[#allocation5 + $0x2168] sm:$0xff]
    %v1276 = vld [vmem:[#allocation5 + $0x2170] sm:$0xff]
    %v1277 = vld [vmem:[#allocation5 + $0x2178] sm:$0xff]
    %v1278 = vld [vmem:[#allocation5 + $0x2180] sm:$0xf]
    %v1279 = vld [vmem:[#allocation5 + $0x2184] sm:$0xff]
    %v1280 = vld [vmem:[#allocation5 + $0x218c] sm:$0xff]
    %v1281 = vld [vmem:[#allocation5 + $0x2194] sm:$0xff]
    %v1282 = vld [vmem:[#allocation5 + $0x219c] sm:$0xff]
    %v1283 = vld [vmem:[#allocation5 + $0x21a4] sm:$0xff]
    %v1284 = vld [vmem:[#allocation5 + $0x21ac] sm:$0xf]
    %v1285 = vld [vmem:[#allocation5 + $0x21b0] sm:$0xff]
    %v1286 = vld [vmem:[#allocation5 + $0x21b8] sm:$0xff]
    %v1287 = vld [vmem:[#allocation5 + $0x21c0] sm:$0xff]
    %v1288 = vld [vmem:[#allocation5 + $0x21c8] sm:$0xff]
    %v1289 = vld [vmem:[#allocation5 + $0x21d0] sm:$0xff]
    %v1290 = vld [vmem:[#allocation5 + $0x21d8] sm:$0xf]
    %v1291 = vld [vmem:[#allocation5 + $0x21dc] sm:$0xff]
    %v1292 = vld [vmem:[#allocation5 + $0x21e4] sm:$0xff]
    %v1293 = vld [vmem:[#allocation5 + $0x21ec] sm:$0xff]
    %v1294 = vld [vmem:[#allocation5 + $0x21f4] sm:$0xff]
    %v1295 = vld [vmem:[#allocation5 + $0x21fc] sm:$0xff]
    %v1296 = vld [vmem:[#allocation5 + $0x2204] sm:$0xf]
    %v1297 = vld [vmem:[#allocation5 + $0x2208] sm:$0xff]
    %v1298 = vld [vmem:[#allocation5 + $0x2210] sm:$0xff]
    %v1299 = vld [vmem:[#allocation5 + $0x2218] sm:$0xff]
    %v1300 = vld [vmem:[#allocation5 + $0x2220] sm:$0xff]
    %v1301 = vld [vmem:[#allocation5 + $0x2228] sm:$0xff]
    %v1302 = vld [vmem:[#allocation5 + $0x2230] sm:$0xf]
    %v1303 = vld [vmem:[#allocation5 + $0x2234] sm:$0xff]
    %v1304 = vld [vmem:[#allocation5 + $0x223c] sm:$0xff]
    %v1305 = vld [vmem:[#allocation5 + $0x2244] sm:$0xff]
    %v1306 = vld [vmem:[#allocation5 + $0x224c] sm:$0xff]
    %v1307 = vld [vmem:[#allocation5 + $0x2254] sm:$0xff]
    %v1308 = vld [vmem:[#allocation5 + $0x225c] sm:$0xf]
    %v1309 = vld [vmem:[#allocation7] sm:$0xff]
    %v1310 = vld [vmem:[#allocation7 + $0x8] sm:$0x7]
    %v1313 = vlaneseq
    %v1314 = vshrl.u32 %v1313, 7
    %v1315 = vsub.s32 0, %v1314
    %v1316 = vrot.slane %v1309, %v1315
    %v1317 = vlaneseq
    %v1318 = vshrl.u32 %v1317, 7
    %v1319 = vsub.s32 1, %v1318
    %v1320 = vrot.slane %v1309, %v1319
    %v1321 = vlaneseq
    %v1322 = vshrl.u32 %v1321, 7
    %v1323 = vsub.s32 2, %v1322
    %v1324 = vrot.slane %v1309, %v1323
    %v1325 = vlaneseq
    %v1326 = vshrl.u32 %v1325, 7
    %v1327 = vsub.s32 3, %v1326
    %v1328 = vrot.slane %v1309, %v1327
    %v1329 = vlaneseq
    %v1330 = vshrl.u32 %v1329, 7
    %v1331 = vsub.s32 4, %v1330
    %v1332 = vrot.slane %v1309, %v1331
    %v1333 = vlaneseq
    %v1334 = vshrl.u32 %v1333, 7
    %v1335 = vsub.s32 5, %v1334
    %v1336 = vrot.slane %v1309, %v1335
    %v1337 = vlaneseq
    %v1338 = vshrl.u32 %v1337, 7
    %v1339 = vsub.s32 6, %v1338
    %v1340 = vrot.slane %v1309, %v1339
    %v1341 = vlaneseq
    %v1342 = vshrl.u32 %v1341, 7
    %v1343 = vsub.s32 7, %v1342
    %v1344 = vrot.slane %v1309, %v1343
    %v1345 = vlaneseq
    %v1346 = vshrl.u32 %v1345, 7
    %v1347 = vsub.s32 0, %v1346
    %v1348 = vrot.slane %v1310, %v1347
    %v1349 = vlaneseq
    %v1350 = vshrl.u32 %v1349, 7
    %v1351 = vsub.s32 1, %v1350
    %v1352 = vrot.slane %v1310, %v1351
    %v1353 = vlaneseq
    %v1354 = vshrl.u32 %v1353, 7
    %v1355 = vsub.s32 2, %v1354
    %v1356 = vrot.slane %v1310, %v1355
    %v1375 = vunpack.c.l.b16 %v102
    %v1376 = vunpack.c.h.b16 %v102
    %v1377 = vunpack.c.l.b16 %v103
    %v1378 = vunpack.c.h.b16 %v103
    %v1379 = vunpack.c.l.b16 %v104
    %v1380 = vunpack.c.h.b16 %v104
    %v1381 = vunpack.c.l.b16 %v105
    %v1382 = vunpack.c.h.b16 %v105
    %v1383 = vunpack.c.l.b16 %v106
    %v1384 = vunpack.c.h.b16 %v106
    %v1385 = vunpack.c.l.b16 %v107
    %v1386 = vunpack.c.h.b16 %v107
    %v1387 = vunpack.c.l.b16 %v108
    %v1388 = vpack.c.b16 %v1375, %v1375
    %v1389 = vpack.c.b16 %v1376, %v1376
    %v1390 = vpack.c.b16 %v1377, %v1377
    %v1391 = vpack.c.b16 %v1378, %v1378
    %v1392 = vpack.c.b16 %v1379, %v1379
    %v1393 = vpack.c.b16 %v1380, %v1380
    %v1394 = vpack.c.b16 %v1381, %v1381
    %v1395 = vpack.c.b16 %v1382, %v1382
    %v1396 = vpack.c.b16 %v1383, %v1383
    %v1397 = vpack.c.b16 %v1384, %v1384
    %v1398 = vpack.c.b16 %v1385, %v1385
    %v1399 = vpack.c.b16 %v1386, %v1386
    %v1400 = vpack.c.b16 %v1387, %v1387
    %v2613 = vunpack.c.l.b16 %v109
    %v2614 = vunpack.c.h.b16 %v109
    %v2615 = vunpack.c.l.b16 %v110
    %v2616 = vunpack.c.h.b16 %v110
    %v2617 = vunpack.c.l.b16 %v111
    %v2618 = vunpack.c.h.b16 %v111
    %v2619 = vunpack.c.l.b16 %v112
    %v2620 = vunpack.c.h.b16 %v112
    %v2621 = vunpack.c.l.b16 %v113
    %v2622 = vunpack.c.h.b16 %v113
    %v2623 = vunpack.c.l.b16 %v114
    %v2624 = vunpack.c.l.b16 %v115
    %v2625 = vunpack.c.h.b16 %v115
    %v2626 = vunpack.c.l.b16 %v116
    %v2627 = vunpack.c.h.b16 %v116
    %v2628 = vunpack.c.l.b16 %v117
    %v2629 = vunpack.c.h.b16 %v117
    %v2630 = vunpack.c.l.b16 %v118
    %v2631 = vunpack.c.h.b16 %v118
    %v2632 = vunpack.c.l.b16 %v119
    %v2633 = vunpack.c.h.b16 %v119
    %v2634 = vunpack.c.l.b16 %v120
    %v2635 = vunpack.c.l.b16 %v121
    %v2636 = vunpack.c.h.b16 %v121
    %v2637 = vunpack.c.l.b16 %v122
    %v2638 = vunpack.c.h.b16 %v122
    %v2639 = vunpack.c.l.b16 %v123
    %v2640 = vunpack.c.h.b16 %v123
    %v2641 = vunpack.c.l.b16 %v124
    %v2642 = vunpack.c.h.b16 %v124
    %v2643 = vunpack.c.l.b16 %v125
    %v2644 = vunpack.c.h.b16 %v125
    %v2645 = vunpack.c.l.b16 %v126
    %v2646 = vunpack.c.l.b16 %v127
    %v2647 = vunpack.c.h.b16 %v127
    %v2648 = vunpack.c.l.b16 %v128
    %v2649 = vunpack.c.h.b16 %v128
    %v2650 = vunpack.c.l.b16 %v129
    %v2651 = vunpack.c.h.b16 %v129
    %v2652 = vunpack.c.l.b16 %v130
    %v2653 = vunpack.c.h.b16 %v130
    %v2654 = vunpack.c.l.b16 %v131
    %v2655 = vunpack.c.h.b16 %v131
    %v2656 = vunpack.c.l.b16 %v132
    %v2657 = vunpack.c.l.b16 %v133
    %v2658 = vunpack.c.h.b16 %v133
    %v2659 = vunpack.c.l.b16 %v134
    %v2660 = vunpack.c.h.b16 %v134
    %v2661 = vunpack.c.l.b16 %v135
    %v2662 = vunpack.c.h.b16 %v135
    %v2663 = vunpack.c.l.b16 %v136
    %v2664 = vunpack.c.h.b16 %v136
    %v2665 = vunpack.c.l.b16 %v137
    %v2666 = vunpack.c.h.b16 %v137
    %v2667 = vunpack.c.l.b16 %v138
    %v2668 = vunpack.c.l.b16 %v139
    %v2669 = vunpack.c.h.b16 %v139
    %v2670 = vunpack.c.l.b16 %v140
    %v2671 = vunpack.c.h.b16 %v140
    %v2672 = vunpack.c.l.b16 %v141
    %v2673 = vunpack.c.h.b16 %v141
    %v2674 = vunpack.c.l.b16 %v142
    %v2675 = vunpack.c.h.b16 %v142
    %v2676 = vunpack.c.l.b16 %v143
    %v2677 = vunpack.c.h.b16 %v143
    %v2678 = vunpack.c.l.b16 %v144
    %v2679 = vunpack.c.l.b16 %v145
    %v2680 = vunpack.c.h.b16 %v145
    %v2681 = vunpack.c.l.b16 %v146
    %v2682 = vunpack.c.h.b16 %v146
    %v2683 = vunpack.c.l.b16 %v147
    %v2684 = vunpack.c.h.b16 %v147
    %v2685 = vunpack.c.l.b16 %v148
    %v2686 = vunpack.c.h.b16 %v148
    %v2687 = vunpack.c.l.b16 %v149
    %v2688 = vunpack.c.h.b16 %v149
    %v2689 = vunpack.c.l.b16 %v150
    %v2690 = vunpack.c.l.b16 %v151
    %v2691 = vunpack.c.h.b16 %v151
    %v2692 = vunpack.c.l.b16 %v152
    %v2693 = vunpack.c.h.b16 %v152
    %v2694 = vunpack.c.l.b16 %v153
    %v2695 = vunpack.c.h.b16 %v153
    %v2696 = vunpack.c.l.b16 %v154
    %v2697 = vunpack.c.h.b16 %v154
    %v2698 = vunpack.c.l.b16 %v155
    %v2699 = vunpack.c.h.b16 %v155
    %v2700 = vunpack.c.l.b16 %v156
    %v2701 = vunpack.c.l.b16 %v157
    %v2702 = vunpack.c.h.b16 %v157
    %v2703 = vunpack.c.l.b16 %v158
    %v2704 = vunpack.c.h.b16 %v158
    %v2705 = vunpack.c.l.b16 %v159
    %v2706 = vunpack.c.h.b16 %v159
    %v2707 = vunpack.c.l.b16 %v160
    %v2708 = vunpack.c.h.b16 %v160
    %v2709 = vunpack.c.l.b16 %v161
    %v2710 = vunpack.c.h.b16 %v161
    %v2711 = vunpack.c.l.b16 %v162
    %v2712 = vunpack.c.l.b16 %v163
    %v2713 = vunpack.c.h.b16 %v163
    %v2714 = vunpack.c.l.b16 %v164
    %v2715 = vunpack.c.h.b16 %v164
    %v2716 = vunpack.c.l.b16 %v165
    %v2717 = vunpack.c.h.b16 %v165
    %v2718 = vunpack.c.l.b16 %v166
    %v2719 = vunpack.c.h.b16 %v166
    %v2720 = vunpack.c.l.b16 %v167
    %v2721 = vunpack.c.h.b16 %v167
    %v2722 = vunpack.c.l.b16 %v168
    %v2723 = vunpack.c.l.b16 %v169
    %v2724 = vunpack.c.h.b16 %v169
    %v2725 = vunpack.c.l.b16 %v170
    %v2726 = vunpack.c.h.b16 %v170
    %v2727 = vunpack.c.l.b16 %v171
    %v2728 = vunpack.c.h.b16 %v171
    %v2729 = vunpack.c.l.b16 %v172
    %v2730 = vunpack.c.h.b16 %v172
    %v2731 = vunpack.c.l.b16 %v173
    %v2732 = vunpack.c.h.b16 %v173
    %v2733 = vunpack.c.l.b16 %v174
    %v2734 = vunpack.c.l.b16 %v175
    %v2735 = vunpack.c.h.b16 %v175
    %v2736 = vunpack.c.l.b16 %v176
    %v2737 = vunpack.c.h.b16 %v176
    %v2738 = vunpack.c.l.b16 %v177
    %v2739 = vunpack.c.h.b16 %v177
    %v2740 = vunpack.c.l.b16 %v178
    %v2741 = vunpack.c.h.b16 %v178
    %v2742 = vunpack.c.l.b16 %v179
    %v2743 = vunpack.c.h.b16 %v179
    %v2744 = vunpack.c.l.b16 %v180
    %v2745 = vunpack.c.l.b16 %v181
    %v2746 = vunpack.c.h.b16 %v181
    %v2747 = vunpack.c.l.b16 %v182
    %v2748 = vunpack.c.h.b16 %v182
    %v2749 = vunpack.c.l.b16 %v183
    %v2750 = vunpack.c.h.b16 %v183
    %v2751 = vunpack.c.l.b16 %v184
    %v2752 = vunpack.c.h.b16 %v184
    %v2753 = vunpack.c.l.b16 %v185
    %v2754 = vunpack.c.h.b16 %v185
    %v2755 = vunpack.c.l.b16 %v186
    %v2756 = vunpack.c.l.b16 %v187
    %v2757 = vunpack.c.h.b16 %v187
    %v2758 = vunpack.c.l.b16 %v188
    %v2759 = vunpack.c.h.b16 %v188
    %v2760 = vunpack.c.l.b16 %v189
    %v2761 = vunpack.c.h.b16 %v189
    %v2762 = vunpack.c.l.b16 %v190
    %v2763 = vunpack.c.h.b16 %v190
    %v2764 = vunpack.c.l.b16 %v191
    %v2765 = vunpack.c.h.b16 %v191
    %v2766 = vunpack.c.l.b16 %v192
    %v2767 = vunpack.c.l.b16 %v193
    %v2768 = vunpack.c.h.b16 %v193
    %v2769 = vunpack.c.l.b16 %v194
    %v2770 = vunpack.c.h.b16 %v194
    %v2771 = vunpack.c.l.b16 %v195
    %v2772 = vunpack.c.h.b16 %v195
    %v2773 = vunpack.c.l.b16 %v196
    %v2774 = vunpack.c.h.b16 %v196
    %v2775 = vunpack.c.l.b16 %v197
    %v2776 = vunpack.c.h.b16 %v197
    %v2777 = vunpack.c.l.b16 %v198
    %v2778 = vunpack.c.l.b16 %v199
    %v2779 = vunpack.c.h.b16 %v199
    %v2780 = vunpack.c.l.b16 %v200
    %v2781 = vunpack.c.h.b16 %v200
    %v2782 = vunpack.c.l.b16 %v201
    %v2783 = vunpack.c.h.b16 %v201
    %v2784 = vunpack.c.l.b16 %v202
    %v2785 = vunpack.c.h.b16 %v202
    %v2786 = vunpack.c.l.b16 %v203
    %v2787 = vunpack.c.h.b16 %v203
    %v2788 = vunpack.c.l.b16 %v204
    %v2789 = vunpack.c.l.b16 %v205
    %v2790 = vunpack.c.h.b16 %v205
    %v2791 = vunpack.c.l.b16 %v206
    %v2792 = vunpack.c.h.b16 %v206
    %v2793 = vunpack.c.l.b16 %v207
    %v2794 = vunpack.c.h.b16 %v207
    %v2795 = vunpack.c.l.b16 %v208
    %v2796 = vunpack.c.h.b16 %v208
    %v2797 = vunpack.c.l.b16 %v209
    %v2798 = vunpack.c.h.b16 %v209
    %v2799 = vunpack.c.l.b16 %v210
    %v2800 = vunpack.c.l.b16 %v211
    %v2801 = vunpack.c.h.b16 %v211
    %v2802 = vunpack.c.l.b16 %v212
    %v2803 = vunpack.c.h.b16 %v212
    %v2804 = vunpack.c.l.b16 %v213
    %v2805 = vunpack.c.h.b16 %v213
    %v2806 = vunpack.c.l.b16 %v214
    %v2807 = vunpack.c.h.b16 %v214
    %v2808 = vunpack.c.l.b16 %v215
    %v2809 = vunpack.c.h.b16 %v215
    %v2810 = vunpack.c.l.b16 %v216
    %v2811 = vunpack.c.l.b16 %v217
    %v2812 = vunpack.c.h.b16 %v217
    %v2813 = vunpack.c.l.b16 %v218
    %v2814 = vunpack.c.h.b16 %v218
    %v2815 = vunpack.c.l.b16 %v219
    %v2816 = vunpack.c.h.b16 %v219
    %v2817 = vunpack.c.l.b16 %v220
    %v2818 = vunpack.c.h.b16 %v220
    %v2819 = vunpack.c.l.b16 %v221
    %v2820 = vunpack.c.h.b16 %v221
    %v2821 = vunpack.c.l.b16 %v222
    %v2822 = vunpack.c.l.b16 %v223
    %v2823 = vunpack.c.h.b16 %v223
    %v2824 = vunpack.c.l.b16 %v224
    %v2825 = vunpack.c.h.b16 %v224
    %v2826 = vunpack.c.l.b16 %v225
    %v2827 = vunpack.c.h.b16 %v225
    %v2828 = vunpack.c.l.b16 %v226
    %v2829 = vunpack.c.h.b16 %v226
    %v2830 = vunpack.c.l.b16 %v227
    %v2831 = vunpack.c.h.b16 %v227
    %v2832 = vunpack.c.l.b16 %v228
    %v2833 = vunpack.c.l.b16 %v229
    %v2834 = vunpack.c.h.b16 %v229
    %v2835 = vunpack.c.l.b16 %v230
    %v2836 = vunpack.c.h.b16 %v230
    %v2837 = vunpack.c.l.b16 %v231
    %v2838 = vunpack.c.h.b16 %v231
    %v2839 = vunpack.c.l.b16 %v232
    %v2840 = vunpack.c.h.b16 %v232
    %v2841 = vunpack.c.l.b16 %v233
    %v2842 = vunpack.c.h.b16 %v233
    %v2843 = vunpack.c.l.b16 %v234
    %v2844 = vunpack.c.l.b16 %v235
    %v2845 = vunpack.c.h.b16 %v235
    %v2846 = vunpack.c.l.b16 %v236
    %v2847 = vunpack.c.h.b16 %v236
    %v2848 = vunpack.c.l.b16 %v237
    %v2849 = vunpack.c.h.b16 %v237
    %v2850 = vunpack.c.l.b16 %v238
    %v2851 = vunpack.c.h.b16 %v238
    %v2852 = vunpack.c.l.b16 %v239
    %v2853 = vunpack.c.h.b16 %v239
    %v2854 = vunpack.c.l.b16 %v240
    %v2855 = vunpack.c.l.b16 %v241
    %v2856 = vunpack.c.h.b16 %v241
    %v2857 = vunpack.c.l.b16 %v242
    %v2858 = vunpack.c.h.b16 %v242
    %v2859 = vunpack.c.l.b16 %v243
    %v2860 = vunpack.c.h.b16 %v243
    %v2861 = vunpack.c.l.b16 %v244
    %v2862 = vunpack.c.h.b16 %v244
    %v2863 = vunpack.c.l.b16 %v245
    %v2864 = vunpack.c.h.b16 %v245
    %v2865 = vunpack.c.l.b16 %v246
    %v2866 = vunpack.c.l.b16 %v247
    %v2867 = vunpack.c.h.b16 %v247
    %v2868 = vunpack.c.l.b16 %v248
    %v2869 = vunpack.c.h.b16 %v248
    %v2870 = vunpack.c.l.b16 %v249
    %v2871 = vunpack.c.h.b16 %v249
    %v2872 = vunpack.c.l.b16 %v250
    %v2873 = vunpack.c.h.b16 %v250
    %v2874 = vunpack.c.l.b16 %v251
    %v2875 = vunpack.c.h.b16 %v251
    %v2876 = vunpack.c.l.b16 %v252
    %v2877 = vunpack.c.l.b16 %v253
    %v2878 = vunpack.c.h.b16 %v253
    %v2879 = vunpack.c.l.b16 %v254
    %v2880 = vunpack.c.h.b16 %v254
    %v2881 = vunpack.c.l.b16 %v255
    %v2882 = vunpack.c.h.b16 %v255
    %v2883 = vunpack.c.l.b16 %v256
    %v2884 = vunpack.c.h.b16 %v256
    %v2885 = vunpack.c.l.b16 %v257
    %v2886 = vunpack.c.h.b16 %v257
    %v2887 = vunpack.c.l.b16 %v258
    %v2888 = vunpack.c.l.b16 %v259
    %v2889 = vunpack.c.h.b16 %v259
    %v2890 = vunpack.c.l.b16 %v260
    %v2891 = vunpack.c.h.b16 %v260
    %v2892 = vunpack.c.l.b16 %v261
    %v2893 = vunpack.c.h.b16 %v261
    %v2894 = vunpack.c.l.b16 %v262
    %v2895 = vunpack.c.h.b16 %v262
    %v2896 = vunpack.c.l.b16 %v263
    %v2897 = vunpack.c.h.b16 %v263
    %v2898 = vunpack.c.l.b16 %v264
    %v2899 = vunpack.c.l.b16 %v265
    %v2900 = vunpack.c.h.b16 %v265
    %v2901 = vunpack.c.l.b16 %v266
    %v2902 = vunpack.c.h.b16 %v266
    %v2903 = vunpack.c.l.b16 %v267
    %v2904 = vunpack.c.h.b16 %v267
    %v2905 = vunpack.c.l.b16 %v268
    %v2906 = vunpack.c.h.b16 %v268
    %v2907 = vunpack.c.l.b16 %v269
    %v2908 = vunpack.c.h.b16 %v269
    %v2909 = vunpack.c.l.b16 %v270
    %v2910 = vunpack.c.l.b16 %v271
    %v2911 = vunpack.c.h.b16 %v271
    %v2912 = vunpack.c.l.b16 %v272
    %v2913 = vunpack.c.h.b16 %v272
    %v2914 = vunpack.c.l.b16 %v273
    %v2915 = vunpack.c.h.b16 %v273
    %v2916 = vunpack.c.l.b16 %v274
    %v2917 = vunpack.c.h.b16 %v274
    %v2918 = vunpack.c.l.b16 %v275
    %v2919 = vunpack.c.h.b16 %v275
    %v2920 = vunpack.c.l.b16 %v276
    %v2921 = vunpack.c.l.b16 %v277
    %v2922 = vunpack.c.h.b16 %v277
    %v2923 = vunpack.c.l.b16 %v278
    %v2924 = vunpack.c.h.b16 %v278
    %v2925 = vunpack.c.l.b16 %v279
    %v2926 = vunpack.c.h.b16 %v279
    %v2927 = vunpack.c.l.b16 %v280
    %v2928 = vunpack.c.h.b16 %v280
    %v2929 = vunpack.c.l.b16 %v281
    %v2930 = vunpack.c.h.b16 %v281
    %v2931 = vunpack.c.l.b16 %v282
    %v2932 = vunpack.c.l.b16 %v283
    %v2933 = vunpack.c.h.b16 %v283
    %v2934 = vunpack.c.l.b16 %v284
    %v2935 = vunpack.c.h.b16 %v284
    %v2936 = vunpack.c.l.b16 %v285
    %v2937 = vunpack.c.h.b16 %v285
    %v2938 = vunpack.c.l.b16 %v286
    %v2939 = vunpack.c.h.b16 %v286
    %v2940 = vunpack.c.l.b16 %v287
    %v2941 = vunpack.c.h.b16 %v287
    %v2942 = vunpack.c.l.b16 %v288
    %v2943 = vunpack.c.l.b16 %v289
    %v2944 = vunpack.c.h.b16 %v289
    %v2945 = vunpack.c.l.b16 %v290
    %v2946 = vunpack.c.h.b16 %v290
    %v2947 = vunpack.c.l.b16 %v291
    %v2948 = vunpack.c.h.b16 %v291
    %v2949 = vunpack.c.l.b16 %v292
    %v2950 = vunpack.c.h.b16 %v292
    %v2951 = vunpack.c.l.b16 %v293
    %v2952 = vunpack.c.h.b16 %v293
    %v2953 = vunpack.c.l.b16 %v294
    %v2954 = vunpack.c.l.b16 %v295
    %v2955 = vunpack.c.h.b16 %v295
    %v2956 = vunpack.c.l.b16 %v296
    %v2957 = vunpack.c.h.b16 %v296
    %v2958 = vunpack.c.l.b16 %v297
    %v2959 = vunpack.c.h.b16 %v297
    %v2960 = vunpack.c.l.b16 %v298
    %v2961 = vunpack.c.h.b16 %v298
    %v2962 = vunpack.c.l.b16 %v299
    %v2963 = vunpack.c.h.b16 %v299
    %v2964 = vunpack.c.l.b16 %v300
    %v2965 = vunpack.c.l.b16 %v301
    %v2966 = vunpack.c.h.b16 %v301
    %v2967 = vunpack.c.l.b16 %v302
    %v2968 = vunpack.c.h.b16 %v302
    %v2969 = vunpack.c.l.b16 %v303
    %v2970 = vunpack.c.h.b16 %v303
    %v2971 = vunpack.c.l.b16 %v304
    %v2972 = vunpack.c.h.b16 %v304
    %v2973 = vunpack.c.l.b16 %v305
    %v2974 = vunpack.c.h.b16 %v305
    %v2975 = vunpack.c.l.b16 %v306
    %v2976 = vunpack.c.l.b16 %v307
    %v2977 = vunpack.c.h.b16 %v307
    %v2978 = vunpack.c.l.b16 %v308
    %v2979 = vunpack.c.h.b16 %v308
    %v2980 = vunpack.c.l.b16 %v309
    %v2981 = vunpack.c.h.b16 %v309
    %v2982 = vunpack.c.l.b16 %v310
    %v2983 = vunpack.c.h.b16 %v310
    %v2984 = vunpack.c.l.b16 %v311
    %v2985 = vunpack.c.h.b16 %v311
    %v2986 = vunpack.c.l.b16 %v312
    %v2987 = vunpack.c.l.b16 %v313
    %v2988 = vunpack.c.h.b16 %v313
    %v2989 = vunpack.c.l.b16 %v314
    %v2990 = vunpack.c.h.b16 %v314
    %v2991 = vunpack.c.l.b16 %v315
    %v2992 = vunpack.c.h.b16 %v315
    %v2993 = vunpack.c.l.b16 %v316
    %v2994 = vunpack.c.h.b16 %v316
    %v2995 = vunpack.c.l.b16 %v317
    %v2996 = vunpack.c.h.b16 %v317
    %v2997 = vunpack.c.l.b16 %v318
    %v2998 = vunpack.c.l.b16 %v319
    %v2999 = vunpack.c.h.b16 %v319
    %v3000 = vunpack.c.l.b16 %v320
    %v3001 = vunpack.c.h.b16 %v320
    %v3002 = vunpack.c.l.b16 %v321
    %v3003 = vunpack.c.h.b16 %v321
    %v3004 = vunpack.c.l.b16 %v322
    %v3005 = vunpack.c.h.b16 %v322
    %v3006 = vunpack.c.l.b16 %v323
    %v3007 = vunpack.c.h.b16 %v323
    %v3008 = vunpack.c.l.b16 %v324
    %v3009 = vunpack.c.l.b16 %v325
    %v3010 = vunpack.c.h.b16 %v325
    %v3011 = vunpack.c.l.b16 %v326
    %v3012 = vunpack.c.h.b16 %v326
    %v3013 = vunpack.c.l.b16 %v327
    %v3014 = vunpack.c.h.b16 %v327
    %v3015 = vunpack.c.l.b16 %v328
    %v3016 = vunpack.c.h.b16 %v328
    %v3017 = vunpack.c.l.b16 %v329
    %v3018 = vunpack.c.h.b16 %v329
    %v3019 = vunpack.c.l.b16 %v330
    %v3020 = vunpack.c.l.b16 %v331
    %v3021 = vunpack.c.h.b16 %v331
    %v3022 = vunpack.c.l.b16 %v332
    %v3023 = vunpack.c.h.b16 %v332
    %v3024 = vunpack.c.l.b16 %v333
    %v3025 = vunpack.c.h.b16 %v333
    %v3026 = vunpack.c.l.b16 %v334
    %v3027 = vunpack.c.h.b16 %v334
    %v3028 = vunpack.c.l.b16 %v335
    %v3029 = vunpack.c.h.b16 %v335
    %v3030 = vunpack.c.l.b16 %v336
    %v3031 = vunpack.c.l.b16 %v337
    %v3032 = vunpack.c.h.b16 %v337
    %v3033 = vunpack.c.l.b16 %v338
    %v3034 = vunpack.c.h.b16 %v338
    %v3035 = vunpack.c.l.b16 %v339
    %v3036 = vunpack.c.h.b16 %v339
    %v3037 = vunpack.c.l.b16 %v340
    %v3038 = vunpack.c.h.b16 %v340
    %v3039 = vunpack.c.l.b16 %v341
    %v3040 = vunpack.c.h.b16 %v341
    %v3041 = vunpack.c.l.b16 %v342
    %v3042 = vunpack.c.l.b16 %v343
    %v3043 = vunpack.c.h.b16 %v343
    %v3044 = vunpack.c.l.b16 %v344
    %v3045 = vunpack.c.h.b16 %v344
    %v3046 = vunpack.c.l.b16 %v345
    %v3047 = vunpack.c.h.b16 %v345
    %v3048 = vunpack.c.l.b16 %v346
    %v3049 = vunpack.c.h.b16 %v346
    %v3050 = vunpack.c.l.b16 %v347
    %v3051 = vunpack.c.h.b16 %v347
    %v3052 = vunpack.c.l.b16 %v348
    %v3053 = vunpack.c.l.b16 %v349
    %v3054 = vunpack.c.h.b16 %v349
    %v3055 = vunpack.c.l.b16 %v350
    %v3056 = vunpack.c.h.b16 %v350
    %v3057 = vunpack.c.l.b16 %v351
    %v3058 = vunpack.c.h.b16 %v351
    %v3059 = vunpack.c.l.b16 %v352
    %v3060 = vunpack.c.h.b16 %v352
    %v3061 = vunpack.c.l.b16 %v353
    %v3062 = vunpack.c.h.b16 %v353
    %v3063 = vunpack.c.l.b16 %v354
    %v3064 = vunpack.c.l.b16 %v355
    %v3065 = vunpack.c.h.b16 %v355
    %v3066 = vunpack.c.l.b16 %v356
    %v3067 = vunpack.c.h.b16 %v356
    %v3068 = vunpack.c.l.b16 %v357
    %v3069 = vunpack.c.h.b16 %v357
    %v3070 = vunpack.c.l.b16 %v358
    %v3071 = vunpack.c.h.b16 %v358
    %v3072 = vunpack.c.l.b16 %v359
    %v3073 = vunpack.c.h.b16 %v359
    %v3074 = vunpack.c.l.b16 %v360
    %v3075 = vunpack.c.l.b16 %v361
    %v3076 = vunpack.c.h.b16 %v361
    %v3077 = vunpack.c.l.b16 %v362
    %v3078 = vunpack.c.h.b16 %v362
    %v3079 = vunpack.c.l.b16 %v363
    %v3080 = vunpack.c.h.b16 %v363
    %v3081 = vunpack.c.l.b16 %v364
    %v3082 = vunpack.c.h.b16 %v364
    %v3083 = vunpack.c.l.b16 %v365
    %v3084 = vunpack.c.h.b16 %v365
    %v3085 = vunpack.c.l.b16 %v366
    %v3086 = vunpack.c.l.b16 %v367
    %v3087 = vunpack.c.h.b16 %v367
    %v3088 = vunpack.c.l.b16 %v368
    %v3089 = vunpack.c.h.b16 %v368
    %v3090 = vunpack.c.l.b16 %v369
    %v3091 = vunpack.c.h.b16 %v369
    %v3092 = vunpack.c.l.b16 %v370
    %v3093 = vunpack.c.h.b16 %v370
    %v3094 = vunpack.c.l.b16 %v371
    %v3095 = vunpack.c.h.b16 %v371
    %v3096 = vunpack.c.l.b16 %v372
    %v3097 = vunpack.c.l.b16 %v373
    %v3098 = vunpack.c.h.b16 %v373
    %v3099 = vunpack.c.l.b16 %v374
    %v3100 = vunpack.c.h.b16 %v374
    %v3101 = vunpack.c.l.b16 %v375
    %v3102 = vunpack.c.h.b16 %v375
    %v3103 = vunpack.c.l.b16 %v376
    %v3104 = vunpack.c.h.b16 %v376
    %v3105 = vunpack.c.l.b16 %v377
    %v3106 = vunpack.c.h.b16 %v377
    %v3107 = vunpack.c.l.b16 %v378
    %v3108 = vunpack.c.l.b16 %v379
    %v3109 = vunpack.c.h.b16 %v379
    %v3110 = vunpack.c.l.b16 %v380
    %v3111 = vunpack.c.h.b16 %v380
    %v3112 = vunpack.c.l.b16 %v381
    %v3113 = vunpack.c.h.b16 %v381
    %v3114 = vunpack.c.l.b16 %v382
    %v3115 = vunpack.c.h.b16 %v382
    %v3116 = vunpack.c.l.b16 %v383
    %v3117 = vunpack.c.h.b16 %v383
    %v3118 = vunpack.c.l.b16 %v384
    %v3119 = vunpack.c.l.b16 %v385
    %v3120 = vunpack.c.h.b16 %v385
    %v3121 = vunpack.c.l.b16 %v386
    %v3122 = vunpack.c.h.b16 %v386
    %v3123 = vunpack.c.l.b16 %v387
    %v3124 = vunpack.c.h.b16 %v387
    %v3125 = vunpack.c.l.b16 %v388
    %v3126 = vunpack.c.h.b16 %v388
    %v3127 = vunpack.c.l.b16 %v389
    %v3128 = vunpack.c.h.b16 %v389
    %v3129 = vunpack.c.l.b16 %v390
    %v3130 = vunpack.c.l.b16 %v391
    %v3131 = vunpack.c.h.b16 %v391
    %v3132 = vunpack.c.l.b16 %v392
    %v3133 = vunpack.c.h.b16 %v392
    %v3134 = vunpack.c.l.b16 %v393
    %v3135 = vunpack.c.h.b16 %v393
    %v3136 = vunpack.c.l.b16 %v394
    %v3137 = vunpack.c.h.b16 %v394
    %v3138 = vunpack.c.l.b16 %v395
    %v3139 = vunpack.c.h.b16 %v395
    %v3140 = vunpack.c.l.b16 %v396
    %v3141 = vunpack.c.l.b16 %v397
    %v3142 = vunpack.c.h.b16 %v397
    %v3143 = vunpack.c.l.b16 %v398
    %v3144 = vunpack.c.h.b16 %v398
    %v3145 = vunpack.c.l.b16 %v399
    %v3146 = vunpack.c.h.b16 %v399
    %v3147 = vunpack.c.l.b16 %v400
    %v3148 = vunpack.c.h.b16 %v400
    %v3149 = vunpack.c.l.b16 %v401
    %v3150 = vunpack.c.h.b16 %v401
    %v3151 = vunpack.c.l.b16 %v402
    %v3152 = vunpack.c.l.b16 %v403
    %v3153 = vunpack.c.h.b16 %v403
    %v3154 = vunpack.c.l.b16 %v404
    %v3155 = vunpack.c.h.b16 %v404
    %v3156 = vunpack.c.l.b16 %v405
    %v3157 = vunpack.c.h.b16 %v405
    %v3158 = vunpack.c.l.b16 %v406
    %v3159 = vunpack.c.h.b16 %v406
    %v3160 = vunpack.c.l.b16 %v407
    %v3161 = vunpack.c.h.b16 %v407
    %v3162 = vunpack.c.l.b16 %v408
    %v3163 = vunpack.c.l.b16 %v409
    %v3164 = vunpack.c.h.b16 %v409
    %v3165 = vunpack.c.l.b16 %v410
    %v3166 = vunpack.c.h.b16 %v410
    %v3167 = vunpack.c.l.b16 %v411
    %v3168 = vunpack.c.h.b16 %v411
    %v3169 = vunpack.c.l.b16 %v412
    %v3170 = vunpack.c.h.b16 %v412
    %v3171 = vunpack.c.l.b16 %v413
    %v3172 = vunpack.c.h.b16 %v413
    %v3173 = vunpack.c.l.b16 %v414
    %v3174 = vunpack.c.l.b16 %v415
    %v3175 = vunpack.c.h.b16 %v415
    %v3176 = vunpack.c.l.b16 %v416
    %v3177 = vunpack.c.h.b16 %v416
    %v3178 = vunpack.c.l.b16 %v417
    %v3179 = vunpack.c.h.b16 %v417
    %v3180 = vunpack.c.l.b16 %v418
    %v3181 = vunpack.c.h.b16 %v418
    %v3182 = vunpack.c.l.b16 %v419
    %v3183 = vunpack.c.h.b16 %v419
    %v3184 = vunpack.c.l.b16 %v420
    %v3185 = vunpack.c.l.b16 %v421
    %v3186 = vunpack.c.h.b16 %v421
    %v3187 = vunpack.c.l.b16 %v422
    %v3188 = vunpack.c.h.b16 %v422
    %v3189 = vunpack.c.l.b16 %v423
    %v3190 = vunpack.c.h.b16 %v423
    %v3191 = vunpack.c.l.b16 %v424
    %v3192 = vunpack.c.h.b16 %v424
    %v3193 = vunpack.c.l.b16 %v425
    %v3194 = vunpack.c.h.b16 %v425
    %v3195 = vunpack.c.l.b16 %v426
    %v3196 = vunpack.c.l.b16 %v427
    %v3197 = vunpack.c.h.b16 %v427
    %v3198 = vunpack.c.l.b16 %v428
    %v3199 = vunpack.c.h.b16 %v428
    %v3200 = vunpack.c.l.b16 %v429
    %v3201 = vunpack.c.h.b16 %v429
    %v3202 = vunpack.c.l.b16 %v430
    %v3203 = vunpack.c.h.b16 %v430
    %v3204 = vunpack.c.l.b16 %v431
    %v3205 = vunpack.c.h.b16 %v431
    %v3206 = vunpack.c.l.b16 %v432
    %v3207 = vunpack.c.l.b16 %v433
    %v3208 = vunpack.c.h.b16 %v433
    %v3209 = vunpack.c.l.b16 %v434
    %v3210 = vunpack.c.h.b16 %v434
    %v3211 = vunpack.c.l.b16 %v435
    %v3212 = vunpack.c.h.b16 %v435
    %v3213 = vunpack.c.l.b16 %v436
    %v3214 = vunpack.c.h.b16 %v436
    %v3215 = vunpack.c.l.b16 %v437
    %v3216 = vunpack.c.h.b16 %v437
    %v3217 = vunpack.c.l.b16 %v438
    %v3218 = vunpack.c.l.b16 %v439
    %v3219 = vunpack.c.h.b16 %v439
    %v3220 = vunpack.c.l.b16 %v440
    %v3221 = vunpack.c.h.b16 %v440
    %v3222 = vunpack.c.l.b16 %v441
    %v3223 = vunpack.c.h.b16 %v441
    %v3224 = vunpack.c.l.b16 %v442
    %v3225 = vunpack.c.h.b16 %v442
    %v3226 = vunpack.c.l.b16 %v443
    %v3227 = vunpack.c.h.b16 %v443
    %v3228 = vunpack.c.l.b16 %v444
    %v3229 = vunpack.c.l.b16 %v445
    %v3230 = vunpack.c.h.b16 %v445
    %v3231 = vunpack.c.l.b16 %v446
    %v3232 = vunpack.c.h.b16 %v446
    %v3233 = vunpack.c.l.b16 %v447
    %v3234 = vunpack.c.h.b16 %v447
    %v3235 = vunpack.c.l.b16 %v448
    %v3236 = vunpack.c.h.b16 %v448
    %v3237 = vunpack.c.l.b16 %v449
    %v3238 = vunpack.c.h.b16 %v449
    %v3239 = vunpack.c.l.b16 %v450
    %v3240 = vunpack.c.l.b16 %v451
    %v3241 = vunpack.c.h.b16 %v451
    %v3242 = vunpack.c.l.b16 %v452
    %v3243 = vunpack.c.h.b16 %v452
    %v3244 = vunpack.c.l.b16 %v453
    %v3245 = vunpack.c.h.b16 %v453
    %v3246 = vunpack.c.l.b16 %v454
    %v3247 = vunpack.c.h.b16 %v454
    %v3248 = vunpack.c.l.b16 %v455
    %v3249 = vunpack.c.h.b16 %v455
    %v3250 = vunpack.c.l.b16 %v456
    %v3251 = vunpack.c.l.b16 %v457
    %v3252 = vunpack.c.h.b16 %v457
    %v3253 = vunpack.c.l.b16 %v458
    %v3254 = vunpack.c.h.b16 %v458
    %v3255 = vunpack.c.l.b16 %v459
    %v3256 = vunpack.c.h.b16 %v459
    %v3257 = vunpack.c.l.b16 %v460
    %v3258 = vunpack.c.h.b16 %v460
    %v3259 = vunpack.c.l.b16 %v461
    %v3260 = vunpack.c.h.b16 %v461
    %v3261 = vunpack.c.l.b16 %v462
    %v3262 = vunpack.c.l.b16 %v463
    %v3263 = vunpack.c.h.b16 %v463
    %v3264 = vunpack.c.l.b16 %v464
    %v3265 = vunpack.c.h.b16 %v464
    %v3266 = vunpack.c.l.b16 %v465
    %v3267 = vunpack.c.h.b16 %v465
    %v3268 = vunpack.c.l.b16 %v466
    %v3269 = vunpack.c.h.b16 %v466
    %v3270 = vunpack.c.l.b16 %v467
    %v3271 = vunpack.c.h.b16 %v467
    %v3272 = vunpack.c.l.b16 %v468
    %v3273 = vunpack.c.l.b16 %v469
    %v3274 = vunpack.c.h.b16 %v469
    %v3275 = vunpack.c.l.b16 %v470
    %v3276 = vunpack.c.h.b16 %v470
    %v3277 = vunpack.c.l.b16 %v471
    %v3278 = vunpack.c.h.b16 %v471
    %v3279 = vunpack.c.l.b16 %v472
    %v3280 = vunpack.c.h.b16 %v472
    %v3281 = vunpack.c.l.b16 %v473
    %v3282 = vunpack.c.h.b16 %v473
    %v3283 = vunpack.c.l.b16 %v474
    %v3284 = vunpack.c.l.b16 %v475
    %v3285 = vunpack.c.h.b16 %v475
    %v3286 = vunpack.c.l.b16 %v476
    %v3287 = vunpack.c.h.b16 %v476
    %v3288 = vunpack.c.l.b16 %v477
    %v3289 = vunpack.c.h.b16 %v477
    %v3290 = vunpack.c.l.b16 %v478
    %v3291 = vunpack.c.h.b16 %v478
    %v3292 = vunpack.c.l.b16 %v479
    %v3293 = vunpack.c.h.b16 %v479
    %v3294 = vunpack.c.l.b16 %v480
    %v3295 = vunpack.c.l.b16 %v481
    %v3296 = vunpack.c.h.b16 %v481
    %v3297 = vunpack.c.l.b16 %v482
    %v3298 = vunpack.c.h.b16 %v482
    %v3299 = vunpack.c.l.b16 %v483
    %v3300 = vunpack.c.h.b16 %v483
    %v3301 = vunpack.c.l.b16 %v484
    %v3302 = vunpack.c.h.b16 %v484
    %v3303 = vunpack.c.l.b16 %v485
    %v3304 = vunpack.c.h.b16 %v485
    %v3305 = vunpack.c.l.b16 %v486
    %v3306 = vunpack.c.l.b16 %v487
    %v3307 = vunpack.c.h.b16 %v487
    %v3308 = vunpack.c.l.b16 %v488
    %v3309 = vunpack.c.h.b16 %v488
    %v3310 = vunpack.c.l.b16 %v489
    %v3311 = vunpack.c.h.b16 %v489
    %v3312 = vunpack.c.l.b16 %v490
    %v3313 = vunpack.c.h.b16 %v490
    %v3314 = vunpack.c.l.b16 %v491
    %v3315 = vunpack.c.h.b16 %v491
    %v3316 = vunpack.c.l.b16 %v492
    %v3317 = vunpack.c.l.b16 %v493
    %v3318 = vunpack.c.h.b16 %v493
    %v3319 = vunpack.c.l.b16 %v494
    %v3320 = vunpack.c.h.b16 %v494
    %v3321 = vunpack.c.l.b16 %v495
    %v3322 = vunpack.c.h.b16 %v495
    %v3323 = vunpack.c.l.b16 %v496
    %v3324 = vunpack.c.h.b16 %v496
    %v3325 = vunpack.c.l.b16 %v497
    %v3326 = vunpack.c.h.b16 %v497
    %v3327 = vunpack.c.l.b16 %v498
    %v3328 = vunpack.c.l.b16 %v499
    %v3329 = vunpack.c.h.b16 %v499
    %v3330 = vunpack.c.l.b16 %v500
    %v3331 = vunpack.c.h.b16 %v500
    %v3332 = vunpack.c.l.b16 %v501
    %v3333 = vunpack.c.h.b16 %v501
    %v3334 = vunpack.c.l.b16 %v502
    %v3335 = vunpack.c.h.b16 %v502
    %v3336 = vunpack.c.l.b16 %v503
    %v3337 = vunpack.c.h.b16 %v503
    %v3338 = vunpack.c.l.b16 %v504
    %v3339 = vunpack.c.l.b16 %v505
    %v3340 = vunpack.c.h.b16 %v505
    %v3341 = vunpack.c.l.b16 %v506
    %v3342 = vunpack.c.h.b16 %v506
    %v3343 = vunpack.c.l.b16 %v507
    %v3344 = vunpack.c.h.b16 %v507
    %v3345 = vunpack.c.l.b16 %v508
    %v3346 = vunpack.c.h.b16 %v508
    %v3347 = vunpack.c.l.b16 %v509
    %v3348 = vunpack.c.h.b16 %v509
    %v3349 = vunpack.c.l.b16 %v510
    %v3350 = vunpack.c.l.b16 %v511
    %v3351 = vunpack.c.h.b16 %v511
    %v3352 = vunpack.c.l.b16 %v512
    %v3353 = vunpack.c.h.b16 %v512
    %v3354 = vunpack.c.l.b16 %v513
    %v3355 = vunpack.c.h.b16 %v513
    %v3356 = vunpack.c.l.b16 %v514
    %v3357 = vunpack.c.h.b16 %v514
    %v3358 = vunpack.c.l.b16 %v515
    %v3359 = vunpack.c.h.b16 %v515
    %v3360 = vunpack.c.l.b16 %v516
    %v3361 = vunpack.c.l.b16 %v517
    %v3362 = vunpack.c.h.b16 %v517
    %v3363 = vunpack.c.l.b16 %v518
    %v3364 = vunpack.c.h.b16 %v518
    %v3365 = vunpack.c.l.b16 %v519
    %v3366 = vunpack.c.h.b16 %v519
    %v3367 = vunpack.c.l.b16 %v520
    %v3368 = vunpack.c.h.b16 %v520
    %v3369 = vunpack.c.l.b16 %v521
    %v3370 = vunpack.c.h.b16 %v521
    %v3371 = vunpack.c.l.b16 %v522
    %v3372 = vunpack.c.l.b16 %v523
    %v3373 = vunpack.c.h.b16 %v523
    %v3374 = vunpack.c.l.b16 %v524
    %v3375 = vunpack.c.h.b16 %v524
    %v3376 = vunpack.c.l.b16 %v525
    %v3377 = vunpack.c.h.b16 %v525
    %v3378 = vunpack.c.l.b16 %v526
    %v3379 = vunpack.c.h.b16 %v526
    %v3380 = vunpack.c.l.b16 %v527
    %v3381 = vunpack.c.h.b16 %v527
    %v3382 = vunpack.c.l.b16 %v528
    %v3383 = vunpack.c.l.b16 %v529
    %v3384 = vunpack.c.h.b16 %v529
    %v3385 = vunpack.c.l.b16 %v530
    %v3386 = vunpack.c.h.b16 %v530
    %v3387 = vunpack.c.l.b16 %v531
    %v3388 = vunpack.c.h.b16 %v531
    %v3389 = vunpack.c.l.b16 %v532
    %v3390 = vunpack.c.h.b16 %v532
    %v3391 = vunpack.c.l.b16 %v533
    %v3392 = vunpack.c.h.b16 %v533
    %v3393 = vunpack.c.l.b16 %v534
    %v3394 = vunpack.c.l.b16 %v535
    %v3395 = vunpack.c.h.b16 %v535
    %v3396 = vunpack.c.l.b16 %v536
    %v3397 = vunpack.c.h.b16 %v536
    %v3398 = vunpack.c.l.b16 %v537
    %v3399 = vunpack.c.h.b16 %v537
    %v3400 = vunpack.c.l.b16 %v538
    %v3401 = vunpack.c.h.b16 %v538
    %v3402 = vunpack.c.l.b16 %v539
    %v3403 = vunpack.c.h.b16 %v539
    %v3404 = vunpack.c.l.b16 %v540
    %v3405 = vunpack.c.l.b16 %v541
    %v3406 = vunpack.c.h.b16 %v541
    %v3407 = vunpack.c.l.b16 %v542
    %v3408 = vunpack.c.h.b16 %v542
    %v3409 = vunpack.c.l.b16 %v543
    %v3410 = vunpack.c.h.b16 %v543
    %v3411 = vunpack.c.l.b16 %v544
    %v3412 = vunpack.c.h.b16 %v544
    %v3413 = vunpack.c.l.b16 %v545
    %v3414 = vunpack.c.h.b16 %v545
    %v3415 = vunpack.c.l.b16 %v546
    %v3416 = vunpack.c.l.b16 %v547
    %v3417 = vunpack.c.h.b16 %v547
    %v3418 = vunpack.c.l.b16 %v548
    %v3419 = vunpack.c.h.b16 %v548
    %v3420 = vunpack.c.l.b16 %v549
    %v3421 = vunpack.c.h.b16 %v549
    %v3422 = vunpack.c.l.b16 %v550
    %v3423 = vunpack.c.h.b16 %v550
    %v3424 = vunpack.c.l.b16 %v551
    %v3425 = vunpack.c.h.b16 %v551
    %v3426 = vunpack.c.l.b16 %v552
    %v3427 = vunpack.c.l.b16 %v553
    %v3428 = vunpack.c.h.b16 %v553
    %v3429 = vunpack.c.l.b16 %v554
    %v3430 = vunpack.c.h.b16 %v554
    %v3431 = vunpack.c.l.b16 %v555
    %v3432 = vunpack.c.h.b16 %v555
    %v3433 = vunpack.c.l.b16 %v556
    %v3434 = vunpack.c.h.b16 %v556
    %v3435 = vunpack.c.l.b16 %v557
    %v3436 = vunpack.c.h.b16 %v557
    %v3437 = vunpack.c.l.b16 %v558
    %v3438 = vunpack.c.l.b16 %v559
    %v3439 = vunpack.c.h.b16 %v559
    %v3440 = vunpack.c.l.b16 %v560
    %v3441 = vunpack.c.h.b16 %v560
    %v3442 = vunpack.c.l.b16 %v561
    %v3443 = vunpack.c.h.b16 %v561
    %v3444 = vunpack.c.l.b16 %v562
    %v3445 = vunpack.c.h.b16 %v562
    %v3446 = vunpack.c.l.b16 %v563
    %v3447 = vunpack.c.h.b16 %v563
    %v3448 = vunpack.c.l.b16 %v564
    %v3449 = vunpack.c.l.b16 %v565
    %v3450 = vunpack.c.h.b16 %v565
    %v3451 = vunpack.c.l.b16 %v566
    %v3452 = vunpack.c.h.b16 %v566
    %v3453 = vunpack.c.l.b16 %v567
    %v3454 = vunpack.c.h.b16 %v567
    %v3455 = vunpack.c.l.b16 %v568
    %v3456 = vunpack.c.h.b16 %v568
    %v3457 = vunpack.c.l.b16 %v569
    %v3458 = vunpack.c.h.b16 %v569
    %v3459 = vunpack.c.l.b16 %v570
    %v3460 = vunpack.c.l.b16 %v571
    %v3461 = vunpack.c.h.b16 %v571
    %v3462 = vunpack.c.l.b16 %v572
    %v3463 = vunpack.c.h.b16 %v572
    %v3464 = vunpack.c.l.b16 %v573
    %v3465 = vunpack.c.h.b16 %v573
    %v3466 = vunpack.c.l.b16 %v574
    %v3467 = vunpack.c.h.b16 %v574
    %v3468 = vunpack.c.l.b16 %v575
    %v3469 = vunpack.c.h.b16 %v575
    %v3470 = vunpack.c.l.b16 %v576
    %v3471 = vunpack.c.l.b16 %v577
    %v3472 = vunpack.c.h.b16 %v577
    %v3473 = vunpack.c.l.b16 %v578
    %v3474 = vunpack.c.h.b16 %v578
    %v3475 = vunpack.c.l.b16 %v579
    %v3476 = vunpack.c.h.b16 %v579
    %v3477 = vunpack.c.l.b16 %v580
    %v3478 = vunpack.c.h.b16 %v580
    %v3479 = vunpack.c.l.b16 %v581
    %v3480 = vunpack.c.h.b16 %v581
    %v3481 = vunpack.c.l.b16 %v582
    %v3482 = vunpack.c.l.b16 %v583
    %v3483 = vunpack.c.h.b16 %v583
    %v3484 = vunpack.c.l.b16 %v584
    %v3485 = vunpack.c.h.b16 %v584
    %v3486 = vunpack.c.l.b16 %v585
    %v3487 = vunpack.c.h.b16 %v585
    %v3488 = vunpack.c.l.b16 %v586
    %v3489 = vunpack.c.h.b16 %v586
    %v3490 = vunpack.c.l.b16 %v587
    %v3491 = vunpack.c.h.b16 %v587
    %v3492 = vunpack.c.l.b16 %v588
    %v3493 = vunpack.c.l.b16 %v589
    %v3494 = vunpack.c.h.b16 %v589
    %v3495 = vunpack.c.l.b16 %v590
    %v3496 = vunpack.c.h.b16 %v590
    %v3497 = vunpack.c.l.b16 %v591
    %v3498 = vunpack.c.h.b16 %v591
    %v3499 = vunpack.c.l.b16 %v592
    %v3500 = vunpack.c.h.b16 %v592
    %v3501 = vunpack.c.l.b16 %v593
    %v3502 = vunpack.c.h.b16 %v593
    %v3503 = vunpack.c.l.b16 %v594
    %v3504 = vunpack.c.l.b16 %v595
    %v3505 = vunpack.c.h.b16 %v595
    %v3506 = vunpack.c.l.b16 %v596
    %v3507 = vunpack.c.h.b16 %v596
    %v3508 = vunpack.c.l.b16 %v597
    %v3509 = vunpack.c.h.b16 %v597
    %v3510 = vunpack.c.l.b16 %v598
    %v3511 = vunpack.c.h.b16 %v598
    %v3512 = vunpack.c.l.b16 %v599
    %v3513 = vunpack.c.h.b16 %v599
    %v3514 = vunpack.c.l.b16 %v600
    %v3515 = vunpack.c.l.b16 %v601
    %v3516 = vunpack.c.h.b16 %v601
    %v3517 = vunpack.c.l.b16 %v602
    %v3518 = vunpack.c.h.b16 %v602
    %v3519 = vunpack.c.l.b16 %v603
    %v3520 = vunpack.c.h.b16 %v603
    %v3521 = vunpack.c.l.b16 %v604
    %v3522 = vunpack.c.h.b16 %v604
    %v3523 = vunpack.c.l.b16 %v605
    %v3524 = vunpack.c.h.b16 %v605
    %v3525 = vunpack.c.l.b16 %v606
    %v3526 = vunpack.c.l.b16 %v607
    %v3527 = vunpack.c.h.b16 %v607
    %v3528 = vunpack.c.l.b16 %v608
    %v3529 = vunpack.c.h.b16 %v608
    %v3530 = vunpack.c.l.b16 %v609
    %v3531 = vunpack.c.h.b16 %v609
    %v3532 = vunpack.c.l.b16 %v610
    %v3533 = vunpack.c.h.b16 %v610
    %v3534 = vunpack.c.l.b16 %v611
    %v3535 = vunpack.c.h.b16 %v611
    %v3536 = vunpack.c.l.b16 %v612
    %v3537 = vunpack.c.l.b16 %v613
    %v3538 = vunpack.c.h.b16 %v613
    %v3539 = vunpack.c.l.b16 %v614
    %v3540 = vunpack.c.h.b16 %v614
    %v3541 = vunpack.c.l.b16 %v615
    %v3542 = vunpack.c.h.b16 %v615
    %v3543 = vunpack.c.l.b16 %v616
    %v3544 = vunpack.c.h.b16 %v616
    %v3545 = vunpack.c.l.b16 %v617
    %v3546 = vunpack.c.h.b16 %v617
    %v3547 = vunpack.c.l.b16 %v618
    %v3548 = vunpack.c.l.b16 %v619
    %v3549 = vunpack.c.h.b16 %v619
    %v3550 = vunpack.c.l.b16 %v620
    %v3551 = vunpack.c.h.b16 %v620
    %v3552 = vunpack.c.l.b16 %v621
    %v3553 = vunpack.c.h.b16 %v621
    %v3554 = vunpack.c.l.b16 %v622
    %v3555 = vunpack.c.h.b16 %v622
    %v3556 = vunpack.c.l.b16 %v623
    %v3557 = vunpack.c.h.b16 %v623
    %v3558 = vunpack.c.l.b16 %v624
    %v3559 = vunpack.c.l.b16 %v625
    %v3560 = vunpack.c.h.b16 %v625
    %v3561 = vunpack.c.l.b16 %v626
    %v3562 = vunpack.c.h.b16 %v626
    %v3563 = vunpack.c.l.b16 %v627
    %v3564 = vunpack.c.h.b16 %v627
    %v3565 = vunpack.c.l.b16 %v628
    %v3566 = vunpack.c.h.b16 %v628
    %v3567 = vunpack.c.l.b16 %v629
    %v3568 = vunpack.c.h.b16 %v629
    %v3569 = vunpack.c.l.b16 %v630
    %v3570 = vunpack.c.l.b16 %v631
    %v3571 = vunpack.c.h.b16 %v631
    %v3572 = vunpack.c.l.b16 %v632
    %v3573 = vunpack.c.h.b16 %v632
    %v3574 = vunpack.c.l.b16 %v633
    %v3575 = vunpack.c.h.b16 %v633
    %v3576 = vunpack.c.l.b16 %v634
    %v3577 = vunpack.c.h.b16 %v634
    %v3578 = vunpack.c.l.b16 %v635
    %v3579 = vunpack.c.h.b16 %v635
    %v3580 = vunpack.c.l.b16 %v636
    %v3581 = vunpack.c.l.b16 %v637
    %v3582 = vunpack.c.h.b16 %v637
    %v3583 = vunpack.c.l.b16 %v638
    %v3584 = vunpack.c.h.b16 %v638
    %v3585 = vunpack.c.l.b16 %v639
    %v3586 = vunpack.c.h.b16 %v639
    %v3587 = vunpack.c.l.b16 %v640
    %v3588 = vunpack.c.h.b16 %v640
    %v3589 = vunpack.c.l.b16 %v641
    %v3590 = vunpack.c.h.b16 %v641
    %v3591 = vunpack.c.l.b16 %v642
    %v3592 = vunpack.c.l.b16 %v643
    %v3593 = vunpack.c.h.b16 %v643
    %v3594 = vunpack.c.l.b16 %v644
    %v3595 = vunpack.c.h.b16 %v644
    %v3596 = vunpack.c.l.b16 %v645
    %v3597 = vunpack.c.h.b16 %v645
    %v3598 = vunpack.c.l.b16 %v646
    %v3599 = vunpack.c.h.b16 %v646
    %v3600 = vunpack.c.l.b16 %v647
    %v3601 = vunpack.c.h.b16 %v647
    %v3602 = vunpack.c.l.b16 %v648
    %v3603 = vunpack.c.l.b16 %v649
    %v3604 = vunpack.c.h.b16 %v649
    %v3605 = vunpack.c.l.b16 %v650
    %v3606 = vunpack.c.h.b16 %v650
    %v3607 = vunpack.c.l.b16 %v651
    %v3608 = vunpack.c.h.b16 %v651
    %v3609 = vunpack.c.l.b16 %v652
    %v3610 = vunpack.c.h.b16 %v652
    %v3611 = vunpack.c.l.b16 %v653
    %v3612 = vunpack.c.h.b16 %v653
    %v3613 = vunpack.c.l.b16 %v654
    %v3614 = vunpack.c.l.b16 %v655
    %v3615 = vunpack.c.h.b16 %v655
    %v3616 = vunpack.c.l.b16 %v656
    %v3617 = vunpack.c.h.b16 %v656
    %v3618 = vunpack.c.l.b16 %v657
    %v3619 = vunpack.c.h.b16 %v657
    %v3620 = vunpack.c.l.b16 %v658
    %v3621 = vunpack.c.h.b16 %v658
    %v3622 = vunpack.c.l.b16 %v659
    %v3623 = vunpack.c.h.b16 %v659
    %v3624 = vunpack.c.l.b16 %v660
    %v3625 = vunpack.c.l.b16 %v661
    %v3626 = vunpack.c.h.b16 %v661
    %v3627 = vunpack.c.l.b16 %v662
    %v3628 = vunpack.c.h.b16 %v662
    %v3629 = vunpack.c.l.b16 %v663
    %v3630 = vunpack.c.h.b16 %v663
    %v3631 = vunpack.c.l.b16 %v664
    %v3632 = vunpack.c.h.b16 %v664
    %v3633 = vunpack.c.l.b16 %v665
    %v3634 = vunpack.c.h.b16 %v665
    %v3635 = vunpack.c.l.b16 %v666
    %v3636 = vunpack.c.l.b16 %v667
    %v3637 = vunpack.c.h.b16 %v667
    %v3638 = vunpack.c.l.b16 %v668
    %v3639 = vunpack.c.h.b16 %v668
    %v3640 = vunpack.c.l.b16 %v669
    %v3641 = vunpack.c.h.b16 %v669
    %v3642 = vunpack.c.l.b16 %v670
    %v3643 = vunpack.c.h.b16 %v670
    %v3644 = vunpack.c.l.b16 %v671
    %v3645 = vunpack.c.h.b16 %v671
    %v3646 = vunpack.c.l.b16 %v672
    %v3647 = vunpack.c.l.b16 %v673
    %v3648 = vunpack.c.h.b16 %v673
    %v3649 = vunpack.c.l.b16 %v674
    %v3650 = vunpack.c.h.b16 %v674
    %v3651 = vunpack.c.l.b16 %v675
    %v3652 = vunpack.c.h.b16 %v675
    %v3653 = vunpack.c.l.b16 %v676
    %v3654 = vunpack.c.h.b16 %v676
    %v3655 = vunpack.c.l.b16 %v677
    %v3656 = vunpack.c.h.b16 %v677
    %v3657 = vunpack.c.l.b16 %v678
    %v3658 = vunpack.c.l.b16 %v679
    %v3659 = vunpack.c.h.b16 %v679
    %v3660 = vunpack.c.l.b16 %v680
    %v3661 = vunpack.c.h.b16 %v680
    %v3662 = vunpack.c.l.b16 %v681
    %v3663 = vunpack.c.h.b16 %v681
    %v3664 = vunpack.c.l.b16 %v682
    %v3665 = vunpack.c.h.b16 %v682
    %v3666 = vunpack.c.l.b16 %v683
    %v3667 = vunpack.c.h.b16 %v683
    %v3668 = vunpack.c.l.b16 %v684
    %v3669 = vunpack.c.l.b16 %v685
    %v3670 = vunpack.c.h.b16 %v685
    %v3671 = vunpack.c.l.b16 %v686
    %v3672 = vunpack.c.h.b16 %v686
    %v3673 = vunpack.c.l.b16 %v687
    %v3674 = vunpack.c.h.b16 %v687
    %v3675 = vunpack.c.l.b16 %v688
    %v3676 = vunpack.c.h.b16 %v688
    %v3677 = vunpack.c.l.b16 %v689
    %v3678 = vunpack.c.h.b16 %v689
    %v3679 = vunpack.c.l.b16 %v690
    %v3680 = vunpack.c.l.b16 %v691
    %v3681 = vunpack.c.h.b16 %v691
    %v3682 = vunpack.c.l.b16 %v692
    %v3683 = vunpack.c.h.b16 %v692
    %v3684 = vunpack.c.l.b16 %v693
    %v3685 = vunpack.c.h.b16 %v693
    %v3686 = vunpack.c.l.b16 %v694
    %v3687 = vunpack.c.h.b16 %v694
    %v3688 = vunpack.c.l.b16 %v695
    %v3689 = vunpack.c.h.b16 %v695
    %v3690 = vunpack.c.l.b16 %v696
    %v3691 = vunpack.c.l.b16 %v697
    %v3692 = vunpack.c.h.b16 %v697
    %v3693 = vunpack.c.l.b16 %v698
    %v3694 = vunpack.c.h.b16 %v698
    %v3695 = vunpack.c.l.b16 %v699
    %v3696 = vunpack.c.h.b16 %v699
    %v3697 = vunpack.c.l.b16 %v700
    %v3698 = vunpack.c.h.b16 %v700
    %v3699 = vunpack.c.l.b16 %v701
    %v3700 = vunpack.c.h.b16 %v701
    %v3701 = vunpack.c.l.b16 %v702
    %v3702 = vunpack.c.l.b16 %v703
    %v3703 = vunpack.c.h.b16 %v703
    %v3704 = vunpack.c.l.b16 %v704
    %v3705 = vunpack.c.h.b16 %v704
    %v3706 = vunpack.c.l.b16 %v705
    %v3707 = vunpack.c.h.b16 %v705
    %v3708 = vunpack.c.l.b16 %v706
    %v3709 = vunpack.c.h.b16 %v706
    %v3710 = vunpack.c.l.b16 %v707
    %v3711 = vunpack.c.h.b16 %v707
    %v3712 = vunpack.c.l.b16 %v708
    %v3713 = vunpack.c.l.b16 %v709
    %v3714 = vunpack.c.h.b16 %v709
    %v3715 = vunpack.c.l.b16 %v710
    %v3716 = vunpack.c.h.b16 %v710
    %v3717 = vunpack.c.l.b16 %v711
    %v3718 = vunpack.c.h.b16 %v711
    %v3719 = vunpack.c.l.b16 %v712
    %v3720 = vunpack.c.h.b16 %v712
    %v3721 = vunpack.c.l.b16 %v713
    %v3722 = vunpack.c.h.b16 %v713
    %v3723 = vunpack.c.l.b16 %v714
    %v3724 = vunpack.c.l.b16 %v715
    %v3725 = vunpack.c.h.b16 %v715
    %v3726 = vunpack.c.l.b16 %v716
    %v3727 = vunpack.c.h.b16 %v716
    %v3728 = vunpack.c.l.b16 %v717
    %v3729 = vunpack.c.h.b16 %v717
    %v3730 = vunpack.c.l.b16 %v718
    %v3731 = vunpack.c.h.b16 %v718
    %v3732 = vunpack.c.l.b16 %v719
    %v3733 = vunpack.c.h.b16 %v719
    %v3734 = vunpack.c.l.b16 %v720
    %v3735 = vunpack.c.l.b16 %v721
    %v3736 = vunpack.c.h.b16 %v721
    %v3737 = vunpack.c.l.b16 %v722
    %v3738 = vunpack.c.h.b16 %v722
    %v3739 = vunpack.c.l.b16 %v723
    %v3740 = vunpack.c.h.b16 %v723
    %v3741 = vunpack.c.l.b16 %v724
    %v3742 = vunpack.c.h.b16 %v724
    %v3743 = vunpack.c.l.b16 %v725
    %v3744 = vunpack.c.h.b16 %v725
    %v3745 = vunpack.c.l.b16 %v726
    %v3746 = vunpack.c.l.b16 %v727
    %v3747 = vunpack.c.h.b16 %v727
    %v3748 = vunpack.c.l.b16 %v728
    %v3749 = vunpack.c.h.b16 %v728
    %v3750 = vunpack.c.l.b16 %v729
    %v3751 = vunpack.c.h.b16 %v729
    %v3752 = vunpack.c.l.b16 %v730
    %v3753 = vunpack.c.h.b16 %v730
    %v3754 = vunpack.c.l.b16 %v731
    %v3755 = vunpack.c.h.b16 %v731
    %v3756 = vunpack.c.l.b16 %v732
    %v3757 = vunpack.c.l.b16 %v733
    %v3758 = vunpack.c.h.b16 %v733
    %v3759 = vunpack.c.l.b16 %v734
    %v3760 = vunpack.c.h.b16 %v734
    %v3761 = vunpack.c.l.b16 %v735
    %v3762 = vunpack.c.h.b16 %v735
    %v3763 = vunpack.c.l.b16 %v736
    %v3764 = vunpack.c.h.b16 %v736
    %v3765 = vunpack.c.l.b16 %v737
    %v3766 = vunpack.c.h.b16 %v737
    %v3767 = vunpack.c.l.b16 %v738
    %v3768 = vunpack.c.l.b16 %v739
    %v3769 = vunpack.c.h.b16 %v739
    %v3770 = vunpack.c.l.b16 %v740
    %v3771 = vunpack.c.h.b16 %v740
    %v3772 = vunpack.c.l.b16 %v741
    %v3773 = vunpack.c.h.b16 %v741
    %v3774 = vunpack.c.l.b16 %v742
    %v3775 = vunpack.c.h.b16 %v742
    %v3776 = vunpack.c.l.b16 %v743
    %v3777 = vunpack.c.h.b16 %v743
    %v3778 = vunpack.c.l.b16 %v744
    %v3779 = vunpack.c.l.b16 %v745
    %v3780 = vunpack.c.h.b16 %v745
    %v3781 = vunpack.c.l.b16 %v746
    %v3782 = vunpack.c.h.b16 %v746
    %v3783 = vunpack.c.l.b16 %v747
    %v3784 = vunpack.c.h.b16 %v747
    %v3785 = vunpack.c.l.b16 %v748
    %v3786 = vunpack.c.h.b16 %v748
    %v3787 = vunpack.c.l.b16 %v749
    %v3788 = vunpack.c.h.b16 %v749
    %v3789 = vunpack.c.l.b16 %v750
    %v3790 = vunpack.c.l.b16 %v751
    %v3791 = vunpack.c.h.b16 %v751
    %v3792 = vunpack.c.l.b16 %v752
    %v3793 = vunpack.c.h.b16 %v752
    %v3794 = vunpack.c.l.b16 %v753
    %v3795 = vunpack.c.h.b16 %v753
    %v3796 = vunpack.c.l.b16 %v754
    %v3797 = vunpack.c.h.b16 %v754
    %v3798 = vunpack.c.l.b16 %v755
    %v3799 = vunpack.c.h.b16 %v755
    %v3800 = vunpack.c.l.b16 %v756
    %v3801 = vunpack.c.l.b16 %v757
    %v3802 = vunpack.c.h.b16 %v757
    %v3803 = vunpack.c.l.b16 %v758
    %v3804 = vunpack.c.h.b16 %v758
    %v3805 = vunpack.c.l.b16 %v759
    %v3806 = vunpack.c.h.b16 %v759
    %v3807 = vunpack.c.l.b16 %v760
    %v3808 = vunpack.c.h.b16 %v760
    %v3809 = vunpack.c.l.b16 %v761
    %v3810 = vunpack.c.h.b16 %v761
    %v3811 = vunpack.c.l.b16 %v762
    %v3812 = vunpack.c.l.b16 %v763
    %v3813 = vunpack.c.h.b16 %v763
    %v3814 = vunpack.c.l.b16 %v764
    %v3815 = vunpack.c.h.b16 %v764
    %v3816 = vunpack.c.l.b16 %v765
    %v3817 = vunpack.c.h.b16 %v765
    %v3818 = vunpack.c.l.b16 %v766
    %v3819 = vunpack.c.h.b16 %v766
    %v3820 = vunpack.c.l.b16 %v767
    %v3821 = vunpack.c.h.b16 %v767
    %v3822 = vunpack.c.l.b16 %v768
    %v3823 = vunpack.c.l.b16 %v769
    %v3824 = vunpack.c.h.b16 %v769
    %v3825 = vunpack.c.l.b16 %v770
    %v3826 = vunpack.c.h.b16 %v770
    %v3827 = vunpack.c.l.b16 %v771
    %v3828 = vunpack.c.h.b16 %v771
    %v3829 = vunpack.c.l.b16 %v772
    %v3830 = vunpack.c.h.b16 %v772
    %v3831 = vunpack.c.l.b16 %v773
    %v3832 = vunpack.c.h.b16 %v773
    %v3833 = vunpack.c.l.b16 %v774
    %v3834 = vunpack.c.l.b16 %v775
    %v3835 = vunpack.c.h.b16 %v775
    %v3836 = vunpack.c.l.b16 %v776
    %v3837 = vunpack.c.h.b16 %v776
    %v3838 = vunpack.c.l.b16 %v777
    %v3839 = vunpack.c.h.b16 %v777
    %v3840 = vunpack.c.l.b16 %v778
    %v3841 = vunpack.c.h.b16 %v778
    %v3842 = vunpack.c.l.b16 %v779
    %v3843 = vunpack.c.h.b16 %v779
    %v3844 = vunpack.c.l.b16 %v780
    %v3845 = vunpack.c.l.b16 %v781
    %v3846 = vunpack.c.h.b16 %v781
    %v3847 = vunpack.c.l.b16 %v782
    %v3848 = vunpack.c.h.b16 %v782
    %v3849 = vunpack.c.l.b16 %v783
    %v3850 = vunpack.c.h.b16 %v783
    %v3851 = vunpack.c.l.b16 %v784
    %v3852 = vunpack.c.h.b16 %v784
    %v3853 = vunpack.c.l.b16 %v785
    %v3854 = vunpack.c.h.b16 %v785
    %v3855 = vunpack.c.l.b16 %v786
    %v3856 = vunpack.c.l.b16 %v787
    %v3857 = vunpack.c.h.b16 %v787
    %v3858 = vunpack.c.l.b16 %v788
    %v3859 = vunpack.c.h.b16 %v788
    %v3860 = vunpack.c.l.b16 %v789
    %v3861 = vunpack.c.h.b16 %v789
    %v3862 = vunpack.c.l.b16 %v790
    %v3863 = vunpack.c.h.b16 %v790
    %v3864 = vunpack.c.l.b16 %v791
    %v3865 = vunpack.c.h.b16 %v791
    %v3866 = vunpack.c.l.b16 %v792
    %v3867 = vunpack.c.l.b16 %v793
    %v3868 = vunpack.c.h.b16 %v793
    %v3869 = vunpack.c.l.b16 %v794
    %v3870 = vunpack.c.h.b16 %v794
    %v3871 = vunpack.c.l.b16 %v795
    %v3872 = vunpack.c.h.b16 %v795
    %v3873 = vunpack.c.l.b16 %v796
    %v3874 = vunpack.c.h.b16 %v796
    %v3875 = vunpack.c.l.b16 %v797
    %v3876 = vunpack.c.h.b16 %v797
    %v3877 = vunpack.c.l.b16 %v798
    %v3878 = vunpack.c.l.b16 %v799
    %v3879 = vunpack.c.h.b16 %v799
    %v3880 = vunpack.c.l.b16 %v800
    %v3881 = vunpack.c.h.b16 %v800
    %v3882 = vunpack.c.l.b16 %v801
    %v3883 = vunpack.c.h.b16 %v801
    %v3884 = vunpack.c.l.b16 %v802
    %v3885 = vunpack.c.h.b16 %v802
    %v3886 = vunpack.c.l.b16 %v803
    %v3887 = vunpack.c.h.b16 %v803
    %v3888 = vunpack.c.l.b16 %v804
    %v3889 = vunpack.c.l.b16 %v805
    %v3890 = vunpack.c.h.b16 %v805
    %v3891 = vunpack.c.l.b16 %v806
    %v3892 = vunpack.c.h.b16 %v806
    %v3893 = vunpack.c.l.b16 %v807
    %v3894 = vunpack.c.h.b16 %v807
    %v3895 = vunpack.c.l.b16 %v808
    %v3896 = vunpack.c.h.b16 %v808
    %v3897 = vunpack.c.l.b16 %v809
    %v3898 = vunpack.c.h.b16 %v809
    %v3899 = vunpack.c.l.b16 %v810
    %v3900 = vunpack.c.l.b16 %v811
    %v3901 = vunpack.c.h.b16 %v811
    %v3902 = vunpack.c.l.b16 %v812
    %v3903 = vunpack.c.h.b16 %v812
    %v3904 = vunpack.c.l.b16 %v813
    %v3905 = vunpack.c.h.b16 %v813
    %v3906 = vunpack.c.l.b16 %v814
    %v3907 = vunpack.c.h.b16 %v814
    %v3908 = vunpack.c.l.b16 %v815
    %v3909 = vunpack.c.h.b16 %v815
    %v3910 = vunpack.c.l.b16 %v816
    %v3911 = vunpack.c.l.b16 %v817
    %v3912 = vunpack.c.h.b16 %v817
    %v3913 = vunpack.c.l.b16 %v818
    %v3914 = vunpack.c.h.b16 %v818
    %v3915 = vunpack.c.l.b16 %v819
    %v3916 = vunpack.c.h.b16 %v819
    %v3917 = vunpack.c.l.b16 %v820
    %v3918 = vunpack.c.h.b16 %v820
    %v3919 = vunpack.c.l.b16 %v821
    %v3920 = vunpack.c.h.b16 %v821
    %v3921 = vunpack.c.l.b16 %v822
    %v3922 = vunpack.c.l.b16 %v823
    %v3923 = vunpack.c.h.b16 %v823
    %v3924 = vunpack.c.l.b16 %v824
    %v3925 = vunpack.c.h.b16 %v824
    %v3926 = vunpack.c.l.b16 %v825
    %v3927 = vunpack.c.h.b16 %v825
    %v3928 = vunpack.c.l.b16 %v826
    %v3929 = vunpack.c.h.b16 %v826
    %v3930 = vunpack.c.l.b16 %v827
    %v3931 = vunpack.c.h.b16 %v827
    %v3932 = vunpack.c.l.b16 %v828
    %v3933 = vunpack.c.l.b16 %v829
    %v3934 = vunpack.c.h.b16 %v829
    %v3935 = vunpack.c.l.b16 %v830
    %v3936 = vunpack.c.h.b16 %v830
    %v3937 = vunpack.c.l.b16 %v831
    %v3938 = vunpack.c.h.b16 %v831
    %v3939 = vunpack.c.l.b16 %v832
    %v3940 = vunpack.c.h.b16 %v832
    %v3941 = vunpack.c.l.b16 %v833
    %v3942 = vunpack.c.h.b16 %v833
    %v3943 = vunpack.c.l.b16 %v834
    %v3944 = vunpack.c.l.b16 %v835
    %v3945 = vunpack.c.h.b16 %v835
    %v3946 = vunpack.c.l.b16 %v836
    %v3947 = vunpack.c.h.b16 %v836
    %v3948 = vunpack.c.l.b16 %v837
    %v3949 = vunpack.c.h.b16 %v837
    %v3950 = vunpack.c.l.b16 %v838
    %v3951 = vunpack.c.h.b16 %v838
    %v3952 = vunpack.c.l.b16 %v839
    %v3953 = vunpack.c.h.b16 %v839
    %v3954 = vunpack.c.l.b16 %v840
    %v3955 = vunpack.c.l.b16 %v841
    %v3956 = vunpack.c.h.b16 %v841
    %v3957 = vunpack.c.l.b16 %v842
    %v3958 = vunpack.c.h.b16 %v842
    %v3959 = vunpack.c.l.b16 %v843
    %v3960 = vunpack.c.h.b16 %v843
    %v3961 = vunpack.c.l.b16 %v844
    %v3962 = vunpack.c.h.b16 %v844
    %v3963 = vunpack.c.l.b16 %v845
    %v3964 = vunpack.c.h.b16 %v845
    %v3965 = vunpack.c.l.b16 %v846
    %v3966 = vunpack.c.l.b16 %v847
    %v3967 = vunpack.c.h.b16 %v847
    %v3968 = vunpack.c.l.b16 %v848
    %v3969 = vunpack.c.h.b16 %v848
    %v3970 = vunpack.c.l.b16 %v849
    %v3971 = vunpack.c.h.b16 %v849
    %v3972 = vunpack.c.l.b16 %v850
    %v3973 = vunpack.c.h.b16 %v850
    %v3974 = vunpack.c.l.b16 %v851
    %v3975 = vunpack.c.h.b16 %v851
    %v3976 = vunpack.c.l.b16 %v852
    %v3977 = vunpack.c.l.b16 %v853
    %v3978 = vunpack.c.h.b16 %v853
    %v3979 = vunpack.c.l.b16 %v854
    %v3980 = vunpack.c.h.b16 %v854
    %v3981 = vunpack.c.l.b16 %v855
    %v3982 = vunpack.c.h.b16 %v855
    %v3983 = vunpack.c.l.b16 %v856
    %v3984 = vunpack.c.h.b16 %v856
    %v3985 = vunpack.c.l.b16 %v857
    %v3986 = vunpack.c.h.b16 %v857
    %v3987 = vunpack.c.l.b16 %v858
    %v3988 = vunpack.c.l.b16 %v859
    %v3989 = vunpack.c.h.b16 %v859
    %v3990 = vunpack.c.l.b16 %v860
    %v3991 = vunpack.c.h.b16 %v860
    %v3992 = vunpack.c.l.b16 %v861
    %v3993 = vunpack.c.h.b16 %v861
    %v3994 = vunpack.c.l.b16 %v862
    %v3995 = vunpack.c.h.b16 %v862
    %v3996 = vunpack.c.l.b16 %v863
    %v3997 = vunpack.c.h.b16 %v863
    %v3998 = vunpack.c.l.b16 %v864
    %v3999 = vunpack.c.l.b16 %v865
    %v4000 = vunpack.c.h.b16 %v865
    %v4001 = vunpack.c.l.b16 %v866
    %v4002 = vunpack.c.h.b16 %v866
    %v4003 = vunpack.c.l.b16 %v867
    %v4004 = vunpack.c.h.b16 %v867
    %v4005 = vunpack.c.l.b16 %v868
    %v4006 = vunpack.c.h.b16 %v868
    %v4007 = vunpack.c.l.b16 %v869
    %v4008 = vunpack.c.h.b16 %v869
    %v4009 = vunpack.c.l.b16 %v870
    %v4010 = vunpack.c.l.b16 %v871
    %v4011 = vunpack.c.h.b16 %v871
    %v4012 = vunpack.c.l.b16 %v872
    %v4013 = vunpack.c.h.b16 %v872
    %v4014 = vunpack.c.l.b16 %v873
    %v4015 = vunpack.c.h.b16 %v873
    %v4016 = vunpack.c.l.b16 %v874
    %v4017 = vunpack.c.h.b16 %v874
    %v4018 = vunpack.c.l.b16 %v875
    %v4019 = vunpack.c.h.b16 %v875
    %v4020 = vunpack.c.l.b16 %v876
    %v4021 = vunpack.c.l.b16 %v877
    %v4022 = vunpack.c.h.b16 %v877
    %v4023 = vunpack.c.l.b16 %v878
    %v4024 = vunpack.c.h.b16 %v878
    %v4025 = vunpack.c.l.b16 %v879
    %v4026 = vunpack.c.h.b16 %v879
    %v4027 = vunpack.c.l.b16 %v880
    %v4028 = vunpack.c.h.b16 %v880
    %v4029 = vunpack.c.l.b16 %v881
    %v4030 = vunpack.c.h.b16 %v881
    %v4031 = vunpack.c.l.b16 %v882
    %v4032 = vunpack.c.l.b16 %v883
    %v4033 = vunpack.c.h.b16 %v883
    %v4034 = vunpack.c.l.b16 %v884
    %v4035 = vunpack.c.h.b16 %v884
    %v4036 = vunpack.c.l.b16 %v885
    %v4037 = vunpack.c.h.b16 %v885
    %v4038 = vunpack.c.l.b16 %v886
    %v4039 = vunpack.c.h.b16 %v886
    %v4040 = vunpack.c.l.b16 %v887
    %v4041 = vunpack.c.h.b16 %v887
    %v4042 = vunpack.c.l.b16 %v888
    %v4043 = vunpack.c.l.b16 %v889
    %v4044 = vunpack.c.h.b16 %v889
    %v4045 = vunpack.c.l.b16 %v890
    %v4046 = vunpack.c.h.b16 %v890
    %v4047 = vunpack.c.l.b16 %v891
    %v4048 = vunpack.c.h.b16 %v891
    %v4049 = vunpack.c.l.b16 %v892
    %v4050 = vunpack.c.h.b16 %v892
    %v4051 = vunpack.c.l.b16 %v893
    %v4052 = vunpack.c.h.b16 %v893
    %v4053 = vunpack.c.l.b16 %v894
    %v4054 = vunpack.c.l.b16 %v895
    %v4055 = vunpack.c.h.b16 %v895
    %v4056 = vunpack.c.l.b16 %v896
    %v4057 = vunpack.c.h.b16 %v896
    %v4058 = vunpack.c.l.b16 %v897
    %v4059 = vunpack.c.h.b16 %v897
    %v4060 = vunpack.c.l.b16 %v898
    %v4061 = vunpack.c.h.b16 %v898
    %v4062 = vunpack.c.l.b16 %v899
    %v4063 = vunpack.c.h.b16 %v899
    %v4064 = vunpack.c.l.b16 %v900
    %v4065 = vunpack.c.l.b16 %v901
    %v4066 = vunpack.c.h.b16 %v901
    %v4067 = vunpack.c.l.b16 %v902
    %v4068 = vunpack.c.h.b16 %v902
    %v4069 = vunpack.c.l.b16 %v903
    %v4070 = vunpack.c.h.b16 %v903
    %v4071 = vunpack.c.l.b16 %v904
    %v4072 = vunpack.c.h.b16 %v904
    %v4073 = vunpack.c.l.b16 %v905
    %v4074 = vunpack.c.h.b16 %v905
    %v4075 = vunpack.c.l.b16 %v906
    %v4076 = vunpack.c.l.b16 %v907
    %v4077 = vunpack.c.h.b16 %v907
    %v4078 = vunpack.c.l.b16 %v908
    %v4079 = vunpack.c.h.b16 %v908
    %v4080 = vunpack.c.l.b16 %v909
    %v4081 = vunpack.c.h.b16 %v909
    %v4082 = vunpack.c.l.b16 %v910
    %v4083 = vunpack.c.h.b16 %v910
    %v4084 = vunpack.c.l.b16 %v911
    %v4085 = vunpack.c.h.b16 %v911
    %v4086 = vunpack.c.l.b16 %v912
    %v4087 = vunpack.c.l.b16 %v913
    %v4088 = vunpack.c.h.b16 %v913
    %v4089 = vunpack.c.l.b16 %v914
    %v4090 = vunpack.c.h.b16 %v914
    %v4091 = vunpack.c.l.b16 %v915
    %v4092 = vunpack.c.h.b16 %v915
    %v4093 = vunpack.c.l.b16 %v916
    %v4094 = vunpack.c.h.b16 %v916
    %v4095 = vunpack.c.l.b16 %v917
    %v4096 = vunpack.c.h.b16 %v917
    %v4097 = vunpack.c.l.b16 %v918
    %v4098 = vunpack.c.l.b16 %v919
    %v4099 = vunpack.c.h.b16 %v919
    %v4100 = vunpack.c.l.b16 %v920
    %v4101 = vunpack.c.h.b16 %v920
    %v4102 = vunpack.c.l.b16 %v921
    %v4103 = vunpack.c.h.b16 %v921
    %v4104 = vunpack.c.l.b16 %v922
    %v4105 = vunpack.c.h.b16 %v922
    %v4106 = vunpack.c.l.b16 %v923
    %v4107 = vunpack.c.h.b16 %v923
    %v4108 = vunpack.c.l.b16 %v924
    %v4109 = vunpack.c.l.b16 %v925
    %v4110 = vunpack.c.h.b16 %v925
    %v4111 = vunpack.c.l.b16 %v926
    %v4112 = vunpack.c.h.b16 %v926
    %v4113 = vunpack.c.l.b16 %v927
    %v4114 = vunpack.c.h.b16 %v927
    %v4115 = vunpack.c.l.b16 %v928
    %v4116 = vunpack.c.h.b16 %v928
    %v4117 = vunpack.c.l.b16 %v929
    %v4118 = vunpack.c.h.b16 %v929
    %v4119 = vunpack.c.l.b16 %v930
    %v4120 = vunpack.c.l.b16 %v931
    %v4121 = vunpack.c.h.b16 %v931
    %v4122 = vunpack.c.l.b16 %v932
    %v4123 = vunpack.c.h.b16 %v932
    %v4124 = vunpack.c.l.b16 %v933
    %v4125 = vunpack.c.h.b16 %v933
    %v4126 = vunpack.c.l.b16 %v934
    %v4127 = vunpack.c.h.b16 %v934
    %v4128 = vunpack.c.l.b16 %v935
    %v4129 = vunpack.c.h.b16 %v935
    %v4130 = vunpack.c.l.b16 %v936
    %v4131 = vunpack.c.l.b16 %v937
    %v4132 = vunpack.c.h.b16 %v937
    %v4133 = vunpack.c.l.b16 %v938
    %v4134 = vunpack.c.h.b16 %v938
    %v4135 = vunpack.c.l.b16 %v939
    %v4136 = vunpack.c.h.b16 %v939
    %v4137 = vunpack.c.l.b16 %v940
    %v4138 = vunpack.c.h.b16 %v940
    %v4139 = vunpack.c.l.b16 %v941
    %v4140 = vunpack.c.h.b16 %v941
    %v4141 = vunpack.c.l.b16 %v942
    %v4142 = vunpack.c.l.b16 %v943
    %v4143 = vunpack.c.h.b16 %v943
    %v4144 = vunpack.c.l.b16 %v944
    %v4145 = vunpack.c.h.b16 %v944
    %v4146 = vunpack.c.l.b16 %v945
    %v4147 = vunpack.c.h.b16 %v945
    %v4148 = vunpack.c.l.b16 %v946
    %v4149 = vunpack.c.h.b16 %v946
    %v4150 = vunpack.c.l.b16 %v947
    %v4151 = vunpack.c.h.b16 %v947
    %v4152 = vunpack.c.l.b16 %v948
    %v4153 = vunpack.c.l.b16 %v949
    %v4154 = vunpack.c.h.b16 %v949
    %v4155 = vunpack.c.l.b16 %v950
    %v4156 = vunpack.c.h.b16 %v950
    %v4157 = vunpack.c.l.b16 %v951
    %v4158 = vunpack.c.h.b16 %v951
    %v4159 = vunpack.c.l.b16 %v952
    %v4160 = vunpack.c.h.b16 %v952
    %v4161 = vunpack.c.l.b16 %v953
    %v4162 = vunpack.c.h.b16 %v953
    %v4163 = vunpack.c.l.b16 %v954
    %v4164 = vunpack.c.l.b16 %v955
    %v4165 = vunpack.c.h.b16 %v955
    %v4166 = vunpack.c.l.b16 %v956
    %v4167 = vunpack.c.h.b16 %v956
    %v4168 = vunpack.c.l.b16 %v957
    %v4169 = vunpack.c.h.b16 %v957
    %v4170 = vunpack.c.l.b16 %v958
    %v4171 = vunpack.c.h.b16 %v958
    %v4172 = vunpack.c.l.b16 %v959
    %v4173 = vunpack.c.h.b16 %v959
    %v4174 = vunpack.c.l.b16 %v960
    %v4175 = vunpack.c.l.b16 %v961
    %v4176 = vunpack.c.h.b16 %v961
    %v4177 = vunpack.c.l.b16 %v962
    %v4178 = vunpack.c.h.b16 %v962
    %v4179 = vunpack.c.l.b16 %v963
    %v4180 = vunpack.c.h.b16 %v963
    %v4181 = vunpack.c.l.b16 %v964
    %v4182 = vunpack.c.h.b16 %v964
    %v4183 = vunpack.c.l.b16 %v965
    %v4184 = vunpack.c.h.b16 %v965
    %v4185 = vunpack.c.l.b16 %v966
    %v4186 = vunpack.c.l.b16 %v967
    %v4187 = vunpack.c.h.b16 %v967
    %v4188 = vunpack.c.l.b16 %v968
    %v4189 = vunpack.c.h.b16 %v968
    %v4190 = vunpack.c.l.b16 %v969
    %v4191 = vunpack.c.h.b16 %v969
    %v4192 = vunpack.c.l.b16 %v970
    %v4193 = vunpack.c.h.b16 %v970
    %v4194 = vunpack.c.l.b16 %v971
    %v4195 = vunpack.c.h.b16 %v971
    %v4196 = vunpack.c.l.b16 %v972
    %v4197 = vunpack.c.l.b16 %v973
    %v4198 = vunpack.c.h.b16 %v973
    %v4199 = vunpack.c.l.b16 %v974
    %v4200 = vunpack.c.h.b16 %v974
    %v4201 = vunpack.c.l.b16 %v975
    %v4202 = vunpack.c.h.b16 %v975
    %v4203 = vunpack.c.l.b16 %v976
    %v4204 = vunpack.c.h.b16 %v976
    %v4205 = vunpack.c.l.b16 %v977
    %v4206 = vunpack.c.h.b16 %v977
    %v4207 = vunpack.c.l.b16 %v978
    %v4208 = vunpack.c.l.b16 %v979
    %v4209 = vunpack.c.h.b16 %v979
    %v4210 = vunpack.c.l.b16 %v980
    %v4211 = vunpack.c.h.b16 %v980
    %v4212 = vunpack.c.l.b16 %v981
    %v4213 = vunpack.c.h.b16 %v981
    %v4214 = vunpack.c.l.b16 %v982
    %v4215 = vunpack.c.h.b16 %v982
    %v4216 = vunpack.c.l.b16 %v983
    %v4217 = vunpack.c.h.b16 %v983
    %v4218 = vunpack.c.l.b16 %v984
    %v4219 = vunpack.c.l.b16 %v985
    %v4220 = vunpack.c.h.b16 %v985
    %v4221 = vunpack.c.l.b16 %v986
    %v4222 = vunpack.c.h.b16 %v986
    %v4223 = vunpack.c.l.b16 %v987
    %v4224 = vunpack.c.h.b16 %v987
    %v4225 = vunpack.c.l.b16 %v988
    %v4226 = vunpack.c.h.b16 %v988
    %v4227 = vunpack.c.l.b16 %v989
    %v4228 = vunpack.c.h.b16 %v989
    %v4229 = vunpack.c.l.b16 %v990
    %v4230 = vunpack.c.l.b16 %v991
    %v4231 = vunpack.c.h.b16 %v991
    %v4232 = vunpack.c.l.b16 %v992
    %v4233 = vunpack.c.h.b16 %v992
    %v4234 = vunpack.c.l.b16 %v993
    %v4235 = vunpack.c.h.b16 %v993
    %v4236 = vunpack.c.l.b16 %v994
    %v4237 = vunpack.c.h.b16 %v994
    %v4238 = vunpack.c.l.b16 %v995
    %v4239 = vunpack.c.h.b16 %v995
    %v4240 = vunpack.c.l.b16 %v996
    %v4241 = vunpack.c.l.b16 %v997
    %v4242 = vunpack.c.h.b16 %v997
    %v4243 = vunpack.c.l.b16 %v998
    %v4244 = vunpack.c.h.b16 %v998
    %v4245 = vunpack.c.l.b16 %v999
    %v4246 = vunpack.c.h.b16 %v999
    %v4247 = vunpack.c.l.b16 %v1000
    %v4248 = vunpack.c.h.b16 %v1000
    %v4249 = vunpack.c.l.b16 %v1001
    %v4250 = vunpack.c.h.b16 %v1001
    %v4251 = vunpack.c.l.b16 %v1002
    %v4252 = vunpack.c.l.b16 %v1003
    %v4253 = vunpack.c.h.b16 %v1003
    %v4254 = vunpack.c.l.b16 %v1004
    %v4255 = vunpack.c.h.b16 %v1004
    %v4256 = vunpack.c.l.b16 %v1005
    %v4257 = vunpack.c.h.b16 %v1005
    %v4258 = vunpack.c.l.b16 %v1006
    %v4259 = vunpack.c.h.b16 %v1006
    %v4260 = vunpack.c.l.b16 %v1007
    %v4261 = vunpack.c.h.b16 %v1007
    %v4262 = vunpack.c.l.b16 %v1008
    %v4263 = vunpack.c.l.b16 %v1009
    %v4264 = vunpack.c.h.b16 %v1009
    %v4265 = vunpack.c.l.b16 %v1010
    %v4266 = vunpack.c.h.b16 %v1010
    %v4267 = vunpack.c.l.b16 %v1011
    %v4268 = vunpack.c.h.b16 %v1011
    %v4269 = vunpack.c.l.b16 %v1012
    %v4270 = vunpack.c.h.b16 %v1012
    %v4271 = vunpack.c.l.b16 %v1013
    %v4272 = vunpack.c.h.b16 %v1013
    %v4273 = vunpack.c.l.b16 %v1014
    %v4274 = vunpack.c.l.b16 %v1015
    %v4275 = vunpack.c.h.b16 %v1015
    %v4276 = vunpack.c.l.b16 %v1016
    %v4277 = vunpack.c.h.b16 %v1016
    %v4278 = vunpack.c.l.b16 %v1017
    %v4279 = vunpack.c.h.b16 %v1017
    %v4280 = vunpack.c.l.b16 %v1018
    %v4281 = vunpack.c.h.b16 %v1018
    %v4282 = vunpack.c.l.b16 %v1019
    %v4283 = vunpack.c.h.b16 %v1019
    %v4284 = vunpack.c.l.b16 %v1020
    %v4285 = vunpack.c.l.b16 %v1021
    %v4286 = vunpack.c.h.b16 %v1021
    %v4287 = vunpack.c.l.b16 %v1022
    %v4288 = vunpack.c.h.b16 %v1022
    %v4289 = vunpack.c.l.b16 %v1023
    %v4290 = vunpack.c.h.b16 %v1023
    %v4291 = vunpack.c.l.b16 %v1024
    %v4292 = vunpack.c.h.b16 %v1024
    %v4293 = vunpack.c.l.b16 %v1025
    %v4294 = vunpack.c.h.b16 %v1025
    %v4295 = vunpack.c.l.b16 %v1026
    %v4296 = vunpack.c.l.b16 %v1027
    %v4297 = vunpack.c.h.b16 %v1027
    %v4298 = vunpack.c.l.b16 %v1028
    %v4299 = vunpack.c.h.b16 %v1028
    %v4300 = vunpack.c.l.b16 %v1029
    %v4301 = vunpack.c.h.b16 %v1029
    %v4302 = vunpack.c.l.b16 %v1030
    %v4303 = vunpack.c.h.b16 %v1030
    %v4304 = vunpack.c.l.b16 %v1031
    %v4305 = vunpack.c.h.b16 %v1031
    %v4306 = vunpack.c.l.b16 %v1032
    %v4307 = vunpack.c.l.b16 %v1033
    %v4308 = vunpack.c.h.b16 %v1033
    %v4309 = vunpack.c.l.b16 %v1034
    %v4310 = vunpack.c.h.b16 %v1034
    %v4311 = vunpack.c.l.b16 %v1035
    %v4312 = vunpack.c.h.b16 %v1035
    %v4313 = vunpack.c.l.b16 %v1036
    %v4314 = vunpack.c.h.b16 %v1036
    %v4315 = vunpack.c.l.b16 %v1037
    %v4316 = vunpack.c.h.b16 %v1037
    %v4317 = vunpack.c.l.b16 %v1038
    %v4318 = vunpack.c.l.b16 %v1039
    %v4319 = vunpack.c.h.b16 %v1039
    %v4320 = vunpack.c.l.b16 %v1040
    %v4321 = vunpack.c.h.b16 %v1040
    %v4322 = vunpack.c.l.b16 %v1041
    %v4323 = vunpack.c.h.b16 %v1041
    %v4324 = vunpack.c.l.b16 %v1042
    %v4325 = vunpack.c.h.b16 %v1042
    %v4326 = vunpack.c.l.b16 %v1043
    %v4327 = vunpack.c.h.b16 %v1043
    %v4328 = vunpack.c.l.b16 %v1044
    %v4329 = vunpack.c.l.b16 %v1045
    %v4330 = vunpack.c.h.b16 %v1045
    %v4331 = vunpack.c.l.b16 %v1046
    %v4332 = vunpack.c.h.b16 %v1046
    %v4333 = vunpack.c.l.b16 %v1047
    %v4334 = vunpack.c.h.b16 %v1047
    %v4335 = vunpack.c.l.b16 %v1048
    %v4336 = vunpack.c.h.b16 %v1048
    %v4337 = vunpack.c.l.b16 %v1049
    %v4338 = vunpack.c.h.b16 %v1049
    %v4339 = vunpack.c.l.b16 %v1050
    %v4340 = vunpack.c.l.b16 %v1051
    %v4341 = vunpack.c.h.b16 %v1051
    %v4342 = vunpack.c.l.b16 %v1052
    %v4343 = vunpack.c.h.b16 %v1052
    %v4344 = vunpack.c.l.b16 %v1053
    %v4345 = vunpack.c.h.b16 %v1053
    %v4346 = vunpack.c.l.b16 %v1054
    %v4347 = vunpack.c.h.b16 %v1054
    %v4348 = vunpack.c.l.b16 %v1055
    %v4349 = vunpack.c.h.b16 %v1055
    %v4350 = vunpack.c.l.b16 %v1056
    %v4351 = vunpack.c.l.b16 %v1057
    %v4352 = vunpack.c.h.b16 %v1057
    %v4353 = vunpack.c.l.b16 %v1058
    %v4354 = vunpack.c.h.b16 %v1058
    %v4355 = vunpack.c.l.b16 %v1059
    %v4356 = vunpack.c.h.b16 %v1059
    %v4357 = vunpack.c.l.b16 %v1060
    %v4358 = vunpack.c.h.b16 %v1060
    %v4359 = vunpack.c.l.b16 %v1061
    %v4360 = vunpack.c.h.b16 %v1061
    %v4361 = vunpack.c.l.b16 %v1062
    %v4362 = vunpack.c.l.b16 %v1063
    %v4363 = vunpack.c.h.b16 %v1063
    %v4364 = vunpack.c.l.b16 %v1064
    %v4365 = vunpack.c.h.b16 %v1064
    %v4366 = vunpack.c.l.b16 %v1065
    %v4367 = vunpack.c.h.b16 %v1065
    %v4368 = vunpack.c.l.b16 %v1066
    %v4369 = vunpack.c.h.b16 %v1066
    %v4370 = vunpack.c.l.b16 %v1067
    %v4371 = vunpack.c.h.b16 %v1067
    %v4372 = vunpack.c.l.b16 %v1068
    %v4373 = vunpack.c.l.b16 %v1069
    %v4374 = vunpack.c.h.b16 %v1069
    %v4375 = vunpack.c.l.b16 %v1070
    %v4376 = vunpack.c.h.b16 %v1070
    %v4377 = vunpack.c.l.b16 %v1071
    %v4378 = vunpack.c.h.b16 %v1071
    %v4379 = vunpack.c.l.b16 %v1072
    %v4380 = vunpack.c.h.b16 %v1072
    %v4381 = vunpack.c.l.b16 %v1073
    %v4382 = vunpack.c.h.b16 %v1073
    %v4383 = vunpack.c.l.b16 %v1074
    %v4384 = vunpack.c.l.b16 %v1075
    %v4385 = vunpack.c.h.b16 %v1075
    %v4386 = vunpack.c.l.b16 %v1076
    %v4387 = vunpack.c.h.b16 %v1076
    %v4388 = vunpack.c.l.b16 %v1077
    %v4389 = vunpack.c.h.b16 %v1077
    %v4390 = vunpack.c.l.b16 %v1078
    %v4391 = vunpack.c.h.b16 %v1078
    %v4392 = vunpack.c.l.b16 %v1079
    %v4393 = vunpack.c.h.b16 %v1079
    %v4394 = vunpack.c.l.b16 %v1080
    %v4395 = vunpack.c.l.b16 %v1081
    %v4396 = vunpack.c.h.b16 %v1081
    %v4397 = vunpack.c.l.b16 %v1082
    %v4398 = vunpack.c.h.b16 %v1082
    %v4399 = vunpack.c.l.b16 %v1083
    %v4400 = vunpack.c.h.b16 %v1083
    %v4401 = vunpack.c.l.b16 %v1084
    %v4402 = vunpack.c.h.b16 %v1084
    %v4403 = vunpack.c.l.b16 %v1085
    %v4404 = vunpack.c.h.b16 %v1085
    %v4405 = vunpack.c.l.b16 %v1086
    %v4406 = vunpack.c.l.b16 %v1087
    %v4407 = vunpack.c.h.b16 %v1087
    %v4408 = vunpack.c.l.b16 %v1088
    %v4409 = vunpack.c.h.b16 %v1088
    %v4410 = vunpack.c.l.b16 %v1089
    %v4411 = vunpack.c.h.b16 %v1089
    %v4412 = vunpack.c.l.b16 %v1090
    %v4413 = vunpack.c.h.b16 %v1090
    %v4414 = vunpack.c.l.b16 %v1091
    %v4415 = vunpack.c.h.b16 %v1091
    %v4416 = vunpack.c.l.b16 %v1092
    %v4417 = vunpack.c.l.b16 %v1093
    %v4418 = vunpack.c.h.b16 %v1093
    %v4419 = vunpack.c.l.b16 %v1094
    %v4420 = vunpack.c.h.b16 %v1094
    %v4421 = vunpack.c.l.b16 %v1095
    %v4422 = vunpack.c.h.b16 %v1095
    %v4423 = vunpack.c.l.b16 %v1096
    %v4424 = vunpack.c.h.b16 %v1096
    %v4425 = vunpack.c.l.b16 %v1097
    %v4426 = vunpack.c.h.b16 %v1097
    %v4427 = vunpack.c.l.b16 %v1098
    %v4428 = vunpack.c.l.b16 %v1099
    %v4429 = vunpack.c.h.b16 %v1099
    %v4430 = vunpack.c.l.b16 %v1100
    %v4431 = vunpack.c.h.b16 %v1100
    %v4432 = vunpack.c.l.b16 %v1101
    %v4433 = vunpack.c.h.b16 %v1101
    %v4434 = vunpack.c.l.b16 %v1102
    %v4435 = vunpack.c.h.b16 %v1102
    %v4436 = vunpack.c.l.b16 %v1103
    %v4437 = vunpack.c.h.b16 %v1103
    %v4438 = vunpack.c.l.b16 %v1104
    %v4439 = vunpack.c.l.b16 %v1105
    %v4440 = vunpack.c.h.b16 %v1105
    %v4441 = vunpack.c.l.b16 %v1106
    %v4442 = vunpack.c.h.b16 %v1106
    %v4443 = vunpack.c.l.b16 %v1107
    %v4444 = vunpack.c.h.b16 %v1107
    %v4445 = vunpack.c.l.b16 %v1108
    %v4446 = vunpack.c.h.b16 %v1108
    %v4447 = vunpack.c.l.b16 %v1109
    %v4448 = vunpack.c.h.b16 %v1109
    %v4449 = vunpack.c.l.b16 %v1110
    %v4450 = vunpack.c.l.b16 %v1111
    %v4451 = vunpack.c.h.b16 %v1111
    %v4452 = vunpack.c.l.b16 %v1112
    %v4453 = vunpack.c.h.b16 %v1112
    %v4454 = vunpack.c.l.b16 %v1113
    %v4455 = vunpack.c.h.b16 %v1113
    %v4456 = vunpack.c.l.b16 %v1114
    %v4457 = vunpack.c.h.b16 %v1114
    %v4458 = vunpack.c.l.b16 %v1115
    %v4459 = vunpack.c.h.b16 %v1115
    %v4460 = vunpack.c.l.b16 %v1116
    %v4461 = vunpack.c.l.b16 %v1117
    %v4462 = vunpack.c.h.b16 %v1117
    %v4463 = vunpack.c.l.b16 %v1118
    %v4464 = vunpack.c.h.b16 %v1118
    %v4465 = vunpack.c.l.b16 %v1119
    %v4466 = vunpack.c.h.b16 %v1119
    %v4467 = vunpack.c.l.b16 %v1120
    %v4468 = vunpack.c.h.b16 %v1120
    %v4469 = vunpack.c.l.b16 %v1121
    %v4470 = vunpack.c.h.b16 %v1121
    %v4471 = vunpack.c.l.b16 %v1122
    %v4472 = vunpack.c.l.b16 %v1123
    %v4473 = vunpack.c.h.b16 %v1123
    %v4474 = vunpack.c.l.b16 %v1124
    %v4475 = vunpack.c.h.b16 %v1124
    %v4476 = vunpack.c.l.b16 %v1125
    %v4477 = vunpack.c.h.b16 %v1125
    %v4478 = vunpack.c.l.b16 %v1126
    %v4479 = vunpack.c.h.b16 %v1126
    %v4480 = vunpack.c.l.b16 %v1127
    %v4481 = vunpack.c.h.b16 %v1127
    %v4482 = vunpack.c.l.b16 %v1128
    %v4483 = vunpack.c.l.b16 %v1129
    %v4484 = vunpack.c.h.b16 %v1129
    %v4485 = vunpack.c.l.b16 %v1130
    %v4486 = vunpack.c.h.b16 %v1130
    %v4487 = vunpack.c.l.b16 %v1131
    %v4488 = vunpack.c.h.b16 %v1131
    %v4489 = vunpack.c.l.b16 %v1132
    %v4490 = vunpack.c.h.b16 %v1132
    %v4491 = vunpack.c.l.b16 %v1133
    %v4492 = vunpack.c.h.b16 %v1133
    %v4493 = vunpack.c.l.b16 %v1134
    %v4494 = vunpack.c.l.b16 %v1135
    %v4495 = vunpack.c.h.b16 %v1135
    %v4496 = vunpack.c.l.b16 %v1136
    %v4497 = vunpack.c.h.b16 %v1136
    %v4498 = vunpack.c.l.b16 %v1137
    %v4499 = vunpack.c.h.b16 %v1137
    %v4500 = vunpack.c.l.b16 %v1138
    %v4501 = vunpack.c.h.b16 %v1138
    %v4502 = vunpack.c.l.b16 %v1139
    %v4503 = vunpack.c.h.b16 %v1139
    %v4504 = vunpack.c.l.b16 %v1140
    %v4505 = vunpack.c.l.b16 %v1141
    %v4506 = vunpack.c.h.b16 %v1141
    %v4507 = vunpack.c.l.b16 %v1142
    %v4508 = vunpack.c.h.b16 %v1142
    %v4509 = vunpack.c.l.b16 %v1143
    %v4510 = vunpack.c.h.b16 %v1143
    %v4511 = vunpack.c.l.b16 %v1144
    %v4512 = vunpack.c.h.b16 %v1144
    %v4513 = vunpack.c.l.b16 %v1145
    %v4514 = vunpack.c.h.b16 %v1145
    %v4515 = vunpack.c.l.b16 %v1146
    %v4516 = vunpack.c.l.b16 %v1147
    %v4517 = vunpack.c.h.b16 %v1147
    %v4518 = vunpack.c.l.b16 %v1148
    %v4519 = vunpack.c.h.b16 %v1148
    %v4520 = vunpack.c.l.b16 %v1149
    %v4521 = vunpack.c.h.b16 %v1149
    %v4522 = vunpack.c.l.b16 %v1150
    %v4523 = vunpack.c.h.b16 %v1150
    %v4524 = vunpack.c.l.b16 %v1151
    %v4525 = vunpack.c.h.b16 %v1151
    %v4526 = vunpack.c.l.b16 %v1152
    %v4527 = vunpack.c.l.b16 %v1153
    %v4528 = vunpack.c.h.b16 %v1153
    %v4529 = vunpack.c.l.b16 %v1154
    %v4530 = vunpack.c.h.b16 %v1154
    %v4531 = vunpack.c.l.b16 %v1155
    %v4532 = vunpack.c.h.b16 %v1155
    %v4533 = vunpack.c.l.b16 %v1156
    %v4534 = vunpack.c.h.b16 %v1156
    %v4535 = vunpack.c.l.b16 %v1157
    %v4536 = vunpack.c.h.b16 %v1157
    %v4537 = vunpack.c.l.b16 %v1158
    %v4538 = vunpack.c.l.b16 %v1159
    %v4539 = vunpack.c.h.b16 %v1159
    %v4540 = vunpack.c.l.b16 %v1160
    %v4541 = vunpack.c.h.b16 %v1160
    %v4542 = vunpack.c.l.b16 %v1161
    %v4543 = vunpack.c.h.b16 %v1161
    %v4544 = vunpack.c.l.b16 %v1162
    %v4545 = vunpack.c.h.b16 %v1162
    %v4546 = vunpack.c.l.b16 %v1163
    %v4547 = vunpack.c.h.b16 %v1163
    %v4548 = vunpack.c.l.b16 %v1164
    %v4549 = vunpack.c.l.b16 %v1165
    %v4550 = vunpack.c.h.b16 %v1165
    %v4551 = vunpack.c.l.b16 %v1166
    %v4552 = vunpack.c.h.b16 %v1166
    %v4553 = vunpack.c.l.b16 %v1167
    %v4554 = vunpack.c.h.b16 %v1167
    %v4555 = vunpack.c.l.b16 %v1168
    %v4556 = vunpack.c.h.b16 %v1168
    %v4557 = vunpack.c.l.b16 %v1169
    %v4558 = vunpack.c.h.b16 %v1169
    %v4559 = vunpack.c.l.b16 %v1170
    %v4560 = vunpack.c.l.b16 %v1171
    %v4561 = vunpack.c.h.b16 %v1171
    %v4562 = vunpack.c.l.b16 %v1172
    %v4563 = vunpack.c.h.b16 %v1172
    %v4564 = vunpack.c.l.b16 %v1173
    %v4565 = vunpack.c.h.b16 %v1173
    %v4566 = vunpack.c.l.b16 %v1174
    %v4567 = vunpack.c.h.b16 %v1174
    %v4568 = vunpack.c.l.b16 %v1175
    %v4569 = vunpack.c.h.b16 %v1175
    %v4570 = vunpack.c.l.b16 %v1176
    %v4571 = vunpack.c.l.b16 %v1177
    %v4572 = vunpack.c.h.b16 %v1177
    %v4573 = vunpack.c.l.b16 %v1178
    %v4574 = vunpack.c.h.b16 %v1178
    %v4575 = vunpack.c.l.b16 %v1179
    %v4576 = vunpack.c.h.b16 %v1179
    %v4577 = vunpack.c.l.b16 %v1180
    %v4578 = vunpack.c.h.b16 %v1180
    %v4579 = vunpack.c.l.b16 %v1181
    %v4580 = vunpack.c.h.b16 %v1181
    %v4581 = vunpack.c.l.b16 %v1182
    %v4582 = vunpack.c.l.b16 %v1183
    %v4583 = vunpack.c.h.b16 %v1183
    %v4584 = vunpack.c.l.b16 %v1184
    %v4585 = vunpack.c.h.b16 %v1184
    %v4586 = vunpack.c.l.b16 %v1185
    %v4587 = vunpack.c.h.b16 %v1185
    %v4588 = vunpack.c.l.b16 %v1186
    %v4589 = vunpack.c.h.b16 %v1186
    %v4590 = vunpack.c.l.b16 %v1187
    %v4591 = vunpack.c.h.b16 %v1187
    %v4592 = vunpack.c.l.b16 %v1188
    %v4593 = vunpack.c.l.b16 %v1189
    %v4594 = vunpack.c.h.b16 %v1189
    %v4595 = vunpack.c.l.b16 %v1190
    %v4596 = vunpack.c.h.b16 %v1190
    %v4597 = vunpack.c.l.b16 %v1191
    %v4598 = vunpack.c.h.b16 %v1191
    %v4599 = vunpack.c.l.b16 %v1192
    %v4600 = vunpack.c.h.b16 %v1192
    %v4601 = vunpack.c.l.b16 %v1193
    %v4602 = vunpack.c.h.b16 %v1193
    %v4603 = vunpack.c.l.b16 %v1194
    %v4604 = vunpack.c.l.b16 %v1195
    %v4605 = vunpack.c.h.b16 %v1195
    %v4606 = vunpack.c.l.b16 %v1196
    %v4607 = vunpack.c.h.b16 %v1196
    %v4608 = vunpack.c.l.b16 %v1197
    %v4609 = vunpack.c.h.b16 %v1197
    %v4610 = vunpack.c.l.b16 %v1198
    %v4611 = vunpack.c.h.b16 %v1198
    %v4612 = vunpack.c.l.b16 %v1199
    %v4613 = vunpack.c.h.b16 %v1199
    %v4614 = vunpack.c.l.b16 %v1200
    %v4615 = vunpack.c.l.b16 %v1201
    %v4616 = vunpack.c.h.b16 %v1201
    %v4617 = vunpack.c.l.b16 %v1202
    %v4618 = vunpack.c.h.b16 %v1202
    %v4619 = vunpack.c.l.b16 %v1203
    %v4620 = vunpack.c.h.b16 %v1203
    %v4621 = vunpack.c.l.b16 %v1204
    %v4622 = vunpack.c.h.b16 %v1204
    %v4623 = vunpack.c.l.b16 %v1205
    %v4624 = vunpack.c.h.b16 %v1205
    %v4625 = vunpack.c.l.b16 %v1206
    %v4626 = vunpack.c.l.b16 %v1207
    %v4627 = vunpack.c.h.b16 %v1207
    %v4628 = vunpack.c.l.b16 %v1208
    %v4629 = vunpack.c.h.b16 %v1208
    %v4630 = vunpack.c.l.b16 %v1209
    %v4631 = vunpack.c.h.b16 %v1209
    %v4632 = vunpack.c.l.b16 %v1210
    %v4633 = vunpack.c.h.b16 %v1210
    %v4634 = vunpack.c.l.b16 %v1211
    %v4635 = vunpack.c.h.b16 %v1211
    %v4636 = vunpack.c.l.b16 %v1212
    %v4637 = vunpack.c.l.b16 %v1213
    %v4638 = vunpack.c.h.b16 %v1213
    %v4639 = vunpack.c.l.b16 %v1214
    %v4640 = vunpack.c.h.b16 %v1214
    %v4641 = vunpack.c.l.b16 %v1215
    %v4642 = vunpack.c.h.b16 %v1215
    %v4643 = vunpack.c.l.b16 %v1216
    %v4644 = vunpack.c.h.b16 %v1216
    %v4645 = vunpack.c.l.b16 %v1217
    %v4646 = vunpack.c.h.b16 %v1217
    %v4647 = vunpack.c.l.b16 %v1218
    %v4648 = vunpack.c.l.b16 %v1219
    %v4649 = vunpack.c.h.b16 %v1219
    %v4650 = vunpack.c.l.b16 %v1220
    %v4651 = vunpack.c.h.b16 %v1220
    %v4652 = vunpack.c.l.b16 %v1221
    %v4653 = vunpack.c.h.b16 %v1221
    %v4654 = vunpack.c.l.b16 %v1222
    %v4655 = vunpack.c.h.b16 %v1222
    %v4656 = vunpack.c.l.b16 %v1223
    %v4657 = vunpack.c.h.b16 %v1223
    %v4658 = vunpack.c.l.b16 %v1224
    %v4659 = vunpack.c.l.b16 %v1225
    %v4660 = vunpack.c.h.b16 %v1225
    %v4661 = vunpack.c.l.b16 %v1226
    %v4662 = vunpack.c.h.b16 %v1226
    %v4663 = vunpack.c.l.b16 %v1227
    %v4664 = vunpack.c.h.b16 %v1227
    %v4665 = vunpack.c.l.b16 %v1228
    %v4666 = vunpack.c.h.b16 %v1228
    %v4667 = vunpack.c.l.b16 %v1229
    %v4668 = vunpack.c.h.b16 %v1229
    %v4669 = vunpack.c.l.b16 %v1230
    %v4670 = vunpack.c.l.b16 %v1231
    %v4671 = vunpack.c.h.b16 %v1231
    %v4672 = vunpack.c.l.b16 %v1232
    %v4673 = vunpack.c.h.b16 %v1232
    %v4674 = vunpack.c.l.b16 %v1233
    %v4675 = vunpack.c.h.b16 %v1233
    %v4676 = vunpack.c.l.b16 %v1234
    %v4677 = vunpack.c.h.b16 %v1234
    %v4678 = vunpack.c.l.b16 %v1235
    %v4679 = vunpack.c.h.b16 %v1235
    %v4680 = vunpack.c.l.b16 %v1236
    %v4681 = vunpack.c.l.b16 %v1237
    %v4682 = vunpack.c.h.b16 %v1237
    %v4683 = vunpack.c.l.b16 %v1238
    %v4684 = vunpack.c.h.b16 %v1238
    %v4685 = vunpack.c.l.b16 %v1239
    %v4686 = vunpack.c.h.b16 %v1239
    %v4687 = vunpack.c.l.b16 %v1240
    %v4688 = vunpack.c.h.b16 %v1240
    %v4689 = vunpack.c.l.b16 %v1241
    %v4690 = vunpack.c.h.b16 %v1241
    %v4691 = vunpack.c.l.b16 %v1242
    %v4692 = vunpack.c.l.b16 %v1243
    %v4693 = vunpack.c.h.b16 %v1243
    %v4694 = vunpack.c.l.b16 %v1244
    %v4695 = vunpack.c.h.b16 %v1244
    %v4696 = vunpack.c.l.b16 %v1245
    %v4697 = vunpack.c.h.b16 %v1245
    %v4698 = vunpack.c.l.b16 %v1246
    %v4699 = vunpack.c.h.b16 %v1246
    %v4700 = vunpack.c.l.b16 %v1247
    %v4701 = vunpack.c.h.b16 %v1247
    %v4702 = vunpack.c.l.b16 %v1248
    %v4703 = vunpack.c.l.b16 %v1249
    %v4704 = vunpack.c.h.b16 %v1249
    %v4705 = vunpack.c.l.b16 %v1250
    %v4706 = vunpack.c.h.b16 %v1250
    %v4707 = vunpack.c.l.b16 %v1251
    %v4708 = vunpack.c.h.b16 %v1251
    %v4709 = vunpack.c.l.b16 %v1252
    %v4710 = vunpack.c.h.b16 %v1252
    %v4711 = vunpack.c.l.b16 %v1253
    %v4712 = vunpack.c.h.b16 %v1253
    %v4713 = vunpack.c.l.b16 %v1254
    %v4714 = vunpack.c.l.b16 %v1255
    %v4715 = vunpack.c.h.b16 %v1255
    %v4716 = vunpack.c.l.b16 %v1256
    %v4717 = vunpack.c.h.b16 %v1256
    %v4718 = vunpack.c.l.b16 %v1257
    %v4719 = vunpack.c.h.b16 %v1257
    %v4720 = vunpack.c.l.b16 %v1258
    %v4721 = vunpack.c.h.b16 %v1258
    %v4722 = vunpack.c.l.b16 %v1259
    %v4723 = vunpack.c.h.b16 %v1259
    %v4724 = vunpack.c.l.b16 %v1260
    %v4725 = vunpack.c.l.b16 %v1261
    %v4726 = vunpack.c.h.b16 %v1261
    %v4727 = vunpack.c.l.b16 %v1262
    %v4728 = vunpack.c.h.b16 %v1262
    %v4729 = vunpack.c.l.b16 %v1263
    %v4730 = vunpack.c.h.b16 %v1263
    %v4731 = vunpack.c.l.b16 %v1264
    %v4732 = vunpack.c.h.b16 %v1264
    %v4733 = vunpack.c.l.b16 %v1265
    %v4734 = vunpack.c.h.b16 %v1265
    %v4735 = vunpack.c.l.b16 %v1266
    %v4736 = vunpack.c.l.b16 %v1267
    %v4737 = vunpack.c.h.b16 %v1267
    %v4738 = vunpack.c.l.b16 %v1268
    %v4739 = vunpack.c.h.b16 %v1268
    %v4740 = vunpack.c.l.b16 %v1269
    %v4741 = vunpack.c.h.b16 %v1269
    %v4742 = vunpack.c.l.b16 %v1270
    %v4743 = vunpack.c.h.b16 %v1270
    %v4744 = vunpack.c.l.b16 %v1271
    %v4745 = vunpack.c.h.b16 %v1271
    %v4746 = vunpack.c.l.b16 %v1272
    %v4747 = vunpack.c.l.b16 %v1273
    %v4748 = vunpack.c.h.b16 %v1273
    %v4749 = vunpack.c.l.b16 %v1274
    %v4750 = vunpack.c.h.b16 %v1274
    %v4751 = vunpack.c.l.b16 %v1275
    %v4752 = vunpack.c.h.b16 %v1275
    %v4753 = vunpack.c.l.b16 %v1276
    %v4754 = vunpack.c.h.b16 %v1276
    %v4755 = vunpack.c.l.b16 %v1277
    %v4756 = vunpack.c.h.b16 %v1277
    %v4757 = vunpack.c.l.b16 %v1278
    %v4758 = vunpack.c.l.b16 %v1279
    %v4759 = vunpack.c.h.b16 %v1279
    %v4760 = vunpack.c.l.b16 %v1280
    %v4761 = vunpack.c.h.b16 %v1280
    %v4762 = vunpack.c.l.b16 %v1281
    %v4763 = vunpack.c.h.b16 %v1281
    %v4764 = vunpack.c.l.b16 %v1282
    %v4765 = vunpack.c.h.b16 %v1282
    %v4766 = vunpack.c.l.b16 %v1283
    %v4767 = vunpack.c.h.b16 %v1283
    %v4768 = vunpack.c.l.b16 %v1284
    %v4769 = vunpack.c.l.b16 %v1285
    %v4770 = vunpack.c.h.b16 %v1285
    %v4771 = vunpack.c.l.b16 %v1286
    %v4772 = vunpack.c.h.b16 %v1286
    %v4773 = vunpack.c.l.b16 %v1287
    %v4774 = vunpack.c.h.b16 %v1287
    %v4775 = vunpack.c.l.b16 %v1288
    %v4776 = vunpack.c.h.b16 %v1288
    %v4777 = vunpack.c.l.b16 %v1289
    %v4778 = vunpack.c.h.b16 %v1289
    %v4779 = vunpack.c.l.b16 %v1290
    %v4780 = vunpack.c.l.b16 %v1291
    %v4781 = vunpack.c.h.b16 %v1291
    %v4782 = vunpack.c.l.b16 %v1292
    %v4783 = vunpack.c.h.b16 %v1292
    %v4784 = vunpack.c.l.b16 %v1293
    %v4785 = vunpack.c.h.b16 %v1293
    %v4786 = vunpack.c.l.b16 %v1294
    %v4787 = vunpack.c.h.b16 %v1294
    %v4788 = vunpack.c.l.b16 %v1295
    %v4789 = vunpack.c.h.b16 %v1295
    %v4790 = vunpack.c.l.b16 %v1296
    %v4791 = vunpack.c.l.b16 %v1297
    %v4792 = vunpack.c.h.b16 %v1297
    %v4793 = vunpack.c.l.b16 %v1298
    %v4794 = vunpack.c.h.b16 %v1298
    %v4795 = vunpack.c.l.b16 %v1299
    %v4796 = vunpack.c.h.b16 %v1299
    %v4797 = vunpack.c.l.b16 %v1300
    %v4798 = vunpack.c.h.b16 %v1300
    %v4799 = vunpack.c.l.b16 %v1301
    %v4800 = vunpack.c.h.b16 %v1301
    %v4801 = vunpack.c.l.b16 %v1302
    %v4802 = vunpack.c.l.b16 %v1303
    %v4803 = vunpack.c.h.b16 %v1303
    %v4804 = vunpack.c.l.b16 %v1304
    %v4805 = vunpack.c.h.b16 %v1304
    %v4806 = vunpack.c.l.b16 %v1305
    %v4807 = vunpack.c.h.b16 %v1305
    %v4808 = vunpack.c.l.b16 %v1306
    %v4809 = vunpack.c.h.b16 %v1306
    %v4810 = vunpack.c.l.b16 %v1307
    %v4811 = vunpack.c.h.b16 %v1307
    %v4812 = vunpack.c.l.b16 %v1308
    %v4813 = vpack.c.b16 %v2624, %v2613
    %v4814 = vpack.c.b16 %v2625, %v2614
    %v4815 = vpack.c.b16 %v2626, %v2615
    %v4816 = vpack.c.b16 %v2627, %v2616
    %v4817 = vpack.c.b16 %v2628, %v2617
    %v4818 = vpack.c.b16 %v2629, %v2618
    %v4819 = vpack.c.b16 %v2630, %v2619
    %v4820 = vpack.c.b16 %v2631, %v2620
    %v4821 = vpack.c.b16 %v2632, %v2621
    %v4822 = vpack.c.b16 %v2633, %v2622
    %v4823 = vpack.c.b16 %v2634, %v2623
    %v4824 = vpack.c.b16 %v2646, %v2635
    %v4825 = vpack.c.b16 %v2647, %v2636
    %v4826 = vpack.c.b16 %v2648, %v2637
    %v4827 = vpack.c.b16 %v2649, %v2638
    %v4828 = vpack.c.b16 %v2650, %v2639
    %v4829 = vpack.c.b16 %v2651, %v2640
    %v4830 = vpack.c.b16 %v2652, %v2641
    %v4831 = vpack.c.b16 %v2653, %v2642
    %v4832 = vpack.c.b16 %v2654, %v2643
    %v4833 = vpack.c.b16 %v2655, %v2644
    %v4834 = vpack.c.b16 %v2656, %v2645
    %v4835 = vpack.c.b16 %v2668, %v2657
    %v4836 = vpack.c.b16 %v2669, %v2658
    %v4837 = vpack.c.b16 %v2670, %v2659
    %v4838 = vpack.c.b16 %v2671, %v2660
    %v4839 = vpack.c.b16 %v2672, %v2661
    %v4840 = vpack.c.b16 %v2673, %v2662
    %v4841 = vpack.c.b16 %v2674, %v2663
    %v4842 = vpack.c.b16 %v2675, %v2664
    %v4843 = vpack.c.b16 %v2676, %v2665
    %v4844 = vpack.c.b16 %v2677, %v2666
    %v4845 = vpack.c.b16 %v2678, %v2667
    %v4846 = vpack.c.b16 %v2690, %v2679
    %v4847 = vpack.c.b16 %v2691, %v2680
    %v4848 = vpack.c.b16 %v2692, %v2681
    %v4849 = vpack.c.b16 %v2693, %v2682
    %v4850 = vpack.c.b16 %v2694, %v2683
    %v4851 = vpack.c.b16 %v2695, %v2684
    %v4852 = vpack.c.b16 %v2696, %v2685
    %v4853 = vpack.c.b16 %v2697, %v2686
    %v4854 = vpack.c.b16 %v2698, %v2687
    %v4855 = vpack.c.b16 %v2699, %v2688
    %v4856 = vpack.c.b16 %v2700, %v2689
    %v4857 = vpack.c.b16 %v2712, %v2701
    %v4858 = vpack.c.b16 %v2713, %v2702
    %v4859 = vpack.c.b16 %v2714, %v2703
    %v4860 = vpack.c.b16 %v2715, %v2704
    %v4861 = vpack.c.b16 %v2716, %v2705
    %v4862 = vpack.c.b16 %v2717, %v2706
    %v4863 = vpack.c.b16 %v2718, %v2707
    %v4864 = vpack.c.b16 %v2719, %v2708
    %v4865 = vpack.c.b16 %v2720, %v2709
    %v4866 = vpack.c.b16 %v2721, %v2710
    %v4867 = vpack.c.b16 %v2722, %v2711
    %v4868 = vpack.c.b16 %v2734, %v2723
    %v4869 = vpack.c.b16 %v2735, %v2724
    %v4870 = vpack.c.b16 %v2736, %v2725
    %v4871 = vpack.c.b16 %v2737, %v2726
    %v4872 = vpack.c.b16 %v2738, %v2727
    %v4873 = vpack.c.b16 %v2739, %v2728
    %v4874 = vpack.c.b16 %v2740, %v2729
    %v4875 = vpack.c.b16 %v2741, %v2730
    %v4876 = vpack.c.b16 %v2742, %v2731
    %v4877 = vpack.c.b16 %v2743, %v2732
    %v4878 = vpack.c.b16 %v2744, %v2733
    %v4879 = vpack.c.b16 %v2756, %v2745
    %v4880 = vpack.c.b16 %v2757, %v2746
    %v4881 = vpack.c.b16 %v2758, %v2747
    %v4882 = vpack.c.b16 %v2759, %v2748
    %v4883 = vpack.c.b16 %v2760, %v2749
    %v4884 = vpack.c.b16 %v2761, %v2750
    %v4885 = vpack.c.b16 %v2762, %v2751
    %v4886 = vpack.c.b16 %v2763, %v2752
    %v4887 = vpack.c.b16 %v2764, %v2753
    %v4888 = vpack.c.b16 %v2765, %v2754
    %v4889 = vpack.c.b16 %v2766, %v2755
    %v4890 = vpack.c.b16 %v2778, %v2767
    %v4891 = vpack.c.b16 %v2779, %v2768
    %v4892 = vpack.c.b16 %v2780, %v2769
    %v4893 = vpack.c.b16 %v2781, %v2770
    %v4894 = vpack.c.b16 %v2782, %v2771
    %v4895 = vpack.c.b16 %v2783, %v2772
    %v4896 = vpack.c.b16 %v2784, %v2773
    %v4897 = vpack.c.b16 %v2785, %v2774
    %v4898 = vpack.c.b16 %v2786, %v2775
    %v4899 = vpack.c.b16 %v2787, %v2776
    %v4900 = vpack.c.b16 %v2788, %v2777
    %v4901 = vpack.c.b16 %v2800, %v2789
    %v4902 = vpack.c.b16 %v2801, %v2790
    %v4903 = vpack.c.b16 %v2802, %v2791
    %v4904 = vpack.c.b16 %v2803, %v2792
    %v4905 = vpack.c.b16 %v2804, %v2793
    %v4906 = vpack.c.b16 %v2805, %v2794
    %v4907 = vpack.c.b16 %v2806, %v2795
    %v4908 = vpack.c.b16 %v2807, %v2796
    %v4909 = vpack.c.b16 %v2808, %v2797
    %v4910 = vpack.c.b16 %v2809, %v2798
    %v4911 = vpack.c.b16 %v2810, %v2799
    %v4912 = vpack.c.b16 %v2822, %v2811
    %v4913 = vpack.c.b16 %v2823, %v2812
    %v4914 = vpack.c.b16 %v2824, %v2813
    %v4915 = vpack.c.b16 %v2825, %v2814
    %v4916 = vpack.c.b16 %v2826, %v2815
    %v4917 = vpack.c.b16 %v2827, %v2816
    %v4918 = vpack.c.b16 %v2828, %v2817
    %v4919 = vpack.c.b16 %v2829, %v2818
    %v4920 = vpack.c.b16 %v2830, %v2819
    %v4921 = vpack.c.b16 %v2831, %v2820
    %v4922 = vpack.c.b16 %v2832, %v2821
    %v4923 = vpack.c.b16 %v2844, %v2833
    %v4924 = vpack.c.b16 %v2845, %v2834
    %v4925 = vpack.c.b16 %v2846, %v2835
    %v4926 = vpack.c.b16 %v2847, %v2836
    %v4927 = vpack.c.b16 %v2848, %v2837
    %v4928 = vpack.c.b16 %v2849, %v2838
    %v4929 = vpack.c.b16 %v2850, %v2839
    %v4930 = vpack.c.b16 %v2851, %v2840
    %v4931 = vpack.c.b16 %v2852, %v2841
    %v4932 = vpack.c.b16 %v2853, %v2842
    %v4933 = vpack.c.b16 %v2854, %v2843
    %v4934 = vpack.c.b16 %v2866, %v2855
    %v4935 = vpack.c.b16 %v2867, %v2856
    %v4936 = vpack.c.b16 %v2868, %v2857
    %v4937 = vpack.c.b16 %v2869, %v2858
    %v4938 = vpack.c.b16 %v2870, %v2859
    %v4939 = vpack.c.b16 %v2871, %v2860
    %v4940 = vpack.c.b16 %v2872, %v2861
    %v4941 = vpack.c.b16 %v2873, %v2862
    %v4942 = vpack.c.b16 %v2874, %v2863
    %v4943 = vpack.c.b16 %v2875, %v2864
    %v4944 = vpack.c.b16 %v2876, %v2865
    %v4945 = vpack.c.b16 %v2888, %v2877
    %v4946 = vpack.c.b16 %v2889, %v2878
    %v4947 = vpack.c.b16 %v2890, %v2879
    %v4948 = vpack.c.b16 %v2891, %v2880
    %v4949 = vpack.c.b16 %v2892, %v2881
    %v4950 = vpack.c.b16 %v2893, %v2882
    %v4951 = vpack.c.b16 %v2894, %v2883
    %v4952 = vpack.c.b16 %v2895, %v2884
    %v4953 = vpack.c.b16 %v2896, %v2885
    %v4954 = vpack.c.b16 %v2897, %v2886
    %v4955 = vpack.c.b16 %v2898, %v2887
    %v4956 = vpack.c.b16 %v2910, %v2899
    %v4957 = vpack.c.b16 %v2911, %v2900
    %v4958 = vpack.c.b16 %v2912, %v2901
    %v4959 = vpack.c.b16 %v2913, %v2902
    %v4960 = vpack.c.b16 %v2914, %v2903
    %v4961 = vpack.c.b16 %v2915, %v2904
    %v4962 = vpack.c.b16 %v2916, %v2905
    %v4963 = vpack.c.b16 %v2917, %v2906
    %v4964 = vpack.c.b16 %v2918, %v2907
    %v4965 = vpack.c.b16 %v2919, %v2908
    %v4966 = vpack.c.b16 %v2920, %v2909
    %v4967 = vpack.c.b16 %v2932, %v2921
    %v4968 = vpack.c.b16 %v2933, %v2922
    %v4969 = vpack.c.b16 %v2934, %v2923
    %v4970 = vpack.c.b16 %v2935, %v2924
    %v4971 = vpack.c.b16 %v2936, %v2925
    %v4972 = vpack.c.b16 %v2937, %v2926
    %v4973 = vpack.c.b16 %v2938, %v2927
    %v4974 = vpack.c.b16 %v2939, %v2928
    %v4975 = vpack.c.b16 %v2940, %v2929
    %v4976 = vpack.c.b16 %v2941, %v2930
    %v4977 = vpack.c.b16 %v2942, %v2931
    %v4978 = vpack.c.b16 %v2954, %v2943
    %v4979 = vpack.c.b16 %v2955, %v2944
    %v4980 = vpack.c.b16 %v2956, %v2945
    %v4981 = vpack.c.b16 %v2957, %v2946
    %v4982 = vpack.c.b16 %v2958, %v2947
    %v4983 = vpack.c.b16 %v2959, %v2948
    %v4984 = vpack.c.b16 %v2960, %v2949
    %v4985 = vpack.c.b16 %v2961, %v2950
    %v4986 = vpack.c.b16 %v2962, %v2951
    %v4987 = vpack.c.b16 %v2963, %v2952
    %v4988 = vpack.c.b16 %v2964, %v2953
    %v4989 = vpack.c.b16 %v2976, %v2965
    %v4990 = vpack.c.b16 %v2977, %v2966
    %v4991 = vpack.c.b16 %v2978, %v2967
    %v4992 = vpack.c.b16 %v2979, %v2968
    %v4993 = vpack.c.b16 %v2980, %v2969
    %v4994 = vpack.c.b16 %v2981, %v2970
    %v4995 = vpack.c.b16 %v2982, %v2971
    %v4996 = vpack.c.b16 %v2983, %v2972
    %v4997 = vpack.c.b16 %v2984, %v2973
    %v4998 = vpack.c.b16 %v2985, %v2974
    %v4999 = vpack.c.b16 %v2986, %v2975
    %v5000 = vpack.c.b16 %v2998, %v2987
    %v5001 = vpack.c.b16 %v2999, %v2988
    %v5002 = vpack.c.b16 %v3000, %v2989
    %v5003 = vpack.c.b16 %v3001, %v2990
    %v5004 = vpack.c.b16 %v3002, %v2991
    %v5005 = vpack.c.b16 %v3003, %v2992
    %v5006 = vpack.c.b16 %v3004, %v2993
    %v5007 = vpack.c.b16 %v3005, %v2994
    %v5008 = vpack.c.b16 %v3006, %v2995
    %v5009 = vpack.c.b16 %v3007, %v2996
    %v5010 = vpack.c.b16 %v3008, %v2997
    %v5011 = vpack.c.b16 %v3020, %v3009
    %v5012 = vpack.c.b16 %v3021, %v3010
    %v5013 = vpack.c.b16 %v3022, %v3011
    %v5014 = vpack.c.b16 %v3023, %v3012
    %v5015 = vpack.c.b16 %v3024, %v3013
    %v5016 = vpack.c.b16 %v3025, %v3014
    %v5017 = vpack.c.b16 %v3026, %v3015
    %v5018 = vpack.c.b16 %v3027, %v3016
    %v5019 = vpack.c.b16 %v3028, %v3017
    %v5020 = vpack.c.b16 %v3029, %v3018
    %v5021 = vpack.c.b16 %v3030, %v3019
    %v5022 = vpack.c.b16 %v3042, %v3031
    %v5023 = vpack.c.b16 %v3043, %v3032
    %v5024 = vpack.c.b16 %v3044, %v3033
    %v5025 = vpack.c.b16 %v3045, %v3034
    %v5026 = vpack.c.b16 %v3046, %v3035
    %v5027 = vpack.c.b16 %v3047, %v3036
    %v5028 = vpack.c.b16 %v3048, %v3037
    %v5029 = vpack.c.b16 %v3049, %v3038
    %v5030 = vpack.c.b16 %v3050, %v3039
    %v5031 = vpack.c.b16 %v3051, %v3040
    %v5032 = vpack.c.b16 %v3052, %v3041
    %v5033 = vpack.c.b16 %v3064, %v3053
    %v5034 = vpack.c.b16 %v3065, %v3054
    %v5035 = vpack.c.b16 %v3066, %v3055
    %v5036 = vpack.c.b16 %v3067, %v3056
    %v5037 = vpack.c.b16 %v3068, %v3057
    %v5038 = vpack.c.b16 %v3069, %v3058
    %v5039 = vpack.c.b16 %v3070, %v3059
    %v5040 = vpack.c.b16 %v3071, %v3060
    %v5041 = vpack.c.b16 %v3072, %v3061
    %v5042 = vpack.c.b16 %v3073, %v3062
    %v5043 = vpack.c.b16 %v3074, %v3063
    %v5044 = vpack.c.b16 %v3086, %v3075
    %v5045 = vpack.c.b16 %v3087, %v3076
    %v5046 = vpack.c.b16 %v3088, %v3077
    %v5047 = vpack.c.b16 %v3089, %v3078
    %v5048 = vpack.c.b16 %v3090, %v3079
    %v5049 = vpack.c.b16 %v3091, %v3080
    %v5050 = vpack.c.b16 %v3092, %v3081
    %v5051 = vpack.c.b16 %v3093, %v3082
    %v5052 = vpack.c.b16 %v3094, %v3083
    %v5053 = vpack.c.b16 %v3095, %v3084
    %v5054 = vpack.c.b16 %v3096, %v3085
    %v5055 = vpack.c.b16 %v3108, %v3097
    %v5056 = vpack.c.b16 %v3109, %v3098
    %v5057 = vpack.c.b16 %v3110, %v3099
    %v5058 = vpack.c.b16 %v3111, %v3100
    %v5059 = vpack.c.b16 %v3112, %v3101
    %v5060 = vpack.c.b16 %v3113, %v3102
    %v5061 = vpack.c.b16 %v3114, %v3103
    %v5062 = vpack.c.b16 %v3115, %v3104
    %v5063 = vpack.c.b16 %v3116, %v3105
    %v5064 = vpack.c.b16 %v3117, %v3106
    %v5065 = vpack.c.b16 %v3118, %v3107
    %v5066 = vpack.c.b16 %v3130, %v3119
    %v5067 = vpack.c.b16 %v3131, %v3120
    %v5068 = vpack.c.b16 %v3132, %v3121
    %v5069 = vpack.c.b16 %v3133, %v3122
    %v5070 = vpack.c.b16 %v3134, %v3123
    %v5071 = vpack.c.b16 %v3135, %v3124
    %v5072 = vpack.c.b16 %v3136, %v3125
    %v5073 = vpack.c.b16 %v3137, %v3126
    %v5074 = vpack.c.b16 %v3138, %v3127
    %v5075 = vpack.c.b16 %v3139, %v3128
    %v5076 = vpack.c.b16 %v3140, %v3129
    %v5077 = vpack.c.b16 %v3152, %v3141
    %v5078 = vpack.c.b16 %v3153, %v3142
    %v5079 = vpack.c.b16 %v3154, %v3143
    %v5080 = vpack.c.b16 %v3155, %v3144
    %v5081 = vpack.c.b16 %v3156, %v3145
    %v5082 = vpack.c.b16 %v3157, %v3146
    %v5083 = vpack.c.b16 %v3158, %v3147
    %v5084 = vpack.c.b16 %v3159, %v3148
    %v5085 = vpack.c.b16 %v3160, %v3149
    %v5086 = vpack.c.b16 %v3161, %v3150
    %v5087 = vpack.c.b16 %v3162, %v3151
    %v5088 = vpack.c.b16 %v3174, %v3163
    %v5089 = vpack.c.b16 %v3175, %v3164
    %v5090 = vpack.c.b16 %v3176, %v3165
    %v5091 = vpack.c.b16 %v3177, %v3166
    %v5092 = vpack.c.b16 %v3178, %v3167
    %v5093 = vpack.c.b16 %v3179, %v3168
    %v5094 = vpack.c.b16 %v3180, %v3169
    %v5095 = vpack.c.b16 %v3181, %v3170
    %v5096 = vpack.c.b16 %v3182, %v3171
    %v5097 = vpack.c.b16 %v3183, %v3172
    %v5098 = vpack.c.b16 %v3184, %v3173
    %v5099 = vpack.c.b16 %v3196, %v3185
    %v5100 = vpack.c.b16 %v3197, %v3186
    %v5101 = vpack.c.b16 %v3198, %v3187
    %v5102 = vpack.c.b16 %v3199, %v3188
    %v5103 = vpack.c.b16 %v3200, %v3189
    %v5104 = vpack.c.b16 %v3201, %v3190
    %v5105 = vpack.c.b16 %v3202, %v3191
    %v5106 = vpack.c.b16 %v3203, %v3192
    %v5107 = vpack.c.b16 %v3204, %v3193
    %v5108 = vpack.c.b16 %v3205, %v3194
    %v5109 = vpack.c.b16 %v3206, %v3195
    %v5110 = vpack.c.b16 %v3218, %v3207
    %v5111 = vpack.c.b16 %v3219, %v3208
    %v5112 = vpack.c.b16 %v3220, %v3209
    %v5113 = vpack.c.b16 %v3221, %v3210
    %v5114 = vpack.c.b16 %v3222, %v3211
    %v5115 = vpack.c.b16 %v3223, %v3212
    %v5116 = vpack.c.b16 %v3224, %v3213
    %v5117 = vpack.c.b16 %v3225, %v3214
    %v5118 = vpack.c.b16 %v3226, %v3215
    %v5119 = vpack.c.b16 %v3227, %v3216
    %v5120 = vpack.c.b16 %v3228, %v3217
    %v5121 = vpack.c.b16 %v3240, %v3229
    %v5122 = vpack.c.b16 %v3241, %v3230
    %v5123 = vpack.c.b16 %v3242, %v3231
    %v5124 = vpack.c.b16 %v3243, %v3232
    %v5125 = vpack.c.b16 %v3244, %v3233
    %v5126 = vpack.c.b16 %v3245, %v3234
    %v5127 = vpack.c.b16 %v3246, %v3235
    %v5128 = vpack.c.b16 %v3247, %v3236
    %v5129 = vpack.c.b16 %v3248, %v3237
    %v5130 = vpack.c.b16 %v3249, %v3238
    %v5131 = vpack.c.b16 %v3250, %v3239
    %v5132 = vpack.c.b16 %v3262, %v3251
    %v5133 = vpack.c.b16 %v3263, %v3252
    %v5134 = vpack.c.b16 %v3264, %v3253
    %v5135 = vpack.c.b16 %v3265, %v3254
    %v5136 = vpack.c.b16 %v3266, %v3255
    %v5137 = vpack.c.b16 %v3267, %v3256
    %v5138 = vpack.c.b16 %v3268, %v3257
    %v5139 = vpack.c.b16 %v3269, %v3258
    %v5140 = vpack.c.b16 %v3270, %v3259
    %v5141 = vpack.c.b16 %v3271, %v3260
    %v5142 = vpack.c.b16 %v3272, %v3261
    %v5143 = vpack.c.b16 %v3284, %v3273
    %v5144 = vpack.c.b16 %v3285, %v3274
    %v5145 = vpack.c.b16 %v3286, %v3275
    %v5146 = vpack.c.b16 %v3287, %v3276
    %v5147 = vpack.c.b16 %v3288, %v3277
    %v5148 = vpack.c.b16 %v3289, %v3278
    %v5149 = vpack.c.b16 %v3290, %v3279
    %v5150 = vpack.c.b16 %v3291, %v3280
    %v5151 = vpack.c.b16 %v3292, %v3281
    %v5152 = vpack.c.b16 %v3293, %v3282
    %v5153 = vpack.c.b16 %v3294, %v3283
    %v5154 = vpack.c.b16 %v3306, %v3295
    %v5155 = vpack.c.b16 %v3307, %v3296
    %v5156 = vpack.c.b16 %v3308, %v3297
    %v5157 = vpack.c.b16 %v3309, %v3298
    %v5158 = vpack.c.b16 %v3310, %v3299
    %v5159 = vpack.c.b16 %v3311, %v3300
    %v5160 = vpack.c.b16 %v3312, %v3301
    %v5161 = vpack.c.b16 %v3313, %v3302
    %v5162 = vpack.c.b16 %v3314, %v3303
    %v5163 = vpack.c.b16 %v3315, %v3304
    %v5164 = vpack.c.b16 %v3316, %v3305
    %v5165 = vpack.c.b16 %v3328, %v3317
    %v5166 = vpack.c.b16 %v3329, %v3318
    %v5167 = vpack.c.b16 %v3330, %v3319
    %v5168 = vpack.c.b16 %v3331, %v3320
    %v5169 = vpack.c.b16 %v3332, %v3321
    %v5170 = vpack.c.b16 %v3333, %v3322
    %v5171 = vpack.c.b16 %v3334, %v3323
    %v5172 = vpack.c.b16 %v3335, %v3324
    %v5173 = vpack.c.b16 %v3336, %v3325
    %v5174 = vpack.c.b16 %v3337, %v3326
    %v5175 = vpack.c.b16 %v3338, %v3327
    %v5176 = vpack.c.b16 %v3350, %v3339
    %v5177 = vpack.c.b16 %v3351, %v3340
    %v5178 = vpack.c.b16 %v3352, %v3341
    %v5179 = vpack.c.b16 %v3353, %v3342
    %v5180 = vpack.c.b16 %v3354, %v3343
    %v5181 = vpack.c.b16 %v3355, %v3344
    %v5182 = vpack.c.b16 %v3356, %v3345
    %v5183 = vpack.c.b16 %v3357, %v3346
    %v5184 = vpack.c.b16 %v3358, %v3347
    %v5185 = vpack.c.b16 %v3359, %v3348
    %v5186 = vpack.c.b16 %v3360, %v3349
    %v5187 = vpack.c.b16 %v3372, %v3361
    %v5188 = vpack.c.b16 %v3373, %v3362
    %v5189 = vpack.c.b16 %v3374, %v3363
    %v5190 = vpack.c.b16 %v3375, %v3364
    %v5191 = vpack.c.b16 %v3376, %v3365
    %v5192 = vpack.c.b16 %v3377, %v3366
    %v5193 = vpack.c.b16 %v3378, %v3367
    %v5194 = vpack.c.b16 %v3379, %v3368
    %v5195 = vpack.c.b16 %v3380, %v3369
    %v5196 = vpack.c.b16 %v3381, %v3370
    %v5197 = vpack.c.b16 %v3382, %v3371
    %v5198 = vpack.c.b16 %v3394, %v3383
    %v5199 = vpack.c.b16 %v3395, %v3384
    %v5200 = vpack.c.b16 %v3396, %v3385
    %v5201 = vpack.c.b16 %v3397, %v3386
    %v5202 = vpack.c.b16 %v3398, %v3387
    %v5203 = vpack.c.b16 %v3399, %v3388
    %v5204 = vpack.c.b16 %v3400, %v3389
    %v5205 = vpack.c.b16 %v3401, %v3390
    %v5206 = vpack.c.b16 %v3402, %v3391
    %v5207 = vpack.c.b16 %v3403, %v3392
    %v5208 = vpack.c.b16 %v3404, %v3393
    %v5209 = vpack.c.b16 %v3416, %v3405
    %v5210 = vpack.c.b16 %v3417, %v3406
    %v5211 = vpack.c.b16 %v3418, %v3407
    %v5212 = vpack.c.b16 %v3419, %v3408
    %v5213 = vpack.c.b16 %v3420, %v3409
    %v5214 = vpack.c.b16 %v3421, %v3410
    %v5215 = vpack.c.b16 %v3422, %v3411
    %v5216 = vpack.c.b16 %v3423, %v3412
    %v5217 = vpack.c.b16 %v3424, %v3413
    %v5218 = vpack.c.b16 %v3425, %v3414
    %v5219 = vpack.c.b16 %v3426, %v3415
    %v5220 = vpack.c.b16 %v3438, %v3427
    %v5221 = vpack.c.b16 %v3439, %v3428
    %v5222 = vpack.c.b16 %v3440, %v3429
    %v5223 = vpack.c.b16 %v3441, %v3430
    %v5224 = vpack.c.b16 %v3442, %v3431
    %v5225 = vpack.c.b16 %v3443, %v3432
    %v5226 = vpack.c.b16 %v3444, %v3433
    %v5227 = vpack.c.b16 %v3445, %v3434
    %v5228 = vpack.c.b16 %v3446, %v3435
    %v5229 = vpack.c.b16 %v3447, %v3436
    %v5230 = vpack.c.b16 %v3448, %v3437
    %v5231 = vpack.c.b16 %v3460, %v3449
    %v5232 = vpack.c.b16 %v3461, %v3450
    %v5233 = vpack.c.b16 %v3462, %v3451
    %v5234 = vpack.c.b16 %v3463, %v3452
    %v5235 = vpack.c.b16 %v3464, %v3453
    %v5236 = vpack.c.b16 %v3465, %v3454
    %v5237 = vpack.c.b16 %v3466, %v3455
    %v5238 = vpack.c.b16 %v3467, %v3456
    %v5239 = vpack.c.b16 %v3468, %v3457
    %v5240 = vpack.c.b16 %v3469, %v3458
    %v5241 = vpack.c.b16 %v3470, %v3459
    %v5242 = vpack.c.b16 %v3482, %v3471
    %v5243 = vpack.c.b16 %v3483, %v3472
    %v5244 = vpack.c.b16 %v3484, %v3473
    %v5245 = vpack.c.b16 %v3485, %v3474
    %v5246 = vpack.c.b16 %v3486, %v3475
    %v5247 = vpack.c.b16 %v3487, %v3476
    %v5248 = vpack.c.b16 %v3488, %v3477
    %v5249 = vpack.c.b16 %v3489, %v3478
    %v5250 = vpack.c.b16 %v3490, %v3479
    %v5251 = vpack.c.b16 %v3491, %v3480
    %v5252 = vpack.c.b16 %v3492, %v3481
    %v5253 = vpack.c.b16 %v3504, %v3493
    %v5254 = vpack.c.b16 %v3505, %v3494
    %v5255 = vpack.c.b16 %v3506, %v3495
    %v5256 = vpack.c.b16 %v3507, %v3496
    %v5257 = vpack.c.b16 %v3508, %v3497
    %v5258 = vpack.c.b16 %v3509, %v3498
    %v5259 = vpack.c.b16 %v3510, %v3499
    %v5260 = vpack.c.b16 %v3511, %v3500
    %v5261 = vpack.c.b16 %v3512, %v3501
    %v5262 = vpack.c.b16 %v3513, %v3502
    %v5263 = vpack.c.b16 %v3514, %v3503
    %v5264 = vpack.c.b16 %v3526, %v3515
    %v5265 = vpack.c.b16 %v3527, %v3516
    %v5266 = vpack.c.b16 %v3528, %v3517
    %v5267 = vpack.c.b16 %v3529, %v3518
    %v5268 = vpack.c.b16 %v3530, %v3519
    %v5269 = vpack.c.b16 %v3531, %v3520
    %v5270 = vpack.c.b16 %v3532, %v3521
    %v5271 = vpack.c.b16 %v3533, %v3522
    %v5272 = vpack.c.b16 %v3534, %v3523
    %v5273 = vpack.c.b16 %v3535, %v3524
    %v5274 = vpack.c.b16 %v3536, %v3525
    %v5275 = vpack.c.b16 %v3548, %v3537
    %v5276 = vpack.c.b16 %v3549, %v3538
    %v5277 = vpack.c.b16 %v3550, %v3539
    %v5278 = vpack.c.b16 %v3551, %v3540
    %v5279 = vpack.c.b16 %v3552, %v3541
    %v5280 = vpack.c.b16 %v3553, %v3542
    %v5281 = vpack.c.b16 %v3554, %v3543
    %v5282 = vpack.c.b16 %v3555, %v3544
    %v5283 = vpack.c.b16 %v3556, %v3545
    %v5284 = vpack.c.b16 %v3557, %v3546
    %v5285 = vpack.c.b16 %v3558, %v3547
    %v5286 = vpack.c.b16 %v3570, %v3559
    %v5287 = vpack.c.b16 %v3571, %v3560
    %v5288 = vpack.c.b16 %v3572, %v3561
    %v5289 = vpack.c.b16 %v3573, %v3562
    %v5290 = vpack.c.b16 %v3574, %v3563
    %v5291 = vpack.c.b16 %v3575, %v3564
    %v5292 = vpack.c.b16 %v3576, %v3565
    %v5293 = vpack.c.b16 %v3577, %v3566
    %v5294 = vpack.c.b16 %v3578, %v3567
    %v5295 = vpack.c.b16 %v3579, %v3568
    %v5296 = vpack.c.b16 %v3580, %v3569
    %v5297 = vpack.c.b16 %v3592, %v3581
    %v5298 = vpack.c.b16 %v3593, %v3582
    %v5299 = vpack.c.b16 %v3594, %v3583
    %v5300 = vpack.c.b16 %v3595, %v3584
    %v5301 = vpack.c.b16 %v3596, %v3585
    %v5302 = vpack.c.b16 %v3597, %v3586
    %v5303 = vpack.c.b16 %v3598, %v3587
    %v5304 = vpack.c.b16 %v3599, %v3588
    %v5305 = vpack.c.b16 %v3600, %v3589
    %v5306 = vpack.c.b16 %v3601, %v3590
    %v5307 = vpack.c.b16 %v3602, %v3591
    %v5308 = vpack.c.b16 %v3614, %v3603
    %v5309 = vpack.c.b16 %v3615, %v3604
    %v5310 = vpack.c.b16 %v3616, %v3605
    %v5311 = vpack.c.b16 %v3617, %v3606
    %v5312 = vpack.c.b16 %v3618, %v3607
    %v5313 = vpack.c.b16 %v3619, %v3608
    %v5314 = vpack.c.b16 %v3620, %v3609
    %v5315 = vpack.c.b16 %v3621, %v3610
    %v5316 = vpack.c.b16 %v3622, %v3611
    %v5317 = vpack.c.b16 %v3623, %v3612
    %v5318 = vpack.c.b16 %v3624, %v3613
    %v5319 = vpack.c.b16 %v3636, %v3625
    %v5320 = vpack.c.b16 %v3637, %v3626
    %v5321 = vpack.c.b16 %v3638, %v3627
    %v5322 = vpack.c.b16 %v3639, %v3628
    %v5323 = vpack.c.b16 %v3640, %v3629
    %v5324 = vpack.c.b16 %v3641, %v3630
    %v5325 = vpack.c.b16 %v3642, %v3631
    %v5326 = vpack.c.b16 %v3643, %v3632
    %v5327 = vpack.c.b16 %v3644, %v3633
    %v5328 = vpack.c.b16 %v3645, %v3634
    %v5329 = vpack.c.b16 %v3646, %v3635
    %v5330 = vpack.c.b16 %v3658, %v3647
    %v5331 = vpack.c.b16 %v3659, %v3648
    %v5332 = vpack.c.b16 %v3660, %v3649
    %v5333 = vpack.c.b16 %v3661, %v3650
    %v5334 = vpack.c.b16 %v3662, %v3651
    %v5335 = vpack.c.b16 %v3663, %v3652
    %v5336 = vpack.c.b16 %v3664, %v3653
    %v5337 = vpack.c.b16 %v3665, %v3654
    %v5338 = vpack.c.b16 %v3666, %v3655
    %v5339 = vpack.c.b16 %v3667, %v3656
    %v5340 = vpack.c.b16 %v3668, %v3657
    %v5341 = vpack.c.b16 %v3680, %v3669
    %v5342 = vpack.c.b16 %v3681, %v3670
    %v5343 = vpack.c.b16 %v3682, %v3671
    %v5344 = vpack.c.b16 %v3683, %v3672
    %v5345 = vpack.c.b16 %v3684, %v3673
    %v5346 = vpack.c.b16 %v3685, %v3674
    %v5347 = vpack.c.b16 %v3686, %v3675
    %v5348 = vpack.c.b16 %v3687, %v3676
    %v5349 = vpack.c.b16 %v3688, %v3677
    %v5350 = vpack.c.b16 %v3689, %v3678
    %v5351 = vpack.c.b16 %v3690, %v3679
    %v5352 = vpack.c.b16 %v3702, %v3691
    %v5353 = vpack.c.b16 %v3703, %v3692
    %v5354 = vpack.c.b16 %v3704, %v3693
    %v5355 = vpack.c.b16 %v3705, %v3694
    %v5356 = vpack.c.b16 %v3706, %v3695
    %v5357 = vpack.c.b16 %v3707, %v3696
    %v5358 = vpack.c.b16 %v3708, %v3697
    %v5359 = vpack.c.b16 %v3709, %v3698
    %v5360 = vpack.c.b16 %v3710, %v3699
    %v5361 = vpack.c.b16 %v3711, %v3700
    %v5362 = vpack.c.b16 %v3712, %v3701
    %v5363 = vpack.c.b16 %v3724, %v3713
    %v5364 = vpack.c.b16 %v3725, %v3714
    %v5365 = vpack.c.b16 %v3726, %v3715
    %v5366 = vpack.c.b16 %v3727, %v3716
    %v5367 = vpack.c.b16 %v3728, %v3717
    %v5368 = vpack.c.b16 %v3729, %v3718
    %v5369 = vpack.c.b16 %v3730, %v3719
    %v5370 = vpack.c.b16 %v3731, %v3720
    %v5371 = vpack.c.b16 %v3732, %v3721
    %v5372 = vpack.c.b16 %v3733, %v3722
    %v5373 = vpack.c.b16 %v3734, %v3723
    %v5374 = vpack.c.b16 %v3746, %v3735
    %v5375 = vpack.c.b16 %v3747, %v3736
    %v5376 = vpack.c.b16 %v3748, %v3737
    %v5377 = vpack.c.b16 %v3749, %v3738
    %v5378 = vpack.c.b16 %v3750, %v3739
    %v5379 = vpack.c.b16 %v3751, %v3740
    %v5380 = vpack.c.b16 %v3752, %v3741
    %v5381 = vpack.c.b16 %v3753, %v3742
    %v5382 = vpack.c.b16 %v3754, %v3743
    %v5383 = vpack.c.b16 %v3755, %v3744
    %v5384 = vpack.c.b16 %v3756, %v3745
    %v5385 = vpack.c.b16 %v3768, %v3757
    %v5386 = vpack.c.b16 %v3769, %v3758
    %v5387 = vpack.c.b16 %v3770, %v3759
    %v5388 = vpack.c.b16 %v3771, %v3760
    %v5389 = vpack.c.b16 %v3772, %v3761
    %v5390 = vpack.c.b16 %v3773, %v3762
    %v5391 = vpack.c.b16 %v3774, %v3763
    %v5392 = vpack.c.b16 %v3775, %v3764
    %v5393 = vpack.c.b16 %v3776, %v3765
    %v5394 = vpack.c.b16 %v3777, %v3766
    %v5395 = vpack.c.b16 %v3778, %v3767
    %v5396 = vpack.c.b16 %v3790, %v3779
    %v5397 = vpack.c.b16 %v3791, %v3780
    %v5398 = vpack.c.b16 %v3792, %v3781
    %v5399 = vpack.c.b16 %v3793, %v3782
    %v5400 = vpack.c.b16 %v3794, %v3783
    %v5401 = vpack.c.b16 %v3795, %v3784
    %v5402 = vpack.c.b16 %v3796, %v3785
    %v5403 = vpack.c.b16 %v3797, %v3786
    %v5404 = vpack.c.b16 %v3798, %v3787
    %v5405 = vpack.c.b16 %v3799, %v3788
    %v5406 = vpack.c.b16 %v3800, %v3789
    %v5407 = vpack.c.b16 %v3812, %v3801
    %v5408 = vpack.c.b16 %v3813, %v3802
    %v5409 = vpack.c.b16 %v3814, %v3803
    %v5410 = vpack.c.b16 %v3815, %v3804
    %v5411 = vpack.c.b16 %v3816, %v3805
    %v5412 = vpack.c.b16 %v3817, %v3806
    %v5413 = vpack.c.b16 %v3818, %v3807
    %v5414 = vpack.c.b16 %v3819, %v3808
    %v5415 = vpack.c.b16 %v3820, %v3809
    %v5416 = vpack.c.b16 %v3821, %v3810
    %v5417 = vpack.c.b16 %v3822, %v3811
    %v5418 = vpack.c.b16 %v3834, %v3823
    %v5419 = vpack.c.b16 %v3835, %v3824
    %v5420 = vpack.c.b16 %v3836, %v3825
    %v5421 = vpack.c.b16 %v3837, %v3826
    %v5422 = vpack.c.b16 %v3838, %v3827
    %v5423 = vpack.c.b16 %v3839, %v3828
    %v5424 = vpack.c.b16 %v3840, %v3829
    %v5425 = vpack.c.b16 %v3841, %v3830
    %v5426 = vpack.c.b16 %v3842, %v3831
    %v5427 = vpack.c.b16 %v3843, %v3832
    %v5428 = vpack.c.b16 %v3844, %v3833
    %v5429 = vpack.c.b16 %v3856, %v3845
    %v5430 = vpack.c.b16 %v3857, %v3846
    %v5431 = vpack.c.b16 %v3858, %v3847
    %v5432 = vpack.c.b16 %v3859, %v3848
    %v5433 = vpack.c.b16 %v3860, %v3849
    %v5434 = vpack.c.b16 %v3861, %v3850
    %v5435 = vpack.c.b16 %v3862, %v3851
    %v5436 = vpack.c.b16 %v3863, %v3852
    %v5437 = vpack.c.b16 %v3864, %v3853
    %v5438 = vpack.c.b16 %v3865, %v3854
    %v5439 = vpack.c.b16 %v3866, %v3855
    %v5440 = vpack.c.b16 %v3878, %v3867
    %v5441 = vpack.c.b16 %v3879, %v3868
    %v5442 = vpack.c.b16 %v3880, %v3869
    %v5443 = vpack.c.b16 %v3881, %v3870
    %v5444 = vpack.c.b16 %v3882, %v3871
    %v5445 = vpack.c.b16 %v3883, %v3872
    %v5446 = vpack.c.b16 %v3884, %v3873
    %v5447 = vpack.c.b16 %v3885, %v3874
    %v5448 = vpack.c.b16 %v3886, %v3875
    %v5449 = vpack.c.b16 %v3887, %v3876
    %v5450 = vpack.c.b16 %v3888, %v3877
    %v5451 = vpack.c.b16 %v3900, %v3889
    %v5452 = vpack.c.b16 %v3901, %v3890
    %v5453 = vpack.c.b16 %v3902, %v3891
    %v5454 = vpack.c.b16 %v3903, %v3892
    %v5455 = vpack.c.b16 %v3904, %v3893
    %v5456 = vpack.c.b16 %v3905, %v3894
    %v5457 = vpack.c.b16 %v3906, %v3895
    %v5458 = vpack.c.b16 %v3907, %v3896
    %v5459 = vpack.c.b16 %v3908, %v3897
    %v5460 = vpack.c.b16 %v3909, %v3898
    %v5461 = vpack.c.b16 %v3910, %v3899
    %v5462 = vpack.c.b16 %v3922, %v3911
    %v5463 = vpack.c.b16 %v3923, %v3912
    %v5464 = vpack.c.b16 %v3924, %v3913
    %v5465 = vpack.c.b16 %v3925, %v3914
    %v5466 = vpack.c.b16 %v3926, %v3915
    %v5467 = vpack.c.b16 %v3927, %v3916
    %v5468 = vpack.c.b16 %v3928, %v3917
    %v5469 = vpack.c.b16 %v3929, %v3918
    %v5470 = vpack.c.b16 %v3930, %v3919
    %v5471 = vpack.c.b16 %v3931, %v3920
    %v5472 = vpack.c.b16 %v3932, %v3921
    %v5473 = vpack.c.b16 %v3944, %v3933
    %v5474 = vpack.c.b16 %v3945, %v3934
    %v5475 = vpack.c.b16 %v3946, %v3935
    %v5476 = vpack.c.b16 %v3947, %v3936
    %v5477 = vpack.c.b16 %v3948, %v3937
    %v5478 = vpack.c.b16 %v3949, %v3938
    %v5479 = vpack.c.b16 %v3950, %v3939
    %v5480 = vpack.c.b16 %v3951, %v3940
    %v5481 = vpack.c.b16 %v3952, %v3941
    %v5482 = vpack.c.b16 %v3953, %v3942
    %v5483 = vpack.c.b16 %v3954, %v3943
    %v5484 = vpack.c.b16 %v3966, %v3955
    %v5485 = vpack.c.b16 %v3967, %v3956
    %v5486 = vpack.c.b16 %v3968, %v3957
    %v5487 = vpack.c.b16 %v3969, %v3958
    %v5488 = vpack.c.b16 %v3970, %v3959
    %v5489 = vpack.c.b16 %v3971, %v3960
    %v5490 = vpack.c.b16 %v3972, %v3961
    %v5491 = vpack.c.b16 %v3973, %v3962
    %v5492 = vpack.c.b16 %v3974, %v3963
    %v5493 = vpack.c.b16 %v3975, %v3964
    %v5494 = vpack.c.b16 %v3976, %v3965
    %v5495 = vpack.c.b16 %v3988, %v3977
    %v5496 = vpack.c.b16 %v3989, %v3978
    %v5497 = vpack.c.b16 %v3990, %v3979
    %v5498 = vpack.c.b16 %v3991, %v3980
    %v5499 = vpack.c.b16 %v3992, %v3981
    %v5500 = vpack.c.b16 %v3993, %v3982
    %v5501 = vpack.c.b16 %v3994, %v3983
    %v5502 = vpack.c.b16 %v3995, %v3984
    %v5503 = vpack.c.b16 %v3996, %v3985
    %v5504 = vpack.c.b16 %v3997, %v3986
    %v5505 = vpack.c.b16 %v3998, %v3987
    %v5506 = vpack.c.b16 %v4010, %v3999
    %v5507 = vpack.c.b16 %v4011, %v4000
    %v5508 = vpack.c.b16 %v4012, %v4001
    %v5509 = vpack.c.b16 %v4013, %v4002
    %v5510 = vpack.c.b16 %v4014, %v4003
    %v5511 = vpack.c.b16 %v4015, %v4004
    %v5512 = vpack.c.b16 %v4016, %v4005
    %v5513 = vpack.c.b16 %v4017, %v4006
    %v5514 = vpack.c.b16 %v4018, %v4007
    %v5515 = vpack.c.b16 %v4019, %v4008
    %v5516 = vpack.c.b16 %v4020, %v4009
    %v5517 = vpack.c.b16 %v4032, %v4021
    %v5518 = vpack.c.b16 %v4033, %v4022
    %v5519 = vpack.c.b16 %v4034, %v4023
    %v5520 = vpack.c.b16 %v4035, %v4024
    %v5521 = vpack.c.b16 %v4036, %v4025
    %v5522 = vpack.c.b16 %v4037, %v4026
    %v5523 = vpack.c.b16 %v4038, %v4027
    %v5524 = vpack.c.b16 %v4039, %v4028
    %v5525 = vpack.c.b16 %v4040, %v4029
    %v5526 = vpack.c.b16 %v4041, %v4030
    %v5527 = vpack.c.b16 %v4042, %v4031
    %v5528 = vpack.c.b16 %v4054, %v4043
    %v5529 = vpack.c.b16 %v4055, %v4044
    %v5530 = vpack.c.b16 %v4056, %v4045
    %v5531 = vpack.c.b16 %v4057, %v4046
    %v5532 = vpack.c.b16 %v4058, %v4047
    %v5533 = vpack.c.b16 %v4059, %v4048
    %v5534 = vpack.c.b16 %v4060, %v4049
    %v5535 = vpack.c.b16 %v4061, %v4050
    %v5536 = vpack.c.b16 %v4062, %v4051
    %v5537 = vpack.c.b16 %v4063, %v4052
    %v5538 = vpack.c.b16 %v4064, %v4053
    %v5539 = vpack.c.b16 %v4076, %v4065
    %v5540 = vpack.c.b16 %v4077, %v4066
    %v5541 = vpack.c.b16 %v4078, %v4067
    %v5542 = vpack.c.b16 %v4079, %v4068
    %v5543 = vpack.c.b16 %v4080, %v4069
    %v5544 = vpack.c.b16 %v4081, %v4070
    %v5545 = vpack.c.b16 %v4082, %v4071
    %v5546 = vpack.c.b16 %v4083, %v4072
    %v5547 = vpack.c.b16 %v4084, %v4073
    %v5548 = vpack.c.b16 %v4085, %v4074
    %v5549 = vpack.c.b16 %v4086, %v4075
    %v5550 = vpack.c.b16 %v4098, %v4087
    %v5551 = vpack.c.b16 %v4099, %v4088
    %v5552 = vpack.c.b16 %v4100, %v4089
    %v5553 = vpack.c.b16 %v4101, %v4090
    %v5554 = vpack.c.b16 %v4102, %v4091
    %v5555 = vpack.c.b16 %v4103, %v4092
    %v5556 = vpack.c.b16 %v4104, %v4093
    %v5557 = vpack.c.b16 %v4105, %v4094
    %v5558 = vpack.c.b16 %v4106, %v4095
    %v5559 = vpack.c.b16 %v4107, %v4096
    %v5560 = vpack.c.b16 %v4108, %v4097
    %v5561 = vpack.c.b16 %v4120, %v4109
    %v5562 = vpack.c.b16 %v4121, %v4110
    %v5563 = vpack.c.b16 %v4122, %v4111
    %v5564 = vpack.c.b16 %v4123, %v4112
    %v5565 = vpack.c.b16 %v4124, %v4113
    %v5566 = vpack.c.b16 %v4125, %v4114
    %v5567 = vpack.c.b16 %v4126, %v4115
    %v5568 = vpack.c.b16 %v4127, %v4116
    %v5569 = vpack.c.b16 %v4128, %v4117
    %v5570 = vpack.c.b16 %v4129, %v4118
    %v5571 = vpack.c.b16 %v4130, %v4119
    %v5572 = vpack.c.b16 %v4142, %v4131
    %v5573 = vpack.c.b16 %v4143, %v4132
    %v5574 = vpack.c.b16 %v4144, %v4133
    %v5575 = vpack.c.b16 %v4145, %v4134
    %v5576 = vpack.c.b16 %v4146, %v4135
    %v5577 = vpack.c.b16 %v4147, %v4136
    %v5578 = vpack.c.b16 %v4148, %v4137
    %v5579 = vpack.c.b16 %v4149, %v4138
    %v5580 = vpack.c.b16 %v4150, %v4139
    %v5581 = vpack.c.b16 %v4151, %v4140
    %v5582 = vpack.c.b16 %v4152, %v4141
    %v5583 = vpack.c.b16 %v4164, %v4153
    %v5584 = vpack.c.b16 %v4165, %v4154
    %v5585 = vpack.c.b16 %v4166, %v4155
    %v5586 = vpack.c.b16 %v4167, %v4156
    %v5587 = vpack.c.b16 %v4168, %v4157
    %v5588 = vpack.c.b16 %v4169, %v4158
    %v5589 = vpack.c.b16 %v4170, %v4159
    %v5590 = vpack.c.b16 %v4171, %v4160
    %v5591 = vpack.c.b16 %v4172, %v4161
    %v5592 = vpack.c.b16 %v4173, %v4162
    %v5593 = vpack.c.b16 %v4174, %v4163
    %v5594 = vpack.c.b16 %v4186, %v4175
    %v5595 = vpack.c.b16 %v4187, %v4176
    %v5596 = vpack.c.b16 %v4188, %v4177
    %v5597 = vpack.c.b16 %v4189, %v4178
    %v5598 = vpack.c.b16 %v4190, %v4179
    %v5599 = vpack.c.b16 %v4191, %v4180
    %v5600 = vpack.c.b16 %v4192, %v4181
    %v5601 = vpack.c.b16 %v4193, %v4182
    %v5602 = vpack.c.b16 %v4194, %v4183
    %v5603 = vpack.c.b16 %v4195, %v4184
    %v5604 = vpack.c.b16 %v4196, %v4185
    %v5605 = vpack.c.b16 %v4208, %v4197
    %v5606 = vpack.c.b16 %v4209, %v4198
    %v5607 = vpack.c.b16 %v4210, %v4199
    %v5608 = vpack.c.b16 %v4211, %v4200
    %v5609 = vpack.c.b16 %v4212, %v4201
    %v5610 = vpack.c.b16 %v4213, %v4202
    %v5611 = vpack.c.b16 %v4214, %v4203
    %v5612 = vpack.c.b16 %v4215, %v4204
    %v5613 = vpack.c.b16 %v4216, %v4205
    %v5614 = vpack.c.b16 %v4217, %v4206
    %v5615 = vpack.c.b16 %v4218, %v4207
    %v5616 = vpack.c.b16 %v4230, %v4219
    %v5617 = vpack.c.b16 %v4231, %v4220
    %v5618 = vpack.c.b16 %v4232, %v4221
    %v5619 = vpack.c.b16 %v4233, %v4222
    %v5620 = vpack.c.b16 %v4234, %v4223
    %v5621 = vpack.c.b16 %v4235, %v4224
    %v5622 = vpack.c.b16 %v4236, %v4225
    %v5623 = vpack.c.b16 %v4237, %v4226
    %v5624 = vpack.c.b16 %v4238, %v4227
    %v5625 = vpack.c.b16 %v4239, %v4228
    %v5626 = vpack.c.b16 %v4240, %v4229
    %v5627 = vpack.c.b16 %v4252, %v4241
    %v5628 = vpack.c.b16 %v4253, %v4242
    %v5629 = vpack.c.b16 %v4254, %v4243
    %v5630 = vpack.c.b16 %v4255, %v4244
    %v5631 = vpack.c.b16 %v4256, %v4245
    %v5632 = vpack.c.b16 %v4257, %v4246
    %v5633 = vpack.c.b16 %v4258, %v4247
    %v5634 = vpack.c.b16 %v4259, %v4248
    %v5635 = vpack.c.b16 %v4260, %v4249
    %v5636 = vpack.c.b16 %v4261, %v4250
    %v5637 = vpack.c.b16 %v4262, %v4251
    %v5638 = vpack.c.b16 %v4274, %v4263
    %v5639 = vpack.c.b16 %v4275, %v4264
    %v5640 = vpack.c.b16 %v4276, %v4265
    %v5641 = vpack.c.b16 %v4277, %v4266
    %v5642 = vpack.c.b16 %v4278, %v4267
    %v5643 = vpack.c.b16 %v4279, %v4268
    %v5644 = vpack.c.b16 %v4280, %v4269
    %v5645 = vpack.c.b16 %v4281, %v4270
    %v5646 = vpack.c.b16 %v4282, %v4271
    %v5647 = vpack.c.b16 %v4283, %v4272
    %v5648 = vpack.c.b16 %v4284, %v4273
    %v5649 = vpack.c.b16 %v4296, %v4285
    %v5650 = vpack.c.b16 %v4297, %v4286
    %v5651 = vpack.c.b16 %v4298, %v4287
    %v5652 = vpack.c.b16 %v4299, %v4288
    %v5653 = vpack.c.b16 %v4300, %v4289
    %v5654 = vpack.c.b16 %v4301, %v4290
    %v5655 = vpack.c.b16 %v4302, %v4291
    %v5656 = vpack.c.b16 %v4303, %v4292
    %v5657 = vpack.c.b16 %v4304, %v4293
    %v5658 = vpack.c.b16 %v4305, %v4294
    %v5659 = vpack.c.b16 %v4306, %v4295
    %v5660 = vpack.c.b16 %v4318, %v4307
    %v5661 = vpack.c.b16 %v4319, %v4308
    %v5662 = vpack.c.b16 %v4320, %v4309
    %v5663 = vpack.c.b16 %v4321, %v4310
    %v5664 = vpack.c.b16 %v4322, %v4311
    %v5665 = vpack.c.b16 %v4323, %v4312
    %v5666 = vpack.c.b16 %v4324, %v4313
    %v5667 = vpack.c.b16 %v4325, %v4314
    %v5668 = vpack.c.b16 %v4326, %v4315
    %v5669 = vpack.c.b16 %v4327, %v4316
    %v5670 = vpack.c.b16 %v4328, %v4317
    %v5671 = vpack.c.b16 %v4340, %v4329
    %v5672 = vpack.c.b16 %v4341, %v4330
    %v5673 = vpack.c.b16 %v4342, %v4331
    %v5674 = vpack.c.b16 %v4343, %v4332
    %v5675 = vpack.c.b16 %v4344, %v4333
    %v5676 = vpack.c.b16 %v4345, %v4334
    %v5677 = vpack.c.b16 %v4346, %v4335
    %v5678 = vpack.c.b16 %v4347, %v4336
    %v5679 = vpack.c.b16 %v4348, %v4337
    %v5680 = vpack.c.b16 %v4349, %v4338
    %v5681 = vpack.c.b16 %v4350, %v4339
    %v5682 = vpack.c.b16 %v4362, %v4351
    %v5683 = vpack.c.b16 %v4363, %v4352
    %v5684 = vpack.c.b16 %v4364, %v4353
    %v5685 = vpack.c.b16 %v4365, %v4354
    %v5686 = vpack.c.b16 %v4366, %v4355
    %v5687 = vpack.c.b16 %v4367, %v4356
    %v5688 = vpack.c.b16 %v4368, %v4357
    %v5689 = vpack.c.b16 %v4369, %v4358
    %v5690 = vpack.c.b16 %v4370, %v4359
    %v5691 = vpack.c.b16 %v4371, %v4360
    %v5692 = vpack.c.b16 %v4372, %v4361
    %v5693 = vpack.c.b16 %v4384, %v4373
    %v5694 = vpack.c.b16 %v4385, %v4374
    %v5695 = vpack.c.b16 %v4386, %v4375
    %v5696 = vpack.c.b16 %v4387, %v4376
    %v5697 = vpack.c.b16 %v4388, %v4377
    %v5698 = vpack.c.b16 %v4389, %v4378
    %v5699 = vpack.c.b16 %v4390, %v4379
    %v5700 = vpack.c.b16 %v4391, %v4380
    %v5701 = vpack.c.b16 %v4392, %v4381
    %v5702 = vpack.c.b16 %v4393, %v4382
    %v5703 = vpack.c.b16 %v4394, %v4383
    %v5704 = vpack.c.b16 %v4406, %v4395
    %v5705 = vpack.c.b16 %v4407, %v4396
    %v5706 = vpack.c.b16 %v4408, %v4397
    %v5707 = vpack.c.b16 %v4409, %v4398
    %v5708 = vpack.c.b16 %v4410, %v4399
    %v5709 = vpack.c.b16 %v4411, %v4400
    %v5710 = vpack.c.b16 %v4412, %v4401
    %v5711 = vpack.c.b16 %v4413, %v4402
    %v5712 = vpack.c.b16 %v4414, %v4403
    %v5713 = vpack.c.b16 %v4415, %v4404
    %v5714 = vpack.c.b16 %v4416, %v4405
    %v5715 = vpack.c.b16 %v4428, %v4417
    %v5716 = vpack.c.b16 %v4429, %v4418
    %v5717 = vpack.c.b16 %v4430, %v4419
    %v5718 = vpack.c.b16 %v4431, %v4420
    %v5719 = vpack.c.b16 %v4432, %v4421
    %v5720 = vpack.c.b16 %v4433, %v4422
    %v5721 = vpack.c.b16 %v4434, %v4423
    %v5722 = vpack.c.b16 %v4435, %v4424
    %v5723 = vpack.c.b16 %v4436, %v4425
    %v5724 = vpack.c.b16 %v4437, %v4426
    %v5725 = vpack.c.b16 %v4438, %v4427
    %v5726 = vpack.c.b16 %v4450, %v4439
    %v5727 = vpack.c.b16 %v4451, %v4440
    %v5728 = vpack.c.b16 %v4452, %v4441
    %v5729 = vpack.c.b16 %v4453, %v4442
    %v5730 = vpack.c.b16 %v4454, %v4443
    %v5731 = vpack.c.b16 %v4455, %v4444
    %v5732 = vpack.c.b16 %v4456, %v4445
    %v5733 = vpack.c.b16 %v4457, %v4446
    %v5734 = vpack.c.b16 %v4458, %v4447
    %v5735 = vpack.c.b16 %v4459, %v4448
    %v5736 = vpack.c.b16 %v4460, %v4449
    %v5737 = vpack.c.b16 %v4472, %v4461
    %v5738 = vpack.c.b16 %v4473, %v4462
    %v5739 = vpack.c.b16 %v4474, %v4463
    %v5740 = vpack.c.b16 %v4475, %v4464
    %v5741 = vpack.c.b16 %v4476, %v4465
    %v5742 = vpack.c.b16 %v4477, %v4466
    %v5743 = vpack.c.b16 %v4478, %v4467
    %v5744 = vpack.c.b16 %v4479, %v4468
    %v5745 = vpack.c.b16 %v4480, %v4469
    %v5746 = vpack.c.b16 %v4481, %v4470
    %v5747 = vpack.c.b16 %v4482, %v4471
    %v5748 = vpack.c.b16 %v4494, %v4483
    %v5749 = vpack.c.b16 %v4495, %v4484
    %v5750 = vpack.c.b16 %v4496, %v4485
    %v5751 = vpack.c.b16 %v4497, %v4486
    %v5752 = vpack.c.b16 %v4498, %v4487
    %v5753 = vpack.c.b16 %v4499, %v4488
    %v5754 = vpack.c.b16 %v4500, %v4489
    %v5755 = vpack.c.b16 %v4501, %v4490
    %v5756 = vpack.c.b16 %v4502, %v4491
    %v5757 = vpack.c.b16 %v4503, %v4492
    %v5758 = vpack.c.b16 %v4504, %v4493
    %v5759 = vpack.c.b16 %v4516, %v4505
    %v5760 = vpack.c.b16 %v4517, %v4506
    %v5761 = vpack.c.b16 %v4518, %v4507
    %v5762 = vpack.c.b16 %v4519, %v4508
    %v5763 = vpack.c.b16 %v4520, %v4509
    %v5764 = vpack.c.b16 %v4521, %v4510
    %v5765 = vpack.c.b16 %v4522, %v4511
    %v5766 = vpack.c.b16 %v4523, %v4512
    %v5767 = vpack.c.b16 %v4524, %v4513
    %v5768 = vpack.c.b16 %v4525, %v4514
    %v5769 = vpack.c.b16 %v4526, %v4515
    %v5770 = vpack.c.b16 %v4538, %v4527
    %v5771 = vpack.c.b16 %v4539, %v4528
    %v5772 = vpack.c.b16 %v4540, %v4529
    %v5773 = vpack.c.b16 %v4541, %v4530
    %v5774 = vpack.c.b16 %v4542, %v4531
    %v5775 = vpack.c.b16 %v4543, %v4532
    %v5776 = vpack.c.b16 %v4544, %v4533
    %v5777 = vpack.c.b16 %v4545, %v4534
    %v5778 = vpack.c.b16 %v4546, %v4535
    %v5779 = vpack.c.b16 %v4547, %v4536
    %v5780 = vpack.c.b16 %v4548, %v4537
    %v5781 = vpack.c.b16 %v4560, %v4549
    %v5782 = vpack.c.b16 %v4561, %v4550
    %v5783 = vpack.c.b16 %v4562, %v4551
    %v5784 = vpack.c.b16 %v4563, %v4552
    %v5785 = vpack.c.b16 %v4564, %v4553
    %v5786 = vpack.c.b16 %v4565, %v4554
    %v5787 = vpack.c.b16 %v4566, %v4555
    %v5788 = vpack.c.b16 %v4567, %v4556
    %v5789 = vpack.c.b16 %v4568, %v4557
    %v5790 = vpack.c.b16 %v4569, %v4558
    %v5791 = vpack.c.b16 %v4570, %v4559
    %v5792 = vpack.c.b16 %v4582, %v4571
    %v5793 = vpack.c.b16 %v4583, %v4572
    %v5794 = vpack.c.b16 %v4584, %v4573
    %v5795 = vpack.c.b16 %v4585, %v4574
    %v5796 = vpack.c.b16 %v4586, %v4575
    %v5797 = vpack.c.b16 %v4587, %v4576
    %v5798 = vpack.c.b16 %v4588, %v4577
    %v5799 = vpack.c.b16 %v4589, %v4578
    %v5800 = vpack.c.b16 %v4590, %v4579
    %v5801 = vpack.c.b16 %v4591, %v4580
    %v5802 = vpack.c.b16 %v4592, %v4581
    %v5803 = vpack.c.b16 %v4604, %v4593
    %v5804 = vpack.c.b16 %v4605, %v4594
    %v5805 = vpack.c.b16 %v4606, %v4595
    %v5806 = vpack.c.b16 %v4607, %v4596
    %v5807 = vpack.c.b16 %v4608, %v4597
    %v5808 = vpack.c.b16 %v4609, %v4598
    %v5809 = vpack.c.b16 %v4610, %v4599
    %v5810 = vpack.c.b16 %v4611, %v4600
    %v5811 = vpack.c.b16 %v4612, %v4601
    %v5812 = vpack.c.b16 %v4613, %v4602
    %v5813 = vpack.c.b16 %v4614, %v4603
    %v5814 = vpack.c.b16 %v4626, %v4615
    %v5815 = vpack.c.b16 %v4627, %v4616
    %v5816 = vpack.c.b16 %v4628, %v4617
    %v5817 = vpack.c.b16 %v4629, %v4618
    %v5818 = vpack.c.b16 %v4630, %v4619
    %v5819 = vpack.c.b16 %v4631, %v4620
    %v5820 = vpack.c.b16 %v4632, %v4621
    %v5821 = vpack.c.b16 %v4633, %v4622
    %v5822 = vpack.c.b16 %v4634, %v4623
    %v5823 = vpack.c.b16 %v4635, %v4624
    %v5824 = vpack.c.b16 %v4636, %v4625
    %v5825 = vpack.c.b16 %v4648, %v4637
    %v5826 = vpack.c.b16 %v4649, %v4638
    %v5827 = vpack.c.b16 %v4650, %v4639
    %v5828 = vpack.c.b16 %v4651, %v4640
    %v5829 = vpack.c.b16 %v4652, %v4641
    %v5830 = vpack.c.b16 %v4653, %v4642
    %v5831 = vpack.c.b16 %v4654, %v4643
    %v5832 = vpack.c.b16 %v4655, %v4644
    %v5833 = vpack.c.b16 %v4656, %v4645
    %v5834 = vpack.c.b16 %v4657, %v4646
    %v5835 = vpack.c.b16 %v4658, %v4647
    %v5836 = vpack.c.b16 %v4670, %v4659
    %v5837 = vpack.c.b16 %v4671, %v4660
    %v5838 = vpack.c.b16 %v4672, %v4661
    %v5839 = vpack.c.b16 %v4673, %v4662
    %v5840 = vpack.c.b16 %v4674, %v4663
    %v5841 = vpack.c.b16 %v4675, %v4664
    %v5842 = vpack.c.b16 %v4676, %v4665
    %v5843 = vpack.c.b16 %v4677, %v4666
    %v5844 = vpack.c.b16 %v4678, %v4667
    %v5845 = vpack.c.b16 %v4679, %v4668
    %v5846 = vpack.c.b16 %v4680, %v4669
    %v5847 = vpack.c.b16 %v4692, %v4681
    %v5848 = vpack.c.b16 %v4693, %v4682
    %v5849 = vpack.c.b16 %v4694, %v4683
    %v5850 = vpack.c.b16 %v4695, %v4684
    %v5851 = vpack.c.b16 %v4696, %v4685
    %v5852 = vpack.c.b16 %v4697, %v4686
    %v5853 = vpack.c.b16 %v4698, %v4687
    %v5854 = vpack.c.b16 %v4699, %v4688
    %v5855 = vpack.c.b16 %v4700, %v4689
    %v5856 = vpack.c.b16 %v4701, %v4690
    %v5857 = vpack.c.b16 %v4702, %v4691
    %v5858 = vpack.c.b16 %v4714, %v4703
    %v5859 = vpack.c.b16 %v4715, %v4704
    %v5860 = vpack.c.b16 %v4716, %v4705
    %v5861 = vpack.c.b16 %v4717, %v4706
    %v5862 = vpack.c.b16 %v4718, %v4707
    %v5863 = vpack.c.b16 %v4719, %v4708
    %v5864 = vpack.c.b16 %v4720, %v4709
    %v5865 = vpack.c.b16 %v4721, %v4710
    %v5866 = vpack.c.b16 %v4722, %v4711
    %v5867 = vpack.c.b16 %v4723, %v4712
    %v5868 = vpack.c.b16 %v4724, %v4713
    %v5869 = vpack.c.b16 %v4736, %v4725
    %v5870 = vpack.c.b16 %v4737, %v4726
    %v5871 = vpack.c.b16 %v4738, %v4727
    %v5872 = vpack.c.b16 %v4739, %v4728
    %v5873 = vpack.c.b16 %v4740, %v4729
    %v5874 = vpack.c.b16 %v4741, %v4730
    %v5875 = vpack.c.b16 %v4742, %v4731
    %v5876 = vpack.c.b16 %v4743, %v4732
    %v5877 = vpack.c.b16 %v4744, %v4733
    %v5878 = vpack.c.b16 %v4745, %v4734
    %v5879 = vpack.c.b16 %v4746, %v4735
    %v5880 = vpack.c.b16 %v4758, %v4747
    %v5881 = vpack.c.b16 %v4759, %v4748
    %v5882 = vpack.c.b16 %v4760, %v4749
    %v5883 = vpack.c.b16 %v4761, %v4750
    %v5884 = vpack.c.b16 %v4762, %v4751
    %v5885 = vpack.c.b16 %v4763, %v4752
    %v5886 = vpack.c.b16 %v4764, %v4753
    %v5887 = vpack.c.b16 %v4765, %v4754
    %v5888 = vpack.c.b16 %v4766, %v4755
    %v5889 = vpack.c.b16 %v4767, %v4756
    %v5890 = vpack.c.b16 %v4768, %v4757
    %v5891 = vpack.c.b16 %v4780, %v4769
    %v5892 = vpack.c.b16 %v4781, %v4770
    %v5893 = vpack.c.b16 %v4782, %v4771
    %v5894 = vpack.c.b16 %v4783, %v4772
    %v5895 = vpack.c.b16 %v4784, %v4773
    %v5896 = vpack.c.b16 %v4785, %v4774
    %v5897 = vpack.c.b16 %v4786, %v4775
    %v5898 = vpack.c.b16 %v4787, %v4776
    %v5899 = vpack.c.b16 %v4788, %v4777
    %v5900 = vpack.c.b16 %v4789, %v4778
    %v5901 = vpack.c.b16 %v4790, %v4779
    %v5902 = vpack.c.b16 %v4802, %v4791
    %v5903 = vpack.c.b16 %v4803, %v4792
    %v5904 = vpack.c.b16 %v4804, %v4793
    %v5905 = vpack.c.b16 %v4805, %v4794
    %v5906 = vpack.c.b16 %v4806, %v4795
    %v5907 = vpack.c.b16 %v4807, %v4796
    %v5908 = vpack.c.b16 %v4808, %v4797
    %v5909 = vpack.c.b16 %v4809, %v4798
    %v5910 = vpack.c.b16 %v4810, %v4799
    %v5911 = vpack.c.b16 %v4811, %v4800
    %v5912 = vpack.c.b16 %v4812, %v4801
    %vm7013 = vcmask 523264
    %v7015 = vsel %vm7013, %v1400, 0
    %7017 = vmatprep.subr.bf16.mxu0 %v4891
    %7018 = vmatpush1.bf16.msra.mxu0 %v4890
    %7019 = vmatprep.subr.bf16.mxu0 %v4880
    %7020 = vmatpush1.bf16.msra.mxu0 %v4879
    %7021 = vmatprep.subr.bf16.mxu0 %v4869
    %7022 = vmatpush1.bf16.msra.mxu0 %v4868
    %7023 = vmatprep.subr.bf16.mxu0 %v4858
    %7024 = vmatpush1.bf16.msra.mxu0 %v4857
    %7025 = vmatprep.subr.bf16.mxu0 %v4847
    %7026 = vmatpush1.bf16.msra.mxu0 %v4846
    %7027 = vmatprep.subr.bf16.mxu0 %v4836
    %7028 = vmatpush1.bf16.msra.mxu0 %v4835
    %7029 = vmatprep.subr.bf16.mxu0 %v4825
    %7030 = vmatpush1.bf16.msra.mxu0 %v4824
    %7031 = vmatprep.subr.bf16.mxu0 %v4814
    %7032 = vmatpush1.bf16.msra.mxu0 %v4813
    %7033 = vmatprep.subr.bf16.mxu0 %v4979
    %7034 = vmatpush2.bf16.msra.mxu0 %v4978
    %7035 = vmatprep.subr.bf16.mxu0 %v4968
    %7036 = vmatpush2.bf16.msra.mxu0 %v4967
    %7037 = vmatprep.subr.bf16.mxu0 %v4957
    %7038 = vmatpush2.bf16.msra.mxu0 %v4956
    %7039 = vmatprep.subr.bf16.mxu0 %v4946
    %7040 = vmatpush2.bf16.msra.mxu0 %v4945
    %7041 = vmatprep.subr.bf16.mxu0 %v4935
    %7042 = vmatpush2.bf16.msra.mxu0 %v4934
    %7043 = vmatprep.subr.bf16.mxu0 %v4924
    %7044 = vmatpush2.bf16.msra.mxu0 %v4923
    %7045 = vmatprep.subr.bf16.mxu0 %v4913
    %7046 = vmatpush2.bf16.msra.mxu0 %v4912
    %7047 = vmatprep.subr.bf16.mxu0 %v4902
    %7048 = vmatpush2.bf16.msra.mxu0 %v4901
    %7049 = vmatprep.mubr.bf16.mxu0 %v1389
    %7050 = vmatmul.mubr.bf16.gmra.mxu0 %v1388
    %v7051 = vpop.f32.mrf.mxu0
    %v7052 = vadd.f32 %v1316, %v7051
    %v7053 = vpop.f32.mrf.mxu0
    %v7054 = vadd.f32 %v1320, %v7053
    %v7055 = vpop.f32.mrf.mxu0
    %v7056 = vpop.f32.mrf.mxu0
    %7057 = vdwg.mxu0
    %7058 = vmatprep.subr.bf16.mxu0 %v5067
    %7059 = vmatpush1.bf16.msra.mxu0 %v5066
    %7060 = vmatprep.subr.bf16.mxu0 %v5056
    %7061 = vmatpush1.bf16.msra.mxu0 %v5055
    %7062 = vmatprep.subr.bf16.mxu0 %v5045
    %7063 = vmatpush1.bf16.msra.mxu0 %v5044
    %7064 = vmatprep.subr.bf16.mxu0 %v5034
    %7065 = vmatpush1.bf16.msra.mxu0 %v5033
    %7066 = vmatprep.subr.bf16.mxu0 %v5023
    %7067 = vmatpush1.bf16.msra.mxu0 %v5022
    %7068 = vmatprep.subr.bf16.mxu0 %v5012
    %7069 = vmatpush1.bf16.msra.mxu0 %v5011
    %7070 = vmatprep.subr.bf16.mxu0 %v5001
    %7071 = vmatpush1.bf16.msra.mxu0 %v5000
    %7072 = vmatprep.subr.bf16.mxu0 %v4990
    %7073 = vmatpush1.bf16.msra.mxu0 %v4989
    %7074 = vmatprep.subr.bf16.mxu0 %v5155
    %7075 = vmatpush2.bf16.msra.mxu0 %v5154
    %7076 = vmatprep.subr.bf16.mxu0 %v5144
    %7077 = vmatpush2.bf16.msra.mxu0 %v5143
    %7078 = vmatprep.subr.bf16.mxu0 %v5133
    %7079 = vmatpush2.bf16.msra.mxu0 %v5132
    %7080 = vmatprep.subr.bf16.mxu0 %v5122
    %7081 = vmatpush2.bf16.msra.mxu0 %v5121
    %7082 = vmatprep.subr.bf16.mxu0 %v5111
    %7083 = vmatpush2.bf16.msra.mxu0 %v5110
    %7084 = vmatprep.subr.bf16.mxu0 %v5100
    %7085 = vmatpush2.bf16.msra.mxu0 %v5099
    %7086 = vmatprep.subr.bf16.mxu0 %v5089
    %7087 = vmatpush2.bf16.msra.mxu0 %v5088
    %7088 = vmatprep.subr.bf16.mxu0 %v5078
    %7089 = vmatpush2.bf16.msra.mxu0 %v5077
    %7090 = vmatprep.mubr.bf16.mxu0 %v1391
    %7091 = vmatmul.mubr.bf16.gmra.mxu0 %v1390
    %v7092 = vpop.f32.mrf.mxu0
    %v7093 = vadd.f32 %v7052, %v7092
    %v7094 = vpop.f32.mrf.mxu0
    %v7095 = vadd.f32 %v7054, %v7094
    %v7096 = vpop.f32.mrf.mxu0
    %v7097 = vpop.f32.mrf.mxu0
    %7098 = vdwg.mxu0
    %7099 = vmatprep.subr.bf16.mxu0 %v5243
    %7100 = vmatpush1.bf16.msra.mxu0 %v5242
    %7101 = vmatprep.subr.bf16.mxu0 %v5232
    %7102 = vmatpush1.bf16.msra.mxu0 %v5231
    %7103 = vmatprep.subr.bf16.mxu0 %v5221
    %7104 = vmatpush1.bf16.msra.mxu0 %v5220
    %7105 = vmatprep.subr.bf16.mxu0 %v5210
    %7106 = vmatpush1.bf16.msra.mxu0 %v5209
    %7107 = vmatprep.subr.bf16.mxu0 %v5199
    %7108 = vmatpush1.bf16.msra.mxu0 %v5198
    %7109 = vmatprep.subr.bf16.mxu0 %v5188
    %7110 = vmatpush1.bf16.msra.mxu0 %v5187
    %7111 = vmatprep.subr.bf16.mxu0 %v5177
    %7112 = vmatpush1.bf16.msra.mxu0 %v5176
    %7113 = vmatprep.subr.bf16.mxu0 %v5166
    %7114 = vmatpush1.bf16.msra.mxu0 %v5165
    %7115 = vmatprep.subr.bf16.mxu0 %v5331
    %7116 = vmatpush2.bf16.msra.mxu0 %v5330
    %7117 = vmatprep.subr.bf16.mxu0 %v5320
    %7118 = vmatpush2.bf16.msra.mxu0 %v5319
    %7119 = vmatprep.subr.bf16.mxu0 %v5309
    %7120 = vmatpush2.bf16.msra.mxu0 %v5308
    %7121 = vmatprep.subr.bf16.mxu0 %v5298
    %7122 = vmatpush2.bf16.msra.mxu0 %v5297
    %7123 = vmatprep.subr.bf16.mxu0 %v5287
    %7124 = vmatpush2.bf16.msra.mxu0 %v5286
    %7125 = vmatprep.subr.bf16.mxu0 %v5276
    %7126 = vmatpush2.bf16.msra.mxu0 %v5275
    %7127 = vmatprep.subr.bf16.mxu0 %v5265
    %7128 = vmatpush2.bf16.msra.mxu0 %v5264
    %7129 = vmatprep.subr.bf16.mxu0 %v5254
    %7130 = vmatpush2.bf16.msra.mxu0 %v5253
    %7131 = vmatprep.mubr.bf16.mxu0 %v1393
    %7132 = vmatmul.mubr.bf16.gmra.mxu0 %v1392
    %v7133 = vpop.f32.mrf.mxu0
    %v7134 = vadd.f32 %v7093, %v7133
    %v7135 = vpop.f32.mrf.mxu0
    %v7136 = vadd.f32 %v7095, %v7135
    %v7137 = vpop.f32.mrf.mxu0
    %v7138 = vpop.f32.mrf.mxu0
    %7139 = vdwg.mxu0
    %7140 = vmatprep.subr.bf16.mxu0 %v5419
    %7141 = vmatpush1.bf16.msra.mxu0 %v5418
    %7142 = vmatprep.subr.bf16.mxu0 %v5408
    %7143 = vmatpush1.bf16.msra.mxu0 %v5407
    %7144 = vmatprep.subr.bf16.mxu0 %v5397
    %7145 = vmatpush1.bf16.msra.mxu0 %v5396
    %7146 = vmatprep.subr.bf16.mxu0 %v5386
    %7147 = vmatpush1.bf16.msra.mxu0 %v5385
    %7148 = vmatprep.subr.bf16.mxu0 %v5375
    %7149 = vmatpush1.bf16.msra.mxu0 %v5374
    %7150 = vmatprep.subr.bf16.mxu0 %v5364
    %7151 = vmatpush1.bf16.msra.mxu0 %v5363
    %7152 = vmatprep.subr.bf16.mxu0 %v5353
    %7153 = vmatpush1.bf16.msra.mxu0 %v5352
    %7154 = vmatprep.subr.bf16.mxu0 %v5342
    %7155 = vmatpush1.bf16.msra.mxu0 %v5341
    %7156 = vmatprep.subr.bf16.mxu0 %v5507
    %7157 = vmatpush2.bf16.msra.mxu0 %v5506
    %7158 = vmatprep.subr.bf16.mxu0 %v5496
    %7159 = vmatpush2.bf16.msra.mxu0 %v5495
    %7160 = vmatprep.subr.bf16.mxu0 %v5485
    %7161 = vmatpush2.bf16.msra.mxu0 %v5484
    %7162 = vmatprep.subr.bf16.mxu0 %v5474
    %7163 = vmatpush2.bf16.msra.mxu0 %v5473
    %7164 = vmatprep.subr.bf16.mxu0 %v5463
    %7165 = vmatpush2.bf16.msra.mxu0 %v5462
    %7166 = vmatprep.subr.bf16.mxu0 %v5452
    %7167 = vmatpush2.bf16.msra.mxu0 %v5451
    %7168 = vmatprep.subr.bf16.mxu0 %v5441
    %7169 = vmatpush2.bf16.msra.mxu0 %v5440
    %7170 = vmatprep.subr.bf16.mxu0 %v5430
    %7171 = vmatpush2.bf16.msra.mxu0 %v5429
    %7172 = vmatprep.mubr.bf16.mxu0 %v1395
    %7173 = vmatmul.mubr.bf16.gmra.mxu0 %v1394
    %v7174 = vpop.f32.mrf.mxu0
    %v7175 = vadd.f32 %v7134, %v7174
    %v7176 = vpop.f32.mrf.mxu0
    %v7177 = vadd.f32 %v7136, %v7176
    %v7178 = vpop.f32.mrf.mxu0
    %v7179 = vpop.f32.mrf.mxu0
    %7180 = vdwg.mxu0
    %7181 = vmatprep.subr.bf16.mxu0 %v5595
    %7182 = vmatpush1.bf16.msra.mxu0 %v5594
    %7183 = vmatprep.subr.bf16.mxu0 %v5584
    %7184 = vmatpush1.bf16.msra.mxu0 %v5583
    %7185 = vmatprep.subr.bf16.mxu0 %v5573
    %7186 = vmatpush1.bf16.msra.mxu0 %v5572
    %7187 = vmatprep.subr.bf16.mxu0 %v5562
    %7188 = vmatpush1.bf16.msra.mxu0 %v5561
    %7189 = vmatprep.subr.bf16.mxu0 %v5551
    %7190 = vmatpush1.bf16.msra.mxu0 %v5550
    %7191 = vmatprep.subr.bf16.mxu0 %v5540
    %7192 = vmatpush1.bf16.msra.mxu0 %v5539
    %7193 = vmatprep.subr.bf16.mxu0 %v5529
    %7194 = vmatpush1.bf16.msra.mxu0 %v5528
    %7195 = vmatprep.subr.bf16.mxu0 %v5518
    %7196 = vmatpush1.bf16.msra.mxu0 %v5517
    %7197 = vmatprep.subr.bf16.mxu0 %v5683
    %7198 = vmatpush2.bf16.msra.mxu0 %v5682
    %7199 = vmatprep.subr.bf16.mxu0 %v5672
    %7200 = vmatpush2.bf16.msra.mxu0 %v5671
    %7201 = vmatprep.subr.bf16.mxu0 %v5661
    %7202 = vmatpush2.bf16.msra.mxu0 %v5660
    %7203 = vmatprep.subr.bf16.mxu0 %v5650
    %7204 = vmatpush2.bf16.msra.mxu0 %v5649
    %7205 = vmatprep.subr.bf16.mxu0 %v5639
    %7206 = vmatpush2.bf16.msra.mxu0 %v5638
    %7207 = vmatprep.subr.bf16.mxu0 %v5628
    %7208 = vmatpush2.bf16.msra.mxu0 %v5627
    %7209 = vmatprep.subr.bf16.mxu0 %v5617
    %7210 = vmatpush2.bf16.msra.mxu0 %v5616
    %7211 = vmatprep.subr.bf16.mxu0 %v5606
    %7212 = vmatpush2.bf16.msra.mxu0 %v5605
    %7213 = vmatprep.mubr.bf16.mxu0 %v1397
    %7214 = vmatmul.mubr.bf16.gmra.mxu0 %v1396
    %v7215 = vpop.f32.mrf.mxu0
    %v7216 = vadd.f32 %v7175, %v7215
    %v7217 = vpop.f32.mrf.mxu0
    %v7218 = vadd.f32 %v7177, %v7217
    %v7219 = vpop.f32.mrf.mxu0
    %v7220 = vpop.f32.mrf.mxu0
    %7221 = vdwg.mxu0
    %7222 = vmatprep.subr.bf16.mxu0 %v5771
    %7223 = vmatpush1.bf16.msra.mxu0 %v5770
    %7224 = vmatprep.subr.bf16.mxu0 %v5760
    %7225 = vmatpush1.bf16.msra.mxu0 %v5759
    %7226 = vmatprep.subr.bf16.mxu0 %v5749
    %7227 = vmatpush1.bf16.msra.mxu0 %v5748
    %7228 = vmatprep.subr.bf16.mxu0 %v5738
    %7229 = vmatpush1.bf16.msra.mxu0 %v5737
    %7230 = vmatprep.subr.bf16.mxu0 %v5727
    %7231 = vmatpush1.bf16.msra.mxu0 %v5726
    %7232 = vmatprep.subr.bf16.mxu0 %v5716
    %7233 = vmatpush1.bf16.msra.mxu0 %v5715
    %7234 = vmatprep.subr.bf16.mxu0 %v5705
    %7235 = vmatpush1.bf16.msra.mxu0 %v5704
    %7236 = vmatprep.subr.bf16.mxu0 %v5694
    %7237 = vmatpush1.bf16.msra.mxu0 %v5693
    %7238 = vmatprep.subr.bf16.mxu0 %v5859
    %7239 = vmatpush2.bf16.msra.mxu0 %v5858
    %7240 = vmatprep.subr.bf16.mxu0 %v5848
    %7241 = vmatpush2.bf16.msra.mxu0 %v5847
    %7242 = vmatprep.subr.bf16.mxu0 %v5837
    %7243 = vmatpush2.bf16.msra.mxu0 %v5836
    %7244 = vmatprep.subr.bf16.mxu0 %v5826
    %7245 = vmatpush2.bf16.msra.mxu0 %v5825
    %7246 = vmatprep.subr.bf16.mxu0 %v5815
    %7247 = vmatpush2.bf16.msra.mxu0 %v5814
    %7248 = vmatprep.subr.bf16.mxu0 %v5804
    %7249 = vmatpush2.bf16.msra.mxu0 %v5803
    %7250 = vmatprep.subr.bf16.mxu0 %v5793
    %7251 = vmatpush2.bf16.msra.mxu0 %v5792
    %7252 = vmatprep.subr.bf16.mxu0 %v5782
    %7253 = vmatpush2.bf16.msra.mxu0 %v5781
    %7254 = vmatprep.mubr.bf16.mxu0 %v1399
    %7255 = vmatmul.mubr.bf16.gmra.mxu0 %v1398
    %v7256 = vpop.f32.mrf.mxu0
    %v7257 = vadd.f32 %v7216, %v7256
    %v7258 = vpop.f32.mrf.mxu0
    %v7259 = vadd.f32 %v7218, %v7258
    %v7260 = vpop.f32.mrf.mxu0
    %v7261 = vpop.f32.mrf.mxu0
    %7262 = vdwg.mxu0
    %7263 = vmatprep.subr.bf16.mxu0 0
    %7264 = vmatpush1.bf16.msra.mxu0 0
    %7265 = vmatprep.subr.bf16.mxu0 0
    %7266 = vmatpush1.bf16.msra.mxu0 0
    %7267 = vmatprep.subr.bf16.mxu0 0
    %7268 = vmatpush1.bf16.msra.mxu0 0
    %7269 = vmatprep.subr.bf16.mxu0 0
    %7270 = vmatpush1.bf16.msra.mxu0 0
    %7271 = vmatprep.subr.bf16.mxu0 %v5903
    %7272 = vmatpush1.bf16.msra.mxu0 %v5902
    %7273 = vmatprep.subr.bf16.mxu0 %v5892
    %7274 = vmatpush1.bf16.msra.mxu0 %v5891
    %7275 = vmatprep.subr.bf16.mxu0 %v5881
    %7276 = vmatpush1.bf16.msra.mxu0 %v5880
    %7277 = vmatprep.subr.bf16.mxu0 %v5870
    %7278 = vmatpush1.bf16.msra.mxu0 %v5869
    %7279 = vmatprep.subr.bf16.mxu0 0
    %7280 = vmatpush2.bf16.msra.mxu0 0
    %7281 = vmatprep.subr.bf16.mxu0 0
    %7282 = vmatpush2.bf16.msra.mxu0 0
    %7283 = vmatprep.subr.bf16.mxu0 0
    %7284 = vmatpush2.bf16.msra.mxu0 0
    %7285 = vmatprep.subr.bf16.mxu0 0
    %7286 = vmatpush2.bf16.msra.mxu0 0
    %7287 = vmatprep.subr.bf16.mxu0 0
    %7288 = vmatpush2.bf16.msra.mxu0 0
    %7289 = vmatprep.subr.bf16.mxu0 0
    %7290 = vmatpush2.bf16.msra.mxu0 0
    %7291 = vmatprep.subr.bf16.mxu0 0
    %7292 = vmatpush2.bf16.msra.mxu0 0
    %7293 = vmatprep.subr.bf16.mxu0 0
    %7294 = vmatpush2.bf16.msra.mxu0 0
    %7295 = vmatprep.mubr.bf16.mxu0 0
    %7296 = vmatmul.mubr.bf16.gmra.mxu0 %v7015
    %v7297 = vpop.f32.mrf.mxu0
    %v7298 = vadd.f32 %v7257, %v7297
    %v7299 = vpop.f32.mrf.mxu0
    %v7300 = vadd.f32 %v7259, %v7299
    %v7301 = vpop.f32.mrf.mxu0
    %v7302 = vpop.f32.mrf.mxu0
    %7303 = vdwg.mxu0
    %7304 = vmatprep.subr.bf16.mxu0 %v4893
    %7305 = vmatpush1.bf16.msra.mxu0 %v4892
    %7306 = vmatprep.subr.bf16.mxu0 %v4882
    %7307 = vmatpush1.bf16.msra.mxu0 %v4881
    %7308 = vmatprep.subr.bf16.mxu0 %v4871
    %7309 = vmatpush1.bf16.msra.mxu0 %v4870
    %7310 = vmatprep.subr.bf16.mxu0 %v4860
    %7311 = vmatpush1.bf16.msra.mxu0 %v4859
    %7312 = vmatprep.subr.bf16.mxu0 %v4849
    %7313 = vmatpush1.bf16.msra.mxu0 %v4848
    %7314 = vmatprep.subr.bf16.mxu0 %v4838
    %7315 = vmatpush1.bf16.msra.mxu0 %v4837
    %7316 = vmatprep.subr.bf16.mxu0 %v4827
    %7317 = vmatpush1.bf16.msra.mxu0 %v4826
    %7318 = vmatprep.subr.bf16.mxu0 %v4816
    %7319 = vmatpush1.bf16.msra.mxu0 %v4815
    %7320 = vmatprep.subr.bf16.mxu0 %v4981
    %7321 = vmatpush2.bf16.msra.mxu0 %v4980
    %7322 = vmatprep.subr.bf16.mxu0 %v4970
    %7323 = vmatpush2.bf16.msra.mxu0 %v4969
    %7324 = vmatprep.subr.bf16.mxu0 %v4959
    %7325 = vmatpush2.bf16.msra.mxu0 %v4958
    %7326 = vmatprep.subr.bf16.mxu0 %v4948
    %7327 = vmatpush2.bf16.msra.mxu0 %v4947
    %7328 = vmatprep.subr.bf16.mxu0 %v4937
    %7329 = vmatpush2.bf16.msra.mxu0 %v4936
    %7330 = vmatprep.subr.bf16.mxu0 %v4926
    %7331 = vmatpush2.bf16.msra.mxu0 %v4925
    %7332 = vmatprep.subr.bf16.mxu0 %v4915
    %7333 = vmatpush2.bf16.msra.mxu0 %v4914
    %7334 = vmatprep.subr.bf16.mxu0 %v4904
    %7335 = vmatpush2.bf16.msra.mxu0 %v4903
    %7336 = vmatprep.mubr.bf16.mxu0 %v1389
    %7337 = vmatmul.mubr.bf16.gmra.mxu0 %v1388
    %v7338 = vpop.f32.mrf.mxu0
    %v7339 = vadd.f32 %v1324, %v7338
    %v7340 = vpop.f32.mrf.mxu0
    %v7341 = vadd.f32 %v1328, %v7340
    %v7342 = vpop.f32.mrf.mxu0
    %v7343 = vpop.f32.mrf.mxu0
    %7344 = vdwg.mxu0
    %7345 = vmatprep.subr.bf16.mxu0 %v5069
    %7346 = vmatpush1.bf16.msra.mxu0 %v5068
    %7347 = vmatprep.subr.bf16.mxu0 %v5058
    %7348 = vmatpush1.bf16.msra.mxu0 %v5057
    %7349 = vmatprep.subr.bf16.mxu0 %v5047
    %7350 = vmatpush1.bf16.msra.mxu0 %v5046
    %7351 = vmatprep.subr.bf16.mxu0 %v5036
    %7352 = vmatpush1.bf16.msra.mxu0 %v5035
    %7353 = vmatprep.subr.bf16.mxu0 %v5025
    %7354 = vmatpush1.bf16.msra.mxu0 %v5024
    %7355 = vmatprep.subr.bf16.mxu0 %v5014
    %7356 = vmatpush1.bf16.msra.mxu0 %v5013
    %7357 = vmatprep.subr.bf16.mxu0 %v5003
    %7358 = vmatpush1.bf16.msra.mxu0 %v5002
    %7359 = vmatprep.subr.bf16.mxu0 %v4992
    %7360 = vmatpush1.bf16.msra.mxu0 %v4991
    %7361 = vmatprep.subr.bf16.mxu0 %v5157
    %7362 = vmatpush2.bf16.msra.mxu0 %v5156
    %7363 = vmatprep.subr.bf16.mxu0 %v5146
    %7364 = vmatpush2.bf16.msra.mxu0 %v5145
    %7365 = vmatprep.subr.bf16.mxu0 %v5135
    %7366 = vmatpush2.bf16.msra.mxu0 %v5134
    %7367 = vmatprep.subr.bf16.mxu0 %v5124
    %7368 = vmatpush2.bf16.msra.mxu0 %v5123
    %7369 = vmatprep.subr.bf16.mxu0 %v5113
    %7370 = vmatpush2.bf16.msra.mxu0 %v5112
    %7371 = vmatprep.subr.bf16.mxu0 %v5102
    %7372 = vmatpush2.bf16.msra.mxu0 %v5101
    %7373 = vmatprep.subr.bf16.mxu0 %v5091
    %7374 = vmatpush2.bf16.msra.mxu0 %v5090
    %7375 = vmatprep.subr.bf16.mxu0 %v5080
    %7376 = vmatpush2.bf16.msra.mxu0 %v5079
    %7377 = vmatprep.mubr.bf16.mxu0 %v1391
    %7378 = vmatmul.mubr.bf16.gmra.mxu0 %v1390
    %v7379 = vpop.f32.mrf.mxu0
    %v7380 = vadd.f32 %v7339, %v7379
    %v7381 = vpop.f32.mrf.mxu0
    %v7382 = vadd.f32 %v7341, %v7381
    %v7383 = vpop.f32.mrf.mxu0
    %v7384 = vpop.f32.mrf.mxu0
    %7385 = vdwg.mxu0
    %7386 = vmatprep.subr.bf16.mxu0 %v5245
    %7387 = vmatpush1.bf16.msra.mxu0 %v5244
    %7388 = vmatprep.subr.bf16.mxu0 %v5234
    %7389 = vmatpush1.bf16.msra.mxu0 %v5233
    %7390 = vmatprep.subr.bf16.mxu0 %v5223
    %7391 = vmatpush1.bf16.msra.mxu0 %v5222
    %7392 = vmatprep.subr.bf16.mxu0 %v5212
    %7393 = vmatpush1.bf16.msra.mxu0 %v5211
    %7394 = vmatprep.subr.bf16.mxu0 %v5201
    %7395 = vmatpush1.bf16.msra.mxu0 %v5200
    %7396 = vmatprep.subr.bf16.mxu0 %v5190
    %7397 = vmatpush1.bf16.msra.mxu0 %v5189
    %7398 = vmatprep.subr.bf16.mxu0 %v5179
    %7399 = vmatpush1.bf16.msra.mxu0 %v5178
    %7400 = vmatprep.subr.bf16.mxu0 %v5168
    %7401 = vmatpush1.bf16.msra.mxu0 %v5167
    %7402 = vmatprep.subr.bf16.mxu0 %v5333
    %7403 = vmatpush2.bf16.msra.mxu0 %v5332
    %7404 = vmatprep.subr.bf16.mxu0 %v5322
    %7405 = vmatpush2.bf16.msra.mxu0 %v5321
    %7406 = vmatprep.subr.bf16.mxu0 %v5311
    %7407 = vmatpush2.bf16.msra.mxu0 %v5310
    %7408 = vmatprep.subr.bf16.mxu0 %v5300
    %7409 = vmatpush2.bf16.msra.mxu0 %v5299
    %7410 = vmatprep.subr.bf16.mxu0 %v5289
    %7411 = vmatpush2.bf16.msra.mxu0 %v5288
    %7412 = vmatprep.subr.bf16.mxu0 %v5278
    %7413 = vmatpush2.bf16.msra.mxu0 %v5277
    %7414 = vmatprep.subr.bf16.mxu0 %v5267
    %7415 = vmatpush2.bf16.msra.mxu0 %v5266
    %7416 = vmatprep.subr.bf16.mxu0 %v5256
    %7417 = vmatpush2.bf16.msra.mxu0 %v5255
    %7418 = vmatprep.mubr.bf16.mxu0 %v1393
    %7419 = vmatmul.mubr.bf16.gmra.mxu0 %v1392
    %v7420 = vpop.f32.mrf.mxu0
    %v7421 = vadd.f32 %v7380, %v7420
    %v7422 = vpop.f32.mrf.mxu0
    %v7423 = vadd.f32 %v7382, %v7422
    %v7424 = vpop.f32.mrf.mxu0
    %v7425 = vpop.f32.mrf.mxu0
    %7426 = vdwg.mxu0
    %7427 = vmatprep.subr.bf16.mxu0 %v5421
    %7428 = vmatpush1.bf16.msra.mxu0 %v5420
    %7429 = vmatprep.subr.bf16.mxu0 %v5410
    %7430 = vmatpush1.bf16.msra.mxu0 %v5409
    %7431 = vmatprep.subr.bf16.mxu0 %v5399
    %7432 = vmatpush1.bf16.msra.mxu0 %v5398
    %7433 = vmatprep.subr.bf16.mxu0 %v5388
    %7434 = vmatpush1.bf16.msra.mxu0 %v5387
    %7435 = vmatprep.subr.bf16.mxu0 %v5377
    %7436 = vmatpush1.bf16.msra.mxu0 %v5376
    %7437 = vmatprep.subr.bf16.mxu0 %v5366
    %7438 = vmatpush1.bf16.msra.mxu0 %v5365
    %7439 = vmatprep.subr.bf16.mxu0 %v5355
    %7440 = vmatpush1.bf16.msra.mxu0 %v5354
    %7441 = vmatprep.subr.bf16.mxu0 %v5344
    %7442 = vmatpush1.bf16.msra.mxu0 %v5343
    %7443 = vmatprep.subr.bf16.mxu0 %v5509
    %7444 = vmatpush2.bf16.msra.mxu0 %v5508
    %7445 = vmatprep.subr.bf16.mxu0 %v5498
    %7446 = vmatpush2.bf16.msra.mxu0 %v5497
    %7447 = vmatprep.subr.bf16.mxu0 %v5487
    %7448 = vmatpush2.bf16.msra.mxu0 %v5486
    %7449 = vmatprep.subr.bf16.mxu0 %v5476
    %7450 = vmatpush2.bf16.msra.mxu0 %v5475
    %7451 = vmatprep.subr.bf16.mxu0 %v5465
    %7452 = vmatpush2.bf16.msra.mxu0 %v5464
    %7453 = vmatprep.subr.bf16.mxu0 %v5454
    %7454 = vmatpush2.bf16.msra.mxu0 %v5453
    %7455 = vmatprep.subr.bf16.mxu0 %v5443
    %7456 = vmatpush2.bf16.msra.mxu0 %v5442
    %7457 = vmatprep.subr.bf16.mxu0 %v5432
    %7458 = vmatpush2.bf16.msra.mxu0 %v5431
    %7459 = vmatprep.mubr.bf16.mxu0 %v1395
    %7460 = vmatmul.mubr.bf16.gmra.mxu0 %v1394
    %v7461 = vpop.f32.mrf.mxu0
    %v7462 = vadd.f32 %v7421, %v7461
    %v7463 = vpop.f32.mrf.mxu0
    %v7464 = vadd.f32 %v7423, %v7463
    %v7465 = vpop.f32.mrf.mxu0
    %v7466 = vpop.f32.mrf.mxu0
    %7467 = vdwg.mxu0
    %7468 = vmatprep.subr.bf16.mxu0 %v5597
    %7469 = vmatpush1.bf16.msra.mxu0 %v5596
    %7470 = vmatprep.subr.bf16.mxu0 %v5586
    %7471 = vmatpush1.bf16.msra.mxu0 %v5585
    %7472 = vmatprep.subr.bf16.mxu0 %v5575
    %7473 = vmatpush1.bf16.msra.mxu0 %v5574
    %7474 = vmatprep.subr.bf16.mxu0 %v5564
    %7475 = vmatpush1.bf16.msra.mxu0 %v5563
    %7476 = vmatprep.subr.bf16.mxu0 %v5553
    %7477 = vmatpush1.bf16.msra.mxu0 %v5552
    %7478 = vmatprep.subr.bf16.mxu0 %v5542
    %7479 = vmatpush1.bf16.msra.mxu0 %v5541
    %7480 = vmatprep.subr.bf16.mxu0 %v5531
    %7481 = vmatpush1.bf16.msra.mxu0 %v5530
    %7482 = vmatprep.subr.bf16.mxu0 %v5520
    %7483 = vmatpush1.bf16.msra.mxu0 %v5519
    %7484 = vmatprep.subr.bf16.mxu0 %v5685
    %7485 = vmatpush2.bf16.msra.mxu0 %v5684
    %7486 = vmatprep.subr.bf16.mxu0 %v5674
    %7487 = vmatpush2.bf16.msra.mxu0 %v5673
    %7488 = vmatprep.subr.bf16.mxu0 %v5663
    %7489 = vmatpush2.bf16.msra.mxu0 %v5662
    %7490 = vmatprep.subr.bf16.mxu0 %v5652
    %7491 = vmatpush2.bf16.msra.mxu0 %v5651
    %7492 = vmatprep.subr.bf16.mxu0 %v5641
    %7493 = vmatpush2.bf16.msra.mxu0 %v5640
    %7494 = vmatprep.subr.bf16.mxu0 %v5630
    %7495 = vmatpush2.bf16.msra.mxu0 %v5629
    %7496 = vmatprep.subr.bf16.mxu0 %v5619
    %7497 = vmatpush2.bf16.msra.mxu0 %v5618
    %7498 = vmatprep.subr.bf16.mxu0 %v5608
    %7499 = vmatpush2.bf16.msra.mxu0 %v5607
    %7500 = vmatprep.mubr.bf16.mxu0 %v1397
    %7501 = vmatmul.mubr.bf16.gmra.mxu0 %v1396
    %v7502 = vpop.f32.mrf.mxu0
    %v7503 = vadd.f32 %v7462, %v7502
    %v7504 = vpop.f32.mrf.mxu0
    %v7505 = vadd.f32 %v7464, %v7504
    %v7506 = vpop.f32.mrf.mxu0
    %v7507 = vpop.f32.mrf.mxu0
    %7508 = vdwg.mxu0
    %7509 = vmatprep.subr.bf16.mxu0 %v5773
    %7510 = vmatpush1.bf16.msra.mxu0 %v5772
    %7511 = vmatprep.subr.bf16.mxu0 %v5762
    %7512 = vmatpush1.bf16.msra.mxu0 %v5761
    %7513 = vmatprep.subr.bf16.mxu0 %v5751
    %7514 = vmatpush1.bf16.msra.mxu0 %v5750
    %7515 = vmatprep.subr.bf16.mxu0 %v5740
    %7516 = vmatpush1.bf16.msra.mxu0 %v5739
    %7517 = vmatprep.subr.bf16.mxu0 %v5729
    %7518 = vmatpush1.bf16.msra.mxu0 %v5728
    %7519 = vmatprep.subr.bf16.mxu0 %v5718
    %7520 = vmatpush1.bf16.msra.mxu0 %v5717
    %7521 = vmatprep.subr.bf16.mxu0 %v5707
    %7522 = vmatpush1.bf16.msra.mxu0 %v5706
    %7523 = vmatprep.subr.bf16.mxu0 %v5696
    %7524 = vmatpush1.bf16.msra.mxu0 %v5695
    %7525 = vmatprep.subr.bf16.mxu0 %v5861
    %7526 = vmatpush2.bf16.msra.mxu0 %v5860
    %7527 = vmatprep.subr.bf16.mxu0 %v5850
    %7528 = vmatpush2.bf16.msra.mxu0 %v5849
    %7529 = vmatprep.subr.bf16.mxu0 %v5839
    %7530 = vmatpush2.bf16.msra.mxu0 %v5838
    %7531 = vmatprep.subr.bf16.mxu0 %v5828
    %7532 = vmatpush2.bf16.msra.mxu0 %v5827
    %7533 = vmatprep.subr.bf16.mxu0 %v5817
    %7534 = vmatpush2.bf16.msra.mxu0 %v5816
    %7535 = vmatprep.subr.bf16.mxu0 %v5806
    %7536 = vmatpush2.bf16.msra.mxu0 %v5805
    %7537 = vmatprep.subr.bf16.mxu0 %v5795
    %7538 = vmatpush2.bf16.msra.mxu0 %v5794
    %7539 = vmatprep.subr.bf16.mxu0 %v5784
    %7540 = vmatpush2.bf16.msra.mxu0 %v5783
    %7541 = vmatprep.mubr.bf16.mxu0 %v1399
    %7542 = vmatmul.mubr.bf16.gmra.mxu0 %v1398
    %v7543 = vpop.f32.mrf.mxu0
    %v7544 = vadd.f32 %v7503, %v7543
    %v7545 = vpop.f32.mrf.mxu0
    %v7546 = vadd.f32 %v7505, %v7545
    %v7547 = vpop.f32.mrf.mxu0
    %v7548 = vpop.f32.mrf.mxu0
    %7549 = vdwg.mxu0
    %7550 = vmatprep.subr.bf16.mxu0 0
    %7551 = vmatpush1.bf16.msra.mxu0 0
    %7552 = vmatprep.subr.bf16.mxu0 0
    %7553 = vmatpush1.bf16.msra.mxu0 0
    %7554 = vmatprep.subr.bf16.mxu0 0
    %7555 = vmatpush1.bf16.msra.mxu0 0
    %7556 = vmatprep.subr.bf16.mxu0 0
    %7557 = vmatpush1.bf16.msra.mxu0 0
    %7558 = vmatprep.subr.bf16.mxu0 %v5905
    %7559 = vmatpush1.bf16.msra.mxu0 %v5904
    %7560 = vmatprep.subr.bf16.mxu0 %v5894
    %7561 = vmatpush1.bf16.msra.mxu0 %v5893
    %7562 = vmatprep.subr.bf16.mxu0 %v5883
    %7563 = vmatpush1.bf16.msra.mxu0 %v5882
    %7564 = vmatprep.subr.bf16.mxu0 %v5872
    %7565 = vmatpush1.bf16.msra.mxu0 %v5871
    %7566 = vmatprep.subr.bf16.mxu0 0
    %7567 = vmatpush2.bf16.msra.mxu0 0
    %7568 = vmatprep.subr.bf16.mxu0 0
    %7569 = vmatpush2.bf16.msra.mxu0 0
    %7570 = vmatprep.subr.bf16.mxu0 0
    %7571 = vmatpush2.bf16.msra.mxu0 0
    %7572 = vmatprep.subr.bf16.mxu0 0
    %7573 = vmatpush2.bf16.msra.mxu0 0
    %7574 = vmatprep.subr.bf16.mxu0 0
    %7575 = vmatpush2.bf16.msra.mxu0 0
    %7576 = vmatprep.subr.bf16.mxu0 0
    %7577 = vmatpush2.bf16.msra.mxu0 0
    %7578 = vmatprep.subr.bf16.mxu0 0
    %7579 = vmatpush2.bf16.msra.mxu0 0
    %7580 = vmatprep.subr.bf16.mxu0 0
    %7581 = vmatpush2.bf16.msra.mxu0 0
    %7582 = vmatprep.mubr.bf16.mxu0 0
    %7583 = vmatmul.mubr.bf16.gmra.mxu0 %v7015
    %v7584 = vpop.f32.mrf.mxu0
    %v7585 = vadd.f32 %v7544, %v7584
    %v7586 = vpop.f32.mrf.mxu0
    %v7587 = vadd.f32 %v7546, %v7586
    %v7588 = vpop.f32.mrf.mxu0
    %v7589 = vpop.f32.mrf.mxu0
    %7590 = vdwg.mxu0
    %7591 = vmatprep.subr.bf16.mxu0 %v4895
    %7592 = vmatpush1.bf16.msra.mxu0 %v4894
    %7593 = vmatprep.subr.bf16.mxu0 %v4884
    %7594 = vmatpush1.bf16.msra.mxu0 %v4883
    %7595 = vmatprep.subr.bf16.mxu0 %v4873
    %7596 = vmatpush1.bf16.msra.mxu0 %v4872
    %7597 = vmatprep.subr.bf16.mxu0 %v4862
    %7598 = vmatpush1.bf16.msra.mxu0 %v4861
    %7599 = vmatprep.subr.bf16.mxu0 %v4851
    %7600 = vmatpush1.bf16.msra.mxu0 %v4850
    %7601 = vmatprep.subr.bf16.mxu0 %v4840
    %7602 = vmatpush1.bf16.msra.mxu0 %v4839
    %7603 = vmatprep.subr.bf16.mxu0 %v4829
    %7604 = vmatpush1.bf16.msra.mxu0 %v4828
    %7605 = vmatprep.subr.bf16.mxu0 %v4818
    %7606 = vmatpush1.bf16.msra.mxu0 %v4817
    %7607 = vmatprep.subr.bf16.mxu0 %v4983
    %7608 = vmatpush2.bf16.msra.mxu0 %v4982
    %7609 = vmatprep.subr.bf16.mxu0 %v4972
    %7610 = vmatpush2.bf16.msra.mxu0 %v4971
    %7611 = vmatprep.subr.bf16.mxu0 %v4961
    %7612 = vmatpush2.bf16.msra.mxu0 %v4960
    %7613 = vmatprep.subr.bf16.mxu0 %v4950
    %7614 = vmatpush2.bf16.msra.mxu0 %v4949
    %7615 = vmatprep.subr.bf16.mxu0 %v4939
    %7616 = vmatpush2.bf16.msra.mxu0 %v4938
    %7617 = vmatprep.subr.bf16.mxu0 %v4928
    %7618 = vmatpush2.bf16.msra.mxu0 %v4927
    %7619 = vmatprep.subr.bf16.mxu0 %v4917
    %7620 = vmatpush2.bf16.msra.mxu0 %v4916
    %7621 = vmatprep.subr.bf16.mxu0 %v4906
    %7622 = vmatpush2.bf16.msra.mxu0 %v4905
    %7623 = vmatprep.mubr.bf16.mxu0 %v1389
    %7624 = vmatmul.mubr.bf16.gmra.mxu0 %v1388
    %v7625 = vpop.f32.mrf.mxu0
    %v7626 = vadd.f32 %v1332, %v7625
    %v7627 = vpop.f32.mrf.mxu0
    %v7628 = vadd.f32 %v1336, %v7627
    %v7629 = vpop.f32.mrf.mxu0
    %v7630 = vpop.f32.mrf.mxu0
    %7631 = vdwg.mxu0
    %7632 = vmatprep.subr.bf16.mxu0 %v5071
    %7633 = vmatpush1.bf16.msra.mxu0 %v5070
    %7634 = vmatprep.subr.bf16.mxu0 %v5060
    %7635 = vmatpush1.bf16.msra.mxu0 %v5059
    %7636 = vmatprep.subr.bf16.mxu0 %v5049
    %7637 = vmatpush1.bf16.msra.mxu0 %v5048
    %7638 = vmatprep.subr.bf16.mxu0 %v5038
    %7639 = vmatpush1.bf16.msra.mxu0 %v5037
    %7640 = vmatprep.subr.bf16.mxu0 %v5027
    %7641 = vmatpush1.bf16.msra.mxu0 %v5026
    %7642 = vmatprep.subr.bf16.mxu0 %v5016
    %7643 = vmatpush1.bf16.msra.mxu0 %v5015
    %7644 = vmatprep.subr.bf16.mxu0 %v5005
    %7645 = vmatpush1.bf16.msra.mxu0 %v5004
    %7646 = vmatprep.subr.bf16.mxu0 %v4994
    %7647 = vmatpush1.bf16.msra.mxu0 %v4993
    %7648 = vmatprep.subr.bf16.mxu0 %v5159
    %7649 = vmatpush2.bf16.msra.mxu0 %v5158
    %7650 = vmatprep.subr.bf16.mxu0 %v5148
    %7651 = vmatpush2.bf16.msra.mxu0 %v5147
    %7652 = vmatprep.subr.bf16.mxu0 %v5137
    %7653 = vmatpush2.bf16.msra.mxu0 %v5136
    %7654 = vmatprep.subr.bf16.mxu0 %v5126
    %7655 = vmatpush2.bf16.msra.mxu0 %v5125
    %7656 = vmatprep.subr.bf16.mxu0 %v5115
    %7657 = vmatpush2.bf16.msra.mxu0 %v5114
    %7658 = vmatprep.subr.bf16.mxu0 %v5104
    %7659 = vmatpush2.bf16.msra.mxu0 %v5103
    %7660 = vmatprep.subr.bf16.mxu0 %v5093
    %7661 = vmatpush2.bf16.msra.mxu0 %v5092
    %7662 = vmatprep.subr.bf16.mxu0 %v5082
    %7663 = vmatpush2.bf16.msra.mxu0 %v5081
    %7664 = vmatprep.mubr.bf16.mxu0 %v1391
    %7665 = vmatmul.mubr.bf16.gmra.mxu0 %v1390
    %v7666 = vpop.f32.mrf.mxu0
    %v7667 = vadd.f32 %v7626, %v7666
    %v7668 = vpop.f32.mrf.mxu0
    %v7669 = vadd.f32 %v7628, %v7668
    %v7670 = vpop.f32.mrf.mxu0
    %v7671 = vpop.f32.mrf.mxu0
    %7672 = vdwg.mxu0
    %7673 = vmatprep.subr.bf16.mxu0 %v5247
    %7674 = vmatpush1.bf16.msra.mxu0 %v5246
    %7675 = vmatprep.subr.bf16.mxu0 %v5236
    %7676 = vmatpush1.bf16.msra.mxu0 %v5235
    %7677 = vmatprep.subr.bf16.mxu0 %v5225
    %7678 = vmatpush1.bf16.msra.mxu0 %v5224
    %7679 = vmatprep.subr.bf16.mxu0 %v5214
    %7680 = vmatpush1.bf16.msra.mxu0 %v5213
    %7681 = vmatprep.subr.bf16.mxu0 %v5203
    %7682 = vmatpush1.bf16.msra.mxu0 %v5202
    %7683 = vmatprep.subr.bf16.mxu0 %v5192
    %7684 = vmatpush1.bf16.msra.mxu0 %v5191
    %7685 = vmatprep.subr.bf16.mxu0 %v5181
    %7686 = vmatpush1.bf16.msra.mxu0 %v5180
    %7687 = vmatprep.subr.bf16.mxu0 %v5170
    %7688 = vmatpush1.bf16.msra.mxu0 %v5169
    %7689 = vmatprep.subr.bf16.mxu0 %v5335
    %7690 = vmatpush2.bf16.msra.mxu0 %v5334
    %7691 = vmatprep.subr.bf16.mxu0 %v5324
    %7692 = vmatpush2.bf16.msra.mxu0 %v5323
    %7693 = vmatprep.subr.bf16.mxu0 %v5313
    %7694 = vmatpush2.bf16.msra.mxu0 %v5312
    %7695 = vmatprep.subr.bf16.mxu0 %v5302
    %7696 = vmatpush2.bf16.msra.mxu0 %v5301
    %7697 = vmatprep.subr.bf16.mxu0 %v5291
    %7698 = vmatpush2.bf16.msra.mxu0 %v5290
    %7699 = vmatprep.subr.bf16.mxu0 %v5280
    %7700 = vmatpush2.bf16.msra.mxu0 %v5279
    %7701 = vmatprep.subr.bf16.mxu0 %v5269
    %7702 = vmatpush2.bf16.msra.mxu0 %v5268
    %7703 = vmatprep.subr.bf16.mxu0 %v5258
    %7704 = vmatpush2.bf16.msra.mxu0 %v5257
    %7705 = vmatprep.mubr.bf16.mxu0 %v1393
    %7706 = vmatmul.mubr.bf16.gmra.mxu0 %v1392
    %v7707 = vpop.f32.mrf.mxu0
    %v7708 = vadd.f32 %v7667, %v7707
    %v7709 = vpop.f32.mrf.mxu0
    %v7710 = vadd.f32 %v7669, %v7709
    %v7711 = vpop.f32.mrf.mxu0
    %v7712 = vpop.f32.mrf.mxu0
    %7713 = vdwg.mxu0
    %7714 = vmatprep.subr.bf16.mxu0 %v5423
    %7715 = vmatpush1.bf16.msra.mxu0 %v5422
    %7716 = vmatprep.subr.bf16.mxu0 %v5412
    %7717 = vmatpush1.bf16.msra.mxu0 %v5411
    %7718 = vmatprep.subr.bf16.mxu0 %v5401
    %7719 = vmatpush1.bf16.msra.mxu0 %v5400
    %7720 = vmatprep.subr.bf16.mxu0 %v5390
    %7721 = vmatpush1.bf16.msra.mxu0 %v5389
    %7722 = vmatprep.subr.bf16.mxu0 %v5379
    %7723 = vmatpush1.bf16.msra.mxu0 %v5378
    %7724 = vmatprep.subr.bf16.mxu0 %v5368
    %7725 = vmatpush1.bf16.msra.mxu0 %v5367
    %7726 = vmatprep.subr.bf16.mxu0 %v5357
    %7727 = vmatpush1.bf16.msra.mxu0 %v5356
    %7728 = vmatprep.subr.bf16.mxu0 %v5346
    %7729 = vmatpush1.bf16.msra.mxu0 %v5345
    %7730 = vmatprep.subr.bf16.mxu0 %v5511
    %7731 = vmatpush2.bf16.msra.mxu0 %v5510
    %7732 = vmatprep.subr.bf16.mxu0 %v5500
    %7733 = vmatpush2.bf16.msra.mxu0 %v5499
    %7734 = vmatprep.subr.bf16.mxu0 %v5489
    %7735 = vmatpush2.bf16.msra.mxu0 %v5488
    %7736 = vmatprep.subr.bf16.mxu0 %v5478
    %7737 = vmatpush2.bf16.msra.mxu0 %v5477
    %7738 = vmatprep.subr.bf16.mxu0 %v5467
    %7739 = vmatpush2.bf16.msra.mxu0 %v5466
    %7740 = vmatprep.subr.bf16.mxu0 %v5456
    %7741 = vmatpush2.bf16.msra.mxu0 %v5455
    %7742 = vmatprep.subr.bf16.mxu0 %v5445
    %7743 = vmatpush2.bf16.msra.mxu0 %v5444
    %7744 = vmatprep.subr.bf16.mxu0 %v5434
    %7745 = vmatpush2.bf16.msra.mxu0 %v5433
    %7746 = vmatprep.mubr.bf16.mxu0 %v1395
    %7747 = vmatmul.mubr.bf16.gmra.mxu0 %v1394
    %v7748 = vpop.f32.mrf.mxu0
    %v7749 = vadd.f32 %v7708, %v7748
    %v7750 = vpop.f32.mrf.mxu0
    %v7751 = vadd.f32 %v7710, %v7750
    %v7752 = vpop.f32.mrf.mxu0
    %v7753 = vpop.f32.mrf.mxu0
    %7754 = vdwg.mxu0
    %7755 = vmatprep.subr.bf16.mxu0 %v5599
    %7756 = vmatpush1.bf16.msra.mxu0 %v5598
    %7757 = vmatprep.subr.bf16.mxu0 %v5588
    %7758 = vmatpush1.bf16.msra.mxu0 %v5587
    %7759 = vmatprep.subr.bf16.mxu0 %v5577
    %7760 = vmatpush1.bf16.msra.mxu0 %v5576
    %7761 = vmatprep.subr.bf16.mxu0 %v5566
    %7762 = vmatpush1.bf16.msra.mxu0 %v5565
    %7763 = vmatprep.subr.bf16.mxu0 %v5555
    %7764 = vmatpush1.bf16.msra.mxu0 %v5554
    %7765 = vmatprep.subr.bf16.mxu0 %v5544
    %7766 = vmatpush1.bf16.msra.mxu0 %v5543
    %7767 = vmatprep.subr.bf16.mxu0 %v5533
    %7768 = vmatpush1.bf16.msra.mxu0 %v5532
    %7769 = vmatprep.subr.bf16.mxu0 %v5522
    %7770 = vmatpush1.bf16.msra.mxu0 %v5521
    %7771 = vmatprep.subr.bf16.mxu0 %v5687
    %7772 = vmatpush2.bf16.msra.mxu0 %v5686
    %7773 = vmatprep.subr.bf16.mxu0 %v5676
    %7774 = vmatpush2.bf16.msra.mxu0 %v5675
    %7775 = vmatprep.subr.bf16.mxu0 %v5665
    %7776 = vmatpush2.bf16.msra.mxu0 %v5664
    %7777 = vmatprep.subr.bf16.mxu0 %v5654
    %7778 = vmatpush2.bf16.msra.mxu0 %v5653
    %7779 = vmatprep.subr.bf16.mxu0 %v5643
    %7780 = vmatpush2.bf16.msra.mxu0 %v5642
    %7781 = vmatprep.subr.bf16.mxu0 %v5632
    %7782 = vmatpush2.bf16.msra.mxu0 %v5631
    %7783 = vmatprep.subr.bf16.mxu0 %v5621
    %7784 = vmatpush2.bf16.msra.mxu0 %v5620
    %7785 = vmatprep.subr.bf16.mxu0 %v5610
    %7786 = vmatpush2.bf16.msra.mxu0 %v5609
    %7787 = vmatprep.mubr.bf16.mxu0 %v1397
    %7788 = vmatmul.mubr.bf16.gmra.mxu0 %v1396
    %v7789 = vpop.f32.mrf.mxu0
    %v7790 = vadd.f32 %v7749, %v7789
    %v7791 = vpop.f32.mrf.mxu0
    %v7792 = vadd.f32 %v7751, %v7791
    %v7793 = vpop.f32.mrf.mxu0
    %v7794 = vpop.f32.mrf.mxu0
    %7795 = vdwg.mxu0
    %7796 = vmatprep.subr.bf16.mxu0 %v5775
    %7797 = vmatpush1.bf16.msra.mxu0 %v5774
    %7798 = vmatprep.subr.bf16.mxu0 %v5764
    %7799 = vmatpush1.bf16.msra.mxu0 %v5763
    %7800 = vmatprep.subr.bf16.mxu0 %v5753
    %7801 = vmatpush1.bf16.msra.mxu0 %v5752
    %7802 = vmatprep.subr.bf16.mxu0 %v5742
    %7803 = vmatpush1.bf16.msra.mxu0 %v5741
    %7804 = vmatprep.subr.bf16.mxu0 %v5731
    %7805 = vmatpush1.bf16.msra.mxu0 %v5730
    %7806 = vmatprep.subr.bf16.mxu0 %v5720
    %7807 = vmatpush1.bf16.msra.mxu0 %v5719
    %7808 = vmatprep.subr.bf16.mxu0 %v5709
    %7809 = vmatpush1.bf16.msra.mxu0 %v5708
    %7810 = vmatprep.subr.bf16.mxu0 %v5698
    %7811 = vmatpush1.bf16.msra.mxu0 %v5697
    %7812 = vmatprep.subr.bf16.mxu0 %v5863
    %7813 = vmatpush2.bf16.msra.mxu0 %v5862
    %7814 = vmatprep.subr.bf16.mxu0 %v5852
    %7815 = vmatpush2.bf16.msra.mxu0 %v5851
    %7816 = vmatprep.subr.bf16.mxu0 %v5841
    %7817 = vmatpush2.bf16.msra.mxu0 %v5840
    %7818 = vmatprep.subr.bf16.mxu0 %v5830
    %7819 = vmatpush2.bf16.msra.mxu0 %v5829
    %7820 = vmatprep.subr.bf16.mxu0 %v5819
    %7821 = vmatpush2.bf16.msra.mxu0 %v5818
    %7822 = vmatprep.subr.bf16.mxu0 %v5808
    %7823 = vmatpush2.bf16.msra.mxu0 %v5807
    %7824 = vmatprep.subr.bf16.mxu0 %v5797
    %7825 = vmatpush2.bf16.msra.mxu0 %v5796
    %7826 = vmatprep.subr.bf16.mxu0 %v5786
    %7827 = vmatpush2.bf16.msra.mxu0 %v5785
    %7828 = vmatprep.mubr.bf16.mxu0 %v1399
    %7829 = vmatmul.mubr.bf16.gmra.mxu0 %v1398
    %v7830 = vpop.f32.mrf.mxu0
    %v7831 = vadd.f32 %v7790, %v7830
    %v7832 = vpop.f32.mrf.mxu0
    %v7833 = vadd.f32 %v7792, %v7832
    %v7834 = vpop.f32.mrf.mxu0
    %v7835 = vpop.f32.mrf.mxu0
    %7836 = vdwg.mxu0
    %7837 = vmatprep.subr.bf16.mxu0 0
    %7838 = vmatpush1.bf16.msra.mxu0 0
    %7839 = vmatprep.subr.bf16.mxu0 0
    %7840 = vmatpush1.bf16.msra.mxu0 0
    %7841 = vmatprep.subr.bf16.mxu0 0
    %7842 = vmatpush1.bf16.msra.mxu0 0
    %7843 = vmatprep.subr.bf16.mxu0 0
    %7844 = vmatpush1.bf16.msra.mxu0 0
    %7845 = vmatprep.subr.bf16.mxu0 %v5907
    %7846 = vmatpush1.bf16.msra.mxu0 %v5906
    %7847 = vmatprep.subr.bf16.mxu0 %v5896
    %7848 = vmatpush1.bf16.msra.mxu0 %v5895
    %7849 = vmatprep.subr.bf16.mxu0 %v5885
    %7850 = vmatpush1.bf16.msra.mxu0 %v5884
    %7851 = vmatprep.subr.bf16.mxu0 %v5874
    %7852 = vmatpush1.bf16.msra.mxu0 %v5873
    %7853 = vmatprep.subr.bf16.mxu0 0
    %7854 = vmatpush2.bf16.msra.mxu0 0
    %7855 = vmatprep.subr.bf16.mxu0 0
    %7856 = vmatpush2.bf16.msra.mxu0 0
    %7857 = vmatprep.subr.bf16.mxu0 0
    %7858 = vmatpush2.bf16.msra.mxu0 0
    %7859 = vmatprep.subr.bf16.mxu0 0
    %7860 = vmatpush2.bf16.msra.mxu0 0
    %7861 = vmatprep.subr.bf16.mxu0 0
    %7862 = vmatpush2.bf16.msra.mxu0 0
    %7863 = vmatprep.subr.bf16.mxu0 0
    %7864 = vmatpush2.bf16.msra.mxu0 0
    %7865 = vmatprep.subr.bf16.mxu0 0
    %7866 = vmatpush2.bf16.msra.mxu0 0
    %7867 = vmatprep.subr.bf16.mxu0 0
    %7868 = vmatpush2.bf16.msra.mxu0 0
    %7869 = vmatprep.mubr.bf16.mxu0 0
    %7870 = vmatmul.mubr.bf16.gmra.mxu0 %v7015
    %v7871 = vpop.f32.mrf.mxu0
    %v7872 = vadd.f32 %v7831, %v7871
    %v7873 = vpop.f32.mrf.mxu0
    %v7874 = vadd.f32 %v7833, %v7873
    %v7875 = vpop.f32.mrf.mxu0
    %v7876 = vpop.f32.mrf.mxu0
    %7877 = vdwg.mxu0
    %7878 = vmatprep.subr.bf16.mxu0 %v4897
    %7879 = vmatpush1.bf16.msra.mxu0 %v4896
    %7880 = vmatprep.subr.bf16.mxu0 %v4886
    %7881 = vmatpush1.bf16.msra.mxu0 %v4885
    %7882 = vmatprep.subr.bf16.mxu0 %v4875
    %7883 = vmatpush1.bf16.msra.mxu0 %v4874
    %7884 = vmatprep.subr.bf16.mxu0 %v4864
    %7885 = vmatpush1.bf16.msra.mxu0 %v4863
    %7886 = vmatprep.subr.bf16.mxu0 %v4853
    %7887 = vmatpush1.bf16.msra.mxu0 %v4852
    %7888 = vmatprep.subr.bf16.mxu0 %v4842
    %7889 = vmatpush1.bf16.msra.mxu0 %v4841
    %7890 = vmatprep.subr.bf16.mxu0 %v4831
    %7891 = vmatpush1.bf16.msra.mxu0 %v4830
    %7892 = vmatprep.subr.bf16.mxu0 %v4820
    %7893 = vmatpush1.bf16.msra.mxu0 %v4819
    %7894 = vmatprep.subr.bf16.mxu0 %v4985
    %7895 = vmatpush2.bf16.msra.mxu0 %v4984
    %7896 = vmatprep.subr.bf16.mxu0 %v4974
    %7897 = vmatpush2.bf16.msra.mxu0 %v4973
    %7898 = vmatprep.subr.bf16.mxu0 %v4963
    %7899 = vmatpush2.bf16.msra.mxu0 %v4962
    %7900 = vmatprep.subr.bf16.mxu0 %v4952
    %7901 = vmatpush2.bf16.msra.mxu0 %v4951
    %7902 = vmatprep.subr.bf16.mxu0 %v4941
    %7903 = vmatpush2.bf16.msra.mxu0 %v4940
    %7904 = vmatprep.subr.bf16.mxu0 %v4930
    %7905 = vmatpush2.bf16.msra.mxu0 %v4929
    %7906 = vmatprep.subr.bf16.mxu0 %v4919
    %7907 = vmatpush2.bf16.msra.mxu0 %v4918
    %7908 = vmatprep.subr.bf16.mxu0 %v4908
    %7909 = vmatpush2.bf16.msra.mxu0 %v4907
    %7910 = vmatprep.mubr.bf16.mxu0 %v1389
    %7911 = vmatmul.mubr.bf16.gmra.mxu0 %v1388
    %v7912 = vpop.f32.mrf.mxu0
    %v7913 = vadd.f32 %v1340, %v7912
    %v7914 = vpop.f32.mrf.mxu0
    %v7915 = vadd.f32 %v1344, %v7914
    %v7916 = vpop.f32.mrf.mxu0
    %v7917 = vpop.f32.mrf.mxu0
    %7918 = vdwg.mxu0
    %7919 = vmatprep.subr.bf16.mxu0 %v5073
    %7920 = vmatpush1.bf16.msra.mxu0 %v5072
    %7921 = vmatprep.subr.bf16.mxu0 %v5062
    %7922 = vmatpush1.bf16.msra.mxu0 %v5061
    %7923 = vmatprep.subr.bf16.mxu0 %v5051
    %7924 = vmatpush1.bf16.msra.mxu0 %v5050
    %7925 = vmatprep.subr.bf16.mxu0 %v5040
    %7926 = vmatpush1.bf16.msra.mxu0 %v5039
    %7927 = vmatprep.subr.bf16.mxu0 %v5029
    %7928 = vmatpush1.bf16.msra.mxu0 %v5028
    %7929 = vmatprep.subr.bf16.mxu0 %v5018
    %7930 = vmatpush1.bf16.msra.mxu0 %v5017
    %7931 = vmatprep.subr.bf16.mxu0 %v5007
    %7932 = vmatpush1.bf16.msra.mxu0 %v5006
    %7933 = vmatprep.subr.bf16.mxu0 %v4996
    %7934 = vmatpush1.bf16.msra.mxu0 %v4995
    %7935 = vmatprep.subr.bf16.mxu0 %v5161
    %7936 = vmatpush2.bf16.msra.mxu0 %v5160
    %7937 = vmatprep.subr.bf16.mxu0 %v5150
    %7938 = vmatpush2.bf16.msra.mxu0 %v5149
    %7939 = vmatprep.subr.bf16.mxu0 %v5139
    %7940 = vmatpush2.bf16.msra.mxu0 %v5138
    %7941 = vmatprep.subr.bf16.mxu0 %v5128
    %7942 = vmatpush2.bf16.msra.mxu0 %v5127
    %7943 = vmatprep.subr.bf16.mxu0 %v5117
    %7944 = vmatpush2.bf16.msra.mxu0 %v5116
    %7945 = vmatprep.subr.bf16.mxu0 %v5106
    %7946 = vmatpush2.bf16.msra.mxu0 %v5105
    %7947 = vmatprep.subr.bf16.mxu0 %v5095
    %7948 = vmatpush2.bf16.msra.mxu0 %v5094
    %7949 = vmatprep.subr.bf16.mxu0 %v5084
    %7950 = vmatpush2.bf16.msra.mxu0 %v5083
    %7951 = vmatprep.mubr.bf16.mxu0 %v1391
    %7952 = vmatmul.mubr.bf16.gmra.mxu0 %v1390
    %v7953 = vpop.f32.mrf.mxu0
    %v7954 = vadd.f32 %v7913, %v7953
    %v7955 = vpop.f32.mrf.mxu0
    %v7956 = vadd.f32 %v7915, %v7955
    %v7957 = vpop.f32.mrf.mxu0
    %v7958 = vpop.f32.mrf.mxu0
    %7959 = vdwg.mxu0
    %7960 = vmatprep.subr.bf16.mxu0 %v5249
    %7961 = vmatpush1.bf16.msra.mxu0 %v5248
    %7962 = vmatprep.subr.bf16.mxu0 %v5238
    %7963 = vmatpush1.bf16.msra.mxu0 %v5237
    %7964 = vmatprep.subr.bf16.mxu0 %v5227
    %7965 = vmatpush1.bf16.msra.mxu0 %v5226
    %7966 = vmatprep.subr.bf16.mxu0 %v5216
    %7967 = vmatpush1.bf16.msra.mxu0 %v5215
    %7968 = vmatprep.subr.bf16.mxu0 %v5205
    %7969 = vmatpush1.bf16.msra.mxu0 %v5204
    %7970 = vmatprep.subr.bf16.mxu0 %v5194
    %7971 = vmatpush1.bf16.msra.mxu0 %v5193
    %7972 = vmatprep.subr.bf16.mxu0 %v5183
    %7973 = vmatpush1.bf16.msra.mxu0 %v5182
    %7974 = vmatprep.subr.bf16.mxu0 %v5172
    %7975 = vmatpush1.bf16.msra.mxu0 %v5171
    %7976 = vmatprep.subr.bf16.mxu0 %v5337
    %7977 = vmatpush2.bf16.msra.mxu0 %v5336
    %7978 = vmatprep.subr.bf16.mxu0 %v5326
    %7979 = vmatpush2.bf16.msra.mxu0 %v5325
    %7980 = vmatprep.subr.bf16.mxu0 %v5315
    %7981 = vmatpush2.bf16.msra.mxu0 %v5314
    %7982 = vmatprep.subr.bf16.mxu0 %v5304
    %7983 = vmatpush2.bf16.msra.mxu0 %v5303
    %7984 = vmatprep.subr.bf16.mxu0 %v5293
    %7985 = vmatpush2.bf16.msra.mxu0 %v5292
    %7986 = vmatprep.subr.bf16.mxu0 %v5282
    %7987 = vmatpush2.bf16.msra.mxu0 %v5281
    %7988 = vmatprep.subr.bf16.mxu0 %v5271
    %7989 = vmatpush2.bf16.msra.mxu0 %v5270
    %7990 = vmatprep.subr.bf16.mxu0 %v5260
    %7991 = vmatpush2.bf16.msra.mxu0 %v5259
    %7992 = vmatprep.mubr.bf16.mxu0 %v1393
    %7993 = vmatmul.mubr.bf16.gmra.mxu0 %v1392
    %v7994 = vpop.f32.mrf.mxu0
    %v7995 = vadd.f32 %v7954, %v7994
    %v7996 = vpop.f32.mrf.mxu0
    %v7997 = vadd.f32 %v7956, %v7996
    %v7998 = vpop.f32.mrf.mxu0
    %v7999 = vpop.f32.mrf.mxu0
    %8000 = vdwg.mxu0
    %8001 = vmatprep.subr.bf16.mxu0 %v5425
    %8002 = vmatpush1.bf16.msra.mxu0 %v5424
    %8003 = vmatprep.subr.bf16.mxu0 %v5414
    %8004 = vmatpush1.bf16.msra.mxu0 %v5413
    %8005 = vmatprep.subr.bf16.mxu0 %v5403
    %8006 = vmatpush1.bf16.msra.mxu0 %v5402
    %8007 = vmatprep.subr.bf16.mxu0 %v5392
    %8008 = vmatpush1.bf16.msra.mxu0 %v5391
    %8009 = vmatprep.subr.bf16.mxu0 %v5381
    %8010 = vmatpush1.bf16.msra.mxu0 %v5380
    %8011 = vmatprep.subr.bf16.mxu0 %v5370
    %8012 = vmatpush1.bf16.msra.mxu0 %v5369
    %8013 = vmatprep.subr.bf16.mxu0 %v5359
    %8014 = vmatpush1.bf16.msra.mxu0 %v5358
    %8015 = vmatprep.subr.bf16.mxu0 %v5348
    %8016 = vmatpush1.bf16.msra.mxu0 %v5347
    %8017 = vmatprep.subr.bf16.mxu0 %v5513
    %8018 = vmatpush2.bf16.msra.mxu0 %v5512
    %8019 = vmatprep.subr.bf16.mxu0 %v5502
    %8020 = vmatpush2.bf16.msra.mxu0 %v5501
    %8021 = vmatprep.subr.bf16.mxu0 %v5491
    %8022 = vmatpush2.bf16.msra.mxu0 %v5490
    %8023 = vmatprep.subr.bf16.mxu0 %v5480
    %8024 = vmatpush2.bf16.msra.mxu0 %v5479
    %8025 = vmatprep.subr.bf16.mxu0 %v5469
    %8026 = vmatpush2.bf16.msra.mxu0 %v5468
    %8027 = vmatprep.subr.bf16.mxu0 %v5458
    %8028 = vmatpush2.bf16.msra.mxu0 %v5457
    %8029 = vmatprep.subr.bf16.mxu0 %v5447
    %8030 = vmatpush2.bf16.msra.mxu0 %v5446
    %8031 = vmatprep.subr.bf16.mxu0 %v5436
    %8032 = vmatpush2.bf16.msra.mxu0 %v5435
    %8033 = vmatprep.mubr.bf16.mxu0 %v1395
    %8034 = vmatmul.mubr.bf16.gmra.mxu0 %v1394
    %v8035 = vpop.f32.mrf.mxu0
    %v8036 = vadd.f32 %v7995, %v8035
    %v8037 = vpop.f32.mrf.mxu0
    %v8038 = vadd.f32 %v7997, %v8037
    %v8039 = vpop.f32.mrf.mxu0
    %v8040 = vpop.f32.mrf.mxu0
    %8041 = vdwg.mxu0
    %8042 = vmatprep.subr.bf16.mxu0 %v5601
    %8043 = vmatpush1.bf16.msra.mxu0 %v5600
    %8044 = vmatprep.subr.bf16.mxu0 %v5590
    %8045 = vmatpush1.bf16.msra.mxu0 %v5589
    %8046 = vmatprep.subr.bf16.mxu0 %v5579
    %8047 = vmatpush1.bf16.msra.mxu0 %v5578
    %8048 = vmatprep.subr.bf16.mxu0 %v5568
    %8049 = vmatpush1.bf16.msra.mxu0 %v5567
    %8050 = vmatprep.subr.bf16.mxu0 %v5557
    %8051 = vmatpush1.bf16.msra.mxu0 %v5556
    %8052 = vmatprep.subr.bf16.mxu0 %v5546
    %8053 = vmatpush1.bf16.msra.mxu0 %v5545
    %8054 = vmatprep.subr.bf16.mxu0 %v5535
    %8055 = vmatpush1.bf16.msra.mxu0 %v5534
    %8056 = vmatprep.subr.bf16.mxu0 %v5524
    %8057 = vmatpush1.bf16.msra.mxu0 %v5523
    %8058 = vmatprep.subr.bf16.mxu0 %v5689
    %8059 = vmatpush2.bf16.msra.mxu0 %v5688
    %8060 = vmatprep.subr.bf16.mxu0 %v5678
    %8061 = vmatpush2.bf16.msra.mxu0 %v5677
    %8062 = vmatprep.subr.bf16.mxu0 %v5667
    %8063 = vmatpush2.bf16.msra.mxu0 %v5666
    %8064 = vmatprep.subr.bf16.mxu0 %v5656
    %8065 = vmatpush2.bf16.msra.mxu0 %v5655
    %8066 = vmatprep.subr.bf16.mxu0 %v5645
    %8067 = vmatpush2.bf16.msra.mxu0 %v5644
    %8068 = vmatprep.subr.bf16.mxu0 %v5634
    %8069 = vmatpush2.bf16.msra.mxu0 %v5633
    %8070 = vmatprep.subr.bf16.mxu0 %v5623
    %8071 = vmatpush2.bf16.msra.mxu0 %v5622
    %8072 = vmatprep.subr.bf16.mxu0 %v5612
    %8073 = vmatpush2.bf16.msra.mxu0 %v5611
    %8074 = vmatprep.mubr.bf16.mxu0 %v1397
    %8075 = vmatmul.mubr.bf16.gmra.mxu0 %v1396
    %v8076 = vpop.f32.mrf.mxu0
    %v8077 = vadd.f32 %v8036, %v8076
    %v8078 = vpop.f32.mrf.mxu0
    %v8079 = vadd.f32 %v8038, %v8078
    %v8080 = vpop.f32.mrf.mxu0
    %v8081 = vpop.f32.mrf.mxu0
    %8082 = vdwg.mxu0
    %8083 = vmatprep.subr.bf16.mxu0 %v5777
    %8084 = vmatpush1.bf16.msra.mxu0 %v5776
    %8085 = vmatprep.subr.bf16.mxu0 %v5766
    %8086 = vmatpush1.bf16.msra.mxu0 %v5765
    %8087 = vmatprep.subr.bf16.mxu0 %v5755
    %8088 = vmatpush1.bf16.msra.mxu0 %v5754
    %8089 = vmatprep.subr.bf16.mxu0 %v5744
    %8090 = vmatpush1.bf16.msra.mxu0 %v5743
    %8091 = vmatprep.subr.bf16.mxu0 %v5733
    %8092 = vmatpush1.bf16.msra.mxu0 %v5732
    %8093 = vmatprep.subr.bf16.mxu0 %v5722
    %8094 = vmatpush1.bf16.msra.mxu0 %v5721
    %8095 = vmatprep.subr.bf16.mxu0 %v5711
    %8096 = vmatpush1.bf16.msra.mxu0 %v5710
    %8097 = vmatprep.subr.bf16.mxu0 %v5700
    %8098 = vmatpush1.bf16.msra.mxu0 %v5699
    %8099 = vmatprep.subr.bf16.mxu0 %v5865
    %8100 = vmatpush2.bf16.msra.mxu0 %v5864
    %8101 = vmatprep.subr.bf16.mxu0 %v5854
    %8102 = vmatpush2.bf16.msra.mxu0 %v5853
    %8103 = vmatprep.subr.bf16.mxu0 %v5843
    %8104 = vmatpush2.bf16.msra.mxu0 %v5842
    %8105 = vmatprep.subr.bf16.mxu0 %v5832
    %8106 = vmatpush2.bf16.msra.mxu0 %v5831
    %8107 = vmatprep.subr.bf16.mxu0 %v5821
    %8108 = vmatpush2.bf16.msra.mxu0 %v5820
    %8109 = vmatprep.subr.bf16.mxu0 %v5810
    %8110 = vmatpush2.bf16.msra.mxu0 %v5809
    %8111 = vmatprep.subr.bf16.mxu0 %v5799
    %8112 = vmatpush2.bf16.msra.mxu0 %v5798
    %8113 = vmatprep.subr.bf16.mxu0 %v5788
    %8114 = vmatpush2.bf16.msra.mxu0 %v5787
    %8115 = vmatprep.mubr.bf16.mxu0 %v1399
    %8116 = vmatmul.mubr.bf16.gmra.mxu0 %v1398
    %v8117 = vpop.f32.mrf.mxu0
    %v8118 = vadd.f32 %v8077, %v8117
    %v8119 = vpop.f32.mrf.mxu0
    %v8120 = vadd.f32 %v8079, %v8119
    %v8121 = vpop.f32.mrf.mxu0
    %v8122 = vpop.f32.mrf.mxu0
    %8123 = vdwg.mxu0
    %8124 = vmatprep.subr.bf16.mxu0 0
    %8125 = vmatpush1.bf16.msra.mxu0 0
    %8126 = vmatprep.subr.bf16.mxu0 0
    %8127 = vmatpush1.bf16.msra.mxu0 0
    %8128 = vmatprep.subr.bf16.mxu0 0
    %8129 = vmatpush1.bf16.msra.mxu0 0
    %8130 = vmatprep.subr.bf16.mxu0 0
    %8131 = vmatpush1.bf16.msra.mxu0 0
    %8132 = vmatprep.subr.bf16.mxu0 %v5909
    %8133 = vmatpush1.bf16.msra.mxu0 %v5908
    %8134 = vmatprep.subr.bf16.mxu0 %v5898
    %8135 = vmatpush1.bf16.msra.mxu0 %v5897
    %8136 = vmatprep.subr.bf16.mxu0 %v5887
    %8137 = vmatpush1.bf16.msra.mxu0 %v5886
    %8138 = vmatprep.subr.bf16.mxu0 %v5876
    %8139 = vmatpush1.bf16.msra.mxu0 %v5875
    %8140 = vmatprep.subr.bf16.mxu0 0
    %8141 = vmatpush2.bf16.msra.mxu0 0
    %8142 = vmatprep.subr.bf16.mxu0 0
    %8143 = vmatpush2.bf16.msra.mxu0 0
    %8144 = vmatprep.subr.bf16.mxu0 0
    %8145 = vmatpush2.bf16.msra.mxu0 0
    %8146 = vmatprep.subr.bf16.mxu0 0
    %8147 = vmatpush2.bf16.msra.mxu0 0
    %8148 = vmatprep.subr.bf16.mxu0 0
    %8149 = vmatpush2.bf16.msra.mxu0 0
    %8150 = vmatprep.subr.bf16.mxu0 0
    %8151 = vmatpush2.bf16.msra.mxu0 0
    %8152 = vmatprep.subr.bf16.mxu0 0
    %8153 = vmatpush2.bf16.msra.mxu0 0
    %8154 = vmatprep.subr.bf16.mxu0 0
    %8155 = vmatpush2.bf16.msra.mxu0 0
    %8156 = vmatprep.mubr.bf16.mxu0 0
    %8157 = vmatmul.mubr.bf16.gmra.mxu0 %v7015
    %v8158 = vpop.f32.mrf.mxu0
    %v8159 = vadd.f32 %v8118, %v8158
    %v8160 = vpop.f32.mrf.mxu0
    %v8161 = vadd.f32 %v8120, %v8160
    %v8162 = vpop.f32.mrf.mxu0
    %v8163 = vpop.f32.mrf.mxu0
    %8164 = vdwg.mxu0
    %8165 = vmatprep.subr.bf16.mxu0 %v4899
    %8166 = vmatpush1.bf16.msra.mxu0 %v4898
    %8167 = vmatprep.subr.bf16.mxu0 %v4888
    %8168 = vmatpush1.bf16.msra.mxu0 %v4887
    %8169 = vmatprep.subr.bf16.mxu0 %v4877
    %8170 = vmatpush1.bf16.msra.mxu0 %v4876
    %8171 = vmatprep.subr.bf16.mxu0 %v4866
    %8172 = vmatpush1.bf16.msra.mxu0 %v4865
    %8173 = vmatprep.subr.bf16.mxu0 %v4855
    %8174 = vmatpush1.bf16.msra.mxu0 %v4854
    %8175 = vmatprep.subr.bf16.mxu0 %v4844
    %8176 = vmatpush1.bf16.msra.mxu0 %v4843
    %8177 = vmatprep.subr.bf16.mxu0 %v4833
    %8178 = vmatpush1.bf16.msra.mxu0 %v4832
    %8179 = vmatprep.subr.bf16.mxu0 %v4822
    %8180 = vmatpush1.bf16.msra.mxu0 %v4821
    %8181 = vmatprep.subr.bf16.mxu0 %v4987
    %8182 = vmatpush2.bf16.msra.mxu0 %v4986
    %8183 = vmatprep.subr.bf16.mxu0 %v4976
    %8184 = vmatpush2.bf16.msra.mxu0 %v4975
    %8185 = vmatprep.subr.bf16.mxu0 %v4965
    %8186 = vmatpush2.bf16.msra.mxu0 %v4964
    %8187 = vmatprep.subr.bf16.mxu0 %v4954
    %8188 = vmatpush2.bf16.msra.mxu0 %v4953
    %8189 = vmatprep.subr.bf16.mxu0 %v4943
    %8190 = vmatpush2.bf16.msra.mxu0 %v4942
    %8191 = vmatprep.subr.bf16.mxu0 %v4932
    %8192 = vmatpush2.bf16.msra.mxu0 %v4931
    %8193 = vmatprep.subr.bf16.mxu0 %v4921
    %8194 = vmatpush2.bf16.msra.mxu0 %v4920
    %8195 = vmatprep.subr.bf16.mxu0 %v4910
    %8196 = vmatpush2.bf16.msra.mxu0 %v4909
    %8197 = vmatprep.mubr.bf16.mxu0 %v1389
    %8198 = vmatmul.mubr.bf16.gmra.mxu0 %v1388
    %v8199 = vpop.f32.mrf.mxu0
    %v8200 = vadd.f32 %v1348, %v8199
    %v8201 = vpop.f32.mrf.mxu0
    %v8202 = vadd.f32 %v1352, %v8201
    %v8203 = vpop.f32.mrf.mxu0
    %v8204 = vpop.f32.mrf.mxu0
    %8205 = vdwg.mxu0
    %8206 = vmatprep.subr.bf16.mxu0 %v5075
    %8207 = vmatpush1.bf16.msra.mxu0 %v5074
    %8208 = vmatprep.subr.bf16.mxu0 %v5064
    %8209 = vmatpush1.bf16.msra.mxu0 %v5063
    %8210 = vmatprep.subr.bf16.mxu0 %v5053
    %8211 = vmatpush1.bf16.msra.mxu0 %v5052
    %8212 = vmatprep.subr.bf16.mxu0 %v5042
    %8213 = vmatpush1.bf16.msra.mxu0 %v5041
    %8214 = vmatprep.subr.bf16.mxu0 %v5031
    %8215 = vmatpush1.bf16.msra.mxu0 %v5030
    %8216 = vmatprep.subr.bf16.mxu0 %v5020
    %8217 = vmatpush1.bf16.msra.mxu0 %v5019
    %8218 = vmatprep.subr.bf16.mxu0 %v5009
    %8219 = vmatpush1.bf16.msra.mxu0 %v5008
    %8220 = vmatprep.subr.bf16.mxu0 %v4998
    %8221 = vmatpush1.bf16.msra.mxu0 %v4997
    %8222 = vmatprep.subr.bf16.mxu0 %v5163
    %8223 = vmatpush2.bf16.msra.mxu0 %v5162
    %8224 = vmatprep.subr.bf16.mxu0 %v5152
    %8225 = vmatpush2.bf16.msra.mxu0 %v5151
    %8226 = vmatprep.subr.bf16.mxu0 %v5141
    %8227 = vmatpush2.bf16.msra.mxu0 %v5140
    %8228 = vmatprep.subr.bf16.mxu0 %v5130
    %8229 = vmatpush2.bf16.msra.mxu0 %v5129
    %8230 = vmatprep.subr.bf16.mxu0 %v5119
    %8231 = vmatpush2.bf16.msra.mxu0 %v5118
    %8232 = vmatprep.subr.bf16.mxu0 %v5108
    %8233 = vmatpush2.bf16.msra.mxu0 %v5107
    %8234 = vmatprep.subr.bf16.mxu0 %v5097
    %8235 = vmatpush2.bf16.msra.mxu0 %v5096
    %8236 = vmatprep.subr.bf16.mxu0 %v5086
    %8237 = vmatpush2.bf16.msra.mxu0 %v5085
    %8238 = vmatprep.mubr.bf16.mxu0 %v1391
    %8239 = vmatmul.mubr.bf16.gmra.mxu0 %v1390
    %v8240 = vpop.f32.mrf.mxu0
    %v8241 = vadd.f32 %v8200, %v8240
    %v8242 = vpop.f32.mrf.mxu0
    %v8243 = vadd.f32 %v8202, %v8242
    %v8244 = vpop.f32.mrf.mxu0
    %v8245 = vpop.f32.mrf.mxu0
    %8246 = vdwg.mxu0
    %8247 = vmatprep.subr.bf16.mxu0 %v5251
    %8248 = vmatpush1.bf16.msra.mxu0 %v5250
    %8249 = vmatprep.subr.bf16.mxu0 %v5240
    %8250 = vmatpush1.bf16.msra.mxu0 %v5239
    %8251 = vmatprep.subr.bf16.mxu0 %v5229
    %8252 = vmatpush1.bf16.msra.mxu0 %v5228
    %8253 = vmatprep.subr.bf16.mxu0 %v5218
    %8254 = vmatpush1.bf16.msra.mxu0 %v5217
    %8255 = vmatprep.subr.bf16.mxu0 %v5207
    %8256 = vmatpush1.bf16.msra.mxu0 %v5206
    %8257 = vmatprep.subr.bf16.mxu0 %v5196
    %8258 = vmatpush1.bf16.msra.mxu0 %v5195
    %8259 = vmatprep.subr.bf16.mxu0 %v5185
    %8260 = vmatpush1.bf16.msra.mxu0 %v5184
    %8261 = vmatprep.subr.bf16.mxu0 %v5174
    %8262 = vmatpush1.bf16.msra.mxu0 %v5173
    %8263 = vmatprep.subr.bf16.mxu0 %v5339
    %8264 = vmatpush2.bf16.msra.mxu0 %v5338
    %8265 = vmatprep.subr.bf16.mxu0 %v5328
    %8266 = vmatpush2.bf16.msra.mxu0 %v5327
    %8267 = vmatprep.subr.bf16.mxu0 %v5317
    %8268 = vmatpush2.bf16.msra.mxu0 %v5316
    %8269 = vmatprep.subr.bf16.mxu0 %v5306
    %8270 = vmatpush2.bf16.msra.mxu0 %v5305
    %8271 = vmatprep.subr.bf16.mxu0 %v5295
    %8272 = vmatpush2.bf16.msra.mxu0 %v5294
    %8273 = vmatprep.subr.bf16.mxu0 %v5284
    %8274 = vmatpush2.bf16.msra.mxu0 %v5283
    %8275 = vmatprep.subr.bf16.mxu0 %v5273
    %8276 = vmatpush2.bf16.msra.mxu0 %v5272
    %8277 = vmatprep.subr.bf16.mxu0 %v5262
    %8278 = vmatpush2.bf16.msra.mxu0 %v5261
    %8279 = vmatprep.mubr.bf16.mxu0 %v1393
    %8280 = vmatmul.mubr.bf16.gmra.mxu0 %v1392
    %v8281 = vpop.f32.mrf.mxu0
    %v8282 = vadd.f32 %v8241, %v8281
    %v8283 = vpop.f32.mrf.mxu0
    %v8284 = vadd.f32 %v8243, %v8283
    %v8285 = vpop.f32.mrf.mxu0
    %v8286 = vpop.f32.mrf.mxu0
    %8287 = vdwg.mxu0
    %8288 = vmatprep.subr.bf16.mxu0 %v5427
    %8289 = vmatpush1.bf16.msra.mxu0 %v5426
    %8290 = vmatprep.subr.bf16.mxu0 %v5416
    %8291 = vmatpush1.bf16.msra.mxu0 %v5415
    %8292 = vmatprep.subr.bf16.mxu0 %v5405
    %8293 = vmatpush1.bf16.msra.mxu0 %v5404
    %8294 = vmatprep.subr.bf16.mxu0 %v5394
    %8295 = vmatpush1.bf16.msra.mxu0 %v5393
    %8296 = vmatprep.subr.bf16.mxu0 %v5383
    %8297 = vmatpush1.bf16.msra.mxu0 %v5382
    %8298 = vmatprep.subr.bf16.mxu0 %v5372
    %8299 = vmatpush1.bf16.msra.mxu0 %v5371
    %8300 = vmatprep.subr.bf16.mxu0 %v5361
    %8301 = vmatpush1.bf16.msra.mxu0 %v5360
    %8302 = vmatprep.subr.bf16.mxu0 %v5350
    %8303 = vmatpush1.bf16.msra.mxu0 %v5349
    %8304 = vmatprep.subr.bf16.mxu0 %v5515
    %8305 = vmatpush2.bf16.msra.mxu0 %v5514
    %8306 = vmatprep.subr.bf16.mxu0 %v5504
    %8307 = vmatpush2.bf16.msra.mxu0 %v5503
    %8308 = vmatprep.subr.bf16.mxu0 %v5493
    %8309 = vmatpush2.bf16.msra.mxu0 %v5492
    %8310 = vmatprep.subr.bf16.mxu0 %v5482
    %8311 = vmatpush2.bf16.msra.mxu0 %v5481
    %8312 = vmatprep.subr.bf16.mxu0 %v5471
    %8313 = vmatpush2.bf16.msra.mxu0 %v5470
    %8314 = vmatprep.subr.bf16.mxu0 %v5460
    %8315 = vmatpush2.bf16.msra.mxu0 %v5459
    %8316 = vmatprep.subr.bf16.mxu0 %v5449
    %8317 = vmatpush2.bf16.msra.mxu0 %v5448
    %8318 = vmatprep.subr.bf16.mxu0 %v5438
    %8319 = vmatpush2.bf16.msra.mxu0 %v5437
    %8320 = vmatprep.mubr.bf16.mxu0 %v1395
    %8321 = vmatmul.mubr.bf16.gmra.mxu0 %v1394
    %v8322 = vpop.f32.mrf.mxu0
    %v8323 = vadd.f32 %v8282, %v8322
    %v8324 = vpop.f32.mrf.mxu0
    %v8325 = vadd.f32 %v8284, %v8324
    %v8326 = vpop.f32.mrf.mxu0
    %v8327 = vpop.f32.mrf.mxu0
    %8328 = vdwg.mxu0
    %8329 = vmatprep.subr.bf16.mxu0 %v5603
    %8330 = vmatpush1.bf16.msra.mxu0 %v5602
    %8331 = vmatprep.subr.bf16.mxu0 %v5592
    %8332 = vmatpush1.bf16.msra.mxu0 %v5591
    %8333 = vmatprep.subr.bf16.mxu0 %v5581
    %8334 = vmatpush1.bf16.msra.mxu0 %v5580
    %8335 = vmatprep.subr.bf16.mxu0 %v5570
    %8336 = vmatpush1.bf16.msra.mxu0 %v5569
    %8337 = vmatprep.subr.bf16.mxu0 %v5559
    %8338 = vmatpush1.bf16.msra.mxu0 %v5558
    %8339 = vmatprep.subr.bf16.mxu0 %v5548
    %8340 = vmatpush1.bf16.msra.mxu0 %v5547
    %8341 = vmatprep.subr.bf16.mxu0 %v5537
    %8342 = vmatpush1.bf16.msra.mxu0 %v5536
    %8343 = vmatprep.subr.bf16.mxu0 %v5526
    %8344 = vmatpush1.bf16.msra.mxu0 %v5525
    %8345 = vmatprep.subr.bf16.mxu0 %v5691
    %8346 = vmatpush2.bf16.msra.mxu0 %v5690
    %8347 = vmatprep.subr.bf16.mxu0 %v5680
    %8348 = vmatpush2.bf16.msra.mxu0 %v5679
    %8349 = vmatprep.subr.bf16.mxu0 %v5669
    %8350 = vmatpush2.bf16.msra.mxu0 %v5668
    %8351 = vmatprep.subr.bf16.mxu0 %v5658
    %8352 = vmatpush2.bf16.msra.mxu0 %v5657
    %8353 = vmatprep.subr.bf16.mxu0 %v5647
    %8354 = vmatpush2.bf16.msra.mxu0 %v5646
    %8355 = vmatprep.subr.bf16.mxu0 %v5636
    %8356 = vmatpush2.bf16.msra.mxu0 %v5635
    %8357 = vmatprep.subr.bf16.mxu0 %v5625
    %8358 = vmatpush2.bf16.msra.mxu0 %v5624
    %8359 = vmatprep.subr.bf16.mxu0 %v5614
    %8360 = vmatpush2.bf16.msra.mxu0 %v5613
    %8361 = vmatprep.mubr.bf16.mxu0 %v1397
    %8362 = vmatmul.mubr.bf16.gmra.mxu0 %v1396
    %v8363 = vpop.f32.mrf.mxu0
    %v8364 = vadd.f32 %v8323, %v8363
    %v8365 = vpop.f32.mrf.mxu0
    %v8366 = vadd.f32 %v8325, %v8365
    %v8367 = vpop.f32.mrf.mxu0
    %v8368 = vpop.f32.mrf.mxu0
    %8369 = vdwg.mxu0
    %8370 = vmatprep.subr.bf16.mxu0 %v5779
    %8371 = vmatpush1.bf16.msra.mxu0 %v5778
    %8372 = vmatprep.subr.bf16.mxu0 %v5768
    %8373 = vmatpush1.bf16.msra.mxu0 %v5767
    %8374 = vmatprep.subr.bf16.mxu0 %v5757
    %8375 = vmatpush1.bf16.msra.mxu0 %v5756
    %8376 = vmatprep.subr.bf16.mxu0 %v5746
    %8377 = vmatpush1.bf16.msra.mxu0 %v5745
    %8378 = vmatprep.subr.bf16.mxu0 %v5735
    %8379 = vmatpush1.bf16.msra.mxu0 %v5734
    %8380 = vmatprep.subr.bf16.mxu0 %v5724
    %8381 = vmatpush1.bf16.msra.mxu0 %v5723
    %8382 = vmatprep.subr.bf16.mxu0 %v5713
    %8383 = vmatpush1.bf16.msra.mxu0 %v5712
    %8384 = vmatprep.subr.bf16.mxu0 %v5702
    %8385 = vmatpush1.bf16.msra.mxu0 %v5701
    %8386 = vmatprep.subr.bf16.mxu0 %v5867
    %8387 = vmatpush2.bf16.msra.mxu0 %v5866
    %8388 = vmatprep.subr.bf16.mxu0 %v5856
    %8389 = vmatpush2.bf16.msra.mxu0 %v5855
    %8390 = vmatprep.subr.bf16.mxu0 %v5845
    %8391 = vmatpush2.bf16.msra.mxu0 %v5844
    %8392 = vmatprep.subr.bf16.mxu0 %v5834
    %8393 = vmatpush2.bf16.msra.mxu0 %v5833
    %8394 = vmatprep.subr.bf16.mxu0 %v5823
    %8395 = vmatpush2.bf16.msra.mxu0 %v5822
    %8396 = vmatprep.subr.bf16.mxu0 %v5812
    %8397 = vmatpush2.bf16.msra.mxu0 %v5811
    %8398 = vmatprep.subr.bf16.mxu0 %v5801
    %8399 = vmatpush2.bf16.msra.mxu0 %v5800
    %8400 = vmatprep.subr.bf16.mxu0 %v5790
    %8401 = vmatpush2.bf16.msra.mxu0 %v5789
    %8402 = vmatprep.mubr.bf16.mxu0 %v1399
    %8403 = vmatmul.mubr.bf16.gmra.mxu0 %v1398
    %v8404 = vpop.f32.mrf.mxu0
    %v8405 = vadd.f32 %v8364, %v8404
    %v8406 = vpop.f32.mrf.mxu0
    %v8407 = vadd.f32 %v8366, %v8406
    %v8408 = vpop.f32.mrf.mxu0
    %v8409 = vpop.f32.mrf.mxu0
    %8410 = vdwg.mxu0
    %8411 = vmatprep.subr.bf16.mxu0 0
    %8412 = vmatpush1.bf16.msra.mxu0 0
    %8413 = vmatprep.subr.bf16.mxu0 0
    %8414 = vmatpush1.bf16.msra.mxu0 0
    %8415 = vmatprep.subr.bf16.mxu0 0
    %8416 = vmatpush1.bf16.msra.mxu0 0
    %8417 = vmatprep.subr.bf16.mxu0 0
    %8418 = vmatpush1.bf16.msra.mxu0 0
    %8419 = vmatprep.subr.bf16.mxu0 %v5911
    %8420 = vmatpush1.bf16.msra.mxu0 %v5910
    %8421 = vmatprep.subr.bf16.mxu0 %v5900
    %8422 = vmatpush1.bf16.msra.mxu0 %v5899
    %8423 = vmatprep.subr.bf16.mxu0 %v5889
    %8424 = vmatpush1.bf16.msra.mxu0 %v5888
    %8425 = vmatprep.subr.bf16.mxu0 %v5878
    %8426 = vmatpush1.bf16.msra.mxu0 %v5877
    %8427 = vmatprep.subr.bf16.mxu0 0
    %8428 = vmatpush2.bf16.msra.mxu0 0
    %8429 = vmatprep.subr.bf16.mxu0 0
    %8430 = vmatpush2.bf16.msra.mxu0 0
    %8431 = vmatprep.subr.bf16.mxu0 0
    %8432 = vmatpush2.bf16.msra.mxu0 0
    %8433 = vmatprep.subr.bf16.mxu0 0
    %8434 = vmatpush2.bf16.msra.mxu0 0
    %8435 = vmatprep.subr.bf16.mxu0 0
    %8436 = vmatpush2.bf16.msra.mxu0 0
    %8437 = vmatprep.subr.bf16.mxu0 0
    %8438 = vmatpush2.bf16.msra.mxu0 0
    %8439 = vmatprep.subr.bf16.mxu0 0
    %8440 = vmatpush2.bf16.msra.mxu0 0
    %8441 = vmatprep.subr.bf16.mxu0 0
    %8442 = vmatpush2.bf16.msra.mxu0 0
    %8443 = vmatprep.mubr.bf16.mxu0 0
    %8444 = vmatmul.mubr.bf16.gmra.mxu0 %v7015
    %v8445 = vpop.f32.mrf.mxu0
    %v8446 = vadd.f32 %v8405, %v8445
    %v8447 = vpop.f32.mrf.mxu0
    %v8448 = vadd.f32 %v8407, %v8447
    %v8449 = vpop.f32.mrf.mxu0
    %v8450 = vpop.f32.mrf.mxu0
    %8451 = vdwg.mxu0
    %8452 = vmatprep.subr.bf16.mxu0 0
    %8453 = vmatpush1.bf16.msra.mxu0 %v4900
    %8454 = vmatprep.subr.bf16.mxu0 0
    %8455 = vmatpush1.bf16.msra.mxu0 %v4889
    %8456 = vmatprep.subr.bf16.mxu0 0
    %8457 = vmatpush1.bf16.msra.mxu0 %v4878
    %8458 = vmatprep.subr.bf16.mxu0 0
    %8459 = vmatpush1.bf16.msra.mxu0 %v4867
    %8460 = vmatprep.subr.bf16.mxu0 0
    %8461 = vmatpush1.bf16.msra.mxu0 %v4856
    %8462 = vmatprep.subr.bf16.mxu0 0
    %8463 = vmatpush1.bf16.msra.mxu0 %v4845
    %8464 = vmatprep.subr.bf16.mxu0 0
    %8465 = vmatpush1.bf16.msra.mxu0 %v4834
    %8466 = vmatprep.subr.bf16.mxu0 0
    %8467 = vmatpush1.bf16.msra.mxu0 %v4823
    %8468 = vmatprep.subr.bf16.mxu0 0
    %8469 = vmatpush2.bf16.msra.mxu0 %v4988
    %8470 = vmatprep.subr.bf16.mxu0 0
    %8471 = vmatpush2.bf16.msra.mxu0 %v4977
    %8472 = vmatprep.subr.bf16.mxu0 0
    %8473 = vmatpush2.bf16.msra.mxu0 %v4966
    %8474 = vmatprep.subr.bf16.mxu0 0
    %8475 = vmatpush2.bf16.msra.mxu0 %v4955
    %8476 = vmatprep.subr.bf16.mxu0 0
    %8477 = vmatpush2.bf16.msra.mxu0 %v4944
    %8478 = vmatprep.subr.bf16.mxu0 0
    %8479 = vmatpush2.bf16.msra.mxu0 %v4933
    %8480 = vmatprep.subr.bf16.mxu0 0
    %8481 = vmatpush2.bf16.msra.mxu0 %v4922
    %8482 = vmatprep.subr.bf16.mxu0 0
    %8483 = vmatpush2.bf16.msra.mxu0 %v4911
    %8484 = vmatprep.mubr.bf16.mxu0 %v1389
    %8485 = vmatmul.mubr.bf16.gmra.mxu0 %v1388
    %v8486 = vpop.f32.mrf.mxu0
    %v8487 = vadd.f32 %v1356, %v8486
    %v8488 = vpop.f32.mrf.mxu0
    %v8489 = vpop.f32.mrf.mxu0
    %v8490 = vpop.f32.mrf.mxu0
    %8491 = vdwg.mxu0
    %8492 = vmatprep.subr.bf16.mxu0 0
    %8493 = vmatpush1.bf16.msra.mxu0 %v5076
    %8494 = vmatprep.subr.bf16.mxu0 0
    %8495 = vmatpush1.bf16.msra.mxu0 %v5065
    %8496 = vmatprep.subr.bf16.mxu0 0
    %8497 = vmatpush1.bf16.msra.mxu0 %v5054
    %8498 = vmatprep.subr.bf16.mxu0 0
    %8499 = vmatpush1.bf16.msra.mxu0 %v5043
    %8500 = vmatprep.subr.bf16.mxu0 0
    %8501 = vmatpush1.bf16.msra.mxu0 %v5032
    %8502 = vmatprep.subr.bf16.mxu0 0
    %8503 = vmatpush1.bf16.msra.mxu0 %v5021
    %8504 = vmatprep.subr.bf16.mxu0 0
    %8505 = vmatpush1.bf16.msra.mxu0 %v5010
    %8506 = vmatprep.subr.bf16.mxu0 0
    %8507 = vmatpush1.bf16.msra.mxu0 %v4999
    %8508 = vmatprep.subr.bf16.mxu0 0
    %8509 = vmatpush2.bf16.msra.mxu0 %v5164
    %8510 = vmatprep.subr.bf16.mxu0 0
    %8511 = vmatpush2.bf16.msra.mxu0 %v5153
    %8512 = vmatprep.subr.bf16.mxu0 0
    %8513 = vmatpush2.bf16.msra.mxu0 %v5142
    %8514 = vmatprep.subr.bf16.mxu0 0
    %8515 = vmatpush2.bf16.msra.mxu0 %v5131
    %8516 = vmatprep.subr.bf16.mxu0 0
    %8517 = vmatpush2.bf16.msra.mxu0 %v5120
    %8518 = vmatprep.subr.bf16.mxu0 0
    %8519 = vmatpush2.bf16.msra.mxu0 %v5109
    %8520 = vmatprep.subr.bf16.mxu0 0
    %8521 = vmatpush2.bf16.msra.mxu0 %v5098
    %8522 = vmatprep.subr.bf16.mxu0 0
    %8523 = vmatpush2.bf16.msra.mxu0 %v5087
    %8524 = vmatprep.mubr.bf16.mxu0 %v1391
    %8525 = vmatmul.mubr.bf16.gmra.mxu0 %v1390
    %v8526 = vpop.f32.mrf.mxu0
    %v8527 = vadd.f32 %v8487, %v8526
    %v8528 = vpop.f32.mrf.mxu0
    %v8529 = vpop.f32.mrf.mxu0
    %v8530 = vpop.f32.mrf.mxu0
    %8531 = vdwg.mxu0
    %8532 = vmatprep.subr.bf16.mxu0 0
    %8533 = vmatpush1.bf16.msra.mxu0 %v5252
    %8534 = vmatprep.subr.bf16.mxu0 0
    %8535 = vmatpush1.bf16.msra.mxu0 %v5241
    %8536 = vmatprep.subr.bf16.mxu0 0
    %8537 = vmatpush1.bf16.msra.mxu0 %v5230
    %8538 = vmatprep.subr.bf16.mxu0 0
    %8539 = vmatpush1.bf16.msra.mxu0 %v5219
    %8540 = vmatprep.subr.bf16.mxu0 0
    %8541 = vmatpush1.bf16.msra.mxu0 %v5208
    %8542 = vmatprep.subr.bf16.mxu0 0
    %8543 = vmatpush1.bf16.msra.mxu0 %v5197
    %8544 = vmatprep.subr.bf16.mxu0 0
    %8545 = vmatpush1.bf16.msra.mxu0 %v5186
    %8546 = vmatprep.subr.bf16.mxu0 0
    %8547 = vmatpush1.bf16.msra.mxu0 %v5175
    %8548 = vmatprep.subr.bf16.mxu0 0
    %8549 = vmatpush2.bf16.msra.mxu0 %v5340
    %8550 = vmatprep.subr.bf16.mxu0 0
    %8551 = vmatpush2.bf16.msra.mxu0 %v5329
    %8552 = vmatprep.subr.bf16.mxu0 0
    %8553 = vmatpush2.bf16.msra.mxu0 %v5318
    %8554 = vmatprep.subr.bf16.mxu0 0
    %8555 = vmatpush2.bf16.msra.mxu0 %v5307
    %8556 = vmatprep.subr.bf16.mxu0 0
    %8557 = vmatpush2.bf16.msra.mxu0 %v5296
    %8558 = vmatprep.subr.bf16.mxu0 0
    %8559 = vmatpush2.bf16.msra.mxu0 %v5285
    %8560 = vmatprep.subr.bf16.mxu0 0
    %8561 = vmatpush2.bf16.msra.mxu0 %v5274
    %8562 = vmatprep.subr.bf16.mxu0 0
    %8563 = vmatpush2.bf16.msra.mxu0 %v5263
    %8564 = vmatprep.mubr.bf16.mxu0 %v1393
    %8565 = vmatmul.mubr.bf16.gmra.mxu0 %v1392
    %v8566 = vpop.f32.mrf.mxu0
    %v8567 = vadd.f32 %v8527, %v8566
    %v8568 = vpop.f32.mrf.mxu0
    %v8569 = vpop.f32.mrf.mxu0
    %v8570 = vpop.f32.mrf.mxu0
    %8571 = vdwg.mxu0
    %8572 = vmatprep.subr.bf16.mxu0 0
    %8573 = vmatpush1.bf16.msra.mxu0 %v5428
    %8574 = vmatprep.subr.bf16.mxu0 0
    %8575 = vmatpush1.bf16.msra.mxu0 %v5417
    %8576 = vmatprep.subr.bf16.mxu0 0
    %8577 = vmatpush1.bf16.msra.mxu0 %v5406
    %8578 = vmatprep.subr.bf16.mxu0 0
    %8579 = vmatpush1.bf16.msra.mxu0 %v5395
    %8580 = vmatprep.subr.bf16.mxu0 0
    %8581 = vmatpush1.bf16.msra.mxu0 %v5384
    %8582 = vmatprep.subr.bf16.mxu0 0
    %8583 = vmatpush1.bf16.msra.mxu0 %v5373
    %8584 = vmatprep.subr.bf16.mxu0 0
    %8585 = vmatpush1.bf16.msra.mxu0 %v5362
    %8586 = vmatprep.subr.bf16.mxu0 0
    %8587 = vmatpush1.bf16.msra.mxu0 %v5351
    %8588 = vmatprep.subr.bf16.mxu0 0
    %8589 = vmatpush2.bf16.msra.mxu0 %v5516
    %8590 = vmatprep.subr.bf16.mxu0 0
    %8591 = vmatpush2.bf16.msra.mxu0 %v5505
    %8592 = vmatprep.subr.bf16.mxu0 0
    %8593 = vmatpush2.bf16.msra.mxu0 %v5494
    %8594 = vmatprep.subr.bf16.mxu0 0
    %8595 = vmatpush2.bf16.msra.mxu0 %v5483
    %8596 = vmatprep.subr.bf16.mxu0 0
    %8597 = vmatpush2.bf16.msra.mxu0 %v5472
    %8598 = vmatprep.subr.bf16.mxu0 0
    %8599 = vmatpush2.bf16.msra.mxu0 %v5461
    %8600 = vmatprep.subr.bf16.mxu0 0
    %8601 = vmatpush2.bf16.msra.mxu0 %v5450
    %8602 = vmatprep.subr.bf16.mxu0 0
    %8603 = vmatpush2.bf16.msra.mxu0 %v5439
    %8604 = vmatprep.mubr.bf16.mxu0 %v1395
    %8605 = vmatmul.mubr.bf16.gmra.mxu0 %v1394
    %v8606 = vpop.f32.mrf.mxu0
    %v8607 = vadd.f32 %v8567, %v8606
    %v8608 = vpop.f32.mrf.mxu0
    %v8609 = vpop.f32.mrf.mxu0
    %v8610 = vpop.f32.mrf.mxu0
    %8611 = vdwg.mxu0
    %8612 = vmatprep.subr.bf16.mxu0 0
    %8613 = vmatpush1.bf16.msra.mxu0 %v5604
    %8614 = vmatprep.subr.bf16.mxu0 0
    %8615 = vmatpush1.bf16.msra.mxu0 %v5593
    %8616 = vmatprep.subr.bf16.mxu0 0
    %8617 = vmatpush1.bf16.msra.mxu0 %v5582
    %8618 = vmatprep.subr.bf16.mxu0 0
    %8619 = vmatpush1.bf16.msra.mxu0 %v5571
    %8620 = vmatprep.subr.bf16.mxu0 0
    %8621 = vmatpush1.bf16.msra.mxu0 %v5560
    %8622 = vmatprep.subr.bf16.mxu0 0
    %8623 = vmatpush1.bf16.msra.mxu0 %v5549
    %8624 = vmatprep.subr.bf16.mxu0 0
    %8625 = vmatpush1.bf16.msra.mxu0 %v5538
    %8626 = vmatprep.subr.bf16.mxu0 0
    %8627 = vmatpush1.bf16.msra.mxu0 %v5527
    %8628 = vmatprep.subr.bf16.mxu0 0
    %8629 = vmatpush2.bf16.msra.mxu0 %v5692
    %8630 = vmatprep.subr.bf16.mxu0 0
    %8631 = vmatpush2.bf16.msra.mxu0 %v5681
    %8632 = vmatprep.subr.bf16.mxu0 0
    %8633 = vmatpush2.bf16.msra.mxu0 %v5670
    %8634 = vmatprep.subr.bf16.mxu0 0
    %8635 = vmatpush2.bf16.msra.mxu0 %v5659
    %8636 = vmatprep.subr.bf16.mxu0 0
    %8637 = vmatpush2.bf16.msra.mxu0 %v5648
    %8638 = vmatprep.subr.bf16.mxu0 0
    %8639 = vmatpush2.bf16.msra.mxu0 %v5637
    %8640 = vmatprep.subr.bf16.mxu0 0
    %8641 = vmatpush2.bf16.msra.mxu0 %v5626
    %8642 = vmatprep.subr.bf16.mxu0 0
    %8643 = vmatpush2.bf16.msra.mxu0 %v5615
    %8644 = vmatprep.mubr.bf16.mxu0 %v1397
    %8645 = vmatmul.mubr.bf16.gmra.mxu0 %v1396
    %v8646 = vpop.f32.mrf.mxu0
    %v8647 = vadd.f32 %v8607, %v8646
    %v8648 = vpop.f32.mrf.mxu0
    %v8649 = vpop.f32.mrf.mxu0
    %v8650 = vpop.f32.mrf.mxu0
    %8651 = vdwg.mxu0
    %8652 = vmatprep.subr.bf16.mxu0 0
    %8653 = vmatpush1.bf16.msra.mxu0 %v5780
    %8654 = vmatprep.subr.bf16.mxu0 0
    %8655 = vmatpush1.bf16.msra.mxu0 %v5769
    %8656 = vmatprep.subr.bf16.mxu0 0
    %8657 = vmatpush1.bf16.msra.mxu0 %v5758
    %8658 = vmatprep.subr.bf16.mxu0 0
    %8659 = vmatpush1.bf16.msra.mxu0 %v5747
    %8660 = vmatprep.subr.bf16.mxu0 0
    %8661 = vmatpush1.bf16.msra.mxu0 %v5736
    %8662 = vmatprep.subr.bf16.mxu0 0
    %8663 = vmatpush1.bf16.msra.mxu0 %v5725
    %8664 = vmatprep.subr.bf16.mxu0 0
    %8665 = vmatpush1.bf16.msra.mxu0 %v5714
    %8666 = vmatprep.subr.bf16.mxu0 0
    %8667 = vmatpush1.bf16.msra.mxu0 %v5703
    %8668 = vmatprep.subr.bf16.mxu0 0
    %8669 = vmatpush2.bf16.msra.mxu0 %v5868
    %8670 = vmatprep.subr.bf16.mxu0 0
    %8671 = vmatpush2.bf16.msra.mxu0 %v5857
    %8672 = vmatprep.subr.bf16.mxu0 0
    %8673 = vmatpush2.bf16.msra.mxu0 %v5846
    %8674 = vmatprep.subr.bf16.mxu0 0
    %8675 = vmatpush2.bf16.msra.mxu0 %v5835
    %8676 = vmatprep.subr.bf16.mxu0 0
    %8677 = vmatpush2.bf16.msra.mxu0 %v5824
    %8678 = vmatprep.subr.bf16.mxu0 0
    %8679 = vmatpush2.bf16.msra.mxu0 %v5813
    %8680 = vmatprep.subr.bf16.mxu0 0
    %8681 = vmatpush2.bf16.msra.mxu0 %v5802
    %8682 = vmatprep.subr.bf16.mxu0 0
    %8683 = vmatpush2.bf16.msra.mxu0 %v5791
    %8684 = vmatprep.mubr.bf16.mxu0 %v1399
    %8685 = vmatmul.mubr.bf16.gmra.mxu0 %v1398
    %v8686 = vpop.f32.mrf.mxu0
    %v8687 = vadd.f32 %v8647, %v8686
    %v8688 = vpop.f32.mrf.mxu0
    %v8689 = vpop.f32.mrf.mxu0
    %v8690 = vpop.f32.mrf.mxu0
    %8691 = vdwg.mxu0
    %8692 = vmatprep.subr.bf16.mxu0 0
    %8693 = vmatpush1.bf16.msra.mxu0 0
    %8694 = vmatprep.subr.bf16.mxu0 0
    %8695 = vmatpush1.bf16.msra.mxu0 0
    %8696 = vmatprep.subr.bf16.mxu0 0
    %8697 = vmatpush1.bf16.msra.mxu0 0
    %8698 = vmatprep.subr.bf16.mxu0 0
    %8699 = vmatpush1.bf16.msra.mxu0 0
    %8700 = vmatprep.subr.bf16.mxu0 0
    %8701 = vmatpush1.bf16.msra.mxu0 %v5912
    %8702 = vmatprep.subr.bf16.mxu0 0
    %8703 = vmatpush1.bf16.msra.mxu0 %v5901
    %8704 = vmatprep.subr.bf16.mxu0 0
    %8705 = vmatpush1.bf16.msra.mxu0 %v5890
    %8706 = vmatprep.subr.bf16.mxu0 0
    %8707 = vmatpush1.bf16.msra.mxu0 %v5879
    %8708 = vmatprep.subr.bf16.mxu0 0
    %8709 = vmatpush2.bf16.msra.mxu0 0
    %8710 = vmatprep.subr.bf16.mxu0 0
    %8711 = vmatpush2.bf16.msra.mxu0 0
    %8712 = vmatprep.subr.bf16.mxu0 0
    %8713 = vmatpush2.bf16.msra.mxu0 0
    %8714 = vmatprep.subr.bf16.mxu0 0
    %8715 = vmatpush2.bf16.msra.mxu0 0
    %8716 = vmatprep.subr.bf16.mxu0 0
    %8717 = vmatpush2.bf16.msra.mxu0 0
    %8718 = vmatprep.subr.bf16.mxu0 0
    %8719 = vmatpush2.bf16.msra.mxu0 0
    %8720 = vmatprep.subr.bf16.mxu0 0
    %8721 = vmatpush2.bf16.msra.mxu0 0
    %8722 = vmatprep.subr.bf16.mxu0 0
    %8723 = vmatpush2.bf16.msra.mxu0 0
    %8724 = vmatprep.mubr.bf16.mxu0 0
    %8725 = vmatmul.mubr.bf16.gmra.mxu0 %v7015
    %v8726 = vpop.f32.mrf.mxu0
    %v8727 = vadd.f32 %v8687, %v8726
    %v8728 = vpop.f32.mrf.mxu0
    %v8729 = vpop.f32.mrf.mxu0
    %v8730 = vpop.f32.mrf.mxu0
    %8731 = vdwg.mxu0
    %v8732 = vmax.f32 %v7298, 0.0
    %v8733 = vmax.f32 %v7300, 0.0
    %v8734 = vmax.f32 %v7585, 0.0
    %v8735 = vmax.f32 %v7587, 0.0
    %v8736 = vmax.f32 %v7872, 0.0
    %v8737 = vmax.f32 %v7874, 0.0
    %v8738 = vmax.f32 %v8159, 0.0
    %v8739 = vmax.f32 %v8161, 0.0
    %v8740 = vmax.f32 %v8446, 0.0
    %v8741 = vmax.f32 %v8448, 0.0
    %v8742 = vmax.f32 %v8727, 0.0
    %v8743 = vpack.c.bf16 %v8732, %v8732
    %v8744 = vpack.c.bf16 %v8733, %v8733
    %v8745 = vpack.c.bf16 %v8734, %v8734
    %v8746 = vpack.c.bf16 %v8735, %v8735
    %v8747 = vpack.c.bf16 %v8736, %v8736
    %v8748 = vpack.c.bf16 %v8737, %v8737
    %v8749 = vpack.c.bf16 %v8738, %v8738
    %v8750 = vpack.c.bf16 %v8739, %v8739
    %v8751 = vpack.c.bf16 %v8740, %v8740
    %v8752 = vpack.c.bf16 %v8741, %v8741
    %v8753 = vpack.c.bf16 %v8742, %v8742
    %v8754 = vld [vmem:[%s3] sm:$0xff]
    %v8755 = vld [vmem:[%s3 + $0x8] sm:$0xff]
    %v8756 = vld [vmem:[%s3 + $0x10] sm:$0xff]
    %v8757 = vld [vmem:[%s3 + $0x18] sm:$0xff]
    %v8758 = vld [vmem:[%s3 + $0x20] sm:$0xff]
    %v8759 = vld [vmem:[%s3 + $0x28] sm:$0xff]
    %v8760 = vld [vmem:[%s3 + $0x30] sm:$0xff]
    %v8761 = vld [vmem:[%s3 + $0x38] sm:$0xff]
    %v8762 = vld [vmem:[%s3 + $0x40] sm:$0xff]
    %v8763 = vld [vmem:[%s3 + $0x48] sm:$0xff]
    %v8764 = vld [vmem:[%s3 + $0x50] sm:$0xff]
    %v8765 = vld [vmem:[%s3 + $0x58] sm:$0xff]
    %v8766 = vld [vmem:[%s3 + $0x60] sm:$0xff]
    %v8767 = vld [vmem:[%s3 + $0x68] sm:$0xff]
    %v8768 = vld [vmem:[%s3 + $0x70] sm:$0xff]
    %v8769 = vld [vmem:[%s3 + $0x78] sm:$0xff]
    %v8770 = vld [vmem:[%s3 + $0x80] sm:$0xff]
    %v8771 = vld [vmem:[%s3 + $0x88] sm:$0xff]
    %v8772 = vld [vmem:[%s3 + $0x90] sm:$0xff]
    %v8773 = vld [vmem:[%s3 + $0x98] sm:$0xff]
    %v8774 = vld [vmem:[%s3 + $0xa0] sm:$0xff]
    %v8775 = vld [vmem:[%s3 + $0xa8] sm:$0xff]
    %v8776 = vld [vmem:[%s3 + $0xb0] sm:$0xff]
    %v8777 = vld [vmem:[%s3 + $0xb8] sm:$0xff]
    %v8778 = vld [vmem:[%s3 + $0xc0] sm:$0xff]
    %v8779 = vld [vmem:[%s3 + $0xc8] sm:$0xff]
    %v8780 = vld [vmem:[%s3 + $0xd0] sm:$0xff]
    %v8781 = vld [vmem:[%s3 + $0xd8] sm:$0xff]
    %v8782 = vld [vmem:[%s3 + $0xe0] sm:$0xff]
    %v8783 = vld [vmem:[%s3 + $0xe8] sm:$0xff]
    %v8784 = vld [vmem:[%s3 + $0xf0] sm:$0xff]
    %v8785 = vld [vmem:[%s3 + $0xf8] sm:$0xff]
    %v8786 = vld [vmem:[%s3 + $0x100] sm:$0xff]
    %v8787 = vld [vmem:[%s3 + $0x108] sm:$0xff]
    %v8788 = vld [vmem:[%s3 + $0x110] sm:$0xff]
    %v8789 = vld [vmem:[%s3 + $0x118] sm:$0xff]
    %v8790 = vld [vmem:[%s3 + $0x120] sm:$0xff]
    %v8791 = vld [vmem:[%s3 + $0x128] sm:$0xff]
    %v8792 = vld [vmem:[%s3 + $0x130] sm:$0xff]
    %v8793 = vld [vmem:[%s3 + $0x138] sm:$0xff]
    %v8794 = vld [vmem:[%s3 + $0x140] sm:$0xff]
    %v8795 = vld [vmem:[%s3 + $0x148] sm:$0xff]
    %v8796 = vld [vmem:[%s3 + $0x150] sm:$0xff]
    %v8797 = vld [vmem:[%s3 + $0x158] sm:$0xff]
    %v8798 = vld [vmem:[%s3 + $0x160] sm:$0xff]
    %v8799 = vld [vmem:[%s3 + $0x168] sm:$0xff]
    %v8800 = vld [vmem:[%s3 + $0x170] sm:$0xff]
    %v8801 = vld [vmem:[%s3 + $0x178] sm:$0xff]
    %v8802 = vld [vmem:[%s3 + $0x180] sm:$0xff]
    %v8803 = vld [vmem:[%s3 + $0x188] sm:$0xff]
    %v8804 = vld [vmem:[%s3 + $0x190] sm:$0xff]
    %v8805 = vld [vmem:[%s3 + $0x198] sm:$0xff]
    %v8806 = vld [vmem:[%s3 + $0x1a0] sm:$0xff]
    %v8807 = vld [vmem:[%s3 + $0x1a8] sm:$0xff]
    %v8808 = vld [vmem:[%s3 + $0x1b0] sm:$0xff]
    %v8809 = vld [vmem:[%s3 + $0x1b8] sm:$0xff]
    %v8810 = vld [vmem:[%s3 + $0x1c0] sm:$0xff]
    %v8811 = vld [vmem:[%s3 + $0x1c8] sm:$0xff]
    %v8812 = vld [vmem:[%s3 + $0x1d0] sm:$0xff]
    %v8813 = vld [vmem:[%s3 + $0x1d8] sm:$0xff]
    %v8814 = vld [vmem:[%s3 + $0x1e0] sm:$0xff]
    %v8815 = vld [vmem:[%s3 + $0x1e8] sm:$0xff]
    %v8816 = vld [vmem:[%s3 + $0x1f0] sm:$0xff]
    %v8817 = vld [vmem:[%s3 + $0x1f8] sm:$0xff]
    %v8818 = vld [vmem:[%s3 + $0x200] sm:$0xff]
    %v8819 = vld [vmem:[%s3 + $0x208] sm:$0xff]
    %v8820 = vld [vmem:[%s3 + $0x210] sm:$0xff]
    %v8821 = vld [vmem:[%s3 + $0x218] sm:$0xff]
    %v8822 = vld [vmem:[%s3 + $0x220] sm:$0xff]
    %v8823 = vld [vmem:[%s3 + $0x228] sm:$0xff]
    %v8824 = vld [vmem:[%s3 + $0x230] sm:$0xff]
    %v8825 = vld [vmem:[%s3 + $0x238] sm:$0xff]
    %v8826 = vld [vmem:[%s3 + $0x240] sm:$0xff]
    %v8827 = vld [vmem:[%s3 + $0x248] sm:$0xff]
    %v8828 = vld [vmem:[%s3 + $0x250] sm:$0xff]
    %v8829 = vld [vmem:[%s3 + $0x258] sm:$0xff]
    %v8830 = vld [vmem:[%s3 + $0x260] sm:$0xff]
    %v8831 = vld [vmem:[%s3 + $0x268] sm:$0xff]
    %v8832 = vld [vmem:[%s3 + $0x270] sm:$0xff]
    %v8833 = vld [vmem:[%s3 + $0x278] sm:$0xff]
    %v8834 = vld [vmem:[%s3 + $0x280] sm:$0xff]
    %v8835 = vld [vmem:[%s3 + $0x288] sm:$0xff]
    %v8836 = vld [vmem:[%s3 + $0x290] sm:$0xff]
    %v8837 = vld [vmem:[%s3 + $0x298] sm:$0xff]
    %v8838 = vld [vmem:[%s3 + $0x2a0] sm:$0xff]
    %v8839 = vld [vmem:[%s3 + $0x2a8] sm:$0xff]
    %v8840 = vld [vmem:[%s3 + $0x2b0] sm:$0xff]
    %v8841 = vld [vmem:[%s3 + $0x2b8] sm:$0xff]
    %v8842 = vld [vmem:[%s3 + $0x2c0] sm:$0xff]
    %v8843 = vld [vmem:[%s3 + $0x2c8] sm:$0xff]
    %v8844 = vld [vmem:[%s3 + $0x2d0] sm:$0xff]
    %v8845 = vld [vmem:[%s3 + $0x2d8] sm:$0xff]
    %v8846 = vld [vmem:[%s3 + $0x2e0] sm:$0xff]
    %v8847 = vld [vmem:[%s3 + $0x2e8] sm:$0xff]
    %v8848 = vld [vmem:[%s3 + $0x2f0] sm:$0xff]
    %v8849 = vld [vmem:[%s3 + $0x2f8] sm:$0xff]
    %v8850 = vld [vmem:[%s3 + $0x300] sm:$0xff]
    %v8851 = vld [vmem:[%s3 + $0x308] sm:$0xff]
    %v8852 = vld [vmem:[%s3 + $0x310] sm:$0xff]
    %v8853 = vld [vmem:[%s3 + $0x318] sm:$0xff]
    %v8854 = vld [vmem:[%s3 + $0x320] sm:$0xff]
    %v8855 = vld [vmem:[%s3 + $0x328] sm:$0xff]
    %v8856 = vld [vmem:[%s3 + $0x330] sm:$0xff]
    %v8857 = vld [vmem:[%s3 + $0x338] sm:$0xff]
    %v8858 = vld [vmem:[%s3 + $0x340] sm:$0xff]
    %v8859 = vld [vmem:[%s3 + $0x348] sm:$0xff]
    %v8860 = vld [vmem:[%s3 + $0x350] sm:$0xff]
    %v8861 = vld [vmem:[%s3 + $0x358] sm:$0xff]
    %v8862 = vld [vmem:[%s3 + $0x360] sm:$0xff]
    %v8863 = vld [vmem:[%s3 + $0x368] sm:$0xff]
    %v8864 = vld [vmem:[%s3 + $0x370] sm:$0xff]
    %v8865 = vld [vmem:[%s3 + $0x378] sm:$0xff]
    %v8866 = vld [vmem:[%s3 + $0x380] sm:$0xff]
    %v8867 = vld [vmem:[%s3 + $0x388] sm:$0xff]
    %v8868 = vld [vmem:[%s3 + $0x390] sm:$0xff]
    %v8869 = vld [vmem:[%s3 + $0x398] sm:$0xff]
    %v8870 = vld [vmem:[%s3 + $0x3a0] sm:$0xff]
    %v8871 = vld [vmem:[%s3 + $0x3a8] sm:$0xff]
    %v8872 = vld [vmem:[%s3 + $0x3b0] sm:$0xff]
    %v8873 = vld [vmem:[%s3 + $0x3b8] sm:$0xff]
    %v8874 = vld [vmem:[%s3 + $0x3c0] sm:$0xff]
    %v8875 = vld [vmem:[%s3 + $0x3c8] sm:$0xff]
    %v8876 = vld [vmem:[%s3 + $0x3d0] sm:$0xff]
    %v8877 = vld [vmem:[%s3 + $0x3d8] sm:$0xff]
    %v8878 = vld [vmem:[%s3 + $0x3e0] sm:$0xff]
    %v8879 = vld [vmem:[%s3 + $0x3e8] sm:$0xff]
    %v8880 = vld [vmem:[%s3 + $0x3f0] sm:$0xff]
    %v8881 = vld [vmem:[%s3 + $0x3f8] sm:$0xff]
    %v8882 = vld [vmem:[%s3 + $0x400] sm:$0xff]
    %v8883 = vld [vmem:[%s3 + $0x408] sm:$0xff]
    %v8884 = vld [vmem:[%s3 + $0x410] sm:$0xff]
    %v8885 = vld [vmem:[%s3 + $0x418] sm:$0xff]
    %v8886 = vld [vmem:[%s3 + $0x420] sm:$0xff]
    %v8887 = vld [vmem:[%s3 + $0x428] sm:$0xff]
    %v8888 = vld [vmem:[%s3 + $0x430] sm:$0xff]
    %v8889 = vld [vmem:[%s3 + $0x438] sm:$0xff]
    %v8890 = vld [vmem:[%s3 + $0x440] sm:$0xff]
    %v8891 = vld [vmem:[%s3 + $0x448] sm:$0xff]
    %v8892 = vld [vmem:[%s3 + $0x450] sm:$0xff]
    %v8893 = vld [vmem:[%s3 + $0x458] sm:$0xff]
    %v8894 = vld [vmem:[%s3 + $0x460] sm:$0xff]
    %v8895 = vld [vmem:[%s3 + $0x468] sm:$0xff]
    %v8896 = vld [vmem:[%s3 + $0x470] sm:$0xff]
    %v8897 = vld [vmem:[%s3 + $0x478] sm:$0xff]
    %v8898 = vld [vmem:[%s3 + $0x480] sm:$0xff]
    %v8899 = vld [vmem:[%s3 + $0x488] sm:$0xff]
    %v8900 = vld [vmem:[%s3 + $0x490] sm:$0xff]
    %v8901 = vld [vmem:[%s3 + $0x498] sm:$0xff]
    %v8902 = vld [vmem:[%s3 + $0x4a0] sm:$0xff]
    %v8903 = vld [vmem:[%s3 + $0x4a8] sm:$0xff]
    %v8904 = vld [vmem:[%s3 + $0x4b0] sm:$0xff]
    %v8905 = vld [vmem:[%s3 + $0x4b8] sm:$0xff]
    %v8906 = vld [vmem:[%s3 + $0x4c0] sm:$0xff]
    %v8907 = vld [vmem:[%s3 + $0x4c8] sm:$0xff]
    %v8908 = vld [vmem:[%s3 + $0x4d0] sm:$0xff]
    %v8909 = vld [vmem:[%s3 + $0x4d8] sm:$0xff]
    %v8910 = vld [vmem:[%s3 + $0x4e0] sm:$0xff]
    %v8911 = vld [vmem:[%s3 + $0x4e8] sm:$0xff]
    %v8912 = vld [vmem:[%s3 + $0x4f0] sm:$0xff]
    %v8913 = vld [vmem:[%s3 + $0x4f8] sm:$0xff]
    %v8914 = vld [vmem:[%s3 + $0x500] sm:$0xff]
    %v8915 = vld [vmem:[%s3 + $0x508] sm:$0xff]
    %v8916 = vld [vmem:[%s3 + $0x510] sm:$0xff]
    %v8917 = vld [vmem:[%s3 + $0x518] sm:$0xff]
    %v8918 = vld [vmem:[%s3 + $0x520] sm:$0xff]
    %v8919 = vld [vmem:[%s3 + $0x528] sm:$0xff]
    %v8920 = vld [vmem:[%s3 + $0x530] sm:$0xff]
    %v8921 = vld [vmem:[%s3 + $0x538] sm:$0xff]
    %v8922 = vld [vmem:[%s3 + $0x540] sm:$0xff]
    %v8923 = vld [vmem:[%s3 + $0x548] sm:$0xff]
    %v8924 = vld [vmem:[%s3 + $0x550] sm:$0xff]
    %v8925 = vld [vmem:[%s3 + $0x558] sm:$0xff]
    %v8926 = vld [vmem:[%s3 + $0x560] sm:$0xff]
    %v8927 = vld [vmem:[%s3 + $0x568] sm:$0xff]
    %v8928 = vld [vmem:[%s3 + $0x570] sm:$0xff]
    %v8929 = vld [vmem:[#allocation8] sm:$0x3]
    %v8931 = vlaneseq
    %v8932 = vshrl.u32 %v8931, 7
    %v8933 = vsub.s32 0, %v8932
    %v8934 = vrot.slane %v8929, %v8933
    %v8935 = vlaneseq
    %v8936 = vshrl.u32 %v8935, 7
    %v8937 = vsub.s32 1, %v8936
    %v8938 = vrot.slane %v8929, %v8937
    %v9116 = vunpack.c.l.b16 %v8754
    %v9117 = vunpack.c.h.b16 %v8754
    %v9118 = vunpack.c.l.b16 %v8755
    %v9119 = vunpack.c.h.b16 %v8755
    %v9120 = vunpack.c.l.b16 %v8756
    %v9121 = vunpack.c.h.b16 %v8756
    %v9122 = vunpack.c.l.b16 %v8757
    %v9123 = vunpack.c.h.b16 %v8757
    %v9124 = vunpack.c.l.b16 %v8758
    %v9125 = vunpack.c.h.b16 %v8758
    %v9126 = vunpack.c.l.b16 %v8759
    %v9127 = vunpack.c.h.b16 %v8759
    %v9128 = vunpack.c.l.b16 %v8760
    %v9129 = vunpack.c.h.b16 %v8760
    %v9130 = vunpack.c.l.b16 %v8761
    %v9131 = vunpack.c.h.b16 %v8761
    %v9132 = vunpack.c.l.b16 %v8762
    %v9133 = vunpack.c.h.b16 %v8762
    %v9134 = vunpack.c.l.b16 %v8763
    %v9135 = vunpack.c.h.b16 %v8763
    %v9136 = vunpack.c.l.b16 %v8764
    %v9137 = vunpack.c.h.b16 %v8764
    %v9138 = vunpack.c.l.b16 %v8765
    %v9139 = vunpack.c.h.b16 %v8765
    %v9140 = vunpack.c.l.b16 %v8766
    %v9141 = vunpack.c.h.b16 %v8766
    %v9142 = vunpack.c.l.b16 %v8767
    %v9143 = vunpack.c.h.b16 %v8767
    %v9144 = vunpack.c.l.b16 %v8768
    %v9145 = vunpack.c.h.b16 %v8768
    %v9146 = vunpack.c.l.b16 %v8769
    %v9147 = vunpack.c.h.b16 %v8769
    %v9148 = vunpack.c.l.b16 %v8770
    %v9149 = vunpack.c.h.b16 %v8770
    %v9150 = vunpack.c.l.b16 %v8771
    %v9151 = vunpack.c.h.b16 %v8771
    %v9152 = vunpack.c.l.b16 %v8772
    %v9153 = vunpack.c.h.b16 %v8772
    %v9154 = vunpack.c.l.b16 %v8773
    %v9155 = vunpack.c.h.b16 %v8773
    %v9156 = vunpack.c.l.b16 %v8774
    %v9157 = vunpack.c.h.b16 %v8774
    %v9158 = vunpack.c.l.b16 %v8775
    %v9159 = vunpack.c.h.b16 %v8775
    %v9160 = vunpack.c.l.b16 %v8776
    %v9161 = vunpack.c.h.b16 %v8776
    %v9162 = vunpack.c.l.b16 %v8777
    %v9163 = vunpack.c.h.b16 %v8777
    %v9164 = vunpack.c.l.b16 %v8778
    %v9165 = vunpack.c.h.b16 %v8778
    %v9166 = vunpack.c.l.b16 %v8779
    %v9167 = vunpack.c.h.b16 %v8779
    %v9168 = vunpack.c.l.b16 %v8780
    %v9169 = vunpack.c.h.b16 %v8780
    %v9170 = vunpack.c.l.b16 %v8781
    %v9171 = vunpack.c.h.b16 %v8781
    %v9172 = vunpack.c.l.b16 %v8782
    %v9173 = vunpack.c.h.b16 %v8782
    %v9174 = vunpack.c.l.b16 %v8783
    %v9175 = vunpack.c.h.b16 %v8783
    %v9176 = vunpack.c.l.b16 %v8784
    %v9177 = vunpack.c.h.b16 %v8784
    %v9178 = vunpack.c.l.b16 %v8785
    %v9179 = vunpack.c.h.b16 %v8785
    %v9180 = vunpack.c.l.b16 %v8786
    %v9181 = vunpack.c.h.b16 %v8786
    %v9182 = vunpack.c.l.b16 %v8787
    %v9183 = vunpack.c.h.b16 %v8787
    %v9184 = vunpack.c.l.b16 %v8788
    %v9185 = vunpack.c.h.b16 %v8788
    %v9186 = vunpack.c.l.b16 %v8789
    %v9187 = vunpack.c.h.b16 %v8789
    %v9188 = vunpack.c.l.b16 %v8790
    %v9189 = vunpack.c.h.b16 %v8790
    %v9190 = vunpack.c.l.b16 %v8791
    %v9191 = vunpack.c.h.b16 %v8791
    %v9192 = vunpack.c.l.b16 %v8792
    %v9193 = vunpack.c.h.b16 %v8792
    %v9194 = vunpack.c.l.b16 %v8793
    %v9195 = vunpack.c.h.b16 %v8793
    %v9196 = vunpack.c.l.b16 %v8794
    %v9197 = vunpack.c.h.b16 %v8794
    %v9198 = vunpack.c.l.b16 %v8795
    %v9199 = vunpack.c.h.b16 %v8795
    %v9200 = vunpack.c.l.b16 %v8796
    %v9201 = vunpack.c.h.b16 %v8796
    %v9202 = vunpack.c.l.b16 %v8797
    %v9203 = vunpack.c.h.b16 %v8797
    %v9204 = vunpack.c.l.b16 %v8798
    %v9205 = vunpack.c.h.b16 %v8798
    %v9206 = vunpack.c.l.b16 %v8799
    %v9207 = vunpack.c.h.b16 %v8799
    %v9208 = vunpack.c.l.b16 %v8800
    %v9209 = vunpack.c.h.b16 %v8800
    %v9210 = vunpack.c.l.b16 %v8801
    %v9211 = vunpack.c.h.b16 %v8801
    %v9212 = vunpack.c.l.b16 %v8802
    %v9213 = vunpack.c.h.b16 %v8802
    %v9214 = vunpack.c.l.b16 %v8803
    %v9215 = vunpack.c.h.b16 %v8803
    %v9216 = vunpack.c.l.b16 %v8804
    %v9217 = vunpack.c.h.b16 %v8804
    %v9218 = vunpack.c.l.b16 %v8805
    %v9219 = vunpack.c.h.b16 %v8805
    %v9220 = vunpack.c.l.b16 %v8806
    %v9221 = vunpack.c.h.b16 %v8806
    %v9222 = vunpack.c.l.b16 %v8807
    %v9223 = vunpack.c.h.b16 %v8807
    %v9224 = vunpack.c.l.b16 %v8808
    %v9225 = vunpack.c.h.b16 %v8808
    %v9226 = vunpack.c.l.b16 %v8809
    %v9227 = vunpack.c.h.b16 %v8809
    %v9228 = vunpack.c.l.b16 %v8810
    %v9229 = vunpack.c.h.b16 %v8810
    %v9230 = vunpack.c.l.b16 %v8811
    %v9231 = vunpack.c.h.b16 %v8811
    %v9232 = vunpack.c.l.b16 %v8812
    %v9233 = vunpack.c.h.b16 %v8812
    %v9234 = vunpack.c.l.b16 %v8813
    %v9235 = vunpack.c.h.b16 %v8813
    %v9236 = vunpack.c.l.b16 %v8814
    %v9237 = vunpack.c.h.b16 %v8814
    %v9238 = vunpack.c.l.b16 %v8815
    %v9239 = vunpack.c.h.b16 %v8815
    %v9240 = vunpack.c.l.b16 %v8816
    %v9241 = vunpack.c.h.b16 %v8816
    %v9242 = vunpack.c.l.b16 %v8817
    %v9243 = vunpack.c.h.b16 %v8817
    %v9244 = vunpack.c.l.b16 %v8818
    %v9245 = vunpack.c.h.b16 %v8818
    %v9246 = vunpack.c.l.b16 %v8819
    %v9247 = vunpack.c.h.b16 %v8819
    %v9248 = vunpack.c.l.b16 %v8820
    %v9249 = vunpack.c.h.b16 %v8820
    %v9250 = vunpack.c.l.b16 %v8821
    %v9251 = vunpack.c.h.b16 %v8821
    %v9252 = vunpack.c.l.b16 %v8822
    %v9253 = vunpack.c.h.b16 %v8822
    %v9254 = vunpack.c.l.b16 %v8823
    %v9255 = vunpack.c.h.b16 %v8823
    %v9256 = vunpack.c.l.b16 %v8824
    %v9257 = vunpack.c.h.b16 %v8824
    %v9258 = vunpack.c.l.b16 %v8825
    %v9259 = vunpack.c.h.b16 %v8825
    %v9260 = vunpack.c.l.b16 %v8826
    %v9261 = vunpack.c.h.b16 %v8826
    %v9262 = vunpack.c.l.b16 %v8827
    %v9263 = vunpack.c.h.b16 %v8827
    %v9264 = vunpack.c.l.b16 %v8828
    %v9265 = vunpack.c.h.b16 %v8828
    %v9266 = vunpack.c.l.b16 %v8829
    %v9267 = vunpack.c.h.b16 %v8829
    %v9268 = vunpack.c.l.b16 %v8830
    %v9269 = vunpack.c.h.b16 %v8830
    %v9270 = vunpack.c.l.b16 %v8831
    %v9271 = vunpack.c.h.b16 %v8831
    %v9272 = vunpack.c.l.b16 %v8832
    %v9273 = vunpack.c.h.b16 %v8832
    %v9274 = vunpack.c.l.b16 %v8833
    %v9275 = vunpack.c.h.b16 %v8833
    %v9276 = vunpack.c.l.b16 %v8834
    %v9277 = vunpack.c.h.b16 %v8834
    %v9278 = vunpack.c.l.b16 %v8835
    %v9279 = vunpack.c.h.b16 %v8835
    %v9280 = vunpack.c.l.b16 %v8836
    %v9281 = vunpack.c.h.b16 %v8836
    %v9282 = vunpack.c.l.b16 %v8837
    %v9283 = vunpack.c.h.b16 %v8837
    %v9284 = vunpack.c.l.b16 %v8838
    %v9285 = vunpack.c.h.b16 %v8838
    %v9286 = vunpack.c.l.b16 %v8839
    %v9287 = vunpack.c.h.b16 %v8839
    %v9288 = vunpack.c.l.b16 %v8840
    %v9289 = vunpack.c.h.b16 %v8840
    %v9290 = vunpack.c.l.b16 %v8841
    %v9291 = vunpack.c.h.b16 %v8841
    %v9292 = vunpack.c.l.b16 %v8842
    %v9293 = vunpack.c.h.b16 %v8842
    %v9294 = vunpack.c.l.b16 %v8843
    %v9295 = vunpack.c.h.b16 %v8843
    %v9296 = vunpack.c.l.b16 %v8844
    %v9297 = vunpack.c.h.b16 %v8844
    %v9298 = vunpack.c.l.b16 %v8845
    %v9299 = vunpack.c.h.b16 %v8845
    %v9300 = vunpack.c.l.b16 %v8846
    %v9301 = vunpack.c.h.b16 %v8846
    %v9302 = vunpack.c.l.b16 %v8847
    %v9303 = vunpack.c.h.b16 %v8847
    %v9304 = vunpack.c.l.b16 %v8848
    %v9305 = vunpack.c.h.b16 %v8848
    %v9306 = vunpack.c.l.b16 %v8849
    %v9307 = vunpack.c.h.b16 %v8849
    %v9308 = vunpack.c.l.b16 %v8850
    %v9309 = vunpack.c.h.b16 %v8850
    %v9310 = vunpack.c.l.b16 %v8851
    %v9311 = vunpack.c.h.b16 %v8851
    %v9312 = vunpack.c.l.b16 %v8852
    %v9313 = vunpack.c.h.b16 %v8852
    %v9314 = vunpack.c.l.b16 %v8853
    %v9315 = vunpack.c.h.b16 %v8853
    %v9316 = vunpack.c.l.b16 %v8854
    %v9317 = vunpack.c.h.b16 %v8854
    %v9318 = vunpack.c.l.b16 %v8855
    %v9319 = vunpack.c.h.b16 %v8855
    %v9320 = vunpack.c.l.b16 %v8856
    %v9321 = vunpack.c.h.b16 %v8856
    %v9322 = vunpack.c.l.b16 %v8857
    %v9323 = vunpack.c.h.b16 %v8857
    %v9324 = vunpack.c.l.b16 %v8858
    %v9325 = vunpack.c.h.b16 %v8858
    %v9326 = vunpack.c.l.b16 %v8859
    %v9327 = vunpack.c.h.b16 %v8859
    %v9328 = vunpack.c.l.b16 %v8860
    %v9329 = vunpack.c.h.b16 %v8860
    %v9330 = vunpack.c.l.b16 %v8861
    %v9331 = vunpack.c.h.b16 %v8861
    %v9332 = vunpack.c.l.b16 %v8862
    %v9333 = vunpack.c.h.b16 %v8862
    %v9334 = vunpack.c.l.b16 %v8863
    %v9335 = vunpack.c.h.b16 %v8863
    %v9336 = vunpack.c.l.b16 %v8864
    %v9337 = vunpack.c.h.b16 %v8864
    %v9338 = vunpack.c.l.b16 %v8865
    %v9339 = vunpack.c.h.b16 %v8865
    %v9340 = vunpack.c.l.b16 %v8866
    %v9341 = vunpack.c.h.b16 %v8866
    %v9342 = vunpack.c.l.b16 %v8867
    %v9343 = vunpack.c.h.b16 %v8867
    %v9344 = vunpack.c.l.b16 %v8868
    %v9345 = vunpack.c.h.b16 %v8868
    %v9346 = vunpack.c.l.b16 %v8869
    %v9347 = vunpack.c.h.b16 %v8869
    %v9348 = vunpack.c.l.b16 %v8870
    %v9349 = vunpack.c.h.b16 %v8870
    %v9350 = vunpack.c.l.b16 %v8871
    %v9351 = vunpack.c.h.b16 %v8871
    %v9352 = vunpack.c.l.b16 %v8872
    %v9353 = vunpack.c.h.b16 %v8872
    %v9354 = vunpack.c.l.b16 %v8873
    %v9355 = vunpack.c.h.b16 %v8873
    %v9356 = vunpack.c.l.b16 %v8874
    %v9357 = vunpack.c.h.b16 %v8874
    %v9358 = vunpack.c.l.b16 %v8875
    %v9359 = vunpack.c.h.b16 %v8875
    %v9360 = vunpack.c.l.b16 %v8876
    %v9361 = vunpack.c.h.b16 %v8876
    %v9362 = vunpack.c.l.b16 %v8877
    %v9363 = vunpack.c.h.b16 %v8877
    %v9364 = vunpack.c.l.b16 %v8878
    %v9365 = vunpack.c.h.b16 %v8878
    %v9366 = vunpack.c.l.b16 %v8879
    %v9367 = vunpack.c.h.b16 %v8879
    %v9368 = vunpack.c.l.b16 %v8880
    %v9369 = vunpack.c.h.b16 %v8880
    %v9370 = vunpack.c.l.b16 %v8881
    %v9371 = vunpack.c.h.b16 %v8881
    %v9372 = vunpack.c.l.b16 %v8882
    %v9373 = vunpack.c.h.b16 %v8882
    %v9374 = vunpack.c.l.b16 %v8883
    %v9375 = vunpack.c.h.b16 %v8883
    %v9376 = vunpack.c.l.b16 %v8884
    %v9377 = vunpack.c.h.b16 %v8884
    %v9378 = vunpack.c.l.b16 %v8885
    %v9379 = vunpack.c.h.b16 %v8885
    %v9380 = vunpack.c.l.b16 %v8886
    %v9381 = vunpack.c.h.b16 %v8886
    %v9382 = vunpack.c.l.b16 %v8887
    %v9383 = vunpack.c.h.b16 %v8887
    %v9384 = vunpack.c.l.b16 %v8888
    %v9385 = vunpack.c.h.b16 %v8888
    %v9386 = vunpack.c.l.b16 %v8889
    %v9387 = vunpack.c.h.b16 %v8889
    %v9388 = vunpack.c.l.b16 %v8890
    %v9389 = vunpack.c.h.b16 %v8890
    %v9390 = vunpack.c.l.b16 %v8891
    %v9391 = vunpack.c.h.b16 %v8891
    %v9392 = vunpack.c.l.b16 %v8892
    %v9393 = vunpack.c.h.b16 %v8892
    %v9394 = vunpack.c.l.b16 %v8893
    %v9395 = vunpack.c.h.b16 %v8893
    %v9396 = vunpack.c.l.b16 %v8894
    %v9397 = vunpack.c.h.b16 %v8894
    %v9398 = vunpack.c.l.b16 %v8895
    %v9399 = vunpack.c.h.b16 %v8895
    %v9400 = vunpack.c.l.b16 %v8896
    %v9401 = vunpack.c.h.b16 %v8896
    %v9402 = vunpack.c.l.b16 %v8897
    %v9403 = vunpack.c.h.b16 %v8897
    %v9404 = vunpack.c.l.b16 %v8898
    %v9405 = vunpack.c.h.b16 %v8898
    %v9406 = vunpack.c.l.b16 %v8899
    %v9407 = vunpack.c.h.b16 %v8899
    %v9408 = vunpack.c.l.b16 %v8900
    %v9409 = vunpack.c.h.b16 %v8900
    %v9410 = vunpack.c.l.b16 %v8901
    %v9411 = vunpack.c.h.b16 %v8901
    %v9412 = vunpack.c.l.b16 %v8902
    %v9413 = vunpack.c.h.b16 %v8902
    %v9414 = vunpack.c.l.b16 %v8903
    %v9415 = vunpack.c.h.b16 %v8903
    %v9416 = vunpack.c.l.b16 %v8904
    %v9417 = vunpack.c.h.b16 %v8904
    %v9418 = vunpack.c.l.b16 %v8905
    %v9419 = vunpack.c.h.b16 %v8905
    %v9420 = vunpack.c.l.b16 %v8906
    %v9421 = vunpack.c.h.b16 %v8906
    %v9422 = vunpack.c.l.b16 %v8907
    %v9423 = vunpack.c.h.b16 %v8907
    %v9424 = vunpack.c.l.b16 %v8908
    %v9425 = vunpack.c.h.b16 %v8908
    %v9426 = vunpack.c.l.b16 %v8909
    %v9427 = vunpack.c.h.b16 %v8909
    %v9428 = vunpack.c.l.b16 %v8910
    %v9429 = vunpack.c.h.b16 %v8910
    %v9430 = vunpack.c.l.b16 %v8911
    %v9431 = vunpack.c.h.b16 %v8911
    %v9432 = vunpack.c.l.b16 %v8912
    %v9433 = vunpack.c.h.b16 %v8912
    %v9434 = vunpack.c.l.b16 %v8913
    %v9435 = vunpack.c.h.b16 %v8913
    %v9436 = vunpack.c.l.b16 %v8914
    %v9437 = vunpack.c.h.b16 %v8914
    %v9438 = vunpack.c.l.b16 %v8915
    %v9439 = vunpack.c.h.b16 %v8915
    %v9440 = vunpack.c.l.b16 %v8916
    %v9441 = vunpack.c.h.b16 %v8916
    %v9442 = vunpack.c.l.b16 %v8917
    %v9443 = vunpack.c.h.b16 %v8917
    %v9444 = vunpack.c.l.b16 %v8918
    %v9445 = vunpack.c.h.b16 %v8918
    %v9446 = vunpack.c.l.b16 %v8919
    %v9447 = vunpack.c.h.b16 %v8919
    %v9448 = vunpack.c.l.b16 %v8920
    %v9449 = vunpack.c.h.b16 %v8920
    %v9450 = vunpack.c.l.b16 %v8921
    %v9451 = vunpack.c.h.b16 %v8921
    %v9452 = vunpack.c.l.b16 %v8922
    %v9453 = vunpack.c.h.b16 %v8922
    %v9454 = vunpack.c.l.b16 %v8923
    %v9455 = vunpack.c.h.b16 %v8923
    %v9456 = vunpack.c.l.b16 %v8924
    %v9457 = vunpack.c.h.b16 %v8924
    %v9458 = vunpack.c.l.b16 %v8925
    %v9459 = vunpack.c.h.b16 %v8925
    %v9460 = vunpack.c.l.b16 %v8926
    %v9461 = vunpack.c.h.b16 %v8926
    %v9462 = vunpack.c.l.b16 %v8927
    %v9463 = vunpack.c.h.b16 %v8927
    %v9464 = vunpack.c.l.b16 %v8928
    %v9465 = vunpack.c.h.b16 %v8928
    %v9466 = vpack.c.b16 %v9118, %v9116
    %v9467 = vpack.c.b16 %v9119, %v9117
    %v9468 = vpack.c.b16 %v9122, %v9120
    %v9469 = vpack.c.b16 %v9123, %v9121
    %v9470 = vpack.c.b16 %v9126, %v9124
    %v9471 = vpack.c.b16 %v9127, %v9125
    %v9472 = vpack.c.b16 %v9130, %v9128
    %v9473 = vpack.c.b16 %v9131, %v9129
    %v9474 = vpack.c.b16 %v9134, %v9132
    %v9475 = vpack.c.b16 %v9135, %v9133
    %v9476 = vpack.c.b16 %v9138, %v9136
    %v9477 = vpack.c.b16 %v9139, %v9137
    %v9478 = vpack.c.b16 %v9142, %v9140
    %v9479 = vpack.c.b16 %v9143, %v9141
    %v9480 = vpack.c.b16 %v9146, %v9144
    %v9481 = vpack.c.b16 %v9147, %v9145
    %v9482 = vpack.c.b16 %v9150, %v9148
    %v9483 = vpack.c.b16 %v9151, %v9149
    %v9484 = vpack.c.b16 %v9154, %v9152
    %v9485 = vpack.c.b16 %v9155, %v9153
    %v9486 = vpack.c.b16 %v9158, %v9156
    %v9487 = vpack.c.b16 %v9159, %v9157
    %v9488 = vpack.c.b16 %v9162, %v9160
    %v9489 = vpack.c.b16 %v9163, %v9161
    %v9490 = vpack.c.b16 %v9166, %v9164
    %v9491 = vpack.c.b16 %v9167, %v9165
    %v9492 = vpack.c.b16 %v9170, %v9168
    %v9493 = vpack.c.b16 %v9171, %v9169
    %v9494 = vpack.c.b16 %v9174, %v9172
    %v9495 = vpack.c.b16 %v9175, %v9173
    %v9496 = vpack.c.b16 %v9178, %v9176
    %v9497 = vpack.c.b16 %v9179, %v9177
    %v9498 = vpack.c.b16 %v9182, %v9180
    %v9499 = vpack.c.b16 %v9183, %v9181
    %v9500 = vpack.c.b16 %v9186, %v9184
    %v9501 = vpack.c.b16 %v9187, %v9185
    %v9502 = vpack.c.b16 %v9190, %v9188
    %v9503 = vpack.c.b16 %v9191, %v9189
    %v9504 = vpack.c.b16 %v9194, %v9192
    %v9505 = vpack.c.b16 %v9195, %v9193
    %v9506 = vpack.c.b16 %v9198, %v9196
    %v9507 = vpack.c.b16 %v9199, %v9197
    %v9508 = vpack.c.b16 %v9202, %v9200
    %v9509 = vpack.c.b16 %v9203, %v9201
    %v9510 = vpack.c.b16 %v9206, %v9204
    %v9511 = vpack.c.b16 %v9207, %v9205
    %v9512 = vpack.c.b16 %v9210, %v9208
    %v9513 = vpack.c.b16 %v9211, %v9209
    %v9514 = vpack.c.b16 %v9214, %v9212
    %v9515 = vpack.c.b16 %v9215, %v9213
    %v9516 = vpack.c.b16 %v9218, %v9216
    %v9517 = vpack.c.b16 %v9219, %v9217
    %v9518 = vpack.c.b16 %v9222, %v9220
    %v9519 = vpack.c.b16 %v9223, %v9221
    %v9520 = vpack.c.b16 %v9226, %v9224
    %v9521 = vpack.c.b16 %v9227, %v9225
    %v9522 = vpack.c.b16 %v9230, %v9228
    %v9523 = vpack.c.b16 %v9231, %v9229
    %v9524 = vpack.c.b16 %v9234, %v9232
    %v9525 = vpack.c.b16 %v9235, %v9233
    %v9526 = vpack.c.b16 %v9238, %v9236
    %v9527 = vpack.c.b16 %v9239, %v9237
    %v9528 = vpack.c.b16 %v9242, %v9240
    %v9529 = vpack.c.b16 %v9243, %v9241
    %v9530 = vpack.c.b16 %v9246, %v9244
    %v9531 = vpack.c.b16 %v9247, %v9245
    %v9532 = vpack.c.b16 %v9250, %v9248
    %v9533 = vpack.c.b16 %v9251, %v9249
    %v9534 = vpack.c.b16 %v9254, %v9252
    %v9535 = vpack.c.b16 %v9255, %v9253
    %v9536 = vpack.c.b16 %v9258, %v9256
    %v9537 = vpack.c.b16 %v9259, %v9257
    %v9538 = vpack.c.b16 %v9262, %v9260
    %v9539 = vpack.c.b16 %v9263, %v9261
    %v9540 = vpack.c.b16 %v9266, %v9264
    %v9541 = vpack.c.b16 %v9267, %v9265
    %v9542 = vpack.c.b16 %v9270, %v9268
    %v9543 = vpack.c.b16 %v9271, %v9269
    %v9544 = vpack.c.b16 %v9274, %v9272
    %v9545 = vpack.c.b16 %v9275, %v9273
    %v9546 = vpack.c.b16 %v9278, %v9276
    %v9547 = vpack.c.b16 %v9279, %v9277
    %v9548 = vpack.c.b16 %v9282, %v9280
    %v9549 = vpack.c.b16 %v9283, %v9281
    %v9550 = vpack.c.b16 %v9286, %v9284
    %v9551 = vpack.c.b16 %v9287, %v9285
    %v9552 = vpack.c.b16 %v9290, %v9288
    %v9553 = vpack.c.b16 %v9291, %v9289
    %v9554 = vpack.c.b16 %v9294, %v9292
    %v9555 = vpack.c.b16 %v9295, %v9293
    %v9556 = vpack.c.b16 %v9298, %v9296
    %v9557 = vpack.c.b16 %v9299, %v9297
    %v9558 = vpack.c.b16 %v9302, %v9300
    %v9559 = vpack.c.b16 %v9303, %v9301
    %v9560 = vpack.c.b16 %v9306, %v9304
    %v9561 = vpack.c.b16 %v9307, %v9305
    %v9562 = vpack.c.b16 %v9310, %v9308
    %v9563 = vpack.c.b16 %v9311, %v9309
    %v9564 = vpack.c.b16 %v9314, %v9312
    %v9565 = vpack.c.b16 %v9315, %v9313
    %v9566 = vpack.c.b16 %v9318, %v9316
    %v9567 = vpack.c.b16 %v9319, %v9317
    %v9568 = vpack.c.b16 %v9322, %v9320
    %v9569 = vpack.c.b16 %v9323, %v9321
    %v9570 = vpack.c.b16 %v9326, %v9324
    %v9571 = vpack.c.b16 %v9327, %v9325
    %v9572 = vpack.c.b16 %v9330, %v9328
    %v9573 = vpack.c.b16 %v9331, %v9329
    %v9574 = vpack.c.b16 %v9334, %v9332
    %v9575 = vpack.c.b16 %v9335, %v9333
    %v9576 = vpack.c.b16 %v9338, %v9336
    %v9577 = vpack.c.b16 %v9339, %v9337
    %v9578 = vpack.c.b16 %v9342, %v9340
    %v9579 = vpack.c.b16 %v9343, %v9341
    %v9580 = vpack.c.b16 %v9346, %v9344
    %v9581 = vpack.c.b16 %v9347, %v9345
    %v9582 = vpack.c.b16 %v9350, %v9348
    %v9583 = vpack.c.b16 %v9351, %v9349
    %v9584 = vpack.c.b16 %v9354, %v9352
    %v9585 = vpack.c.b16 %v9355, %v9353
    %v9586 = vpack.c.b16 %v9358, %v9356
    %v9587 = vpack.c.b16 %v9359, %v9357
    %v9588 = vpack.c.b16 %v9362, %v9360
    %v9589 = vpack.c.b16 %v9363, %v9361
    %v9590 = vpack.c.b16 %v9366, %v9364
    %v9591 = vpack.c.b16 %v9367, %v9365
    %v9592 = vpack.c.b16 %v9370, %v9368
    %v9593 = vpack.c.b16 %v9371, %v9369
    %v9594 = vpack.c.b16 %v9374, %v9372
    %v9595 = vpack.c.b16 %v9375, %v9373
    %v9596 = vpack.c.b16 %v9378, %v9376
    %v9597 = vpack.c.b16 %v9379, %v9377
    %v9598 = vpack.c.b16 %v9382, %v9380
    %v9599 = vpack.c.b16 %v9383, %v9381
    %v9600 = vpack.c.b16 %v9386, %v9384
    %v9601 = vpack.c.b16 %v9387, %v9385
    %v9602 = vpack.c.b16 %v9390, %v9388
    %v9603 = vpack.c.b16 %v9391, %v9389
    %v9604 = vpack.c.b16 %v9394, %v9392
    %v9605 = vpack.c.b16 %v9395, %v9393
    %v9606 = vpack.c.b16 %v9398, %v9396
    %v9607 = vpack.c.b16 %v9399, %v9397
    %v9608 = vpack.c.b16 %v9402, %v9400
    %v9609 = vpack.c.b16 %v9403, %v9401
    %v9610 = vpack.c.b16 %v9406, %v9404
    %v9611 = vpack.c.b16 %v9407, %v9405
    %v9612 = vpack.c.b16 %v9410, %v9408
    %v9613 = vpack.c.b16 %v9411, %v9409
    %v9614 = vpack.c.b16 %v9414, %v9412
    %v9615 = vpack.c.b16 %v9415, %v9413
    %v9616 = vpack.c.b16 %v9418, %v9416
    %v9617 = vpack.c.b16 %v9419, %v9417
    %v9618 = vpack.c.b16 %v9422, %v9420
    %v9619 = vpack.c.b16 %v9423, %v9421
    %v9620 = vpack.c.b16 %v9426, %v9424
    %v9621 = vpack.c.b16 %v9427, %v9425
    %v9622 = vpack.c.b16 %v9430, %v9428
    %v9623 = vpack.c.b16 %v9431, %v9429
    %v9624 = vpack.c.b16 %v9434, %v9432
    %v9625 = vpack.c.b16 %v9435, %v9433
    %v9626 = vpack.c.b16 %v9438, %v9436
    %v9627 = vpack.c.b16 %v9439, %v9437
    %v9628 = vpack.c.b16 %v9442, %v9440
    %v9629 = vpack.c.b16 %v9443, %v9441
    %v9630 = vpack.c.b16 %v9446, %v9444
    %v9631 = vpack.c.b16 %v9447, %v9445
    %v9632 = vpack.c.b16 %v9450, %v9448
    %v9633 = vpack.c.b16 %v9451, %v9449
    %v9634 = vpack.c.b16 %v9454, %v9452
    %v9635 = vpack.c.b16 %v9455, %v9453
    %v9636 = vpack.c.b16 %v9458, %v9456
    %v9637 = vpack.c.b16 %v9459, %v9457
    %v9638 = vpack.c.b16 %v9462, %v9460
    %v9639 = vpack.c.b16 %v9463, %v9461
    %v9640 = vpack.c.b16 %v9464, %v9464
    %v9641 = vpack.c.b16 %v9465, %v9465
    %vm9816 = vcmask 982016
    %v9818 = vsel %vm9816, %v8753, 0
    %vm9820 = vcmask 1043456
    %v9822 = vsel %vm9820, %v9640, 0
    %v9825 = vsel %vm9820, %v9641, 0
    %9827 = vmatprep.subr.bf16.mxu0 %v9481
    %9828 = vmatpush1.bf16.msra.mxu0 %v9480
    %9829 = vmatprep.subr.bf16.mxu0 %v9479
    %9830 = vmatpush1.bf16.msra.mxu0 %v9478
    %9831 = vmatprep.subr.bf16.mxu0 %v9477
    %9832 = vmatpush1.bf16.msra.mxu0 %v9476
    %9833 = vmatprep.subr.bf16.mxu0 %v9475
    %9834 = vmatpush1.bf16.msra.mxu0 %v9474
    %9835 = vmatprep.subr.bf16.mxu0 %v9473
    %9836 = vmatpush1.bf16.msra.mxu0 %v9472
    %9837 = vmatprep.subr.bf16.mxu0 %v9471
    %9838 = vmatpush1.bf16.msra.mxu0 %v9470
    %9839 = vmatprep.subr.bf16.mxu0 %v9469
    %9840 = vmatpush1.bf16.msra.mxu0 %v9468
    %9841 = vmatprep.subr.bf16.mxu0 %v9467
    %9842 = vmatpush1.bf16.msra.mxu0 %v9466
    %9843 = vmatprep.subr.bf16.mxu0 %v9497
    %9844 = vmatpush2.bf16.msra.mxu0 %v9496
    %9845 = vmatprep.subr.bf16.mxu0 %v9495
    %9846 = vmatpush2.bf16.msra.mxu0 %v9494
    %9847 = vmatprep.subr.bf16.mxu0 %v9493
    %9848 = vmatpush2.bf16.msra.mxu0 %v9492
    %9849 = vmatprep.subr.bf16.mxu0 %v9491
    %9850 = vmatpush2.bf16.msra.mxu0 %v9490
    %9851 = vmatprep.subr.bf16.mxu0 %v9489
    %9852 = vmatpush2.bf16.msra.mxu0 %v9488
    %9853 = vmatprep.subr.bf16.mxu0 %v9487
    %9854 = vmatpush2.bf16.msra.mxu0 %v9486
    %9855 = vmatprep.subr.bf16.mxu0 %v9485
    %9856 = vmatpush2.bf16.msra.mxu0 %v9484
    %9857 = vmatprep.subr.bf16.mxu0 %v9483
    %9858 = vmatpush2.bf16.msra.mxu0 %v9482
    %9859 = vmatprep.mubr.bf16.mxu0 %v8744
    %9860 = vmatmul.mubr.bf16.gmra.mxu0 %v8743
    %v9861 = vpop.f32.mrf.mxu0
    %v9862 = vadd.f32 %v8934, %v9861
    %v9863 = vpop.f32.mrf.mxu0
    %v9864 = vadd.f32 %v8938, %v9863
    %v9865 = vpop.f32.mrf.mxu0
    %v9866 = vpop.f32.mrf.mxu0
    %9867 = vdwg.mxu0
    %9868 = vmatprep.subr.bf16.mxu0 %v9513
    %9869 = vmatpush1.bf16.msra.mxu0 %v9512
    %9870 = vmatprep.subr.bf16.mxu0 %v9511
    %9871 = vmatpush1.bf16.msra.mxu0 %v9510
    %9872 = vmatprep.subr.bf16.mxu0 %v9509
    %9873 = vmatpush1.bf16.msra.mxu0 %v9508
    %9874 = vmatprep.subr.bf16.mxu0 %v9507
    %9875 = vmatpush1.bf16.msra.mxu0 %v9506
    %9876 = vmatprep.subr.bf16.mxu0 %v9505
    %9877 = vmatpush1.bf16.msra.mxu0 %v9504
    %9878 = vmatprep.subr.bf16.mxu0 %v9503
    %9879 = vmatpush1.bf16.msra.mxu0 %v9502
    %9880 = vmatprep.subr.bf16.mxu0 %v9501
    %9881 = vmatpush1.bf16.msra.mxu0 %v9500
    %9882 = vmatprep.subr.bf16.mxu0 %v9499
    %9883 = vmatpush1.bf16.msra.mxu0 %v9498
    %9884 = vmatprep.subr.bf16.mxu0 %v9529
    %9885 = vmatpush2.bf16.msra.mxu0 %v9528
    %9886 = vmatprep.subr.bf16.mxu0 %v9527
    %9887 = vmatpush2.bf16.msra.mxu0 %v9526
    %9888 = vmatprep.subr.bf16.mxu0 %v9525
    %9889 = vmatpush2.bf16.msra.mxu0 %v9524
    %9890 = vmatprep.subr.bf16.mxu0 %v9523
    %9891 = vmatpush2.bf16.msra.mxu0 %v9522
    %9892 = vmatprep.subr.bf16.mxu0 %v9521
    %9893 = vmatpush2.bf16.msra.mxu0 %v9520
    %9894 = vmatprep.subr.bf16.mxu0 %v9519
    %9895 = vmatpush2.bf16.msra.mxu0 %v9518
    %9896 = vmatprep.subr.bf16.mxu0 %v9517
    %9897 = vmatpush2.bf16.msra.mxu0 %v9516
    %9898 = vmatprep.subr.bf16.mxu0 %v9515
    %9899 = vmatpush2.bf16.msra.mxu0 %v9514
    %9900 = vmatprep.mubr.bf16.mxu0 %v8746
    %9901 = vmatmul.mubr.bf16.gmra.mxu0 %v8745
    %v9902 = vpop.f32.mrf.mxu0
    %v9903 = vadd.f32 %v9862, %v9902
    %v9904 = vpop.f32.mrf.mxu0
    %v9905 = vadd.f32 %v9864, %v9904
    %v9906 = vpop.f32.mrf.mxu0
    %v9907 = vpop.f32.mrf.mxu0
    %9908 = vdwg.mxu0
    %9909 = vmatprep.subr.bf16.mxu0 %v9545
    %9910 = vmatpush1.bf16.msra.mxu0 %v9544
    %9911 = vmatprep.subr.bf16.mxu0 %v9543
    %9912 = vmatpush1.bf16.msra.mxu0 %v9542
    %9913 = vmatprep.subr.bf16.mxu0 %v9541
    %9914 = vmatpush1.bf16.msra.mxu0 %v9540
    %9915 = vmatprep.subr.bf16.mxu0 %v9539
    %9916 = vmatpush1.bf16.msra.mxu0 %v9538
    %9917 = vmatprep.subr.bf16.mxu0 %v9537
    %9918 = vmatpush1.bf16.msra.mxu0 %v9536
    %9919 = vmatprep.subr.bf16.mxu0 %v9535
    %9920 = vmatpush1.bf16.msra.mxu0 %v9534
    %9921 = vmatprep.subr.bf16.mxu0 %v9533
    %9922 = vmatpush1.bf16.msra.mxu0 %v9532
    %9923 = vmatprep.subr.bf16.mxu0 %v9531
    %9924 = vmatpush1.bf16.msra.mxu0 %v9530
    %9925 = vmatprep.subr.bf16.mxu0 %v9561
    %9926 = vmatpush2.bf16.msra.mxu0 %v9560
    %9927 = vmatprep.subr.bf16.mxu0 %v9559
    %9928 = vmatpush2.bf16.msra.mxu0 %v9558
    %9929 = vmatprep.subr.bf16.mxu0 %v9557
    %9930 = vmatpush2.bf16.msra.mxu0 %v9556
    %9931 = vmatprep.subr.bf16.mxu0 %v9555
    %9932 = vmatpush2.bf16.msra.mxu0 %v9554
    %9933 = vmatprep.subr.bf16.mxu0 %v9553
    %9934 = vmatpush2.bf16.msra.mxu0 %v9552
    %9935 = vmatprep.subr.bf16.mxu0 %v9551
    %9936 = vmatpush2.bf16.msra.mxu0 %v9550
    %9937 = vmatprep.subr.bf16.mxu0 %v9549
    %9938 = vmatpush2.bf16.msra.mxu0 %v9548
    %9939 = vmatprep.subr.bf16.mxu0 %v9547
    %9940 = vmatpush2.bf16.msra.mxu0 %v9546
    %9941 = vmatprep.mubr.bf16.mxu0 %v8748
    %9942 = vmatmul.mubr.bf16.gmra.mxu0 %v8747
    %v9943 = vpop.f32.mrf.mxu0
    %v9944 = vadd.f32 %v9903, %v9943
    %v9945 = vpop.f32.mrf.mxu0
    %v9946 = vadd.f32 %v9905, %v9945
    %v9947 = vpop.f32.mrf.mxu0
    %v9948 = vpop.f32.mrf.mxu0
    %9949 = vdwg.mxu0
    %9950 = vmatprep.subr.bf16.mxu0 %v9577
    %9951 = vmatpush1.bf16.msra.mxu0 %v9576
    %9952 = vmatprep.subr.bf16.mxu0 %v9575
    %9953 = vmatpush1.bf16.msra.mxu0 %v9574
    %9954 = vmatprep.subr.bf16.mxu0 %v9573
    %9955 = vmatpush1.bf16.msra.mxu0 %v9572
    %9956 = vmatprep.subr.bf16.mxu0 %v9571
    %9957 = vmatpush1.bf16.msra.mxu0 %v9570
    %9958 = vmatprep.subr.bf16.mxu0 %v9569
    %9959 = vmatpush1.bf16.msra.mxu0 %v9568
    %9960 = vmatprep.subr.bf16.mxu0 %v9567
    %9961 = vmatpush1.bf16.msra.mxu0 %v9566
    %9962 = vmatprep.subr.bf16.mxu0 %v9565
    %9963 = vmatpush1.bf16.msra.mxu0 %v9564
    %9964 = vmatprep.subr.bf16.mxu0 %v9563
    %9965 = vmatpush1.bf16.msra.mxu0 %v9562
    %9966 = vmatprep.subr.bf16.mxu0 %v9593
    %9967 = vmatpush2.bf16.msra.mxu0 %v9592
    %9968 = vmatprep.subr.bf16.mxu0 %v9591
    %9969 = vmatpush2.bf16.msra.mxu0 %v9590
    %9970 = vmatprep.subr.bf16.mxu0 %v9589
    %9971 = vmatpush2.bf16.msra.mxu0 %v9588
    %9972 = vmatprep.subr.bf16.mxu0 %v9587
    %9973 = vmatpush2.bf16.msra.mxu0 %v9586
    %9974 = vmatprep.subr.bf16.mxu0 %v9585
    %9975 = vmatpush2.bf16.msra.mxu0 %v9584
    %9976 = vmatprep.subr.bf16.mxu0 %v9583
    %9977 = vmatpush2.bf16.msra.mxu0 %v9582
    %9978 = vmatprep.subr.bf16.mxu0 %v9581
    %9979 = vmatpush2.bf16.msra.mxu0 %v9580
    %9980 = vmatprep.subr.bf16.mxu0 %v9579
    %9981 = vmatpush2.bf16.msra.mxu0 %v9578
    %9982 = vmatprep.mubr.bf16.mxu0 %v8750
    %9983 = vmatmul.mubr.bf16.gmra.mxu0 %v8749
    %v9984 = vpop.f32.mrf.mxu0
    %v9985 = vadd.f32 %v9944, %v9984
    %v9986 = vpop.f32.mrf.mxu0
    %v9987 = vadd.f32 %v9946, %v9986
    %v9988 = vpop.f32.mrf.mxu0
    %v9989 = vpop.f32.mrf.mxu0
    %9990 = vdwg.mxu0
    %9991 = vmatprep.subr.bf16.mxu0 %v9609
    %9992 = vmatpush1.bf16.msra.mxu0 %v9608
    %9993 = vmatprep.subr.bf16.mxu0 %v9607
    %9994 = vmatpush1.bf16.msra.mxu0 %v9606
    %9995 = vmatprep.subr.bf16.mxu0 %v9605
    %9996 = vmatpush1.bf16.msra.mxu0 %v9604
    %9997 = vmatprep.subr.bf16.mxu0 %v9603
    %9998 = vmatpush1.bf16.msra.mxu0 %v9602
    %9999 = vmatprep.subr.bf16.mxu0 %v9601
    %10000 = vmatpush1.bf16.msra.mxu0 %v9600
    %10001 = vmatprep.subr.bf16.mxu0 %v9599
    %10002 = vmatpush1.bf16.msra.mxu0 %v9598
    %10003 = vmatprep.subr.bf16.mxu0 %v9597
    %10004 = vmatpush1.bf16.msra.mxu0 %v9596
    %10005 = vmatprep.subr.bf16.mxu0 %v9595
    %10006 = vmatpush1.bf16.msra.mxu0 %v9594
    %10007 = vmatprep.subr.bf16.mxu0 %v9625
    %10008 = vmatpush2.bf16.msra.mxu0 %v9624
    %10009 = vmatprep.subr.bf16.mxu0 %v9623
    %10010 = vmatpush2.bf16.msra.mxu0 %v9622
    %10011 = vmatprep.subr.bf16.mxu0 %v9621
    %10012 = vmatpush2.bf16.msra.mxu0 %v9620
    %10013 = vmatprep.subr.bf16.mxu0 %v9619
    %10014 = vmatpush2.bf16.msra.mxu0 %v9618
    %10015 = vmatprep.subr.bf16.mxu0 %v9617
    %10016 = vmatpush2.bf16.msra.mxu0 %v9616
    %10017 = vmatprep.subr.bf16.mxu0 %v9615
    %10018 = vmatpush2.bf16.msra.mxu0 %v9614
    %10019 = vmatprep.subr.bf16.mxu0 %v9613
    %10020 = vmatpush2.bf16.msra.mxu0 %v9612
    %10021 = vmatprep.subr.bf16.mxu0 %v9611
    %10022 = vmatpush2.bf16.msra.mxu0 %v9610
    %10023 = vmatprep.mubr.bf16.mxu0 %v8752
    %10024 = vmatmul.mubr.bf16.gmra.mxu0 %v8751
    %v10025 = vpop.f32.mrf.mxu0
    %v10026 = vadd.f32 %v9985, %v10025
    %v10027 = vpop.f32.mrf.mxu0
    %v10028 = vadd.f32 %v9987, %v10027
    %v10029 = vpop.f32.mrf.mxu0
    %v10030 = vpop.f32.mrf.mxu0
    %10031 = vdwg.mxu0
    %10032 = vmatprep.subr.bf16.mxu0 %v9825
    %10033 = vmatpush1.bf16.msra.mxu0 %v9822
    %10034 = vmatprep.subr.bf16.mxu0 %v9639
    %10035 = vmatpush1.bf16.msra.mxu0 %v9638
    %10036 = vmatprep.subr.bf16.mxu0 %v9637
    %10037 = vmatpush1.bf16.msra.mxu0 %v9636
    %10038 = vmatprep.subr.bf16.mxu0 %v9635
    %10039 = vmatpush1.bf16.msra.mxu0 %v9634
    %10040 = vmatprep.subr.bf16.mxu0 %v9633
    %10041 = vmatpush1.bf16.msra.mxu0 %v9632
    %10042 = vmatprep.subr.bf16.mxu0 %v9631
    %10043 = vmatpush1.bf16.msra.mxu0 %v9630
    %10044 = vmatprep.subr.bf16.mxu0 %v9629
    %10045 = vmatpush1.bf16.msra.mxu0 %v9628
    %10046 = vmatprep.subr.bf16.mxu0 %v9627
    %10047 = vmatpush1.bf16.msra.mxu0 %v9626
    %10048 = vmatprep.subr.bf16.mxu0 0
    %10049 = vmatpush2.bf16.msra.mxu0 0
    %10050 = vmatprep.subr.bf16.mxu0 0
    %10051 = vmatpush2.bf16.msra.mxu0 0
    %10052 = vmatprep.subr.bf16.mxu0 0
    %10053 = vmatpush2.bf16.msra.mxu0 0
    %10054 = vmatprep.subr.bf16.mxu0 0
    %10055 = vmatpush2.bf16.msra.mxu0 0
    %10056 = vmatprep.subr.bf16.mxu0 0
    %10057 = vmatpush2.bf16.msra.mxu0 0
    %10058 = vmatprep.subr.bf16.mxu0 0
    %10059 = vmatpush2.bf16.msra.mxu0 0
    %10060 = vmatprep.subr.bf16.mxu0 0
    %10061 = vmatpush2.bf16.msra.mxu0 0
    %10062 = vmatprep.subr.bf16.mxu0 0
    %10063 = vmatpush2.bf16.msra.mxu0 0
    %10064 = vmatprep.mubr.bf16.mxu0 0
    %10065 = vmatmul.mubr.bf16.gmra.mxu0 %v9818
    %v10066 = vpop.f32.mrf.mxu0
    %v10067 = vadd.f32 %v10026, %v10066
    %v10068 = vpop.f32.mrf.mxu0
    %v10069 = vadd.f32 %v10028, %v10068
    %v10070 = vpop.f32.mrf.mxu0
    %v10071 = vpop.f32.mrf.mxu0
    %10072 = vdwg.mxu0
    %v10073 = vmax.f32 %v10067, 0.0
    %v10074 = vmax.f32 %v10069, 0.0
    %v10075 = vpack.c.bf16 %v10073, %v10073
    %v10076 = vpack.c.bf16 %v10074, %v10074
    %v10077 = vld [vmem:[#allocation10] sm:$0xf]
    %v10078 = vld [vmem:[#allocation10 + $0x4] sm:$0xf]
    %v10079 = vld [vmem:[#allocation10 + $0x8] sm:$0xf]
    %v10080 = vld [vmem:[#allocation10 + $0xc] sm:$0xf]
    %v10081 = vld [vmem:[#allocation10 + $0x10] sm:$0xf]
    %v10082 = vld [vmem:[#allocation10 + $0x14] sm:$0xf]
    %v10083 = vld [vmem:[#allocation10 + $0x18] sm:$0xf]
    %v10084 = vld [vmem:[#allocation10 + $0x1c] sm:$0xf]
    %v10085 = vld [vmem:[#allocation10 + $0x20] sm:$0xf]
    %v10086 = vld [vmem:[#allocation10 + $0x24] sm:$0xf]
    %v10087 = vld [vmem:[#allocation10 + $0x28] sm:$0xf]
    %v10088 = vld [vmem:[#allocation10 + $0x2c] sm:$0xf]
    %v10089 = vld [vmem:[#allocation10 + $0x30] sm:$0xf]
    %v10090 = vld [vmem:[#allocation10 + $0x34] sm:$0xf]
    %v10091 = vld [vmem:[#allocation10 + $0x38] sm:$0xf]
    %v10092 = vld [vmem:[#allocation10 + $0x3c] sm:$0xf]
    %v10093 = vld [vmem:[#allocation10 + $0x40] sm:$0xf]
    %v10094 = vld [vmem:[#allocation10 + $0x44] sm:$0xf]
    %v10095 = vld [vmem:[#allocation10 + $0x48] sm:$0xf]
    %v10096 = vld [vmem:[#allocation10 + $0x4c] sm:$0xf]
    %v10097 = vld [vmem:[#allocation10 + $0x50] sm:$0xf]
    %v10098 = vld [vmem:[#allocation10 + $0x54] sm:$0xf]
    %v10099 = vld [vmem:[#allocation10 + $0x58] sm:$0xf]
    %v10100 = vld [vmem:[#allocation10 + $0x5c] sm:$0xf]
    %v10101 = vld [vmem:[#allocation10 + $0x60] sm:$0xf]
    %v10102 = vld [vmem:[#allocation11] sm:$0x1]
    %v10104 = vlaneseq
    %v10105 = vshrl.u32 %v10104, 7
    %v10106 = vsub.s32 0, %v10105
    %v10107 = vrot.slane %v10102, %v10106
    %v10134 = vunpack.c.l.b16 %v10077
    %v10135 = vunpack.c.l.b16 %v10078
    %v10136 = vunpack.c.l.b16 %v10079
    %v10137 = vunpack.c.l.b16 %v10080
    %v10138 = vunpack.c.l.b16 %v10081
    %v10139 = vunpack.c.l.b16 %v10082
    %v10140 = vunpack.c.l.b16 %v10083
    %v10141 = vunpack.c.l.b16 %v10084
    %v10142 = vunpack.c.l.b16 %v10085
    %v10143 = vunpack.c.l.b16 %v10086
    %v10144 = vunpack.c.l.b16 %v10087
    %v10145 = vunpack.c.l.b16 %v10088
    %v10146 = vunpack.c.l.b16 %v10089
    %v10147 = vunpack.c.l.b16 %v10090
    %v10148 = vunpack.c.l.b16 %v10091
    %v10149 = vunpack.c.l.b16 %v10092
    %v10150 = vunpack.c.l.b16 %v10093
    %v10151 = vunpack.c.l.b16 %v10094
    %v10152 = vunpack.c.l.b16 %v10095
    %v10153 = vunpack.c.l.b16 %v10096
    %v10154 = vunpack.c.l.b16 %v10097
    %v10155 = vunpack.c.l.b16 %v10098
    %v10156 = vunpack.c.l.b16 %v10099
    %v10157 = vunpack.c.l.b16 %v10100
    %v10158 = vunpack.c.l.b16 %v10101
    %v10159 = vpack.c.b16 %v10135, %v10134
    %v10160 = vpack.c.b16 %v10137, %v10136
    %v10161 = vpack.c.b16 %v10139, %v10138
    %v10162 = vpack.c.b16 %v10141, %v10140
    %v10163 = vpack.c.b16 %v10143, %v10142
    %v10164 = vpack.c.b16 %v10145, %v10144
    %v10165 = vpack.c.b16 %v10147, %v10146
    %v10166 = vpack.c.b16 %v10149, %v10148
    %v10167 = vpack.c.b16 %v10151, %v10150
    %v10168 = vpack.c.b16 %v10153, %v10152
    %v10169 = vpack.c.b16 %v10155, %v10154
    %v10170 = vpack.c.b16 %v10157, %v10156
    %v10171 = vpack.c.b16 %v10158, %v10158
    %vm10184 = vcmask 588800
    %v10186 = vsel %vm10184, %v10076, 0
    %v10189 = vsel %vm9820, %v10171, 0
    %10191 = vmatprep.subr.bf16.mxu0 0
    %10192 = vmatpush1.bf16.msra.mxu0 %v10166
    %10193 = vmatprep.subr.bf16.mxu0 0
    %10194 = vmatpush1.bf16.msra.mxu0 %v10165
    %10195 = vmatprep.subr.bf16.mxu0 0
    %10196 = vmatpush1.bf16.msra.mxu0 %v10164
    %10197 = vmatprep.subr.bf16.mxu0 0
    %10198 = vmatpush1.bf16.msra.mxu0 %v10163
    %10199 = vmatprep.subr.bf16.mxu0 0
    %10200 = vmatpush1.bf16.msra.mxu0 %v10162
    %10201 = vmatprep.subr.bf16.mxu0 0
    %10202 = vmatpush1.bf16.msra.mxu0 %v10161
    %10203 = vmatprep.subr.bf16.mxu0 0
    %10204 = vmatpush1.bf16.msra.mxu0 %v10160
    %10205 = vmatprep.subr.bf16.mxu0 0
    %10206 = vmatpush1.bf16.msra.mxu0 %v10159
    %10207 = vmatprep.subr.bf16.mxu0 0
    %10208 = vmatpush2.bf16.msra.mxu0 0
    %10209 = vmatprep.subr.bf16.mxu0 0
    %10210 = vmatpush2.bf16.msra.mxu0 0
    %10211 = vmatprep.subr.bf16.mxu0 0
    %10212 = vmatpush2.bf16.msra.mxu0 0
    %10213 = vmatprep.subr.bf16.mxu0 0
    %10214 = vmatpush2.bf16.msra.mxu0 %v10189
    %10215 = vmatprep.subr.bf16.mxu0 0
    %10216 = vmatpush2.bf16.msra.mxu0 %v10170
    %10217 = vmatprep.subr.bf16.mxu0 0
    %10218 = vmatpush2.bf16.msra.mxu0 %v10169
    %10219 = vmatprep.subr.bf16.mxu0 0
    %10220 = vmatpush2.bf16.msra.mxu0 %v10168
    %10221 = vmatprep.subr.bf16.mxu0 0
    %10222 = vmatpush2.bf16.msra.mxu0 %v10167
    %10223 = vmatprep.mubr.bf16.mxu0 %v10186
    %10224 = vmatmul.mubr.bf16.gmra.mxu0 %v10075
    %v10225 = vpop.f32.mrf.mxu0
    %v10226 = vadd.f32 %v10107, %v10225
    %v10227 = vpop.f32.mrf.mxu0
    %v10228 = vpop.f32.mrf.mxu0
    %v10229 = vpop.f32.mrf.mxu0
    %10230 = vdwg.mxu0
    %10231 = vst [vmem:[#allocation13] sm:$0xff] %v10226
    // Predicated region
    $region54: #{tpu_custom_call.1} parent=1 // pred_check
      _
    $region55: #{tpu_custom_call.1} parent=1 // pred_check_branch
      %10233 = sbr.rel (0) target = $region57
    $region56: #{tpu_custom_call.1} parent=1 // pred_region
      %s10235 = ssub.s32 128, 128
      %10236 = vsyncadd [#allocation4], %s10235
      %s10238 = sshll.u32 [#allocation13], 4
      %s10239 = int_to_ptr.vmem [resolvable:$true] %s10238
      %10241 = dma.vmem_to_hbm [thread:$0]  %s10239, 128, %s7, [#allocation4]
    $region57: #{tpu_custom_call.1} parent=1 // pred_fallthru
      _
    // Predicated region
    $region58: #{tpu_custom_call.1} parent=1 // pred_check
      _
    $region59: #{tpu_custom_call.1} parent=1 // pred_check_branch
      %10243 = sbr.rel (0) target = $region61
    $region60: #{tpu_custom_call.1} parent=1 // pred_region
      %10244 = dma.done [#allocation4], 128
    $region61: #{tpu_custom_call.1} parent=1 // pred_fallthru
      _
    %10245 = vsyncpa [#allocation3], 1
    %10246 = vsyncpa [#allocation6], 1
    %10247 = vsyncpa [#allocation9], 1
    %10248 = vsyncpa [#allocation12], 1
    %10249 = vsyncpa [#allocation4], 1

</llo_original>
